<compile_context>
chip_gen: v7x
topology: tpu7x:2x2x1
jax: 0.10.0
libtpu: 0.0.40
codegen_flags: <defaults>
</compile_context>

<pallas_src>
import jax
import jax.numpy as jnp
from jax import lax
from jax.experimental import pallas as pl
from jax.experimental.pallas import tpu as pltpu

# ----- model hyper-parameters (small, consistent with the module's forward) -----
B = 2            # batch_size
S = 8            # source (story) length
T = 4            # MAX_LEN_HIGHLIGHT
V = 32           # base vocab size
E = 16           # embedding dim
H = 16           # encoder hidden per direction
H2 = 2 * H       # decoder hidden (= concat of both encoder directions) = 32
G = 4 * H        # per-direction encoder gate width = 64
G2 = 4 * H2      # decoder gate width = 128 (lane-dense)
N_OOV = 4        # width of extra_zeros (max in-batch OOVs)
V_EXT = V + N_OOV
V_PAD = 128      # extended vocab padded to a full lane width for lane-dense stores
SOS = 2          # start-of-sequence token id (decoder_input init in the module)
UNK = 1          # OOV ids produced by argmax are mapped back to UNK for embedding
NEG = -1e30      # logit pad value so padded softmax columns are exactly zero


def _vmem_specs(n):
    return [pl.BlockSpec(memory_space=pltpu.MemorySpace.VMEM) for _ in range(n)]


def _lstm_cell(gates, c, hid):
    # PyTorch gate order [i, f, g, o]
    i = jax.nn.sigmoid(gates[:, 0 * hid:1 * hid])
    f = jax.nn.sigmoid(gates[:, 1 * hid:2 * hid])
    g = jnp.tanh(gates[:, 2 * hid:3 * hid])
    o = jax.nn.sigmoid(gates[:, 3 * hid:4 * hid])
    c_new = f * c + i * g
    h_new = o * jnp.tanh(c_new)
    return h_new, c_new


# =====================  fused bidirectional-encoder kernel (all S steps, both dirs)  =====================
def encoder_kernel(x_ref, wih_ref, whh_f_ref, whh_b_ref, b_ref,
                   hs_f_ref, hs_b_ref, hf_ref, cf_ref, hb_ref, cb_ref,
                   xg_ref):
    # hoisted weight loads (read once per kernel invocation, reused by every timestep)
    whh_f = whh_f_ref[...]                    # (H, 4H)
    whh_b = whh_b_ref[...]                    # (H, 4H)

    # fused fwd|bwd input-gate projection for ALL timesteps in one lane-dense matmul:
    # (S*B, E) @ (E, 8H = 128), bias folded in.  Cols [:4H] = forward gates, [4H:] = backward gates.
    xg_ref[...] = (jnp.dot(x_ref[...], wih_ref[...], preferred_element_type=jnp.float32)
                   + b_ref[...])

    def step(t, carry):
        h_f, c_f, h_b, c_b = carry
        t_rev = S - 1 - t
        xg_t = xg_ref[pl.ds(pl.multiple_of(t * B, B), B), :]        # (B, 8H)
        xg_r = xg_ref[pl.ds(pl.multiple_of(t_rev * B, B), B), :]    # (B, 8H)
        gates_f = xg_t[:, :G] + jnp.dot(h_f, whh_f, preferred_element_type=jnp.float32)
        gates_b = xg_r[:, G:] + jnp.dot(h_b, whh_b, preferred_element_type=jnp.float32)
        h_f, c_f = _lstm_cell(gates_f, c_f, H)
        h_b, c_b = _lstm_cell(gates_b, c_b, H)
        hs_f_ref[t] = h_f
        hs_b_ref[t_rev] = h_b
        return (h_f, c_f, h_b, c_b)

    z = jnp.zeros((B, H), jnp.float32)
    h_f, c_f, h_b, c_b = lax.fori_loop(0, S, step, (z, z, z, z), unroll=True)
    hf_ref[...] = h_f
    cf_ref[...] = c_f
    hb_ref[...] = h_b
    cb_ref[...] = c_b


def encoder_forward(x_flat, wih_fb, whh_f, whh_b, b_fb):
    out_shape = (
        jax.ShapeDtypeStruct((S, B, H), jnp.float32),   # per-step fwd hidden
        jax.ShapeDtypeStruct((S, B, H), jnp.float32),   # per-step bwd hidden
        jax.ShapeDtypeStruct((B, H), jnp.float32),      # final fwd h
        jax.ShapeDtypeStruct((B, H), jnp.float32),      # final fwd c
        jax.ShapeDtypeStruct((B, H), jnp.float32),      # final bwd h
        jax.ShapeDtypeStruct((B, H), jnp.float32),      # final bwd c
    )
    return pl.pallas_call(
        encoder_kernel,
        out_shape=out_shape,
        in_specs=_vmem_specs(5),
        out_specs=tuple(_vmem_specs(6)),
        scratch_shapes=[pltpu.VMEM((S * B, 8 * H), jnp.float32)],
    )(x_flat, wih_fb, whh_f, whh_b, b_fb)


# =====================  fused decoder kernel (all T steps, incl. argmax + re-embed)  =====================
def decoder_kernel(enc_ref, story_ref, extra_ref, emb_ref,
                   h0_ref, c0_ref, x0_ref,
                   wih_ref, whh_ref, bd_ref,
                   wv_h_ref, wv_c_ref, bv_ref,
                   wp_c_ref, wp_h_ref, wp_x_ref, bp_ref,
                   out_ref):
    # ---- hoisted loads: everything stays VMEM/vreg-resident across the T steps ----
    enc = enc_ref[...]                                   # (B, S, H2)
    emb = emb_ref[...]                                   # (V, E)
    extra = extra_ref[...]                               # (B, V_PAD) (extra_zeros placed at [V:V_EXT])
    wih = wih_ref[...]                                   # (E, 128)
    whh = whh_ref[...]                                   # (H2, 128)
    bd = jnp.broadcast_to(bd_ref[...], (B, G2))          # hoisted bias broadcast
    wv_h = wv_h_ref[...]                                 # (H2, V_PAD)
    wv_c = wv_c_ref[...]                                 # (H2, V_PAD)
    bv = bv_ref[...]                                     # (1, V_PAD), pad cols = NEG
    wp_c = wp_c_ref[...]                                 # (H2, 1)
    wp_h = wp_h_ref[...]                                 # (H2, 1)
    wp_x = wp_x_ref[...]                                 # (E, 1)
    bp = bp_ref[...]                                     # (1, 1)

    # story one-hot is loop-invariant: compute ONCE, reuse every step; the copy-dist
    # scatter-add then becomes an MXU contraction per step.
    ids = story_ref[...]                                                    # (B, S) int32
    viota = lax.broadcasted_iota(jnp.int32, (B, S, V_PAD), 2)
    story_onehot = (ids[:, :, None] == viota).astype(jnp.float32)           # (B, S, V_PAD)

    tok_iota = lax.broadcasted_iota(jnp.int32, (B, V), 1)                   # (B, V)
    col_iota = lax.broadcasted_iota(jnp.int32, (B, V_PAD), 1)               # (B, V_PAD)

    def step(t, carry):
        h, c, x = carry
        # ---- decoder LSTM cell: lane-dense (B, 128) gate matmuls ----
        gates = (jnp.dot(x, wih, preferred_element_type=jnp.float32)
                 + jnp.dot(h, whh, preferred_element_type=jnp.float32)
                 + bd)
        h, c = _lstm_cell(gates, c, H2)

        # ---- attention: MXU contractions (flash-style einsums) + EUP reciprocal ----
        s3 = jnp.einsum('bth,bsh->bts', h[:, None, :], enc,
                        preferred_element_type=jnp.float32)                  # (B, 1, S)
        s3 = s3 - jnp.max(s3, axis=-1, keepdims=True)
        e3 = jnp.exp(s3)
        attn3 = e3 * pl.reciprocal(jnp.sum(e3, axis=-1, keepdims=True), approx=True)
        ctx = jnp.einsum('bts,bsh->bth', attn3, enc,
                         preferred_element_type=jnp.float32)[:, 0, :]        # (B, H2)

        # ---- vocab distribution over the padded extended vocab (split matmuls, no concat) ----
        logits = (jnp.dot(h, wv_h, preferred_element_type=jnp.float32)
                  + jnp.dot(ctx, wv_c, preferred_element_type=jnp.float32)
                  + bv)                                                      # (B, V_PAD); pads ~ -1e30
        logits = logits - jnp.max(logits, axis=-1, keepdims=True)
        ve = jnp.exp(logits)                                                 # pad cols exactly 0
        vocab_dist = ve * pl.reciprocal(jnp.sum(ve, axis=-1, keepdims=True), approx=True)

        # ---- generation probability (split matmuls, no concat) ----
        p_gen = jax.nn.sigmoid(
            jnp.dot(ctx, wp_c, preferred_element_type=jnp.float32)
            + jnp.dot(h, wp_h, preferred_element_type=jnp.float32)
            + jnp.dot(x, wp_x, preferred_element_type=jnp.float32)
            + bp)                                                            # (B, 1)

        # ---- pointer/copy distribution: scatter-add as MXU contraction with hoisted one-hot ----
        copy_w = (1.0 - p_gen) * attn3[:, 0, :]                              # (B, S)
        copy_dist = jnp.einsum('bts,bsv->btv', copy_w[:, None, :], story_onehot,
                               preferred_element_type=jnp.float32)[:, 0, :]  # (B, V_PAD)

        dist = p_gen * vocab_dist + extra + copy_dist                        # (B, V_PAD)
        out_ref[t] = dist                                                    # lane-dense 128-wide store

        # ---- greedy next token (eval path): first-occurrence argmax, OOV -> UNK, re-embed ----
        m = jnp.max(dist, axis=-1, keepdims=True)
        idx = jnp.min(jnp.where(dist == m, col_iota, V_PAD), axis=-1, keepdims=True)  # (B, 1)
        nxt = jnp.where(idx >= V, UNK, idx)                                  # (B, 1) in [0, V)
        x_next = jnp.dot((nxt == tok_iota).astype(jnp.float32), emb,
                         preferred_element_type=jnp.float32)                 # (B, E) one-hot gather on MXU
        return (h, c, x_next)

    lax.fori_loop(0, T, step, (h0_ref[...], c0_ref[...], x0_ref[...]), unroll=True)


def decoder_forward(enc, story, extra_pad, emb, h0, c0, x0,
                    wih_d, whh_d, b_d, wv_h, wv_c, bv_pad, wp_c, wp_h, wp_x, bp):
    return pl.pallas_call(
        decoder_kernel,
        out_shape=jax.ShapeDtypeStruct((T, B, V_PAD), jnp.float32),
        in_specs=_vmem_specs(17),
        out_specs=pl.BlockSpec(memory_space=pltpu.MemorySpace.VMEM),
    )(enc, story, extra_pad, emb, h0, c0, x0,
      wih_d, whh_d, b_d, wv_h, wv_c, bv_pad, wp_c, wp_h, wp_x, bp)


# =====================  parameter init (deterministic, synthetic)  =====================
def init_params(key):
    ks = jax.random.split(key, 12)
    s = 0.1
    return {
        "emb":   jax.random.normal(ks[0], (V, E), jnp.float32) * s,
        # encoder forward direction
        "wih_f": jax.random.normal(ks[1], (E, 4 * H), jnp.float32) * s,
        "whh_f": jax.random.normal(ks[2], (H, 4 * H), jnp.float32) * s,
        "b_f":   jnp.zeros((1, 4 * H), jnp.float32),
        # encoder backward direction
        "wih_b": jax.random.normal(ks[3], (E, 4 * H), jnp.float32) * s,
        "whh_b": jax.random.normal(ks[4], (H, 4 * H), jnp.float32) * s,
        "b_b":   jnp.zeros((1, 4 * H), jnp.float32),
        # decoder LSTM (hidden = H2)
        "wih_d": jax.random.normal(ks[5], (E, 4 * H2), jnp.float32) * s,
        "whh_d": jax.random.normal(ks[6], (H2, 4 * H2), jnp.float32) * s,
        "b_d":   jnp.zeros((1, 4 * H2), jnp.float32),
        # vocab projection on [h; context]
        "wv":    jax.random.normal(ks[7], (2 * H2, V), jnp.float32) * s,
        "bv":    jnp.zeros((1, V), jnp.float32),
        # p_gen gate on [context; h; x]
        "wp":    jax.random.normal(ks[8], (2 * H2 + E, 1), jnp.float32) * s,
        "bp":    jnp.zeros((1, 1), jnp.float32),
    }


# =====================  forward pass (PointerGenerator.forward, eval path)  =====================
def pointer_generator_forward(params, inp, target, story_extended, extra_zeros):
    # TODO(synk): teacher-forcing branch (random.uniform > 0.5 and self.training) is a host-side
    #             Python RNG decision only active in training; the eval path (argmax feedback) is implemented.
    del target

    emb = params["emb"]
    emb_in = jnp.take(emb, inp, axis=0)                                  # (B, S, E)
    x_flat = jnp.transpose(emb_in, (1, 0, 2)).reshape(S * B, E)          # time-major, flattened

    # fused [fwd | bwd] input-gate weights -> lane-dense 8H = 128 wide matmul in-kernel
    wih_fb = jnp.concatenate([params["wih_f"], params["wih_b"]], axis=1)  # (E, 8H)
    b_fb = jnp.concatenate([params["b_f"], params["b_b"]], axis=1)        # (1, 8H)

    hs_f, hs_b, hf, cf, hb, cb = encoder_forward(
        x_flat, wih_fb, params["whh_f"], params["whh_b"], b_fb)

    enc = jnp.transpose(jnp.concatenate([hs_f, hs_b], axis=-1), (1, 0, 2))  # (B, S, 2H)
    dec_h0 = jnp.concatenate([hf, hb], axis=1)                            # (B, H2)  torch.cat((l, r), 1)
    dec_c0 = jnp.concatenate([cf, cb], axis=1)                            # (B, H2)

    x0 = jnp.broadcast_to(emb[SOS], (B, E))                               # decoder_input = [2] * B, embedded

    # decoder weights, padded to the lane-dense extended vocab (V_PAD = 128).
    # bias pad columns get a large negative so padded softmax columns are exactly zero.
    pad = V_PAD - V
    wv_h = jnp.pad(params["wv"][:H2], ((0, 0), (0, pad)))
    wv_c = jnp.pad(params["wv"][H2:], ((0, 0), (0, pad)))
    bv_pad = jnp.pad(params["bv"], ((0, 0), (0, pad)), constant_values=NEG)
    extra_pad = jnp.pad(extra_zeros, ((0, 0), (V, V_PAD - V_EXT)))        # extra_zeros at cols [V, V_EXT)
    wp_c = params["wp"][0:H2]
    wp_h = params["wp"][H2:2 * H2]
    wp_x = params["wp"][2 * H2:]

    out = decoder_forward(enc, story_extended, extra_pad, emb, dec_h0, dec_c0, x0,
                          params["wih_d"], params["whh_d"], params["b_d"],
                          wv_h, wv_c, bv_pad, wp_c, wp_h, wp_x, params["bp"])
    # (T, B, V_PAD) -> (B, T, V_EXT)
    return jnp.transpose(out, (1, 0, 2))[:, :, :V_EXT]


if __name__ == "__main__":
    key = jax.random.PRNGKey(0)
    kp, ki, kt = jax.random.split(key, 3)

    params = init_params(kp)

    inp = jax.random.randint(ki, (B, S), 0, V, dtype=jnp.int32)           # encoder input ids
    target = jax.random.randint(kt, (B, T), 0, V, dtype=jnp.int32)        # unused in eval path
    # story_extended: encoder tokens re-indexed in the extended vocab; simulate a couple of OOVs
    story_extended = inp.at[:, 0].set(V + 0).at[:, 3].set(V + 1)
    extra_zeros = jnp.zeros((B, N_OOV), jnp.float32)

    fwd = jax.jit(pointer_generator_forward)
    out = fwd(params, inp, target, story_extended, extra_zeros)
    out = jax.block_until_ready(out)

    assert out.shape == (B, T, V_EXT)
    assert bool(jnp.all(jnp.isfinite(out)))
    # each step's output is a proper distribution over the extended vocab
    # (tolerance loosened from 1e-4 because both softmax denominators use the EUP approx reciprocal)
    assert bool(jnp.allclose(jnp.sum(out, axis=-1), 1.0, atol=2e-3))
    print("KERNEL_OK")
</pallas_src>

<mosaic_0001>
module attributes {stable_mosaic.version = 11 : i64} {
  func.func @encoder_kernel(%arg0: memref<16x16xf32, #tpu.memory_space<vmem>>, %arg1: memref<16x128xf32, #tpu.memory_space<vmem>>, %arg2: memref<16x64xf32, #tpu.memory_space<vmem>>, %arg3: memref<16x64xf32, #tpu.memory_space<vmem>>, %arg4: memref<1x128xf32, #tpu.memory_space<vmem>>, %arg5: memref<8x2x16xf32, #tpu.memory_space<vmem>>, %arg6: memref<8x2x16xf32, #tpu.memory_space<vmem>>, %arg7: memref<2x16xf32, #tpu.memory_space<vmem>>, %arg8: memref<2x16xf32, #tpu.memory_space<vmem>>, %arg9: memref<2x16xf32, #tpu.memory_space<vmem>>, %arg10: memref<2x16xf32, #tpu.memory_space<vmem>>, %arg11: memref<16x128xf32, #tpu.memory_space<vmem>>) attributes {dimension_semantics = [], scalar_prefetch = 0 : i64, scratch_operands = 1 : i64, tpu.core_type = #tpu.core_type<tc>} {
    %c0 = arith.constant 0 : index
    %c0_0 = arith.constant 0 : index
    %0 = vector.load %arg2[%c0, %c0_0] : memref<16x64xf32, #tpu.memory_space<vmem>>, vector<16x64xf32>
    %c0_1 = arith.constant 0 : index
    %c0_2 = arith.constant 0 : index
    %1 = vector.load %arg3[%c0_1, %c0_2] : memref<16x64xf32, #tpu.memory_space<vmem>>, vector<16x64xf32>
    %c0_3 = arith.constant 0 : index
    %c0_4 = arith.constant 0 : index
    %2 = vector.load %arg0[%c0_3, %c0_4] : memref<16x16xf32, #tpu.memory_space<vmem>>, vector<16x16xf32>
    %c0_5 = arith.constant 0 : index
    %c0_6 = arith.constant 0 : index
    %3 = vector.load %arg1[%c0_5, %c0_6] : memref<16x128xf32, #tpu.memory_space<vmem>>, vector<16x128xf32>
    %cst = arith.constant dense<0.000000e+00> : vector<16x128xf32>
    %4 = tpu.matmul %2, %3, %cst {dimension_numbers = #tpu.dot_dimension_numbers<[1], [0], [0], [1], [0, 0, 1, 1], [], []>} : vector<16x16xf32>, vector<16x128xf32>, vector<16x128xf32> -> vector<16x128xf32>
    %c0_7 = arith.constant 0 : index
    %c0_8 = arith.constant 0 : index
    %5 = vector.load %arg4[%c0_7, %c0_8] : memref<1x128xf32, #tpu.memory_space<vmem>>, vector<1x128xf32>
    %6 = vector.broadcast %5 : vector<1x128xf32> to vector<16x128xf32>
    %7 = arith.addf %4, %6 : vector<16x128xf32>
    %c0_9 = arith.constant 0 : index
    %c0_10 = arith.constant 0 : index
    %8 = vector.load %arg11[%c0_9, %c0_10] : memref<16x128xf32, #tpu.memory_space<vmem>>, vector<16x128xf32>
    tpu.vector_store %arg11[%c0_9, %c0_10], %7 {strides = array<i32>} : memref<16x128xf32, #tpu.memory_space<vmem>>, vector<16x128xf32>,
    %cst_11 = arith.constant 0.000000e+00 : f32
    %9 = vector.broadcast %cst_11 : f32 to vector<2x16xf32>
    %c0_i32 = arith.constant 0 : i32
    %c7_i32 = arith.constant 7 : i32
    %10 = arith.subi %c7_i32, %c0_i32 : i32
    %c2_i32 = arith.constant 2 : i32
    %11 = arith.muli %c0_i32, %c2_i32 : i32
    %12 = tpu.assume_multiple %11, 2 : i32
    %13 = arith.index_cast %12 : i32 to index
    %c0_12 = arith.constant 0 : index
    %14 = vector.load %arg11[%13, %c0_12] : memref<16x128xf32, #tpu.memory_space<vmem>>, vector<2x128xf32>
    %c2_i32_13 = arith.constant 2 : i32
    %15 = arith.muli %10, %c2_i32_13 : i32
    %16 = tpu.assume_multiple %15, 2 : i32
    %17 = arith.index_cast %16 : i32 to index
    %c0_14 = arith.constant 0 : index
    %18 = vector.load %arg11[%17, %c0_14] : memref<16x128xf32, #tpu.memory_space<vmem>>, vector<2x128xf32>
    %19 = vector.extract_strided_slice %14 {offsets = [0, 0], sizes = [2, 64], strides = [1, 1]} : vector<2x128xf32> to vector<2x64xf32>
    %cst_15 = arith.constant dense<0.000000e+00> : vector<2x64xf32>
    %20 = tpu.matmul %9, %0, %cst_15 {dimension_numbers = #tpu.dot_dimension_numbers<[1], [0], [0], [1], [0, 0, 1, 1], [], []>} : vector<2x16xf32>, vector<16x64xf32>, vector<2x64xf32> -> vector<2x64xf32>
    %21 = arith.addf %19, %20 : vector<2x64xf32>
    %22 = vector.extract_strided_slice %18 {offsets = [0, 64], sizes = [2, 64], strides = [1, 1]} : vector<2x128xf32> to vector<2x64xf32>
    %cst_16 = arith.constant dense<0.000000e+00> : vector<2x64xf32>
    %23 = tpu.matmul %9, %1, %cst_16 {dimension_numbers = #tpu.dot_dimension_numbers<[1], [0], [0], [1], [0, 0, 1, 1], [], []>} : vector<2x16xf32>, vector<16x64xf32>, vector<2x64xf32> -> vector<2x64xf32>
    %24 = arith.addf %22, %23 : vector<2x64xf32>
    %25 = vector.extract_strided_slice %21 {offsets = [0, 0], sizes = [2, 16], strides = [1, 1]} : vector<2x64xf32> to vector<2x16xf32>
    %26 = arith.negf %25 : vector<2x16xf32>
    %27 = math.exp %26 : vector<2x16xf32>
    %cst_17 = arith.constant 1.000000e+00 : f32
    %28 = vector.broadcast %cst_17 : f32 to vector<2x16xf32>
    %29 = arith.addf %28, %27 : vector<2x16xf32>
    %30 = arith.divf %28, %29 : vector<2x16xf32>
    %31 = vector.extract_strided_slice %21 {offsets = [0, 16], sizes = [2, 16], strides = [1, 1]} : vector<2x64xf32> to vector<2x16xf32>
    %32 = arith.negf %31 : vector<2x16xf32>
    %33 = math.exp %32 : vector<2x16xf32>
    %cst_18 = arith.constant 1.000000e+00 : f32
    %34 = vector.broadcast %cst_18 : f32 to vector<2x16xf32>
    %35 = arith.addf %34, %33 : vector<2x16xf32>
    %36 = arith.divf %34, %35 : vector<2x16xf32>
    %37 = vector.extract_strided_slice %21 {offsets = [0, 32], sizes = [2, 16], strides = [1, 1]} : vector<2x64xf32> to vector<2x16xf32>
    %38 = math.tanh %37 : vector<2x16xf32>
    %39 = vector.extract_strided_slice %21 {offsets = [0, 48], sizes = [2, 16], strides = [1, 1]} : vector<2x64xf32> to vector<2x16xf32>
    %40 = arith.negf %39 : vector<2x16xf32>
    %41 = math.exp %40 : vector<2x16xf32>
    %cst_19 = arith.constant 1.000000e+00 : f32
    %42 = vector.broadcast %cst_19 : f32 to vector<2x16xf32>
    %43 = arith.addf %42, %41 : vector<2x16xf32>
    %44 = arith.divf %42, %43 : vector<2x16xf32>
    %45 = arith.mulf %36, %9 : vector<2x16xf32>
    %46 = arith.mulf %30, %38 : vector<2x16xf32>
    %47 = arith.addf %45, %46 : vector<2x16xf32>
    %48 = math.tanh %47 : vector<2x16xf32>
    %49 = arith.mulf %44, %48 : vector<2x16xf32>
    %50 = vector.extract_strided_slice %24 {offsets = [0, 0], sizes = [2, 16], strides = [1, 1]} : vector<2x64xf32> to vector<2x16xf32>
    %51 = arith.negf %50 : vector<2x16xf32>
    %52 = math.exp %51 : vector<2x16xf32>
    %cst_20 = arith.constant 1.000000e+00 : f32
    %53 = vector.broadcast %cst_20 : f32 to vector<2x16xf32>
    %54 = arith.addf %53, %52 : vector<2x16xf32>
    %55 = arith.divf %53, %54 : vector<2x16xf32>
    %56 = vector.extract_strided_slice %24 {offsets = [0, 16], sizes = [2, 16], strides = [1, 1]} : vector<2x64xf32> to vector<2x16xf32>
    %57 = arith.negf %56 : vector<2x16xf32>
    %58 = math.exp %57 : vector<2x16xf32>
    %cst_21 = arith.constant 1.000000e+00 : f32
    %59 = vector.broadcast %cst_21 : f32 to vector<2x16xf32>
    %60 = arith.addf %59, %58 : vector<2x16xf32>
    %61 = arith.divf %59, %60 : vector<2x16xf32>
    %62 = vector.extract_strided_slice %24 {offsets = [0, 32], sizes = [2, 16], strides = [1, 1]} : vector<2x64xf32> to vector<2x16xf32>
    %63 = math.tanh %62 : vector<2x16xf32>
    %64 = vector.extract_strided_slice %24 {offsets = [0, 48], sizes = [2, 16], strides = [1, 1]} : vector<2x64xf32> to vector<2x16xf32>
    %65 = arith.negf %64 : vector<2x16xf32>
    %66 = math.exp %65 : vector<2x16xf32>
    %cst_22 = arith.constant 1.000000e+00 : f32
    %67 = vector.broadcast %cst_22 : f32 to vector<2x16xf32>
    %68 = arith.addf %67, %66 : vector<2x16xf32>
    %69 = arith.divf %67, %68 : vector<2x16xf32>
    %70 = arith.mulf %61, %9 : vector<2x16xf32>
    %71 = arith.mulf %55, %63 : vector<2x16xf32>
    %72 = arith.addf %70, %71 : vector<2x16xf32>
    %73 = math.tanh %72 : vector<2x16xf32>
    %74 = arith.mulf %69, %73 : vector<2x16xf32>
    %75 = arith.index_cast %c0_i32 : i32 to index
    %c0_23 = arith.constant 0 : index
    %c0_24 = arith.constant 0 : index
    %76 = vector.load %arg5[%75, %c0_23, %c0_24] : memref<8x2x16xf32, #tpu.memory_space<vmem>>, vector<1x2x16xf32>
    %77 = vector.shape_cast %76 : vector<1x2x16xf32> to vector<2x16xf32>
    %78 = vector.shape_cast %49 : vector<2x16xf32> to vector<1x2x16xf32>
    tpu.vector_store %arg5[%75, %c0_23, %c0_24], %78 {strides = array<i32>} : memref<8x2x16xf32, #tpu.memory_space<vmem>>, vector<1x2x16xf32>,
    %79 = arith.index_cast %10 : i32 to index
    %c0_25 = arith.constant 0 : index
    %c0_26 = arith.constant 0 : index
    %80 = vector.load %arg6[%79, %c0_25, %c0_26] : memref<8x2x16xf32, #tpu.memory_space<vmem>>, vector<1x2x16xf32>
    %81 = vector.shape_cast %80 : vector<1x2x16xf32> to vector<2x16xf32>
    %82 = vector.shape_cast %74 : vector<2x16xf32> to vector<1x2x16xf32>
    tpu.vector_store %arg6[%79, %c0_25, %c0_26], %82 {strides = array<i32>} : memref<8x2x16xf32, #tpu.memory_space<vmem>>, vector<1x2x16xf32>,
    %c1_i32 = arith.constant 1 : i32
    %c7_i32_27 = arith.constant 7 : i32
    %83 = arith.subi %c7_i32_27, %c1_i32 : i32
    %c2_i32_28 = arith.constant 2 : i32
    %84 = arith.muli %c1_i32, %c2_i32_28 : i32
    %85 = tpu.assume_multiple %84, 2 : i32
    %86 = arith.index_cast %85 : i32 to index
    %c0_29 = arith.constant 0 : index
    %87 = vector.load %arg11[%86, %c0_29] : memref<16x128xf32, #tpu.memory_space<vmem>>, vector<2x128xf32>
    %c2_i32_30 = arith.constant 2 : i32
    %88 = arith.muli %83, %c2_i32_30 : i32
    %89 = tpu.assume_multiple %88, 2 : i32
    %90 = arith.index_cast %89 : i32 to index
    %c0_31 = arith.constant 0 : index
    %91 = vector.load %arg11[%90, %c0_31] : memref<16x128xf32, #tpu.memory_space<vmem>>, vector<2x128xf32>
    %92 = vector.extract_strided_slice %87 {offsets = [0, 0], sizes = [2, 64], strides = [1, 1]} : vector<2x128xf32> to vector<2x64xf32>
    %cst_32 = arith.constant dense<0.000000e+00> : vector<2x64xf32>
    %93 = tpu.matmul %49, %0, %cst_32 {dimension_numbers = #tpu.dot_dimension_numbers<[1], [0], [0], [1], [0, 0, 1, 1], [], []>} : vector<2x16xf32>, vector<16x64xf32>, vector<2x64xf32> -> vector<2x64xf32>
    %94 = arith.addf %92, %93 : vector<2x64xf32>
    %95 = vector.extract_strided_slice %91 {offsets = [0, 64], sizes = [2, 64], strides = [1, 1]} : vector<2x128xf32> to vector<2x64xf32>
    %cst_33 = arith.constant dense<0.000000e+00> : vector<2x64xf32>
    %96 = tpu.matmul %74, %1, %cst_33 {dimension_numbers = #tpu.dot_dimension_numbers<[1], [0], [0], [1], [0, 0, 1, 1], [], []>} : vector<2x16xf32>, vector<16x64xf32>, vector<2x64xf32> -> vector<2x64xf32>
    %97 = arith.addf %95, %96 : vector<2x64xf32>
    %98 = vector.extract_strided_slice %94 {offsets = [0, 0], sizes = [2, 16], strides = [1, 1]} : vector<2x64xf32> to vector<2x16xf32>
    %99 = arith.negf %98 : vector<2x16xf32>
    %100 = math.exp %99 : vector<2x16xf32>
    %cst_34 = arith.constant 1.000000e+00 : f32
    %101 = vector.broadcast %cst_34 : f32 to vector<2x16xf32>
    %102 = arith.addf %101, %100 : vector<2x16xf32>
    %103 = arith.divf %101, %102 : vector<2x16xf32>
    %104 = vector.extract_strided_slice %94 {offsets = [0, 16], sizes = [2, 16], strides = [1, 1]} : vector<2x64xf32> to vector<2x16xf32>
    %105 = arith.negf %104 : vector<2x16xf32>
    %106 = math.exp %105 : vector<2x16xf32>
    %cst_35 = arith.constant 1.000000e+00 : f32
    %107 = vector.broadcast %cst_35 : f32 to vector<2x16xf32>
    %108 = arith.addf %107, %106 : vector<2x16xf32>
    %109 = arith.divf %107, %108 : vector<2x16xf32>
    %110 = vector.extract_strided_slice %94 {offsets = [0, 32], sizes = [2, 16], strides = [1, 1]} : vector<2x64xf32> to vector<2x16xf32>
    %111 = math.tanh %110 : vector<2x16xf32>
    %112 = vector.extract_strided_slice %94 {offsets = [0, 48], sizes = [2, 16], strides = [1, 1]} : vector<2x64xf32> to vector<2x16xf32>
    %113 = arith.negf %112 : vector<2x16xf32>
    %114 = math.exp %113 : vector<2x16xf32>
    %cst_36 = arith.constant 1.000000e+00 : f32
    %115 = vector.broadcast %cst_36 : f32 to vector<2x16xf32>
    %116 = arith.addf %115, %114 : vector<2x16xf32>
    %117 = arith.divf %115, %116 : vector<2x16xf32>
    %118 = arith.mulf %109, %47 : vector<2x16xf32>
    %119 = arith.mulf %103, %111 : vector<2x16xf32>
    %120 = arith.addf %118, %119 : vector<2x16xf32>
    %121 = math.tanh %120 : vector<2x16xf32>
    %122 = arith.mulf %117, %121 : vector<2x16xf32>
    %123 = vector.extract_strided_slice %97 {offsets = [0, 0], sizes = [2, 16], strides = [1, 1]} : vector<2x64xf32> to vector<2x16xf32>
    %124 = arith.negf %123 : vector<2x16xf32>
    %125 = math.exp %124 : vector<2x16xf32>
    %cst_37 = arith.constant 1.000000e+00 : f32
    %126 = vector.broadcast %cst_37 : f32 to vector<2x16xf32>
    %127 = arith.addf %126, %125 : vector<2x16xf32>
    %128 = arith.divf %126, %127 : vector<2x16xf32>
    %129 = vector.extract_strided_slice %97 {offsets = [0, 16], sizes = [2, 16], strides = [1, 1]} : vector<2x64xf32> to vector<2x16xf32>
    %130 = arith.negf %129 : vector<2x16xf32>
    %131 = math.exp %130 : vector<2x16xf32>
    %cst_38 = arith.constant 1.000000e+00 : f32
    %132 = vector.broadcast %cst_38 : f32 to vector<2x16xf32>
    %133 = arith.addf %132, %131 : vector<2x16xf32>
    %134 = arith.divf %132, %133 : vector<2x16xf32>
    %135 = vector.extract_strided_slice %97 {offsets = [0, 32], sizes = [2, 16], strides = [1, 1]} : vector<2x64xf32> to vector<2x16xf32>
    %136 = math.tanh %135 : vector<2x16xf32>
    %137 = vector.extract_strided_slice %97 {offsets = [0, 48], sizes = [2, 16], strides = [1, 1]} : vector<2x64xf32> to vector<2x16xf32>
    %138 = arith.negf %137 : vector<2x16xf32>
    %139 = math.exp %138 : vector<2x16xf32>
    %cst_39 = arith.constant 1.000000e+00 : f32
    %140 = vector.broadcast %cst_39 : f32 to vector<2x16xf32>
    %141 = arith.addf %140, %139 : vector<2x16xf32>
    %142 = arith.divf %140, %141 : vector<2x16xf32>
    %143 = arith.mulf %134, %72 : vector<2x16xf32>
    %144 = arith.mulf %128, %136 : vector<2x16xf32>
    %145 = arith.addf %143, %144 : vector<2x16xf32>
    %146 = math.tanh %145 : vector<2x16xf32>
    %147 = arith.mulf %142, %146 : vector<2x16xf32>
    %148 = arith.index_cast %c1_i32 : i32 to index
    %c0_40 = arith.constant 0 : index
    %c0_41 = arith.constant 0 : index
    %149 = vector.load %arg5[%148, %c0_40, %c0_41] : memref<8x2x16xf32, #tpu.memory_space<vmem>>, vector<1x2x16xf32>
    %150 = vector.shape_cast %149 : vector<1x2x16xf32> to vector<2x16xf32>
    %151 = vector.shape_cast %122 : vector<2x16xf32> to vector<1x2x16xf32>
    tpu.vector_store %arg5[%148, %c0_40, %c0_41], %151 {strides = array<i32>} : memref<8x2x16xf32, #tpu.memory_space<vmem>>, vector<1x2x16xf32>,
    %152 = arith.index_cast %83 : i32 to index
    %c0_42 = arith.constant 0 : index
    %c0_43 = arith.constant 0 : index
    %153 = vector.load %arg6[%152, %c0_42, %c0_43] : memref<8x2x16xf32, #tpu.memory_space<vmem>>, vector<1x2x16xf32>
    %154 = vector.shape_cast %153 : vector<1x2x16xf32> to vector<2x16xf32>
    %155 = vector.shape_cast %147 : vector<2x16xf32> to vector<1x2x16xf32>
    tpu.vector_store %arg6[%152, %c0_42, %c0_43], %155 {strides = array<i32>} : memref<8x2x16xf32, #tpu.memory_space<vmem>>, vector<1x2x16xf32>,
    %c2_i32_44 = arith.constant 2 : i32
    %c7_i32_45 = arith.constant 7 : i32
    %156 = arith.subi %c7_i32_45, %c2_i32_44 : i32
    %c2_i32_46 = arith.constant 2 : i32
    %157 = arith.muli %c2_i32_44, %c2_i32_46 : i32
    %158 = tpu.assume_multiple %157, 2 : i32
    %159 = arith.index_cast %158 : i32 to index
    %c0_47 = arith.constant 0 : index
    %160 = vector.load %arg11[%159, %c0_47] : memref<16x128xf32, #tpu.memory_space<vmem>>, vector<2x128xf32>
    %c2_i32_48 = arith.constant 2 : i32
    %161 = arith.muli %156, %c2_i32_48 : i32
    %162 = tpu.assume_multiple %161, 2 : i32
    %163 = arith.index_cast %162 : i32 to index
    %c0_49 = arith.constant 0 : index
    %164 = vector.load %arg11[%163, %c0_49] : memref<16x128xf32, #tpu.memory_space<vmem>>, vector<2x128xf32>
    %165 = vector.extract_strided_slice %160 {offsets = [0, 0], sizes = [2, 64], strides = [1, 1]} : vector<2x128xf32> to vector<2x64xf32>
    %cst_50 = arith.constant dense<0.000000e+00> : vector<2x64xf32>
    %166 = tpu.matmul %122, %0, %cst_50 {dimension_numbers = #tpu.dot_dimension_numbers<[1], [0], [0], [1], [0, 0, 1, 1], [], []>} : vector<2x16xf32>, vector<16x64xf32>, vector<2x64xf32> -> vector<2x64xf32>
    %167 = arith.addf %165, %166 : vector<2x64xf32>
    %168 = vector.extract_strided_slice %164 {offsets = [0, 64], sizes = [2, 64], strides = [1, 1]} : vector<2x128xf32> to vector<2x64xf32>
    %cst_51 = arith.constant dense<0.000000e+00> : vector<2x64xf32>
    %169 = tpu.matmul %147, %1, %cst_51 {dimension_numbers = #tpu.dot_dimension_numbers<[1], [0], [0], [1], [0, 0, 1, 1], [], []>} : vector<2x16xf32>, vector<16x64xf32>, vector<2x64xf32> -> vector<2x64xf32>
    %170 = arith.addf %168, %169 : vector<2x64xf32>
    %171 = vector.extract_strided_slice %167 {offsets = [0, 0], sizes = [2, 16], strides = [1, 1]} : vector<2x64xf32> to vector<2x16xf32>
    %172 = arith.negf %171 : vector<2x16xf32>
    %173 = math.exp %172 : vector<2x16xf32>
    %cst_52 = arith.constant 1.000000e+00 : f32
    %174 = vector.broadcast %cst_52 : f32 to vector<2x16xf32>
    %175 = arith.addf %174, %173 : vector<2x16xf32>
    %176 = arith.divf %174, %175 : vector<2x16xf32>
    %177 = vector.extract_strided_slice %167 {offsets = [0, 16], sizes = [2, 16], strides = [1, 1]} : vector<2x64xf32> to vector<2x16xf32>
    %178 = arith.negf %177 : vector<2x16xf32>
    %179 = math.exp %178 : vector<2x16xf32>
    %cst_53 = arith.constant 1.000000e+00 : f32
    %180 = vector.broadcast %cst_53 : f32 to vector<2x16xf32>
    %181 = arith.addf %180, %179 : vector<2x16xf32>
    %182 = arith.divf %180, %181 : vector<2x16xf32>
    %183 = vector.extract_strided_slice %167 {offsets = [0, 32], sizes = [2, 16], strides = [1, 1]} : vector<2x64xf32> to vector<2x16xf32>
    %184 = math.tanh %183 : vector<2x16xf32>
    %185 = vector.extract_strided_slice %167 {offsets = [0, 48], sizes = [2, 16], strides = [1, 1]} : vector<2x64xf32> to vector<2x16xf32>
    %186 = arith.negf %185 : vector<2x16xf32>
    %187 = math.exp %186 : vector<2x16xf32>
    %cst_54 = arith.constant 1.000000e+00 : f32
    %188 = vector.broadcast %cst_54 : f32 to vector<2x16xf32>
    %189 = arith.addf %188, %187 : vector<2x16xf32>
    %190 = arith.divf %188, %189 : vector<2x16xf32>
    %191 = arith.mulf %182, %120 : vector<2x16xf32>
    %192 = arith.mulf %176, %184 : vector<2x16xf32>
    %193 = arith.addf %191, %192 : vector<2x16xf32>
    %194 = math.tanh %193 : vector<2x16xf32>
    %195 = arith.mulf %190, %194 : vector<2x16xf32>
    %196 = vector.extract_strided_slice %170 {offsets = [0, 0], sizes = [2, 16], strides = [1, 1]} : vector<2x64xf32> to vector<2x16xf32>
    %197 = arith.negf %196 : vector<2x16xf32>
    %198 = math.exp %197 : vector<2x16xf32>
    %cst_55 = arith.constant 1.000000e+00 : f32
    %199 = vector.broadcast %cst_55 : f32 to vector<2x16xf32>
    %200 = arith.addf %199, %198 : vector<2x16xf32>
    %201 = arith.divf %199, %200 : vector<2x16xf32>
    %202 = vector.extract_strided_slice %170 {offsets = [0, 16], sizes = [2, 16], strides = [1, 1]} : vector<2x64xf32> to vector<2x16xf32>
    %203 = arith.negf %202 : vector<2x16xf32>
    %204 = math.exp %203 : vector<2x16xf32>
    %cst_56 = arith.constant 1.000000e+00 : f32
    %205 = vector.broadcast %cst_56 : f32 to vector<2x16xf32>
    %206 = arith.addf %205, %204 : vector<2x16xf32>
    %207 = arith.divf %205, %206 : vector<2x16xf32>
    %208 = vector.extract_strided_slice %170 {offsets = [0, 32], sizes = [2, 16], strides = [1, 1]} : vector<2x64xf32> to vector<2x16xf32>
    %209 = math.tanh %208 : vector<2x16xf32>
    %210 = vector.extract_strided_slice %170 {offsets = [0, 48], sizes = [2, 16], strides = [1, 1]} : vector<2x64xf32> to vector<2x16xf32>
    %211 = arith.negf %210 : vector<2x16xf32>
    %212 = math.exp %211 : vector<2x16xf32>
    %cst_57 = arith.constant 1.000000e+00 : f32
    %213 = vector.broadcast %cst_57 : f32 to vector<2x16xf32>
    %214 = arith.addf %213, %212 : vector<2x16xf32>
    %215 = arith.divf %213, %214 : vector<2x16xf32>
    %216 = arith.mulf %207, %145 : vector<2x16xf32>
    %217 = arith.mulf %201, %209 : vector<2x16xf32>
    %218 = arith.addf %216, %217 : vector<2x16xf32>
    %219 = math.tanh %218 : vector<2x16xf32>
    %220 = arith.mulf %215, %219 : vector<2x16xf32>
    %221 = arith.index_cast %c2_i32_44 : i32 to index
    %c0_58 = arith.constant 0 : index
    %c0_59 = arith.constant 0 : index
    %222 = vector.load %arg5[%221, %c0_58, %c0_59] : memref<8x2x16xf32, #tpu.memory_space<vmem>>, vector<1x2x16xf32>
    %223 = vector.shape_cast %222 : vector<1x2x16xf32> to vector<2x16xf32>
    %224 = vector.shape_cast %195 : vector<2x16xf32> to vector<1x2x16xf32>
    tpu.vector_store %arg5[%221, %c0_58, %c0_59], %224 {strides = array<i32>} : memref<8x2x16xf32, #tpu.memory_space<vmem>>, vector<1x2x16xf32>,
    %225 = arith.index_cast %156 : i32 to index
    %c0_60 = arith.constant 0 : index
    %c0_61 = arith.constant 0 : index
    %226 = vector.load %arg6[%225, %c0_60, %c0_61] : memref<8x2x16xf32, #tpu.memory_space<vmem>>, vector<1x2x16xf32>
    %227 = vector.shape_cast %226 : vector<1x2x16xf32> to vector<2x16xf32>
    %228 = vector.shape_cast %220 : vector<2x16xf32> to vector<1x2x16xf32>
    tpu.vector_store %arg6[%225, %c0_60, %c0_61], %228 {strides = array<i32>} : memref<8x2x16xf32, #tpu.memory_space<vmem>>, vector<1x2x16xf32>,
    %c3_i32 = arith.constant 3 : i32
    %c7_i32_62 = arith.constant 7 : i32
    %229 = arith.subi %c7_i32_62, %c3_i32 : i32
    %c2_i32_63 = arith.constant 2 : i32
    %230 = arith.muli %c3_i32, %c2_i32_63 : i32
    %231 = tpu.assume_multiple %230, 2 : i32
    %232 = arith.index_cast %231 : i32 to index
    %c0_64 = arith.constant 0 : index
    %233 = vector.load %arg11[%232, %c0_64] : memref<16x128xf32, #tpu.memory_space<vmem>>, vector<2x128xf32>
    %c2_i32_65 = arith.constant 2 : i32
    %234 = arith.muli %229, %c2_i32_65 : i32
    %235 = tpu.assume_multiple %234, 2 : i32
    %236 = arith.index_cast %235 : i32 to index
    %c0_66 = arith.constant 0 : index
    %237 = vector.load %arg11[%236, %c0_66] : memref<16x128xf32, #tpu.memory_space<vmem>>, vector<2x128xf32>
    %238 = vector.extract_strided_slice %233 {offsets = [0, 0], sizes = [2, 64], strides = [1, 1]} : vector<2x128xf32> to vector<2x64xf32>
    %cst_67 = arith.constant dense<0.000000e+00> : vector<2x64xf32>
    %239 = tpu.matmul %195, %0, %cst_67 {dimension_numbers = #tpu.dot_dimension_numbers<[1], [0], [0], [1], [0, 0, 1, 1], [], []>} : vector<2x16xf32>, vector<16x64xf32>, vector<2x64xf32> -> vector<2x64xf32>
    %240 = arith.addf %238, %239 : vector<2x64xf32>
    %241 = vector.extract_strided_slice %237 {offsets = [0, 64], sizes = [2, 64], strides = [1, 1]} : vector<2x128xf32> to vector<2x64xf32>
    %cst_68 = arith.constant dense<0.000000e+00> : vector<2x64xf32>
    %242 = tpu.matmul %220, %1, %cst_68 {dimension_numbers = #tpu.dot_dimension_numbers<[1], [0], [0], [1], [0, 0, 1, 1], [], []>} : vector<2x16xf32>, vector<16x64xf32>, vector<2x64xf32> -> vector<2x64xf32>
    %243 = arith.addf %241, %242 : vector<2x64xf32>
    %244 = vector.extract_strided_slice %240 {offsets = [0, 0], sizes = [2, 16], strides = [1, 1]} : vector<2x64xf32> to vector<2x16xf32>
    %245 = arith.negf %244 : vector<2x16xf32>
    %246 = math.exp %245 : vector<2x16xf32>
    %cst_69 = arith.constant 1.000000e+00 : f32
    %247 = vector.broadcast %cst_69 : f32 to vector<2x16xf32>
    %248 = arith.addf %247, %246 : vector<2x16xf32>
    %249 = arith.divf %247, %248 : vector<2x16xf32>
    %250 = vector.extract_strided_slice %240 {offsets = [0, 16], sizes = [2, 16], strides = [1, 1]} : vector<2x64xf32> to vector<2x16xf32>
    %251 = arith.negf %250 : vector<2x16xf32>
    %252 = math.exp %251 : vector<2x16xf32>
    %cst_70 = arith.constant 1.000000e+00 : f32
    %253 = vector.broadcast %cst_70 : f32 to vector<2x16xf32>
    %254 = arith.addf %253, %252 : vector<2x16xf32>
    %255 = arith.divf %253, %254 : vector<2x16xf32>
    %256 = vector.extract_strided_slice %240 {offsets = [0, 32], sizes = [2, 16], strides = [1, 1]} : vector<2x64xf32> to vector<2x16xf32>
    %257 = math.tanh %256 : vector<2x16xf32>
    %258 = vector.extract_strided_slice %240 {offsets = [0, 48], sizes = [2, 16], strides = [1, 1]} : vector<2x64xf32> to vector<2x16xf32>
    %259 = arith.negf %258 : vector<2x16xf32>
    %260 = math.exp %259 : vector<2x16xf32>
    %cst_71 = arith.constant 1.000000e+00 : f32
    %261 = vector.broadcast %cst_71 : f32 to vector<2x16xf32>
    %262 = arith.addf %261, %260 : vector<2x16xf32>
    %263 = arith.divf %261, %262 : vector<2x16xf32>
    %264 = arith.mulf %255, %193 : vector<2x16xf32>
    %265 = arith.mulf %249, %257 : vector<2x16xf32>
    %266 = arith.addf %264, %265 : vector<2x16xf32>
    %267 = math.tanh %266 : vector<2x16xf32>
    %268 = arith.mulf %263, %267 : vector<2x16xf32>
    %269 = vector.extract_strided_slice %243 {offsets = [0, 0], sizes = [2, 16], strides = [1, 1]} : vector<2x64xf32> to vector<2x16xf32>
    %270 = arith.negf %269 : vector<2x16xf32>
    %271 = math.exp %270 : vector<2x16xf32>
    %cst_72 = arith.constant 1.000000e+00 : f32
    %272 = vector.broadcast %cst_72 : f32 to vector<2x16xf32>
    %273 = arith.addf %272, %271 : vector<2x16xf32>
    %274 = arith.divf %272, %273 : vector<2x16xf32>
    %275 = vector.extract_strided_slice %243 {offsets = [0, 16], sizes = [2, 16], strides = [1, 1]} : vector<2x64xf32> to vector<2x16xf32>
    %276 = arith.negf %275 : vector<2x16xf32>
    %277 = math.exp %276 : vector<2x16xf32>
    %cst_73 = arith.constant 1.000000e+00 : f32
    %278 = vector.broadcast %cst_73 : f32 to vector<2x16xf32>
    %279 = arith.addf %278, %277 : vector<2x16xf32>
    %280 = arith.divf %278, %279 : vector<2x16xf32>
    %281 = vector.extract_strided_slice %243 {offsets = [0, 32], sizes = [2, 16], strides = [1, 1]} : vector<2x64xf32> to vector<2x16xf32>
    %282 = math.tanh %281 : vector<2x16xf32>
    %283 = vector.extract_strided_slice %243 {offsets = [0, 48], sizes = [2, 16], strides = [1, 1]} : vector<2x64xf32> to vector<2x16xf32>
    %284 = arith.negf %283 : vector<2x16xf32>
    %285 = math.exp %284 : vector<2x16xf32>
    %cst_74 = arith.constant 1.000000e+00 : f32
    %286 = vector.broadcast %cst_74 : f32 to vector<2x16xf32>
    %287 = arith.addf %286, %285 : vector<2x16xf32>
    %288 = arith.divf %286, %287 : vector<2x16xf32>
    %289 = arith.mulf %280, %218 : vector<2x16xf32>
    %290 = arith.mulf %274, %282 : vector<2x16xf32>
    %291 = arith.addf %289, %290 : vector<2x16xf32>
    %292 = math.tanh %291 : vector<2x16xf32>
    %293 = arith.mulf %288, %292 : vector<2x16xf32>
    %294 = arith.index_cast %c3_i32 : i32 to index
    %c0_75 = arith.constant 0 : index
    %c0_76 = arith.constant 0 : index
    %295 = vector.load %arg5[%294, %c0_75, %c0_76] : memref<8x2x16xf32, #tpu.memory_space<vmem>>, vector<1x2x16xf32>
    %296 = vector.shape_cast %295 : vector<1x2x16xf32> to vector<2x16xf32>
    %297 = vector.shape_cast %268 : vector<2x16xf32> to vector<1x2x16xf32>
    tpu.vector_store %arg5[%294, %c0_75, %c0_76], %297 {strides = array<i32>} : memref<8x2x16xf32, #tpu.memory_space<vmem>>, vector<1x2x16xf32>,
    %298 = arith.index_cast %229 : i32 to index
    %c0_77 = arith.constant 0 : index
    %c0_78 = arith.constant 0 : index
    %299 = vector.load %arg6[%298, %c0_77, %c0_78] : memref<8x2x16xf32, #tpu.memory_space<vmem>>, vector<1x2x16xf32>
    %300 = vector.shape_cast %299 : vector<1x2x16xf32> to vector<2x16xf32>
    %301 = vector.shape_cast %293 : vector<2x16xf32> to vector<1x2x16xf32>
    tpu.vector_store %arg6[%298, %c0_77, %c0_78], %301 {strides = array<i32>} : memref<8x2x16xf32, #tpu.memory_space<vmem>>, vector<1x2x16xf32>,
    %c4_i32 = arith.constant 4 : i32
    %c7_i32_79 = arith.constant 7 : i32
    %302 = arith.subi %c7_i32_79, %c4_i32 : i32
    %c2_i32_80 = arith.constant 2 : i32
    %303 = arith.muli %c4_i32, %c2_i32_80 : i32
    %304 = tpu.assume_multiple %303, 2 : i32
    %305 = arith.index_cast %304 : i32 to index
    %c0_81 = arith.constant 0 : index
    %306 = vector.load %arg11[%305, %c0_81] : memref<16x128xf32, #tpu.memory_space<vmem>>, vector<2x128xf32>
    %c2_i32_82 = arith.constant 2 : i32
    %307 = arith.muli %302, %c2_i32_82 : i32
    %308 = tpu.assume_multiple %307, 2 : i32
    %309 = arith.index_cast %308 : i32 to index
    %c0_83 = arith.constant 0 : index
    %310 = vector.load %arg11[%309, %c0_83] : memref<16x128xf32, #tpu.memory_space<vmem>>, vector<2x128xf32>
    %311 = vector.extract_strided_slice %306 {offsets = [0, 0], sizes = [2, 64], strides = [1, 1]} : vector<2x128xf32> to vector<2x64xf32>
    %cst_84 = arith.constant dense<0.000000e+00> : vector<2x64xf32>
    %312 = tpu.matmul %268, %0, %cst_84 {dimension_numbers = #tpu.dot_dimension_numbers<[1], [0], [0], [1], [0, 0, 1, 1], [], []>} : vector<2x16xf32>, vector<16x64xf32>, vector<2x64xf32> -> vector<2x64xf32>
    %313 = arith.addf %311, %312 : vector<2x64xf32>
    %314 = vector.extract_strided_slice %310 {offsets = [0, 64], sizes = [2, 64], strides = [1, 1]} : vector<2x128xf32> to vector<2x64xf32>
    %cst_85 = arith.constant dense<0.000000e+00> : vector<2x64xf32>
    %315 = tpu.matmul %293, %1, %cst_85 {dimension_numbers = #tpu.dot_dimension_numbers<[1], [0], [0], [1], [0, 0, 1, 1], [], []>} : vector<2x16xf32>, vector<16x64xf32>, vector<2x64xf32> -> vector<2x64xf32>
    %316 = arith.addf %314, %315 : vector<2x64xf32>
    %317 = vector.extract_strided_slice %313 {offsets = [0, 0], sizes = [2, 16], strides = [1, 1]} : vector<2x64xf32> to vector<2x16xf32>
    %318 = arith.negf %317 : vector<2x16xf32>
    %319 = math.exp %318 : vector<2x16xf32>
    %cst_86 = arith.constant 1.000000e+00 : f32
    %320 = vector.broadcast %cst_86 : f32 to vector<2x16xf32>
    %321 = arith.addf %320, %319 : vector<2x16xf32>
    %322 = arith.divf %320, %321 : vector<2x16xf32>
    %323 = vector.extract_strided_slice %313 {offsets = [0, 16], sizes = [2, 16], strides = [1, 1]} : vector<2x64xf32> to vector<2x16xf32>
    %324 = arith.negf %323 : vector<2x16xf32>
    %325 = math.exp %324 : vector<2x16xf32>
    %cst_87 = arith.constant 1.000000e+00 : f32
    %326 = vector.broadcast %cst_87 : f32 to vector<2x16xf32>
    %327 = arith.addf %326, %325 : vector<2x16xf32>
    %328 = arith.divf %326, %327 : vector<2x16xf32>
    %329 = vector.extract_strided_slice %313 {offsets = [0, 32], sizes = [2, 16], strides = [1, 1]} : vector<2x64xf32> to vector<2x16xf32>
    %330 = math.tanh %329 : vector<2x16xf32>
    %331 = vector.extract_strided_slice %313 {offsets = [0, 48], sizes = [2, 16], strides = [1, 1]} : vector<2x64xf32> to vector<2x16xf32>
    %332 = arith.negf %331 : vector<2x16xf32>
    %333 = math.exp %332 : vector<2x16xf32>
    %cst_88 = arith.constant 1.000000e+00 : f32
    %334 = vector.broadcast %cst_88 : f32 to vector<2x16xf32>
    %335 = arith.addf %334, %333 : vector<2x16xf32>
    %336 = arith.divf %334, %335 : vector<2x16xf32>
    %337 = arith.mulf %328, %266 : vector<2x16xf32>
    %338 = arith.mulf %322, %330 : vector<2x16xf32>
    %339 = arith.addf %337, %338 : vector<2x16xf32>
    %340 = math.tanh %339 : vector<2x16xf32>
    %341 = arith.mulf %336, %340 : vector<2x16xf32>
    %342 = vector.extract_strided_slice %316 {offsets = [0, 0], sizes = [2, 16], strides = [1, 1]} : vector<2x64xf32> to vector<2x16xf32>
    %343 = arith.negf %342 : vector<2x16xf32>
    %344 = math.exp %343 : vector<2x16xf32>
    %cst_89 = arith.constant 1.000000e+00 : f32
    %345 = vector.broadcast %cst_89 : f32 to vector<2x16xf32>
    %346 = arith.addf %345, %344 : vector<2x16xf32>
    %347 = arith.divf %345, %346 : vector<2x16xf32>
    %348 = vector.extract_strided_slice %316 {offsets = [0, 16], sizes = [2, 16], strides = [1, 1]} : vector<2x64xf32> to vector<2x16xf32>
    %349 = arith.negf %348 : vector<2x16xf32>
    %350 = math.exp %349 : vector<2x16xf32>
    %cst_90 = arith.constant 1.000000e+00 : f32
    %351 = vector.broadcast %cst_90 : f32 to vector<2x16xf32>
    %352 = arith.addf %351, %350 : vector<2x16xf32>
    %353 = arith.divf %351, %352 : vector<2x16xf32>
    %354 = vector.extract_strided_slice %316 {offsets = [0, 32], sizes = [2, 16], strides = [1, 1]} : vector<2x64xf32> to vector<2x16xf32>
    %355 = math.tanh %354 : vector<2x16xf32>
    %356 = vector.extract_strided_slice %316 {offsets = [0, 48], sizes = [2, 16], strides = [1, 1]} : vector<2x64xf32> to vector<2x16xf32>
    %357 = arith.negf %356 : vector<2x16xf32>
    %358 = math.exp %357 : vector<2x16xf32>
    %cst_91 = arith.constant 1.000000e+00 : f32
    %359 = vector.broadcast %cst_91 : f32 to vector<2x16xf32>
    %360 = arith.addf %359, %358 : vector<2x16xf32>
    %361 = arith.divf %359, %360 : vector<2x16xf32>
    %362 = arith.mulf %353, %291 : vector<2x16xf32>
    %363 = arith.mulf %347, %355 : vector<2x16xf32>
    %364 = arith.addf %362, %363 : vector<2x16xf32>
    %365 = math.tanh %364 : vector<2x16xf32>
    %366 = arith.mulf %361, %365 : vector<2x16xf32>
    %367 = arith.index_cast %c4_i32 : i32 to index
    %c0_92 = arith.constant 0 : index
    %c0_93 = arith.constant 0 : index
    %368 = vector.load %arg5[%367, %c0_92, %c0_93] : memref<8x2x16xf32, #tpu.memory_space<vmem>>, vector<1x2x16xf32>
    %369 = vector.shape_cast %368 : vector<1x2x16xf32> to vector<2x16xf32>
    %370 = vector.shape_cast %341 : vector<2x16xf32> to vector<1x2x16xf32>
    tpu.vector_store %arg5[%367, %c0_92, %c0_93], %370 {strides = array<i32>} : memref<8x2x16xf32, #tpu.memory_space<vmem>>, vector<1x2x16xf32>,
    %371 = arith.index_cast %302 : i32 to index
    %c0_94 = arith.constant 0 : index
    %c0_95 = arith.constant 0 : index
    %372 = vector.load %arg6[%371, %c0_94, %c0_95] : memref<8x2x16xf32, #tpu.memory_space<vmem>>, vector<1x2x16xf32>
    %373 = vector.shape_cast %372 : vector<1x2x16xf32> to vector<2x16xf32>
    %374 = vector.shape_cast %366 : vector<2x16xf32> to vector<1x2x16xf32>
    tpu.vector_store %arg6[%371, %c0_94, %c0_95], %374 {strides = array<i32>} : memref<8x2x16xf32, #tpu.memory_space<vmem>>, vector<1x2x16xf32>,
    %c5_i32 = arith.constant 5 : i32
    %c7_i32_96 = arith.constant 7 : i32
    %375 = arith.subi %c7_i32_96, %c5_i32 : i32
    %c2_i32_97 = arith.constant 2 : i32
    %376 = arith.muli %c5_i32, %c2_i32_97 : i32
    %377 = tpu.assume_multiple %376, 2 : i32
    %378 = arith.index_cast %377 : i32 to index
    %c0_98 = arith.constant 0 : index
    %379 = vector.load %arg11[%378, %c0_98] : memref<16x128xf32, #tpu.memory_space<vmem>>, vector<2x128xf32>
    %c2_i32_99 = arith.constant 2 : i32
    %380 = arith.muli %375, %c2_i32_99 : i32
    %381 = tpu.assume_multiple %380, 2 : i32
    %382 = arith.index_cast %381 : i32 to index
    %c0_100 = arith.constant 0 : index
    %383 = vector.load %arg11[%382, %c0_100] : memref<16x128xf32, #tpu.memory_space<vmem>>, vector<2x128xf32>
    %384 = vector.extract_strided_slice %379 {offsets = [0, 0], sizes = [2, 64], strides = [1, 1]} : vector<2x128xf32> to vector<2x64xf32>
    %cst_101 = arith.constant dense<0.000000e+00> : vector<2x64xf32>
    %385 = tpu.matmul %341, %0, %cst_101 {dimension_numbers = #tpu.dot_dimension_numbers<[1], [0], [0], [1], [0, 0, 1, 1], [], []>} : vector<2x16xf32>, vector<16x64xf32>, vector<2x64xf32> -> vector<2x64xf32>
    %386 = arith.addf %384, %385 : vector<2x64xf32>
    %387 = vector.extract_strided_slice %383 {offsets = [0, 64], sizes = [2, 64], strides = [1, 1]} : vector<2x128xf32> to vector<2x64xf32>
    %cst_102 = arith.constant dense<0.000000e+00> : vector<2x64xf32>
    %388 = tpu.matmul %366, %1, %cst_102 {dimension_numbers = #tpu.dot_dimension_numbers<[1], [0], [0], [1], [0, 0, 1, 1], [], []>} : vector<2x16xf32>, vector<16x64xf32>, vector<2x64xf32> -> vector<2x64xf32>
    %389 = arith.addf %387, %388 : vector<2x64xf32>
    %390 = vector.extract_strided_slice %386 {offsets = [0, 0], sizes = [2, 16], strides = [1, 1]} : vector<2x64xf32> to vector<2x16xf32>
    %391 = arith.negf %390 : vector<2x16xf32>
    %392 = math.exp %391 : vector<2x16xf32>
    %cst_103 = arith.constant 1.000000e+00 : f32
    %393 = vector.broadcast %cst_103 : f32 to vector<2x16xf32>
    %394 = arith.addf %393, %392 : vector<2x16xf32>
    %395 = arith.divf %393, %394 : vector<2x16xf32>
    %396 = vector.extract_strided_slice %386 {offsets = [0, 16], sizes = [2, 16], strides = [1, 1]} : vector<2x64xf32> to vector<2x16xf32>
    %397 = arith.negf %396 : vector<2x16xf32>
    %398 = math.exp %397 : vector<2x16xf32>
    %cst_104 = arith.constant 1.000000e+00 : f32
    %399 = vector.broadcast %cst_104 : f32 to vector<2x16xf32>
    %400 = arith.addf %399, %398 : vector<2x16xf32>
    %401 = arith.divf %399, %400 : vector<2x16xf32>
    %402 = vector.extract_strided_slice %386 {offsets = [0, 32], sizes = [2, 16], strides = [1, 1]} : vector<2x64xf32> to vector<2x16xf32>
    %403 = math.tanh %402 : vector<2x16xf32>
    %404 = vector.extract_strided_slice %386 {offsets = [0, 48], sizes = [2, 16], strides = [1, 1]} : vector<2x64xf32> to vector<2x16xf32>
    %405 = arith.negf %404 : vector<2x16xf32>
    %406 = math.exp %405 : vector<2x16xf32>
    %cst_105 = arith.constant 1.000000e+00 : f32
    %407 = vector.broadcast %cst_105 : f32 to vector<2x16xf32>
    %408 = arith.addf %407, %406 : vector<2x16xf32>
    %409 = arith.divf %407, %408 : vector<2x16xf32>
    %410 = arith.mulf %401, %339 : vector<2x16xf32>
    %411 = arith.mulf %395, %403 : vector<2x16xf32>
    %412 = arith.addf %410, %411 : vector<2x16xf32>
    %413 = math.tanh %412 : vector<2x16xf32>
    %414 = arith.mulf %409, %413 : vector<2x16xf32>
    %415 = vector.extract_strided_slice %389 {offsets = [0, 0], sizes = [2, 16], strides = [1, 1]} : vector<2x64xf32> to vector<2x16xf32>
    %416 = arith.negf %415 : vector<2x16xf32>
    %417 = math.exp %416 : vector<2x16xf32>
    %cst_106 = arith.constant 1.000000e+00 : f32
    %418 = vector.broadcast %cst_106 : f32 to vector<2x16xf32>
    %419 = arith.addf %418, %417 : vector<2x16xf32>
    %420 = arith.divf %418, %419 : vector<2x16xf32>
    %421 = vector.extract_strided_slice %389 {offsets = [0, 16], sizes = [2, 16], strides = [1, 1]} : vector<2x64xf32> to vector<2x16xf32>
    %422 = arith.negf %421 : vector<2x16xf32>
    %423 = math.exp %422 : vector<2x16xf32>
    %cst_107 = arith.constant 1.000000e+00 : f32
    %424 = vector.broadcast %cst_107 : f32 to vector<2x16xf32>
    %425 = arith.addf %424, %423 : vector<2x16xf32>
    %426 = arith.divf %424, %425 : vector<2x16xf32>
    %427 = vector.extract_strided_slice %389 {offsets = [0, 32], sizes = [2, 16], strides = [1, 1]} : vector<2x64xf32> to vector<2x16xf32>
    %428 = math.tanh %427 : vector<2x16xf32>
    %429 = vector.extract_strided_slice %389 {offsets = [0, 48], sizes = [2, 16], strides = [1, 1]} : vector<2x64xf32> to vector<2x16xf32>
    %430 = arith.negf %429 : vector<2x16xf32>
    %431 = math.exp %430 : vector<2x16xf32>
    %cst_108 = arith.constant 1.000000e+00 : f32
    %432 = vector.broadcast %cst_108 : f32 to vector<2x16xf32>
    %433 = arith.addf %432, %431 : vector<2x16xf32>
    %434 = arith.divf %432, %433 : vector<2x16xf32>
    %435 = arith.mulf %426, %364 : vector<2x16xf32>
    %436 = arith.mulf %420, %428 : vector<2x16xf32>
    %437 = arith.addf %435, %436 : vector<2x16xf32>
    %438 = math.tanh %437 : vector<2x16xf32>
    %439 = arith.mulf %434, %438 : vector<2x16xf32>
    %440 = arith.index_cast %c5_i32 : i32 to index
    %c0_109 = arith.constant 0 : index
    %c0_110 = arith.constant 0 : index
    %441 = vector.load %arg5[%440, %c0_109, %c0_110] : memref<8x2x16xf32, #tpu.memory_space<vmem>>, vector<1x2x16xf32>
    %442 = vector.shape_cast %441 : vector<1x2x16xf32> to vector<2x16xf32>
    %443 = vector.shape_cast %414 : vector<2x16xf32> to vector<1x2x16xf32>
    tpu.vector_store %arg5[%440, %c0_109, %c0_110], %443 {strides = array<i32>} : memref<8x2x16xf32, #tpu.memory_space<vmem>>, vector<1x2x16xf32>,
    %444 = arith.index_cast %375 : i32 to index
    %c0_111 = arith.constant 0 : index
    %c0_112 = arith.constant 0 : index
    %445 = vector.load %arg6[%444, %c0_111, %c0_112] : memref<8x2x16xf32, #tpu.memory_space<vmem>>, vector<1x2x16xf32>
    %446 = vector.shape_cast %445 : vector<1x2x16xf32> to vector<2x16xf32>
    %447 = vector.shape_cast %439 : vector<2x16xf32> to vector<1x2x16xf32>
    tpu.vector_store %arg6[%444, %c0_111, %c0_112], %447 {strides = array<i32>} : memref<8x2x16xf32, #tpu.memory_space<vmem>>, vector<1x2x16xf32>,
    %c6_i32 = arith.constant 6 : i32
    %c7_i32_113 = arith.constant 7 : i32
    %448 = arith.subi %c7_i32_113, %c6_i32 : i32
    %c2_i32_114 = arith.constant 2 : i32
    %449 = arith.muli %c6_i32, %c2_i32_114 : i32
    %450 = tpu.assume_multiple %449, 2 : i32
    %451 = arith.index_cast %450 : i32 to index
    %c0_115 = arith.constant 0 : index
    %452 = vector.load %arg11[%451, %c0_115] : memref<16x128xf32, #tpu.memory_space<vmem>>, vector<2x128xf32>
    %c2_i32_116 = arith.constant 2 : i32
    %453 = arith.muli %448, %c2_i32_116 : i32
    %454 = tpu.assume_multiple %453, 2 : i32
    %455 = arith.index_cast %454 : i32 to index
    %c0_117 = arith.constant 0 : index
    %456 = vector.load %arg11[%455, %c0_117] : memref<16x128xf32, #tpu.memory_space<vmem>>, vector<2x128xf32>
    %457 = vector.extract_strided_slice %452 {offsets = [0, 0], sizes = [2, 64], strides = [1, 1]} : vector<2x128xf32> to vector<2x64xf32>
    %cst_118 = arith.constant dense<0.000000e+00> : vector<2x64xf32>
    %458 = tpu.matmul %414, %0, %cst_118 {dimension_numbers = #tpu.dot_dimension_numbers<[1], [0], [0], [1], [0, 0, 1, 1], [], []>} : vector<2x16xf32>, vector<16x64xf32>, vector<2x64xf32> -> vector<2x64xf32>
    %459 = arith.addf %457, %458 : vector<2x64xf32>
    %460 = vector.extract_strided_slice %456 {offsets = [0, 64], sizes = [2, 64], strides = [1, 1]} : vector<2x128xf32> to vector<2x64xf32>
    %cst_119 = arith.constant dense<0.000000e+00> : vector<2x64xf32>
    %461 = tpu.matmul %439, %1, %cst_119 {dimension_numbers = #tpu.dot_dimension_numbers<[1], [0], [0], [1], [0, 0, 1, 1], [], []>} : vector<2x16xf32>, vector<16x64xf32>, vector<2x64xf32> -> vector<2x64xf32>
    %462 = arith.addf %460, %461 : vector<2x64xf32>
    %463 = vector.extract_strided_slice %459 {offsets = [0, 0], sizes = [2, 16], strides = [1, 1]} : vector<2x64xf32> to vector<2x16xf32>
    %464 = arith.negf %463 : vector<2x16xf32>
    %465 = math.exp %464 : vector<2x16xf32>
    %cst_120 = arith.constant 1.000000e+00 : f32
    %466 = vector.broadcast %cst_120 : f32 to vector<2x16xf32>
    %467 = arith.addf %466, %465 : vector<2x16xf32>
    %468 = arith.divf %466, %467 : vector<2x16xf32>
    %469 = vector.extract_strided_slice %459 {offsets = [0, 16], sizes = [2, 16], strides = [1, 1]} : vector<2x64xf32> to vector<2x16xf32>
    %470 = arith.negf %469 : vector<2x16xf32>
    %471 = math.exp %470 : vector<2x16xf32>
    %cst_121 = arith.constant 1.000000e+00 : f32
    %472 = vector.broadcast %cst_121 : f32 to vector<2x16xf32>
    %473 = arith.addf %472, %471 : vector<2x16xf32>
    %474 = arith.divf %472, %473 : vector<2x16xf32>
    %475 = vector.extract_strided_slice %459 {offsets = [0, 32], sizes = [2, 16], strides = [1, 1]} : vector<2x64xf32> to vector<2x16xf32>
    %476 = math.tanh %475 : vector<2x16xf32>
    %477 = vector.extract_strided_slice %459 {offsets = [0, 48], sizes = [2, 16], strides = [1, 1]} : vector<2x64xf32> to vector<2x16xf32>
    %478 = arith.negf %477 : vector<2x16xf32>
    %479 = math.exp %478 : vector<2x16xf32>
    %cst_122 = arith.constant 1.000000e+00 : f32
    %480 = vector.broadcast %cst_122 : f32 to vector<2x16xf32>
    %481 = arith.addf %480, %479 : vector<2x16xf32>
    %482 = arith.divf %480, %481 : vector<2x16xf32>
    %483 = arith.mulf %474, %412 : vector<2x16xf32>
    %484 = arith.mulf %468, %476 : vector<2x16xf32>
    %485 = arith.addf %483, %484 : vector<2x16xf32>
    %486 = math.tanh %485 : vector<2x16xf32>
    %487 = arith.mulf %482, %486 : vector<2x16xf32>
    %488 = vector.extract_strided_slice %462 {offsets = [0, 0], sizes = [2, 16], strides = [1, 1]} : vector<2x64xf32> to vector<2x16xf32>
    %489 = arith.negf %488 : vector<2x16xf32>
    %490 = math.exp %489 : vector<2x16xf32>
    %cst_123 = arith.constant 1.000000e+00 : f32
    %491 = vector.broadcast %cst_123 : f32 to vector<2x16xf32>
    %492 = arith.addf %491, %490 : vector<2x16xf32>
    %493 = arith.divf %491, %492 : vector<2x16xf32>
    %494 = vector.extract_strided_slice %462 {offsets = [0, 16], sizes = [2, 16], strides = [1, 1]} : vector<2x64xf32> to vector<2x16xf32>
    %495 = arith.negf %494 : vector<2x16xf32>
    %496 = math.exp %495 : vector<2x16xf32>
    %cst_124 = arith.constant 1.000000e+00 : f32
    %497 = vector.broadcast %cst_124 : f32 to vector<2x16xf32>
    %498 = arith.addf %497, %496 : vector<2x16xf32>
    %499 = arith.divf %497, %498 : vector<2x16xf32>
    %500 = vector.extract_strided_slice %462 {offsets = [0, 32], sizes = [2, 16], strides = [1, 1]} : vector<2x64xf32> to vector<2x16xf32>
    %501 = math.tanh %500 : vector<2x16xf32>
    %502 = vector.extract_strided_slice %462 {offsets = [0, 48], sizes = [2, 16], strides = [1, 1]} : vector<2x64xf32> to vector<2x16xf32>
    %503 = arith.negf %502 : vector<2x16xf32>
    %504 = math.exp %503 : vector<2x16xf32>
    %cst_125 = arith.constant 1.000000e+00 : f32
    %505 = vector.broadcast %cst_125 : f32 to vector<2x16xf32>
    %506 = arith.addf %505, %504 : vector<2x16xf32>
    %507 = arith.divf %505, %506 : vector<2x16xf32>
    %508 = arith.mulf %499, %437 : vector<2x16xf32>
    %509 = arith.mulf %493, %501 : vector<2x16xf32>
    %510 = arith.addf %508, %509 : vector<2x16xf32>
    %511 = math.tanh %510 : vector<2x16xf32>
    %512 = arith.mulf %507, %511 : vector<2x16xf32>
    %513 = arith.index_cast %c6_i32 : i32 to index
    %c0_126 = arith.constant 0 : index
    %c0_127 = arith.constant 0 : index
    %514 = vector.load %arg5[%513, %c0_126, %c0_127] : memref<8x2x16xf32, #tpu.memory_space<vmem>>, vector<1x2x16xf32>
    %515 = vector.shape_cast %514 : vector<1x2x16xf32> to vector<2x16xf32>
    %516 = vector.shape_cast %487 : vector<2x16xf32> to vector<1x2x16xf32>
    tpu.vector_store %arg5[%513, %c0_126, %c0_127], %516 {strides = array<i32>} : memref<8x2x16xf32, #tpu.memory_space<vmem>>, vector<1x2x16xf32>,
    %517 = arith.index_cast %448 : i32 to index
    %c0_128 = arith.constant 0 : index
    %c0_129 = arith.constant 0 : index
    %518 = vector.load %arg6[%517, %c0_128, %c0_129] : memref<8x2x16xf32, #tpu.memory_space<vmem>>, vector<1x2x16xf32>
    %519 = vector.shape_cast %518 : vector<1x2x16xf32> to vector<2x16xf32>
    %520 = vector.shape_cast %512 : vector<2x16xf32> to vector<1x2x16xf32>
    tpu.vector_store %arg6[%517, %c0_128, %c0_129], %520 {strides = array<i32>} : memref<8x2x16xf32, #tpu.memory_space<vmem>>, vector<1x2x16xf32>,
    %c7_i32_130 = arith.constant 7 : i32
    %c7_i32_131 = arith.constant 7 : i32
    %521 = arith.subi %c7_i32_131, %c7_i32_130 : i32
    %c2_i32_132 = arith.constant 2 : i32
    %522 = arith.muli %c7_i32_130, %c2_i32_132 : i32
    %523 = tpu.assume_multiple %522, 2 : i32
    %524 = arith.index_cast %523 : i32 to index
    %c0_133 = arith.constant 0 : index
    %525 = vector.load %arg11[%524, %c0_133] : memref<16x128xf32, #tpu.memory_space<vmem>>, vector<2x128xf32>
    %c2_i32_134 = arith.constant 2 : i32
    %526 = arith.muli %521, %c2_i32_134 : i32
    %527 = tpu.assume_multiple %526, 2 : i32
    %528 = arith.index_cast %527 : i32 to index
    %c0_135 = arith.constant 0 : index
    %529 = vector.load %arg11[%528, %c0_135] : memref<16x128xf32, #tpu.memory_space<vmem>>, vector<2x128xf32>
    %530 = vector.extract_strided_slice %525 {offsets = [0, 0], sizes = [2, 64], strides = [1, 1]} : vector<2x128xf32> to vector<2x64xf32>
    %cst_136 = arith.constant dense<0.000000e+00> : vector<2x64xf32>
    %531 = tpu.matmul %487, %0, %cst_136 {dimension_numbers = #tpu.dot_dimension_numbers<[1], [0], [0], [1], [0, 0, 1, 1], [], []>} : vector<2x16xf32>, vector<16x64xf32>, vector<2x64xf32> -> vector<2x64xf32>
    %532 = arith.addf %530, %531 : vector<2x64xf32>
    %533 = vector.extract_strided_slice %529 {offsets = [0, 64], sizes = [2, 64], strides = [1, 1]} : vector<2x128xf32> to vector<2x64xf32>
    %cst_137 = arith.constant dense<0.000000e+00> : vector<2x64xf32>
    %534 = tpu.matmul %512, %1, %cst_137 {dimension_numbers = #tpu.dot_dimension_numbers<[1], [0], [0], [1], [0, 0, 1, 1], [], []>} : vector<2x16xf32>, vector<16x64xf32>, vector<2x64xf32> -> vector<2x64xf32>
    %535 = arith.addf %533, %534 : vector<2x64xf32>
    %536 = vector.extract_strided_slice %532 {offsets = [0, 0], sizes = [2, 16], strides = [1, 1]} : vector<2x64xf32> to vector<2x16xf32>
    %537 = arith.negf %536 : vector<2x16xf32>
    %538 = math.exp %537 : vector<2x16xf32>
    %cst_138 = arith.constant 1.000000e+00 : f32
    %539 = vector.broadcast %cst_138 : f32 to vector<2x16xf32>
    %540 = arith.addf %539, %538 : vector<2x16xf32>
    %541 = arith.divf %539, %540 : vector<2x16xf32>
    %542 = vector.extract_strided_slice %532 {offsets = [0, 16], sizes = [2, 16], strides = [1, 1]} : vector<2x64xf32> to vector<2x16xf32>
    %543 = arith.negf %542 : vector<2x16xf32>
    %544 = math.exp %543 : vector<2x16xf32>
    %cst_139 = arith.constant 1.000000e+00 : f32
    %545 = vector.broadcast %cst_139 : f32 to vector<2x16xf32>
    %546 = arith.addf %545, %544 : vector<2x16xf32>
    %547 = arith.divf %545, %546 : vector<2x16xf32>
    %548 = vector.extract_strided_slice %532 {offsets = [0, 32], sizes = [2, 16], strides = [1, 1]} : vector<2x64xf32> to vector<2x16xf32>
    %549 = math.tanh %548 : vector<2x16xf32>
    %550 = vector.extract_strided_slice %532 {offsets = [0, 48], sizes = [2, 16], strides = [1, 1]} : vector<2x64xf32> to vector<2x16xf32>
    %551 = arith.negf %550 : vector<2x16xf32>
    %552 = math.exp %551 : vector<2x16xf32>
    %cst_140 = arith.constant 1.000000e+00 : f32
    %553 = vector.broadcast %cst_140 : f32 to vector<2x16xf32>
    %554 = arith.addf %553, %552 : vector<2x16xf32>
    %555 = arith.divf %553, %554 : vector<2x16xf32>
    %556 = arith.mulf %547, %485 : vector<2x16xf32>
    %557 = arith.mulf %541, %549 : vector<2x16xf32>
    %558 = arith.addf %556, %557 : vector<2x16xf32>
    %559 = math.tanh %558 : vector<2x16xf32>
    %560 = arith.mulf %555, %559 : vector<2x16xf32>
    %561 = vector.extract_strided_slice %535 {offsets = [0, 0], sizes = [2, 16], strides = [1, 1]} : vector<2x64xf32> to vector<2x16xf32>
    %562 = arith.negf %561 : vector<2x16xf32>
    %563 = math.exp %562 : vector<2x16xf32>
    %cst_141 = arith.constant 1.000000e+00 : f32
    %564 = vector.broadcast %cst_141 : f32 to vector<2x16xf32>
    %565 = arith.addf %564, %563 : vector<2x16xf32>
    %566 = arith.divf %564, %565 : vector<2x16xf32>
    %567 = vector.extract_strided_slice %535 {offsets = [0, 16], sizes = [2, 16], strides = [1, 1]} : vector<2x64xf32> to vector<2x16xf32>
    %568 = arith.negf %567 : vector<2x16xf32>
    %569 = math.exp %568 : vector<2x16xf32>
    %cst_142 = arith.constant 1.000000e+00 : f32
    %570 = vector.broadcast %cst_142 : f32 to vector<2x16xf32>
    %571 = arith.addf %570, %569 : vector<2x16xf32>
    %572 = arith.divf %570, %571 : vector<2x16xf32>
    %573 = vector.extract_strided_slice %535 {offsets = [0, 32], sizes = [2, 16], strides = [1, 1]} : vector<2x64xf32> to vector<2x16xf32>
    %574 = math.tanh %573 : vector<2x16xf32>
    %575 = vector.extract_strided_slice %535 {offsets = [0, 48], sizes = [2, 16], strides = [1, 1]} : vector<2x64xf32> to vector<2x16xf32>
    %576 = arith.negf %575 : vector<2x16xf32>
    %577 = math.exp %576 : vector<2x16xf32>
    %cst_143 = arith.constant 1.000000e+00 : f32
    %578 = vector.broadcast %cst_143 : f32 to vector<2x16xf32>
    %579 = arith.addf %578, %577 : vector<2x16xf32>
    %580 = arith.divf %578, %579 : vector<2x16xf32>
    %581 = arith.mulf %572, %510 : vector<2x16xf32>
    %582 = arith.mulf %566, %574 : vector<2x16xf32>
    %583 = arith.addf %581, %582 : vector<2x16xf32>
    %584 = math.tanh %583 : vector<2x16xf32>
    %585 = arith.mulf %580, %584 : vector<2x16xf32>
    %586 = arith.index_cast %c7_i32_130 : i32 to index
    %c0_144 = arith.constant 0 : index
    %c0_145 = arith.constant 0 : index
    %587 = vector.load %arg5[%586, %c0_144, %c0_145] : memref<8x2x16xf32, #tpu.memory_space<vmem>>, vector<1x2x16xf32>
    %588 = vector.shape_cast %587 : vector<1x2x16xf32> to vector<2x16xf32>
    %589 = vector.shape_cast %560 : vector<2x16xf32> to vector<1x2x16xf32>
    tpu.vector_store %arg5[%586, %c0_144, %c0_145], %589 {strides = array<i32>} : memref<8x2x16xf32, #tpu.memory_space<vmem>>, vector<1x2x16xf32>,
    %590 = arith.index_cast %521 : i32 to index
    %c0_146 = arith.constant 0 : index
    %c0_147 = arith.constant 0 : index
    %591 = vector.load %arg6[%590, %c0_146, %c0_147] : memref<8x2x16xf32, #tpu.memory_space<vmem>>, vector<1x2x16xf32>
    %592 = vector.shape_cast %591 : vector<1x2x16xf32> to vector<2x16xf32>
    %593 = vector.shape_cast %585 : vector<2x16xf32> to vector<1x2x16xf32>
    tpu.vector_store %arg6[%590, %c0_146, %c0_147], %593 {strides = array<i32>} : memref<8x2x16xf32, #tpu.memory_space<vmem>>, vector<1x2x16xf32>,
    %c8_i32 = arith.constant 8 : i32
    %c0_148 = arith.constant 0 : index
    %c0_149 = arith.constant 0 : index
    %594 = vector.load %arg7[%c0_148, %c0_149] : memref<2x16xf32, #tpu.memory_space<vmem>>, vector<2x16xf32>
    tpu.vector_store %arg7[%c0_148, %c0_149], %560 {strides = array<i32>} : memref<2x16xf32, #tpu.memory_space<vmem>>, vector<2x16xf32>,
    %c0_150 = arith.constant 0 : index
    %c0_151 = arith.constant 0 : index
    %595 = vector.load %arg8[%c0_150, %c0_151] : memref<2x16xf32, #tpu.memory_space<vmem>>, vector<2x16xf32>
    tpu.vector_store %arg8[%c0_150, %c0_151], %558 {strides = array<i32>} : memref<2x16xf32, #tpu.memory_space<vmem>>, vector<2x16xf32>,
    %c0_152 = arith.constant 0 : index
    %c0_153 = arith.constant 0 : index
    %596 = vector.load %arg9[%c0_152, %c0_153] : memref<2x16xf32, #tpu.memory_space<vmem>>, vector<2x16xf32>
    tpu.vector_store %arg9[%c0_152, %c0_153], %585 {strides = array<i32>} : memref<2x16xf32, #tpu.memory_space<vmem>>, vector<2x16xf32>,
    %c0_154 = arith.constant 0 : index
    %c0_155 = arith.constant 0 : index
    %597 = vector.load %arg10[%c0_154, %c0_155] : memref<2x16xf32, #tpu.memory_space<vmem>>, vector<2x16xf32>
    tpu.vector_store %arg10[%c0_154, %c0_155], %583 {strides = array<i32>} : memref<2x16xf32, #tpu.memory_space<vmem>>, vector<2x16xf32>,
    return
  }
}

module attributes {stable_mosaic.version = 11 : i64} {
  func.func @decoder_kernel(%arg0: memref<2x8x32xf32, #tpu.memory_space<vmem>>, %arg1: memref<2x8xi32, #tpu.memory_space<vmem>>, %arg2: memref<2x128xf32, #tpu.memory_space<vmem>>, %arg3: memref<32x16xf32, #tpu.memory_space<vmem>>, %arg4: memref<2x32xf32, #tpu.memory_space<vmem>>, %arg5: memref<2x32xf32, #tpu.memory_space<vmem>>, %arg6: memref<2x16xf32, #tpu.memory_space<vmem>>, %arg7: memref<16x128xf32, #tpu.memory_space<vmem>>, %arg8: memref<32x128xf32, #tpu.memory_space<vmem>>, %arg9: memref<1x128xf32, #tpu.memory_space<vmem>>, %arg10: memref<32x128xf32, #tpu.memory_space<vmem>>, %arg11: memref<32x128xf32, #tpu.memory_space<vmem>>, %arg12: memref<1x128xf32, #tpu.memory_space<vmem>>, %arg13: memref<32x1xf32, #tpu.memory_space<vmem>>, %arg14: memref<32x1xf32, #tpu.memory_space<vmem>>, %arg15: memref<16x1xf32, #tpu.memory_space<vmem>>, %arg16: memref<1x1xf32, #tpu.memory_space<vmem>>, %arg17: memref<4x2x128xf32, #tpu.memory_space<vmem>>) attributes {dimension_semantics = [], scalar_prefetch = 0 : i64, scratch_operands = 0 : i64, tpu.core_type = #tpu.core_type<tc>} {
    %c0 = arith.constant 0 : index
    %c0_0 = arith.constant 0 : index
    %c0_1 = arith.constant 0 : index
    %0 = vector.load %arg0[%c0, %c0_0, %c0_1] : memref<2x8x32xf32, #tpu.memory_space<vmem>>, vector<2x8x32xf32>
    %c0_2 = arith.constant 0 : index
    %c0_3 = arith.constant 0 : index
    %1 = vector.load %arg3[%c0_2, %c0_3] : memref<32x16xf32, #tpu.memory_space<vmem>>, vector<32x16xf32>
    %c0_4 = arith.constant 0 : index
    %c0_5 = arith.constant 0 : index
    %2 = vector.load %arg2[%c0_4, %c0_5] : memref<2x128xf32, #tpu.memory_space<vmem>>, vector<2x128xf32>
    %c0_6 = arith.constant 0 : index
    %c0_7 = arith.constant 0 : index
    %3 = vector.load %arg7[%c0_6, %c0_7] : memref<16x128xf32, #tpu.memory_space<vmem>>, vector<16x128xf32>
    %c0_8 = arith.constant 0 : index
    %c0_9 = arith.constant 0 : index
    %4 = vector.load %arg8[%c0_8, %c0_9] : memref<32x128xf32, #tpu.memory_space<vmem>>, vector<32x128xf32>
    %c0_10 = arith.constant 0 : index
    %c0_11 = arith.constant 0 : index
    %5 = vector.load %arg9[%c0_10, %c0_11] : memref<1x128xf32, #tpu.memory_space<vmem>>, vector<1x128xf32>
    %6 = vector.shape_cast %5 : vector<1x128xf32> to vector<1x128xf32>
    %7 = vector.broadcast %6 : vector<1x128xf32> to vector<2x128xf32>
    %c0_12 = arith.constant 0 : index
    %c0_13 = arith.constant 0 : index
    %8 = vector.load %arg10[%c0_12, %c0_13] : memref<32x128xf32, #tpu.memory_space<vmem>>, vector<32x128xf32>
    %c0_14 = arith.constant 0 : index
    %c0_15 = arith.constant 0 : index
    %9 = vector.load %arg11[%c0_14, %c0_15] : memref<32x128xf32, #tpu.memory_space<vmem>>, vector<32x128xf32>
    %c0_16 = arith.constant 0 : index
    %c0_17 = arith.constant 0 : index
    %10 = vector.load %arg12[%c0_16, %c0_17] : memref<1x128xf32, #tpu.memory_space<vmem>>, vector<1x128xf32>
    %c0_18 = arith.constant 0 : index
    %c0_19 = arith.constant 0 : index
    %11 = vector.load %arg13[%c0_18, %c0_19] : memref<32x1xf32, #tpu.memory_space<vmem>>, vector<32x1xf32>
    %c0_20 = arith.constant 0 : index
    %c0_21 = arith.constant 0 : index
    %12 = vector.load %arg14[%c0_20, %c0_21] : memref<32x1xf32, #tpu.memory_space<vmem>>, vector<32x1xf32>
    %c0_22 = arith.constant 0 : index
    %c0_23 = arith.constant 0 : index
    %13 = vector.load %arg15[%c0_22, %c0_23] : memref<16x1xf32, #tpu.memory_space<vmem>>, vector<16x1xf32>
    %c0_24 = arith.constant 0 : index
    %c0_25 = arith.constant 0 : index
    %14 = vector.load %arg16[%c0_24, %c0_25] : memref<1x1xf32, #tpu.memory_space<vmem>>, vector<1x1xf32>
    %c0_26 = arith.constant 0 : index
    %c0_27 = arith.constant 0 : index
    %15 = vector.load %arg1[%c0_26, %c0_27] : memref<2x8xi32, #tpu.memory_space<vmem>>, vector<2x8xi32>
    %16 = tpu.iota {dimensions = array<i32: 2>} : vector<2x8x128xi32>
    %17 = vector.shape_cast %15 : vector<2x8xi32> to vector<2x8x1xi32>
    %18 = vector.broadcast %17 : vector<2x8x1xi32> to vector<2x8x128xi32>
    %19 = arith.cmpi eq, %18, %16 : vector<2x8x128xi32>
    %20 = arith.extui %19 : vector<2x8x128xi1> to vector<2x8x128xi32>
    %21 = arith.sitofp %20 : vector<2x8x128xi32> to vector<2x8x128xf32>
    %22 = tpu.iota {dimensions = array<i32: 1>} : vector<2x32xi32>
    %23 = tpu.iota {dimensions = array<i32: 1>} : vector<2x128xi32>
    %c0_28 = arith.constant 0 : index
    %c0_29 = arith.constant 0 : index
    %24 = vector.load %arg4[%c0_28, %c0_29] : memref<2x32xf32, #tpu.memory_space<vmem>>, vector<2x32xf32>
    %c0_30 = arith.constant 0 : index
    %c0_31 = arith.constant 0 : index
    %25 = vector.load %arg5[%c0_30, %c0_31] : memref<2x32xf32, #tpu.memory_space<vmem>>, vector<2x32xf32>
    %c0_32 = arith.constant 0 : index
    %c0_33 = arith.constant 0 : index
    %26 = vector.load %arg6[%c0_32, %c0_33] : memref<2x16xf32, #tpu.memory_space<vmem>>, vector<2x16xf32>
    %c0_i32 = arith.constant 0 : i32
    %cst = arith.constant dense<0.000000e+00> : vector<2x128xf32>
    %27 = tpu.matmul %26, %3, %cst {dimension_numbers = #tpu.dot_dimension_numbers<[1], [0], [0], [1], [0, 0, 1, 1], [], []>} : vector<2x16xf32>, vector<16x128xf32>, vector<2x128xf32> -> vector<2x128xf32>
    %cst_34 = arith.constant dense<0.000000e+00> : vector<2x128xf32>
    %28 = tpu.matmul %24, %4, %cst_34 {dimension_numbers = #tpu.dot_dimension_numbers<[1], [0], [0], [1], [0, 0, 1, 1], [], []>} : vector<2x32xf32>, vector<32x128xf32>, vector<2x128xf32> -> vector<2x128xf32>
    %29 = arith.addf %27, %28 : vector<2x128xf32>
    %30 = arith.addf %29, %7 : vector<2x128xf32>
    %31 = vector.extract_strided_slice %30 {offsets = [0, 0], sizes = [2, 32], strides = [1, 1]} : vector<2x128xf32> to vector<2x32xf32>
    %32 = arith.negf %31 : vector<2x32xf32>
    %33 = math.exp %32 : vector<2x32xf32>
    %cst_35 = arith.constant 1.000000e+00 : f32
    %34 = vector.broadcast %cst_35 : f32 to vector<2x32xf32>
    %35 = arith.addf %34, %33 : vector<2x32xf32>
    %36 = arith.divf %34, %35 : vector<2x32xf32>
    %37 = vector.extract_strided_slice %30 {offsets = [0, 32], sizes = [2, 32], strides = [1, 1]} : vector<2x128xf32> to vector<2x32xf32>
    %38 = arith.negf %37 : vector<2x32xf32>
    %39 = math.exp %38 : vector<2x32xf32>
    %cst_36 = arith.constant 1.000000e+00 : f32
    %40 = vector.broadcast %cst_36 : f32 to vector<2x32xf32>
    %41 = arith.addf %40, %39 : vector<2x32xf32>
    %42 = arith.divf %40, %41 : vector<2x32xf32>
    %43 = vector.extract_strided_slice %30 {offsets = [0, 64], sizes = [2, 32], strides = [1, 1]} : vector<2x128xf32> to vector<2x32xf32>
    %44 = math.tanh %43 : vector<2x32xf32>
    %45 = vector.extract_strided_slice %30 {offsets = [0, 96], sizes = [2, 32], strides = [1, 1]} : vector<2x128xf32> to vector<2x32xf32>
    %46 = arith.negf %45 : vector<2x32xf32>
    %47 = math.exp %46 : vector<2x32xf32>
    %cst_37 = arith.constant 1.000000e+00 : f32
    %48 = vector.broadcast %cst_37 : f32 to vector<2x32xf32>
    %49 = arith.addf %48, %47 : vector<2x32xf32>
    %50 = arith.divf %48, %49 : vector<2x32xf32>
    %51 = arith.mulf %42, %25 : vector<2x32xf32>
    %52 = arith.mulf %36, %44 : vector<2x32xf32>
    %53 = arith.addf %51, %52 : vector<2x32xf32>
    %54 = math.tanh %53 : vector<2x32xf32>
    %55 = arith.mulf %50, %54 : vector<2x32xf32>
    %56 = vector.shape_cast %55 : vector<2x32xf32> to vector<2x1x32xf32>
    "tpu.trace_start"() <{level = 10 : i32, message = "bth,bsh->bts"}> : () -> ()
    %cst_38 = arith.constant dense<0.000000e+00> : vector<2x1x8xf32>
    %57 = tpu.matmul %56, %0, %cst_38 {dimension_numbers = #tpu.dot_dimension_numbers<[2], [2], [1], [1], [0, 0, 0, 1, 1, 1], [0], [0]>} : vector<2x1x32xf32>, vector<2x8x32xf32>, vector<2x1x8xf32> -> vector<2x1x8xf32>
    "tpu.trace_stop"() : () -> ()
    %cst_39 = arith.constant dense<0xFF800000> : vector<2x1xf32>
    %58 = vector.multi_reduction <maximumf>, %57, %cst_39 [2] : vector<2x1x8xf32> to vector<2x1xf32>
    %59 = vector.shape_cast %58 : vector<2x1xf32> to vector<2x1x1xf32>
    %60 = vector.broadcast %59 : vector<2x1x1xf32> to vector<2x1x8xf32>
    %61 = arith.subf %57, %60 : vector<2x1x8xf32>
    %62 = math.exp %61 : vector<2x1x8xf32>
    %cst_40 = arith.constant dense<0.000000e+00> : vector<2x1xf32>
    %63 = vector.multi_reduction <add>, %62, %cst_40 [2] : vector<2x1x8xf32> to vector<2x1xf32>
    %64 = vector.shape_cast %63 : vector<2x1xf32> to vector<2x1x1xf32>
    %65 = tpu.reciprocal %64 {approx = true} : vector<2x1x1xf32> -> vector<2x1x1xf32>
    %66 = vector.broadcast %65 : vector<2x1x1xf32> to vector<2x1x8xf32>
    %67 = arith.mulf %62, %66 : vector<2x1x8xf32>
    "tpu.trace_start"() <{level = 10 : i32, message = "bts,bsh->bth"}> : () -> ()
    %cst_41 = arith.constant dense<0.000000e+00> : vector<2x1x32xf32>
    %68 = tpu.matmul %67, %0, %cst_41 {dimension_numbers = #tpu.dot_dimension_numbers<[2], [1], [1], [2], [0, 0, 0, 1, 1, 2], [0], [0]>} : vector<2x1x8xf32>, vector<2x8x32xf32>, vector<2x1x32xf32> -> vector<2x1x32xf32>
    "tpu.trace_stop"() : () -> ()
    %69 = vector.shape_cast %68 : vector<2x1x32xf32> to vector<2x32xf32>
    %cst_42 = arith.constant dense<0.000000e+00> : vector<2x128xf32>
    %70 = tpu.matmul %55, %8, %cst_42 {dimension_numbers = #tpu.dot_dimension_numbers<[1], [0], [0], [1], [0, 0, 1, 1], [], []>} : vector<2x32xf32>, vector<32x128xf32>, vector<2x128xf32> -> vector<2x128xf32>
    %cst_43 = arith.constant dense<0.000000e+00> : vector<2x128xf32>
    %71 = tpu.matmul %69, %9, %cst_43 {dimension_numbers = #tpu.dot_dimension_numbers<[1], [0], [0], [1], [0, 0, 1, 1], [], []>} : vector<2x32xf32>, vector<32x128xf32>, vector<2x128xf32> -> vector<2x128xf32>
    %72 = arith.addf %70, %71 : vector<2x128xf32>
    %73 = vector.broadcast %10 : vector<1x128xf32> to vector<2x128xf32>
    %74 = arith.addf %72, %73 : vector<2x128xf32>
    %cst_44 = arith.constant dense<0xFF800000> : vector<2xf32>
    %75 = vector.multi_reduction <maximumf>, %74, %cst_44 [1] : vector<2x128xf32> to vector<2xf32>
    %76 = vector.shape_cast %75 : vector<2xf32> to vector<2x1xf32>
    %77 = vector.broadcast %76 : vector<2x1xf32> to vector<2x128xf32>
    %78 = arith.subf %74, %77 : vector<2x128xf32>
    %79 = math.exp %78 : vector<2x128xf32>
    %cst_45 = arith.constant dense<0.000000e+00> : vector<2xf32>
    %80 = vector.multi_reduction <add>, %79, %cst_45 [1] : vector<2x128xf32> to vector<2xf32>
    %81 = vector.shape_cast %80 : vector<2xf32> to vector<2x1xf32>
    %82 = tpu.reciprocal %81 {approx = true} : vector<2x1xf32> -> vector<2x1xf32>
    %83 = vector.broadcast %82 : vector<2x1xf32> to vector<2x128xf32>
    %84 = arith.mulf %79, %83 : vector<2x128xf32>
    %cst_46 = arith.constant dense<0.000000e+00> : vector<2x1xf32>
    %85 = tpu.matmul %69, %11, %cst_46 {dimension_numbers = #tpu.dot_dimension_numbers<[1], [0], [0], [1], [0, 0, 1, 1], [], []>} : vector<2x32xf32>, vector<32x1xf32>, vector<2x1xf32> -> vector<2x1xf32>
    %cst_47 = arith.constant dense<0.000000e+00> : vector<2x1xf32>
    %86 = tpu.matmul %55, %12, %cst_47 {dimension_numbers = #tpu.dot_dimension_numbers<[1], [0], [0], [1], [0, 0, 1, 1], [], []>} : vector<2x32xf32>, vector<32x1xf32>, vector<2x1xf32> -> vector<2x1xf32>
    %87 = arith.addf %85, %86 : vector<2x1xf32>
    %cst_48 = arith.constant dense<0.000000e+00> : vector<2x1xf32>
    %88 = tpu.matmul %26, %13, %cst_48 {dimension_numbers = #tpu.dot_dimension_numbers<[1], [0], [0], [1], [0, 0, 1, 1], [], []>} : vector<2x16xf32>, vector<16x1xf32>, vector<2x1xf32> -> vector<2x1xf32>
    %89 = arith.addf %87, %88 : vector<2x1xf32>
    %90 = vector.broadcast %14 : vector<1x1xf32> to vector<2x1xf32>
    %91 = arith.addf %89, %90 : vector<2x1xf32>
    %92 = arith.negf %91 : vector<2x1xf32>
    %93 = math.exp %92 : vector<2x1xf32>
    %cst_49 = arith.constant 1.000000e+00 : f32
    %94 = vector.broadcast %cst_49 : f32 to vector<2x1xf32>
    %95 = arith.addf %94, %93 : vector<2x1xf32>
    %96 = arith.divf %94, %95 : vector<2x1xf32>
    %cst_50 = arith.constant 1.000000e+00 : f32
    %97 = vector.broadcast %cst_50 : f32 to vector<2x1xf32>
    %98 = arith.subf %97, %96 : vector<2x1xf32>
    %99 = vector.shape_cast %67 : vector<2x1x8xf32> to vector<2x8xf32>
    %100 = vector.broadcast %98 : vector<2x1xf32> to vector<2x8xf32>
    %101 = arith.mulf %100, %99 : vector<2x8xf32>
    %102 = vector.shape_cast %101 : vector<2x8xf32> to vector<2x1x8xf32>
    "tpu.trace_start"() <{level = 10 : i32, message = "bts,bsv->btv"}> : () -> ()
    %cst_51 = arith.constant dense<0.000000e+00> : vector<2x1x128xf32>
    %103 = tpu.matmul %102, %21, %cst_51 {dimension_numbers = #tpu.dot_dimension_numbers<[2], [1], [1], [2], [0, 0, 0, 1, 1, 2], [0], [0]>} : vector<2x1x8xf32>, vector<2x8x128xf32>, vector<2x1x128xf32> -> vector<2x1x128xf32>
    "tpu.trace_stop"() : () -> ()
    %104 = vector.shape_cast %103 : vector<2x1x128xf32> to vector<2x128xf32>
    %105 = vector.broadcast %96 : vector<2x1xf32> to vector<2x128xf32>
    %106 = arith.mulf %105, %84 : vector<2x128xf32>
    %107 = arith.addf %106, %2 : vector<2x128xf32>
    %108 = arith.addf %107, %104 : vector<2x128xf32>
    %109 = arith.index_cast %c0_i32 : i32 to index
    %c0_52 = arith.constant 0 : index
    %c0_53 = arith.constant 0 : index
    %110 = vector.load %arg17[%109, %c0_52, %c0_53] : memref<4x2x128xf32, #tpu.memory_space<vmem>>, vector<1x2x128xf32>
    %111 = vector.shape_cast %110 : vector<1x2x128xf32> to vector<2x128xf32>
    %112 = vector.shape_cast %108 : vector<2x128xf32> to vector<1x2x128xf32>
    tpu.vector_store %arg17[%109, %c0_52, %c0_53], %112 {strides = array<i32>} : memref<4x2x128xf32, #tpu.memory_space<vmem>>, vector<1x2x128xf32>,
    %cst_54 = arith.constant dense<0xFF800000> : vector<2xf32>
    %113 = vector.multi_reduction <maximumf>, %108, %cst_54 [1] : vector<2x128xf32> to vector<2xf32>
    %114 = vector.shape_cast %113 : vector<2xf32> to vector<2x1xf32>
    %115 = vector.broadcast %114 : vector<2x1xf32> to vector<2x128xf32>
    %116 = arith.cmpf oeq, %108, %115 : vector<2x128xf32>
    %c128_i32 = arith.constant 128 : i32
    %117 = vector.broadcast %c128_i32 : i32 to vector<2x128xi32>
    %118 = arith.select %116, %23, %117 : vector<2x128xi1>, vector<2x128xi32>
    %cst_55 = arith.constant dense<2147483647> : vector<2xi32>
    %119 = vector.multi_reduction <minsi>, %118, %cst_55 [1] : vector<2x128xi32> to vector<2xi32>
    %120 = vector.shape_cast %119 : vector<2xi32> to vector<2x1xi32>
    %c32_i32 = arith.constant 32 : i32
    %121 = vector.broadcast %c32_i32 : i32 to vector<2x1xi32>
    %122 = arith.cmpi sge, %120, %121 : vector<2x1xi32>
    %c1_i32 = arith.constant 1 : i32
    %123 = vector.broadcast %c1_i32 : i32 to vector<2x1xi32>
    %124 = arith.select %122, %123, %120 : vector<2x1xi1>, vector<2x1xi32>
    %125 = vector.broadcast %124 : vector<2x1xi32> to vector<2x32xi32>
    %126 = arith.cmpi eq, %125, %22 : vector<2x32xi32>
    %127 = arith.extui %126 : vector<2x32xi1> to vector<2x32xi32>
    %128 = arith.sitofp %127 : vector<2x32xi32> to vector<2x32xf32>
    %cst_56 = arith.constant dense<0.000000e+00> : vector<2x16xf32>
    %129 = tpu.matmul %128, %1, %cst_56 {dimension_numbers = #tpu.dot_dimension_numbers<[1], [0], [0], [1], [0, 0, 1, 1], [], []>} : vector<2x32xf32>, vector<32x16xf32>, vector<2x16xf32> -> vector<2x16xf32>
    %c1_i32_57 = arith.constant 1 : i32
    %cst_58 = arith.constant dense<0.000000e+00> : vector<2x128xf32>
    %130 = tpu.matmul %129, %3, %cst_58 {dimension_numbers = #tpu.dot_dimension_numbers<[1], [0], [0], [1], [0, 0, 1, 1], [], []>} : vector<2x16xf32>, vector<16x128xf32>, vector<2x128xf32> -> vector<2x128xf32>
    %cst_59 = arith.constant dense<0.000000e+00> : vector<2x128xf32>
    %131 = tpu.matmul %55, %4, %cst_59 {dimension_numbers = #tpu.dot_dimension_numbers<[1], [0], [0], [1], [0, 0, 1, 1], [], []>} : vector<2x32xf32>, vector<32x128xf32>, vector<2x128xf32> -> vector<2x128xf32>
    %132 = arith.addf %130, %131 : vector<2x128xf32>
    %133 = arith.addf %132, %7 : vector<2x128xf32>
    %134 = vector.extract_strided_slice %133 {offsets = [0, 0], sizes = [2, 32], strides = [1, 1]} : vector<2x128xf32> to vector<2x32xf32>
    %135 = arith.negf %134 : vector<2x32xf32>
    %136 = math.exp %135 : vector<2x32xf32>
    %cst_60 = arith.constant 1.000000e+00 : f32
    %137 = vector.broadcast %cst_60 : f32 to vector<2x32xf32>
    %138 = arith.addf %137, %136 : vector<2x32xf32>
    %139 = arith.divf %137, %138 : vector<2x32xf32>
    %140 = vector.extract_strided_slice %133 {offsets = [0, 32], sizes = [2, 32], strides = [1, 1]} : vector<2x128xf32> to vector<2x32xf32>
    %141 = arith.negf %140 : vector<2x32xf32>
    %142 = math.exp %141 : vector<2x32xf32>
    %cst_61 = arith.constant 1.000000e+00 : f32
    %143 = vector.broadcast %cst_61 : f32 to vector<2x32xf32>
    %144 = arith.addf %143, %142 : vector<2x32xf32>
    %145 = arith.divf %143, %144 : vector<2x32xf32>
    %146 = vector.extract_strided_slice %133 {offsets = [0, 64], sizes = [2, 32], strides = [1, 1]} : vector<2x128xf32> to vector<2x32xf32>
    %147 = math.tanh %146 : vector<2x32xf32>
    %148 = vector.extract_strided_slice %133 {offsets = [0, 96], sizes = [2, 32], strides = [1, 1]} : vector<2x128xf32> to vector<2x32xf32>
    %149 = arith.negf %148 : vector<2x32xf32>
    %150 = math.exp %149 : vector<2x32xf32>
    %cst_62 = arith.constant 1.000000e+00 : f32
    %151 = vector.broadcast %cst_62 : f32 to vector<2x32xf32>
    %152 = arith.addf %151, %150 : vector<2x32xf32>
    %153 = arith.divf %151, %152 : vector<2x32xf32>
    %154 = arith.mulf %145, %53 : vector<2x32xf32>
    %155 = arith.mulf %139, %147 : vector<2x32xf32>
    %156 = arith.addf %154, %155 : vector<2x32xf32>
    %157 = math.tanh %156 : vector<2x32xf32>
    %158 = arith.mulf %153, %157 : vector<2x32xf32>
    %159 = vector.shape_cast %158 : vector<2x32xf32> to vector<2x1x32xf32>
    "tpu.trace_start"() <{level = 10 : i32, message = "bth,bsh->bts"}> : () -> ()
    %cst_63 = arith.constant dense<0.000000e+00> : vector<2x1x8xf32>
    %160 = tpu.matmul %159, %0, %cst_63 {dimension_numbers = #tpu.dot_dimension_numbers<[2], [2], [1], [1], [0, 0, 0, 1, 1, 1], [0], [0]>} : vector<2x1x32xf32>, vector<2x8x32xf32>, vector<2x1x8xf32> -> vector<2x1x8xf32>
    "tpu.trace_stop"() : () -> ()
    %cst_64 = arith.constant dense<0xFF800000> : vector<2x1xf32>
    %161 = vector.multi_reduction <maximumf>, %160, %cst_64 [2] : vector<2x1x8xf32> to vector<2x1xf32>
    %162 = vector.shape_cast %161 : vector<2x1xf32> to vector<2x1x1xf32>
    %163 = vector.broadcast %162 : vector<2x1x1xf32> to vector<2x1x8xf32>
    %164 = arith.subf %160, %163 : vector<2x1x8xf32>
    %165 = math.exp %164 : vector<2x1x8xf32>
    %cst_65 = arith.constant dense<0.000000e+00> : vector<2x1xf32>
    %166 = vector.multi_reduction <add>, %165, %cst_65 [2] : vector<2x1x8xf32> to vector<2x1xf32>
    %167 = vector.shape_cast %166 : vector<2x1xf32> to vector<2x1x1xf32>
    %168 = tpu.reciprocal %167 {approx = true} : vector<2x1x1xf32> -> vector<2x1x1xf32>
    %169 = vector.broadcast %168 : vector<2x1x1xf32> to vector<2x1x8xf32>
    %170 = arith.mulf %165, %169 : vector<2x1x8xf32>
    "tpu.trace_start"() <{level = 10 : i32, message = "bts,bsh->bth"}> : () -> ()
    %cst_66 = arith.constant dense<0.000000e+00> : vector<2x1x32xf32>
    %171 = tpu.matmul %170, %0, %cst_66 {dimension_numbers = #tpu.dot_dimension_numbers<[2], [1], [1], [2], [0, 0, 0, 1, 1, 2], [0], [0]>} : vector<2x1x8xf32>, vector<2x8x32xf32>, vector<2x1x32xf32> -> vector<2x1x32xf32>
    "tpu.trace_stop"() : () -> ()
    %172 = vector.shape_cast %171 : vector<2x1x32xf32> to vector<2x32xf32>
    %cst_67 = arith.constant dense<0.000000e+00> : vector<2x128xf32>
    %173 = tpu.matmul %158, %8, %cst_67 {dimension_numbers = #tpu.dot_dimension_numbers<[1], [0], [0], [1], [0, 0, 1, 1], [], []>} : vector<2x32xf32>, vector<32x128xf32>, vector<2x128xf32> -> vector<2x128xf32>
    %cst_68 = arith.constant dense<0.000000e+00> : vector<2x128xf32>
    %174 = tpu.matmul %172, %9, %cst_68 {dimension_numbers = #tpu.dot_dimension_numbers<[1], [0], [0], [1], [0, 0, 1, 1], [], []>} : vector<2x32xf32>, vector<32x128xf32>, vector<2x128xf32> -> vector<2x128xf32>
    %175 = arith.addf %173, %174 : vector<2x128xf32>
    %176 = vector.broadcast %10 : vector<1x128xf32> to vector<2x128xf32>
    %177 = arith.addf %175, %176 : vector<2x128xf32>
    %cst_69 = arith.constant dense<0xFF800000> : vector<2xf32>
    %178 = vector.multi_reduction <maximumf>, %177, %cst_69 [1] : vector<2x128xf32> to vector<2xf32>
    %179 = vector.shape_cast %178 : vector<2xf32> to vector<2x1xf32>
    %180 = vector.broadcast %179 : vector<2x1xf32> to vector<2x128xf32>
    %181 = arith.subf %177, %180 : vector<2x128xf32>
    %182 = math.exp %181 : vector<2x128xf32>
    %cst_70 = arith.constant dense<0.000000e+00> : vector<2xf32>
    %183 = vector.multi_reduction <add>, %182, %cst_70 [1] : vector<2x128xf32> to vector<2xf32>
    %184 = vector.shape_cast %183 : vector<2xf32> to vector<2x1xf32>
    %185 = tpu.reciprocal %184 {approx = true} : vector<2x1xf32> -> vector<2x1xf32>
    %186 = vector.broadcast %185 : vector<2x1xf32> to vector<2x128xf32>
    %187 = arith.mulf %182, %186 : vector<2x128xf32>
    %cst_71 = arith.constant dense<0.000000e+00> : vector<2x1xf32>
    %188 = tpu.matmul %172, %11, %cst_71 {dimension_numbers = #tpu.dot_dimension_numbers<[1], [0], [0], [1], [0, 0, 1, 1], [], []>} : vector<2x32xf32>, vector<32x1xf32>, vector<2x1xf32> -> vector<2x1xf32>
    %cst_72 = arith.constant dense<0.000000e+00> : vector<2x1xf32>
    %189 = tpu.matmul %158, %12, %cst_72 {dimension_numbers = #tpu.dot_dimension_numbers<[1], [0], [0], [1], [0, 0, 1, 1], [], []>} : vector<2x32xf32>, vector<32x1xf32>, vector<2x1xf32> -> vector<2x1xf32>
    %190 = arith.addf %188, %189 : vector<2x1xf32>
    %cst_73 = arith.constant dense<0.000000e+00> : vector<2x1xf32>
    %191 = tpu.matmul %129, %13, %cst_73 {dimension_numbers = #tpu.dot_dimension_numbers<[1], [0], [0], [1], [0, 0, 1, 1], [], []>} : vector<2x16xf32>, vector<16x1xf32>, vector<2x1xf32> -> vector<2x1xf32>
    %192 = arith.addf %190, %191 : vector<2x1xf32>
    %193 = vector.broadcast %14 : vector<1x1xf32> to vector<2x1xf32>
    %194 = arith.addf %192, %193 : vector<2x1xf32>
    %195 = arith.negf %194 : vector<2x1xf32>
    %196 = math.exp %195 : vector<2x1xf32>
    %cst_74 = arith.constant 1.000000e+00 : f32
    %197 = vector.broadcast %cst_74 : f32 to vector<2x1xf32>
    %198 = arith.addf %197, %196 : vector<2x1xf32>
    %199 = arith.divf %197, %198 : vector<2x1xf32>
    %cst_75 = arith.constant 1.000000e+00 : f32
    %200 = vector.broadcast %cst_75 : f32 to vector<2x1xf32>
    %201 = arith.subf %200, %199 : vector<2x1xf32>
    %202 = vector.shape_cast %170 : vector<2x1x8xf32> to vector<2x8xf32>
    %203 = vector.broadcast %201 : vector<2x1xf32> to vector<2x8xf32>
    %204 = arith.mulf %203, %202 : vector<2x8xf32>
    %205 = vector.shape_cast %204 : vector<2x8xf32> to vector<2x1x8xf32>
    "tpu.trace_start"() <{level = 10 : i32, message = "bts,bsv->btv"}> : () -> ()
    %cst_76 = arith.constant dense<0.000000e+00> : vector<2x1x128xf32>
    %206 = tpu.matmul %205, %21, %cst_76 {dimension_numbers = #tpu.dot_dimension_numbers<[2], [1], [1], [2], [0, 0, 0, 1, 1, 2], [0], [0]>} : vector<2x1x8xf32>, vector<2x8x128xf32>, vector<2x1x128xf32> -> vector<2x1x128xf32>
    "tpu.trace_stop"() : () -> ()
    %207 = vector.shape_cast %206 : vector<2x1x128xf32> to vector<2x128xf32>
    %208 = vector.broadcast %199 : vector<2x1xf32> to vector<2x128xf32>
    %209 = arith.mulf %208, %187 : vector<2x128xf32>
    %210 = arith.addf %209, %2 : vector<2x128xf32>
    %211 = arith.addf %210, %207 : vector<2x128xf32>
    %212 = arith.index_cast %c1_i32_57 : i32 to index
    %c0_77 = arith.constant 0 : index
    %c0_78 = arith.constant 0 : index
    %213 = vector.load %arg17[%212, %c0_77, %c0_78] : memref<4x2x128xf32, #tpu.memory_space<vmem>>, vector<1x2x128xf32>
    %214 = vector.shape_cast %213 : vector<1x2x128xf32> to vector<2x128xf32>
    %215 = vector.shape_cast %211 : vector<2x128xf32> to vector<1x2x128xf32>
    tpu.vector_store %arg17[%212, %c0_77, %c0_78], %215 {strides = array<i32>} : memref<4x2x128xf32, #tpu.memory_space<vmem>>, vector<1x2x128xf32>,
    %cst_79 = arith.constant dense<0xFF800000> : vector<2xf32>
    %216 = vector.multi_reduction <maximumf>, %211, %cst_79 [1] : vector<2x128xf32> to vector<2xf32>
    %217 = vector.shape_cast %216 : vector<2xf32> to vector<2x1xf32>
    %218 = vector.broadcast %217 : vector<2x1xf32> to vector<2x128xf32>
    %219 = arith.cmpf oeq, %211, %218 : vector<2x128xf32>
    %c128_i32_80 = arith.constant 128 : i32
    %220 = vector.broadcast %c128_i32_80 : i32 to vector<2x128xi32>
    %221 = arith.select %219, %23, %220 : vector<2x128xi1>, vector<2x128xi32>
    %cst_81 = arith.constant dense<2147483647> : vector<2xi32>
    %222 = vector.multi_reduction <minsi>, %221, %cst_81 [1] : vector<2x128xi32> to vector<2xi32>
    %223 = vector.shape_cast %222 : vector<2xi32> to vector<2x1xi32>
    %c32_i32_82 = arith.constant 32 : i32
    %224 = vector.broadcast %c32_i32_82 : i32 to vector<2x1xi32>
    %225 = arith.cmpi sge, %223, %224 : vector<2x1xi32>
    %c1_i32_83 = arith.constant 1 : i32
    %226 = vector.broadcast %c1_i32_83 : i32 to vector<2x1xi32>
    %227 = arith.select %225, %226, %223 : vector<2x1xi1>, vector<2x1xi32>
    %228 = vector.broadcast %227 : vector<2x1xi32> to vector<2x32xi32>
    %229 = arith.cmpi eq, %228, %22 : vector<2x32xi32>
    %230 = arith.extui %229 : vector<2x32xi1> to vector<2x32xi32>
    %231 = arith.sitofp %230 : vector<2x32xi32> to vector<2x32xf32>
    %cst_84 = arith.constant dense<0.000000e+00> : vector<2x16xf32>
    %232 = tpu.matmul %231, %1, %cst_84 {dimension_numbers = #tpu.dot_dimension_numbers<[1], [0], [0], [1], [0, 0, 1, 1], [], []>} : vector<2x32xf32>, vector<32x16xf32>, vector<2x16xf32> -> vector<2x16xf32>
    %c2_i32 = arith.constant 2 : i32
    %cst_85 = arith.constant dense<0.000000e+00> : vector<2x128xf32>
    %233 = tpu.matmul %232, %3, %cst_85 {dimension_numbers = #tpu.dot_dimension_numbers<[1], [0], [0], [1], [0, 0, 1, 1], [], []>} : vector<2x16xf32>, vector<16x128xf32>, vector<2x128xf32> -> vector<2x128xf32>
    %cst_86 = arith.constant dense<0.000000e+00> : vector<2x128xf32>
    %234 = tpu.matmul %158, %4, %cst_86 {dimension_numbers = #tpu.dot_dimension_numbers<[1], [0], [0], [1], [0, 0, 1, 1], [], []>} : vector<2x32xf32>, vector<32x128xf32>, vector<2x128xf32> -> vector<2x128xf32>
    %235 = arith.addf %233, %234 : vector<2x128xf32>
    %236 = arith.addf %235, %7 : vector<2x128xf32>
    %237 = vector.extract_strided_slice %236 {offsets = [0, 0], sizes = [2, 32], strides = [1, 1]} : vector<2x128xf32> to vector<2x32xf32>
    %238 = arith.negf %237 : vector<2x32xf32>
    %239 = math.exp %238 : vector<2x32xf32>
    %cst_87 = arith.constant 1.000000e+00 : f32
    %240 = vector.broadcast %cst_87 : f32 to vector<2x32xf32>
    %241 = arith.addf %240, %239 : vector<2x32xf32>
    %242 = arith.divf %240, %241 : vector<2x32xf32>
    %243 = vector.extract_strided_slice %236 {offsets = [0, 32], sizes = [2, 32], strides = [1, 1]} : vector<2x128xf32> to vector<2x32xf32>
    %244 = arith.negf %243 : vector<2x32xf32>
    %245 = math.exp %244 : vector<2x32xf32>
    %cst_88 = arith.constant 1.000000e+00 : f32
    %246 = vector.broadcast %cst_88 : f32 to vector<2x32xf32>
    %247 = arith.addf %246, %245 : vector<2x32xf32>
    %248 = arith.divf %246, %247 : vector<2x32xf32>
    %249 = vector.extract_strided_slice %236 {offsets = [0, 64], sizes = [2, 32], strides = [1, 1]} : vector<2x128xf32> to vector<2x32xf32>
    %250 = math.tanh %249 : vector<2x32xf32>
    %251 = vector.extract_strided_slice %236 {offsets = [0, 96], sizes = [2, 32], strides = [1, 1]} : vector<2x128xf32> to vector<2x32xf32>
    %252 = arith.negf %251 : vector<2x32xf32>
    %253 = math.exp %252 : vector<2x32xf32>
    %cst_89 = arith.constant 1.000000e+00 : f32
    %254 = vector.broadcast %cst_89 : f32 to vector<2x32xf32>
    %255 = arith.addf %254, %253 : vector<2x32xf32>
    %256 = arith.divf %254, %255 : vector<2x32xf32>
    %257 = arith.mulf %248, %156 : vector<2x32xf32>
    %258 = arith.mulf %242, %250 : vector<2x32xf32>
    %259 = arith.addf %257, %258 : vector<2x32xf32>
    %260 = math.tanh %259 : vector<2x32xf32>
    %261 = arith.mulf %256, %260 : vector<2x32xf32>
    %262 = vector.shape_cast %261 : vector<2x32xf32> to vector<2x1x32xf32>
    "tpu.trace_start"() <{level = 10 : i32, message = "bth,bsh->bts"}> : () -> ()
    %cst_90 = arith.constant dense<0.000000e+00> : vector<2x1x8xf32>
    %263 = tpu.matmul %262, %0, %cst_90 {dimension_numbers = #tpu.dot_dimension_numbers<[2], [2], [1], [1], [0, 0, 0, 1, 1, 1], [0], [0]>} : vector<2x1x32xf32>, vector<2x8x32xf32>, vector<2x1x8xf32> -> vector<2x1x8xf32>
    "tpu.trace_stop"() : () -> ()
    %cst_91 = arith.constant dense<0xFF800000> : vector<2x1xf32>
    %264 = vector.multi_reduction <maximumf>, %263, %cst_91 [2] : vector<2x1x8xf32> to vector<2x1xf32>
    %265 = vector.shape_cast %264 : vector<2x1xf32> to vector<2x1x1xf32>
    %266 = vector.broadcast %265 : vector<2x1x1xf32> to vector<2x1x8xf32>
    %267 = arith.subf %263, %266 : vector<2x1x8xf32>
    %268 = math.exp %267 : vector<2x1x8xf32>
    %cst_92 = arith.constant dense<0.000000e+00> : vector<2x1xf32>
    %269 = vector.multi_reduction <add>, %268, %cst_92 [2] : vector<2x1x8xf32> to vector<2x1xf32>
    %270 = vector.shape_cast %269 : vector<2x1xf32> to vector<2x1x1xf32>
    %271 = tpu.reciprocal %270 {approx = true} : vector<2x1x1xf32> -> vector<2x1x1xf32>
    %272 = vector.broadcast %271 : vector<2x1x1xf32> to vector<2x1x8xf32>
    %273 = arith.mulf %268, %272 : vector<2x1x8xf32>
    "tpu.trace_start"() <{level = 10 : i32, message = "bts,bsh->bth"}> : () -> ()
    %cst_93 = arith.constant dense<0.000000e+00> : vector<2x1x32xf32>
    %274 = tpu.matmul %273, %0, %cst_93 {dimension_numbers = #tpu.dot_dimension_numbers<[2], [1], [1], [2], [0, 0, 0, 1, 1, 2], [0], [0]>} : vector<2x1x8xf32>, vector<2x8x32xf32>, vector<2x1x32xf32> -> vector<2x1x32xf32>
    "tpu.trace_stop"() : () -> ()
    %275 = vector.shape_cast %274 : vector<2x1x32xf32> to vector<2x32xf32>
    %cst_94 = arith.constant dense<0.000000e+00> : vector<2x128xf32>
    %276 = tpu.matmul %261, %8, %cst_94 {dimension_numbers = #tpu.dot_dimension_numbers<[1], [0], [0], [1], [0, 0, 1, 1], [], []>} : vector<2x32xf32>, vector<32x128xf32>, vector<2x128xf32> -> vector<2x128xf32>
    %cst_95 = arith.constant dense<0.000000e+00> : vector<2x128xf32>
    %277 = tpu.matmul %275, %9, %cst_95 {dimension_numbers = #tpu.dot_dimension_numbers<[1], [0], [0], [1], [0, 0, 1, 1], [], []>} : vector<2x32xf32>, vector<32x128xf32>, vector<2x128xf32> -> vector<2x128xf32>
    %278 = arith.addf %276, %277 : vector<2x128xf32>
    %279 = vector.broadcast %10 : vector<1x128xf32> to vector<2x128xf32>
    %280 = arith.addf %278, %279 : vector<2x128xf32>
    %cst_96 = arith.constant dense<0xFF800000> : vector<2xf32>
    %281 = vector.multi_reduction <maximumf>, %280, %cst_96 [1] : vector<2x128xf32> to vector<2xf32>
    %282 = vector.shape_cast %281 : vector<2xf32> to vector<2x1xf32>
    %283 = vector.broadcast %282 : vector<2x1xf32> to vector<2x128xf32>
    %284 = arith.subf %280, %283 : vector<2x128xf32>
    %285 = math.exp %284 : vector<2x128xf32>
    %cst_97 = arith.constant dense<0.000000e+00> : vector<2xf32>
    %286 = vector.multi_reduction <add>, %285, %cst_97 [1] : vector<2x128xf32> to vector<2xf32>
    %287 = vector.shape_cast %286 : vector<2xf32> to vector<2x1xf32>
    %288 = tpu.reciprocal %287 {approx = true} : vector<2x1xf32> -> vector<2x1xf32>
    %289 = vector.broadcast %288 : vector<2x1xf32> to vector<2x128xf32>
    %290 = arith.mulf %285, %289 : vector<2x128xf32>
    %cst_98 = arith.constant dense<0.000000e+00> : vector<2x1xf32>
    %291 = tpu.matmul %275, %11, %cst_98 {dimension_numbers = #tpu.dot_dimension_numbers<[1], [0], [0], [1], [0, 0, 1, 1], [], []>} : vector<2x32xf32>, vector<32x1xf32>, vector<2x1xf32> -> vector<2x1xf32>
    %cst_99 = arith.constant dense<0.000000e+00> : vector<2x1xf32>
    %292 = tpu.matmul %261, %12, %cst_99 {dimension_numbers = #tpu.dot_dimension_numbers<[1], [0], [0], [1], [0, 0, 1, 1], [], []>} : vector<2x32xf32>, vector<32x1xf32>, vector<2x1xf32> -> vector<2x1xf32>
    %293 = arith.addf %291, %292 : vector<2x1xf32>
    %cst_100 = arith.constant dense<0.000000e+00> : vector<2x1xf32>
    %294 = tpu.matmul %232, %13, %cst_100 {dimension_numbers = #tpu.dot_dimension_numbers<[1], [0], [0], [1], [0, 0, 1, 1], [], []>} : vector<2x16xf32>, vector<16x1xf32>, vector<2x1xf32> -> vector<2x1xf32>
    %295 = arith.addf %293, %294 : vector<2x1xf32>
    %296 = vector.broadcast %14 : vector<1x1xf32> to vector<2x1xf32>
    %297 = arith.addf %295, %296 : vector<2x1xf32>
    %298 = arith.negf %297 : vector<2x1xf32>
    %299 = math.exp %298 : vector<2x1xf32>
    %cst_101 = arith.constant 1.000000e+00 : f32
    %300 = vector.broadcast %cst_101 : f32 to vector<2x1xf32>
    %301 = arith.addf %300, %299 : vector<2x1xf32>
    %302 = arith.divf %300, %301 : vector<2x1xf32>
    %cst_102 = arith.constant 1.000000e+00 : f32
    %303 = vector.broadcast %cst_102 : f32 to vector<2x1xf32>
    %304 = arith.subf %303, %302 : vector<2x1xf32>
    %305 = vector.shape_cast %273 : vector<2x1x8xf32> to vector<2x8xf32>
    %306 = vector.broadcast %304 : vector<2x1xf32> to vector<2x8xf32>
    %307 = arith.mulf %306, %305 : vector<2x8xf32>
    %308 = vector.shape_cast %307 : vector<2x8xf32> to vector<2x1x8xf32>
    "tpu.trace_start"() <{level = 10 : i32, message = "bts,bsv->btv"}> : () -> ()
    %cst_103 = arith.constant dense<0.000000e+00> : vector<2x1x128xf32>
    %309 = tpu.matmul %308, %21, %cst_103 {dimension_numbers = #tpu.dot_dimension_numbers<[2], [1], [1], [2], [0, 0, 0, 1, 1, 2], [0], [0]>} : vector<2x1x8xf32>, vector<2x8x128xf32>, vector<2x1x128xf32> -> vector<2x1x128xf32>
    "tpu.trace_stop"() : () -> ()
    %310 = vector.shape_cast %309 : vector<2x1x128xf32> to vector<2x128xf32>
    %311 = vector.broadcast %302 : vector<2x1xf32> to vector<2x128xf32>
    %312 = arith.mulf %311, %290 : vector<2x128xf32>
    %313 = arith.addf %312, %2 : vector<2x128xf32>
    %314 = arith.addf %313, %310 : vector<2x128xf32>
    %315 = arith.index_cast %c2_i32 : i32 to index
    %c0_104 = arith.constant 0 : index
    %c0_105 = arith.constant 0 : index
    %316 = vector.load %arg17[%315, %c0_104, %c0_105] : memref<4x2x128xf32, #tpu.memory_space<vmem>>, vector<1x2x128xf32>
    %317 = vector.shape_cast %316 : vector<1x2x128xf32> to vector<2x128xf32>
    %318 = vector.shape_cast %314 : vector<2x128xf32> to vector<1x2x128xf32>
    tpu.vector_store %arg17[%315, %c0_104, %c0_105], %318 {strides = array<i32>} : memref<4x2x128xf32, #tpu.memory_space<vmem>>, vector<1x2x128xf32>,
    %cst_106 = arith.constant dense<0xFF800000> : vector<2xf32>
    %319 = vector.multi_reduction <maximumf>, %314, %cst_106 [1] : vector<2x128xf32> to vector<2xf32>
    %320 = vector.shape_cast %319 : vector<2xf32> to vector<2x1xf32>
    %321 = vector.broadcast %320 : vector<2x1xf32> to vector<2x128xf32>
    %322 = arith.cmpf oeq, %314, %321 : vector<2x128xf32>
    %c128_i32_107 = arith.constant 128 : i32
    %323 = vector.broadcast %c128_i32_107 : i32 to vector<2x128xi32>
    %324 = arith.select %322, %23, %323 : vector<2x128xi1>, vector<2x128xi32>
    %cst_108 = arith.constant dense<2147483647> : vector<2xi32>
    %325 = vector.multi_reduction <minsi>, %324, %cst_108 [1] : vector<2x128xi32> to vector<2xi32>
    %326 = vector.shape_cast %325 : vector<2xi32> to vector<2x1xi32>
    %c32_i32_109 = arith.constant 32 : i32
    %327 = vector.broadcast %c32_i32_109 : i32 to vector<2x1xi32>
    %328 = arith.cmpi sge, %326, %327 : vector<2x1xi32>
    %c1_i32_110 = arith.constant 1 : i32
    %329 = vector.broadcast %c1_i32_110 : i32 to vector<2x1xi32>
    %330 = arith.select %328, %329, %326 : vector<2x1xi1>, vector<2x1xi32>
    %331 = vector.broadcast %330 : vector<2x1xi32> to vector<2x32xi32>
    %332 = arith.cmpi eq, %331, %22 : vector<2x32xi32>
    %333 = arith.extui %332 : vector<2x32xi1> to vector<2x32xi32>
    %334 = arith.sitofp %333 : vector<2x32xi32> to vector<2x32xf32>
    %cst_111 = arith.constant dense<0.000000e+00> : vector<2x16xf32>
    %335 = tpu.matmul %334, %1, %cst_111 {dimension_numbers = #tpu.dot_dimension_numbers<[1], [0], [0], [1], [0, 0, 1, 1], [], []>} : vector<2x32xf32>, vector<32x16xf32>, vector<2x16xf32> -> vector<2x16xf32>
    %c3_i32 = arith.constant 3 : i32
    %cst_112 = arith.constant dense<0.000000e+00> : vector<2x128xf32>
    %336 = tpu.matmul %335, %3, %cst_112 {dimension_numbers = #tpu.dot_dimension_numbers<[1], [0], [0], [1], [0, 0, 1, 1], [], []>} : vector<2x16xf32>, vector<16x128xf32>, vector<2x128xf32> -> vector<2x128xf32>
    %cst_113 = arith.constant dense<0.000000e+00> : vector<2x128xf32>
    %337 = tpu.matmul %261, %4, %cst_113 {dimension_numbers = #tpu.dot_dimension_numbers<[1], [0], [0], [1], [0, 0, 1, 1], [], []>} : vector<2x32xf32>, vector<32x128xf32>, vector<2x128xf32> -> vector<2x128xf32>
    %338 = arith.addf %336, %337 : vector<2x128xf32>
    %339 = arith.addf %338, %7 : vector<2x128xf32>
    %340 = vector.extract_strided_slice %339 {offsets = [0, 0], sizes = [2, 32], strides = [1, 1]} : vector<2x128xf32> to vector<2x32xf32>
    %341 = arith.negf %340 : vector<2x32xf32>
    %342 = math.exp %341 : vector<2x32xf32>
    %cst_114 = arith.constant 1.000000e+00 : f32
    %343 = vector.broadcast %cst_114 : f32 to vector<2x32xf32>
    %344 = arith.addf %343, %342 : vector<2x32xf32>
    %345 = arith.divf %343, %344 : vector<2x32xf32>
    %346 = vector.extract_strided_slice %339 {offsets = [0, 32], sizes = [2, 32], strides = [1, 1]} : vector<2x128xf32> to vector<2x32xf32>
    %347 = arith.negf %346 : vector<2x32xf32>
    %348 = math.exp %347 : vector<2x32xf32>
    %cst_115 = arith.constant 1.000000e+00 : f32
    %349 = vector.broadcast %cst_115 : f32 to vector<2x32xf32>
    %350 = arith.addf %349, %348 : vector<2x32xf32>
    %351 = arith.divf %349, %350 : vector<2x32xf32>
    %352 = vector.extract_strided_slice %339 {offsets = [0, 64], sizes = [2, 32], strides = [1, 1]} : vector<2x128xf32> to vector<2x32xf32>
    %353 = math.tanh %352 : vector<2x32xf32>
    %354 = vector.extract_strided_slice %339 {offsets = [0, 96], sizes = [2, 32], strides = [1, 1]} : vector<2x128xf32> to vector<2x32xf32>
    %355 = arith.negf %354 : vector<2x32xf32>
    %356 = math.exp %355 : vector<2x32xf32>
    %cst_116 = arith.constant 1.000000e+00 : f32
    %357 = vector.broadcast %cst_116 : f32 to vector<2x32xf32>
    %358 = arith.addf %357, %356 : vector<2x32xf32>
    %359 = arith.divf %357, %358 : vector<2x32xf32>
    %360 = arith.mulf %351, %259 : vector<2x32xf32>
    %361 = arith.mulf %345, %353 : vector<2x32xf32>
    %362 = arith.addf %360, %361 : vector<2x32xf32>
    %363 = math.tanh %362 : vector<2x32xf32>
    %364 = arith.mulf %359, %363 : vector<2x32xf32>
    %365 = vector.shape_cast %364 : vector<2x32xf32> to vector<2x1x32xf32>
    "tpu.trace_start"() <{level = 10 : i32, message = "bth,bsh->bts"}> : () -> ()
    %cst_117 = arith.constant dense<0.000000e+00> : vector<2x1x8xf32>
    %366 = tpu.matmul %365, %0, %cst_117 {dimension_numbers = #tpu.dot_dimension_numbers<[2], [2], [1], [1], [0, 0, 0, 1, 1, 1], [0], [0]>} : vector<2x1x32xf32>, vector<2x8x32xf32>, vector<2x1x8xf32> -> vector<2x1x8xf32>
    "tpu.trace_stop"() : () -> ()
    %cst_118 = arith.constant dense<0xFF800000> : vector<2x1xf32>
    %367 = vector.multi_reduction <maximumf>, %366, %cst_118 [2] : vector<2x1x8xf32> to vector<2x1xf32>
    %368 = vector.shape_cast %367 : vector<2x1xf32> to vector<2x1x1xf32>
    %369 = vector.broadcast %368 : vector<2x1x1xf32> to vector<2x1x8xf32>
    %370 = arith.subf %366, %369 : vector<2x1x8xf32>
    %371 = math.exp %370 : vector<2x1x8xf32>
    %cst_119 = arith.constant dense<0.000000e+00> : vector<2x1xf32>
    %372 = vector.multi_reduction <add>, %371, %cst_119 [2] : vector<2x1x8xf32> to vector<2x1xf32>
    %373 = vector.shape_cast %372 : vector<2x1xf32> to vector<2x1x1xf32>
    %374 = tpu.reciprocal %373 {approx = true} : vector<2x1x1xf32> -> vector<2x1x1xf32>
    %375 = vector.broadcast %374 : vector<2x1x1xf32> to vector<2x1x8xf32>
    %376 = arith.mulf %371, %375 : vector<2x1x8xf32>
    "tpu.trace_start"() <{level = 10 : i32, message = "bts,bsh->bth"}> : () -> ()
    %cst_120 = arith.constant dense<0.000000e+00> : vector<2x1x32xf32>
    %377 = tpu.matmul %376, %0, %cst_120 {dimension_numbers = #tpu.dot_dimension_numbers<[2], [1], [1], [2], [0, 0, 0, 1, 1, 2], [0], [0]>} : vector<2x1x8xf32>, vector<2x8x32xf32>, vector<2x1x32xf32> -> vector<2x1x32xf32>
    "tpu.trace_stop"() : () -> ()
    %378 = vector.shape_cast %377 : vector<2x1x32xf32> to vector<2x32xf32>
    %cst_121 = arith.constant dense<0.000000e+00> : vector<2x128xf32>
    %379 = tpu.matmul %364, %8, %cst_121 {dimension_numbers = #tpu.dot_dimension_numbers<[1], [0], [0], [1], [0, 0, 1, 1], [], []>} : vector<2x32xf32>, vector<32x128xf32>, vector<2x128xf32> -> vector<2x128xf32>
    %cst_122 = arith.constant dense<0.000000e+00> : vector<2x128xf32>
    %380 = tpu.matmul %378, %9, %cst_122 {dimension_numbers = #tpu.dot_dimension_numbers<[1], [0], [0], [1], [0, 0, 1, 1], [], []>} : vector<2x32xf32>, vector<32x128xf32>, vector<2x128xf32> -> vector<2x128xf32>
    %381 = arith.addf %379, %380 : vector<2x128xf32>
    %382 = vector.broadcast %10 : vector<1x128xf32> to vector<2x128xf32>
    %383 = arith.addf %381, %382 : vector<2x128xf32>
    %cst_123 = arith.constant dense<0xFF800000> : vector<2xf32>
    %384 = vector.multi_reduction <maximumf>, %383, %cst_123 [1] : vector<2x128xf32> to vector<2xf32>
    %385 = vector.shape_cast %384 : vector<2xf32> to vector<2x1xf32>
    %386 = vector.broadcast %385 : vector<2x1xf32> to vector<2x128xf32>
    %387 = arith.subf %383, %386 : vector<2x128xf32>
    %388 = math.exp %387 : vector<2x128xf32>
    %cst_124 = arith.constant dense<0.000000e+00> : vector<2xf32>
    %389 = vector.multi_reduction <add>, %388, %cst_124 [1] : vector<2x128xf32> to vector<2xf32>
    %390 = vector.shape_cast %389 : vector<2xf32> to vector<2x1xf32>
    %391 = tpu.reciprocal %390 {approx = true} : vector<2x1xf32> -> vector<2x1xf32>
    %392 = vector.broadcast %391 : vector<2x1xf32> to vector<2x128xf32>
    %393 = arith.mulf %388, %392 : vector<2x128xf32>
    %cst_125 = arith.constant dense<0.000000e+00> : vector<2x1xf32>
    %394 = tpu.matmul %378, %11, %cst_125 {dimension_numbers = #tpu.dot_dimension_numbers<[1], [0], [0], [1], [0, 0, 1, 1], [], []>} : vector<2x32xf32>, vector<32x1xf32>, vector<2x1xf32> -> vector<2x1xf32>
    %cst_126 = arith.constant dense<0.000000e+00> : vector<2x1xf32>
    %395 = tpu.matmul %364, %12, %cst_126 {dimension_numbers = #tpu.dot_dimension_numbers<[1], [0], [0], [1], [0, 0, 1, 1], [], []>} : vector<2x32xf32>, vector<32x1xf32>, vector<2x1xf32> -> vector<2x1xf32>
    %396 = arith.addf %394, %395 : vector<2x1xf32>
    %cst_127 = arith.constant dense<0.000000e+00> : vector<2x1xf32>
    %397 = tpu.matmul %335, %13, %cst_127 {dimension_numbers = #tpu.dot_dimension_numbers<[1], [0], [0], [1], [0, 0, 1, 1], [], []>} : vector<2x16xf32>, vector<16x1xf32>, vector<2x1xf32> -> vector<2x1xf32>
    %398 = arith.addf %396, %397 : vector<2x1xf32>
    %399 = vector.broadcast %14 : vector<1x1xf32> to vector<2x1xf32>
    %400 = arith.addf %398, %399 : vector<2x1xf32>
    %401 = arith.negf %400 : vector<2x1xf32>
    %402 = math.exp %401 : vector<2x1xf32>
    %cst_128 = arith.constant 1.000000e+00 : f32
    %403 = vector.broadcast %cst_128 : f32 to vector<2x1xf32>
    %404 = arith.addf %403, %402 : vector<2x1xf32>
    %405 = arith.divf %403, %404 : vector<2x1xf32>
    %cst_129 = arith.constant 1.000000e+00 : f32
    %406 = vector.broadcast %cst_129 : f32 to vector<2x1xf32>
    %407 = arith.subf %406, %405 : vector<2x1xf32>
    %408 = vector.shape_cast %376 : vector<2x1x8xf32> to vector<2x8xf32>
    %409 = vector.broadcast %407 : vector<2x1xf32> to vector<2x8xf32>
    %410 = arith.mulf %409, %408 : vector<2x8xf32>
    %411 = vector.shape_cast %410 : vector<2x8xf32> to vector<2x1x8xf32>
    "tpu.trace_start"() <{level = 10 : i32, message = "bts,bsv->btv"}> : () -> ()
    %cst_130 = arith.constant dense<0.000000e+00> : vector<2x1x128xf32>
    %412 = tpu.matmul %411, %21, %cst_130 {dimension_numbers = #tpu.dot_dimension_numbers<[2], [1], [1], [2], [0, 0, 0, 1, 1, 2], [0], [0]>} : vector<2x1x8xf32>, vector<2x8x128xf32>, vector<2x1x128xf32> -> vector<2x1x128xf32>
    "tpu.trace_stop"() : () -> ()
    %413 = vector.shape_cast %412 : vector<2x1x128xf32> to vector<2x128xf32>
    %414 = vector.broadcast %405 : vector<2x1xf32> to vector<2x128xf32>
    %415 = arith.mulf %414, %393 : vector<2x128xf32>
    %416 = arith.addf %415, %2 : vector<2x128xf32>
    %417 = arith.addf %416, %413 : vector<2x128xf32>
    %418 = arith.index_cast %c3_i32 : i32 to index
    %c0_131 = arith.constant 0 : index
    %c0_132 = arith.constant 0 : index
    %419 = vector.load %arg17[%418, %c0_131, %c0_132] : memref<4x2x128xf32, #tpu.memory_space<vmem>>, vector<1x2x128xf32>
    %420 = vector.shape_cast %419 : vector<1x2x128xf32> to vector<2x128xf32>
    %421 = vector.shape_cast %417 : vector<2x128xf32> to vector<1x2x128xf32>
    tpu.vector_store %arg17[%418, %c0_131, %c0_132], %421 {strides = array<i32>} : memref<4x2x128xf32, #tpu.memory_space<vmem>>, vector<1x2x128xf32>,
    %cst_133 = arith.constant dense<0xFF800000> : vector<2xf32>
    %422 = vector.multi_reduction <maximumf>, %417, %cst_133 [1] : vector<2x128xf32> to vector<2xf32>
    %423 = vector.shape_cast %422 : vector<2xf32> to vector<2x1xf32>
    %424 = vector.broadcast %423 : vector<2x1xf32> to vector<2x128xf32>
    %425 = arith.cmpf oeq, %417, %424 : vector<2x128xf32>
    %c128_i32_134 = arith.constant 128 : i32
    %426 = vector.broadcast %c128_i32_134 : i32 to vector<2x128xi32>
    %427 = arith.select %425, %23, %426 : vector<2x128xi1>, vector<2x128xi32>
    %cst_135 = arith.constant dense<2147483647> : vector<2xi32>
    %428 = vector.multi_reduction <minsi>, %427, %cst_135 [1] : vector<2x128xi32> to vector<2xi32>
    %429 = vector.shape_cast %428 : vector<2xi32> to vector<2x1xi32>
    %c32_i32_136 = arith.constant 32 : i32
    %430 = vector.broadcast %c32_i32_136 : i32 to vector<2x1xi32>
    %431 = arith.cmpi sge, %429, %430 : vector<2x1xi32>
    %c1_i32_137 = arith.constant 1 : i32
    %432 = vector.broadcast %c1_i32_137 : i32 to vector<2x1xi32>
    %433 = arith.select %431, %432, %429 : vector<2x1xi1>, vector<2x1xi32>
    %434 = vector.broadcast %433 : vector<2x1xi32> to vector<2x32xi32>
    %435 = arith.cmpi eq, %434, %22 : vector<2x32xi32>
    %436 = arith.extui %435 : vector<2x32xi1> to vector<2x32xi32>
    %437 = arith.sitofp %436 : vector<2x32xi32> to vector<2x32xf32>
    %cst_138 = arith.constant dense<0.000000e+00> : vector<2x16xf32>
    %438 = tpu.matmul %437, %1, %cst_138 {dimension_numbers = #tpu.dot_dimension_numbers<[1], [0], [0], [1], [0, 0, 1, 1], [], []>} : vector<2x32xf32>, vector<32x16xf32>, vector<2x16xf32> -> vector<2x16xf32>
    %c4_i32 = arith.constant 4 : i32
    return
  }
}

</mosaic_0001>

<llo_original>
// kernel: pointer_generator_forward.2
$region0: #{pointer_generator_forward.2}
  #allocation0 [shape = 'u32[]', space=smem, size = 0x4, offset = 0x4, fixed_abs, tag = 'smem constant byte address 0x4 - core index']
  #allocation1 [shape = 'u32[144,128]{1,0:T(1,128)}', space=vmem, size = 0x12000, scoped, tag = 'internal scratch']
  #allocation2 [shape = 'f32[16,128]{1,0:T(8,128)}', space=vmem, size = 0x2000, scoped, tag = 'scratch operand']
  %s0 = inlined_call_operand.vmem [shape: f32[16,16], index: 0, kind: input, shape index: {}]
  %s1 = inlined_call_operand.vmem [shape: f32[16,128], index: 1, kind: input, shape index: {}]
  %s2 = inlined_call_operand.vmem [shape: f32[16,64], index: 2, kind: input, shape index: {}]
  %s3 = inlined_call_operand.vmem [shape: f32[16,64], index: 3, kind: input, shape index: {}]
  %s4 = inlined_call_operand.vmem [shape: f32[1,128], index: 4, kind: input, shape index: {}]
  %s5 = inlined_call_operand.vmem [shape: f32[8,2,16], index: 5, kind: output, shape index: {0}]
  %s6 = inlined_call_operand.vmem [shape: f32[8,2,16], index: 6, kind: output, shape index: {1}]
  %s7 = inlined_call_operand.vmem [shape: f32[2,16], index: 7, kind: output, shape index: {2}]
  %s8 = inlined_call_operand.vmem [shape: f32[2,16], index: 8, kind: output, shape index: {3}]
  %s9 = inlined_call_operand.vmem [shape: f32[2,16], index: 9, kind: output, shape index: {4}]
  %s10 = inlined_call_operand.vmem [shape: f32[2,16], index: 10, kind: output, shape index: {5}]
  %11 = xla_tuple %s5, %s6, %s7, %s8, %s9, %s10
  %s12 = sld [smem:[#allocation0]]
  $region70: #{pointer_generator_forward.2} parent=0
    _
  %s14 = ssub.s32 1, %s12
  %s15 = scalar_select 0, %s14, %s12
  // Predicated region
  $region2: #{pointer_generator_forward.2} parent=0 // pred_check
    _
  $region3: #{pointer_generator_forward.2} parent=0 // pred_check_branch
    %17 = sbr.rel (0) target = $region5
  $region4: #{pointer_generator_forward.2} parent=0 // pred_region
    _
  $region5: #{pointer_generator_forward.2} parent=0 // pred_fallthru
    _
  // Predicated region
  $region6: #{pointer_generator_forward.2} parent=0 // pred_check
    _
  $region7: #{pointer_generator_forward.2} parent=0 // pred_check_branch
    %19 = sbr.rel (0) target = $region9
  $region8: #{pointer_generator_forward.2} parent=0 // pred_region
    _
  $region9: #{pointer_generator_forward.2} parent=0 // pred_fallthru
    _
  // Predicated region
  $region10: #{pointer_generator_forward.2} parent=0 // pred_check
    _
  $region11: #{pointer_generator_forward.2} parent=0 // pred_check_branch
    %21 = sbr.rel (0) target = $region13
  $region12: #{pointer_generator_forward.2} parent=0 // pred_region
    _
  $region13: #{pointer_generator_forward.2} parent=0 // pred_fallthru
    _
  // Predicated region
  $region14: #{pointer_generator_forward.2} parent=0 // pred_check
    _
  $region15: #{pointer_generator_forward.2} parent=0 // pred_check_branch
    %23 = sbr.rel (0) target = $region17
  $region16: #{pointer_generator_forward.2} parent=0 // pred_region
    _
  $region17: #{pointer_generator_forward.2} parent=0 // pred_fallthru
    _
  // Predicated region
  $region18: #{pointer_generator_forward.2} parent=0 // pred_check
    _
  $region19: #{pointer_generator_forward.2} parent=0 // pred_check_branch
    %25 = sbr.rel (0) target = $region21
  $region20: #{pointer_generator_forward.2} parent=0 // pred_region
    _
  $region21: #{pointer_generator_forward.2} parent=0 // pred_fallthru
    _
  %v26 = vld [vmem:[%s2] sm:$0xff]
  %v27 = vld [vmem:[%s2 + $0x8] sm:$0xff]
  %v28 = vld [vmem:[%s3] sm:$0xff]
  %v29 = vld [vmem:[%s3 + $0x8] sm:$0xff]
  %v30 = vld [vmem:[%s0] sm:$0xff]
  %v31 = vld [vmem:[%s0 + $0x8] sm:$0xff]
  %v32 = vld [vmem:[%s1] sm:$0xff]
  %v33 = vld [vmem:[%s1 + $0x8] sm:$0xff]
  %v34 = vld [vmem:[%s4] sm:$0x1]
  %v36 = vlaneseq
  %v37 = vshrl.u32 %v36, 7
  %v38 = vsub.s32 0, %v37
  %v39 = vrot.slane %v34, %v38
  %vm41 = vcmask 130048
  %v43 = vsel %vm41, %v30, 0
  %v46 = vsel %vm41, %v31, 0
  %48 = vmatprep.subr.mxu0 0.0
  %49 = vmatpush1.msra.mxu0 %v32
  %50 = vmatprep.subr.mxu0 0.0
  %51 = vmatpush1.msra.mxu0 %v33
  %52 = vmatprep.subr.mxu0 0.0
  %53 = vmatpush1.msra.mxu0 0.0
  %54 = vmatprep.subr.mxu0 0.0
  %55 = vmatpush1.msra.mxu0 0.0
  %56 = vmatprep.subr.mxu0 0.0
  %57 = vmatpush1.msra.mxu0 0.0
  %58 = vmatprep.subr.mxu0 0.0
  %59 = vmatpush1.msra.mxu0 0.0
  %60 = vmatprep.subr.mxu0 0.0
  %61 = vmatpush1.msra.mxu0 0.0
  %62 = vmatprep.subr.mxu0 0.0
  %63 = vmatpush1.msra.mxu0 0.0
  %64 = vmatprep.subr.mxu0 0.0
  %65 = vmatpush1.msra.mxu0 0.0
  %66 = vmatprep.subr.mxu0 0.0
  %67 = vmatpush1.msra.mxu0 0.0
  %68 = vmatprep.subr.mxu0 0.0
  %69 = vmatpush1.msra.mxu0 0.0
  %70 = vmatprep.subr.mxu0 0.0
  %71 = vmatpush1.msra.mxu0 0.0
  %72 = vmatprep.subr.mxu0 0.0
  %73 = vmatpush1.msra.mxu0 0.0
  %74 = vmatprep.subr.mxu0 0.0
  %75 = vmatpush1.msra.mxu0 0.0
  %76 = vmatprep.subr.mxu0 0.0
  %77 = vmatpush1.msra.mxu0 0.0
  %78 = vmatprep.subr.mxu0 0.0
  %79 = vmatpush1.msra.mxu0 0.0
  %80 = vmatprep.subr.mxu0 0.0
  %81 = vmatpush1.msra.mxu0 0.0
  %82 = vmatprep.subr.mxu0 0.0
  %83 = vmatpush1.msra.mxu0 0.0
  %84 = vmatprep.subr.mxu0 0.0
  %85 = vmatpush1.msra.mxu0 0.0
  %86 = vmatprep.subr.mxu0 0.0
  %87 = vmatpush1.msra.mxu0 0.0
  %88 = vmatprep.subr.mxu0 0.0
  %89 = vmatpush1.msra.mxu0 0.0
  %90 = vmatprep.subr.mxu0 0.0
  %91 = vmatpush1.msra.mxu0 0.0
  %92 = vmatprep.subr.mxu0 0.0
  %93 = vmatpush1.msra.mxu0 0.0
  %94 = vmatprep.subr.mxu0 0.0
  %95 = vmatpush1.msra.mxu0 0.0
  %96 = vmatprep.subr.mxu0 0.0
  %97 = vmatpush1.msra.mxu0 0.0
  %98 = vmatprep.subr.mxu0 0.0
  %99 = vmatpush1.msra.mxu0 0.0
  %100 = vmatprep.subr.mxu0 0.0
  %101 = vmatpush1.msra.mxu0 0.0
  %102 = vmatprep.subr.mxu0 0.0
  %103 = vmatpush1.msra.mxu0 0.0
  %104 = vmatprep.subr.mxu0 0.0
  %105 = vmatpush1.msra.mxu0 0.0
  %106 = vmatprep.subr.mxu0 0.0
  %107 = vmatpush1.msra.mxu0 0.0
  %108 = vmatprep.subr.mxu0 0.0
  %109 = vmatpush1.msra.mxu0 0.0
  %110 = vmatprep.subr.mxu0 0.0
  %111 = vmatpush1.msra.mxu0 0.0
  %112 = vmatprep.mubr.f32.mxu0 0.0
  %113 = vmatmul.mubr.f32.gmra.mrb[0].mxu0 %v43
  %v114 = vpop.f32.mrb[0].mxu0
  %v115 = vadd.f32 %v39, %v114
  %v116 = vpop.f32.mrb[0].mxu0
  %117 = vmatprep.mubr.f32.mxu0 0.0
  %118 = vmatmul.mubr.f32.gmra.mrb[0].mxu0 %v46
  %v119 = vpop.f32.mrb[0].mxu0
  %v120 = vadd.f32 %v39, %v119
  %v121 = vpop.f32.mrb[0].mxu0
  %122 = vdwg.mxu0
  %123 = vst [vmem:[#allocation2] sm:$0xff] %v115
  %124 = vst [vmem:[#allocation2 + $0x8] sm:$0xff] %v120
  %v125 = vld [vmem:[#allocation2] sm:$0x3]
  %s126 = scalar_lea.vmem [#allocation2], 14
  %v127 = vld [vmem:[%s126] sm:$0x3]
  %v129 = vsel %vm41, 0.0, 0
  %131 = vmatprep.subr.mxu0 0.0
  %132 = vmatpush1.msra.mxu0 %v26
  %133 = vmatprep.subr.mxu0 0.0
  %134 = vmatpush1.msra.mxu0 %v27
  %135 = vmatprep.subr.mxu0 0.0
  %136 = vmatpush1.msra.mxu0 0.0
  %137 = vmatprep.subr.mxu0 0.0
  %138 = vmatpush1.msra.mxu0 0.0
  %139 = vmatprep.subr.mxu0 0.0
  %140 = vmatpush1.msra.mxu0 0.0
  %141 = vmatprep.subr.mxu0 0.0
  %142 = vmatpush1.msra.mxu0 0.0
  %143 = vmatprep.subr.mxu0 0.0
  %144 = vmatpush1.msra.mxu0 0.0
  %145 = vmatprep.subr.mxu0 0.0
  %146 = vmatpush1.msra.mxu0 0.0
  %147 = vmatprep.subr.mxu0 0.0
  %148 = vmatpush1.msra.mxu0 0.0
  %149 = vmatprep.subr.mxu0 0.0
  %150 = vmatpush1.msra.mxu0 0.0
  %151 = vmatprep.subr.mxu0 0.0
  %152 = vmatpush1.msra.mxu0 0.0
  %153 = vmatprep.subr.mxu0 0.0
  %154 = vmatpush1.msra.mxu0 0.0
  %155 = vmatprep.subr.mxu0 0.0
  %156 = vmatpush1.msra.mxu0 0.0
  %157 = vmatprep.subr.mxu0 0.0
  %158 = vmatpush1.msra.mxu0 0.0
  %159 = vmatprep.subr.mxu0 0.0
  %160 = vmatpush1.msra.mxu0 0.0
  %161 = vmatprep.subr.mxu0 0.0
  %162 = vmatpush1.msra.mxu0 0.0
  %163 = vmatprep.subr.mxu0 0.0
  %164 = vmatpush1.msra.mxu0 0.0
  %165 = vmatprep.subr.mxu0 0.0
  %166 = vmatpush1.msra.mxu0 0.0
  %167 = vmatprep.subr.mxu0 0.0
  %168 = vmatpush1.msra.mxu0 0.0
  %169 = vmatprep.subr.mxu0 0.0
  %170 = vmatpush1.msra.mxu0 0.0
  %171 = vmatprep.subr.mxu0 0.0
  %172 = vmatpush1.msra.mxu0 0.0
  %173 = vmatprep.subr.mxu0 0.0
  %174 = vmatpush1.msra.mxu0 0.0
  %175 = vmatprep.subr.mxu0 0.0
  %176 = vmatpush1.msra.mxu0 0.0
  %177 = vmatprep.subr.mxu0 0.0
  %178 = vmatpush1.msra.mxu0 0.0
  %179 = vmatprep.subr.mxu0 0.0
  %180 = vmatpush1.msra.mxu0 0.0
  %181 = vmatprep.subr.mxu0 0.0
  %182 = vmatpush1.msra.mxu0 0.0
  %183 = vmatprep.subr.mxu0 0.0
  %184 = vmatpush1.msra.mxu0 0.0
  %185 = vmatprep.subr.mxu0 0.0
  %186 = vmatpush1.msra.mxu0 0.0
  %187 = vmatprep.subr.mxu0 0.0
  %188 = vmatpush1.msra.mxu0 0.0
  %189 = vmatprep.subr.mxu0 0.0
  %190 = vmatpush1.msra.mxu0 0.0
  %191 = vmatprep.subr.mxu0 0.0
  %192 = vmatpush1.msra.mxu0 0.0
  %193 = vmatprep.subr.mxu0 0.0
  %194 = vmatpush1.msra.mxu0 0.0
  %195 = vmatprep.mubr.f32.mxu0 0.0
  %196 = vmatmul.mubr.f32.gmra.mrb[0].mxu0 %v129
  %v197 = vpop.f32.mrb[0].mxu0
  %v198 = vadd.f32 0.0, %v197
  %v199 = vpop.f32.mrb[0].mxu0
  %200 = vdwg.mxu0
  %v201 = vadd.f32 %v125, %v198
  %202 = vmatprep.subr.mxu0 0.0
  %203 = vmatpush1.msra.mxu0 %v28
  %204 = vmatprep.subr.mxu0 0.0
  %205 = vmatpush1.msra.mxu0 %v29
  %206 = vmatprep.subr.mxu0 0.0
  %207 = vmatpush1.msra.mxu0 0.0
  %208 = vmatprep.subr.mxu0 0.0
  %209 = vmatpush1.msra.mxu0 0.0
  %210 = vmatprep.subr.mxu0 0.0
  %211 = vmatpush1.msra.mxu0 0.0
  %212 = vmatprep.subr.mxu0 0.0
  %213 = vmatpush1.msra.mxu0 0.0
  %214 = vmatprep.subr.mxu0 0.0
  %215 = vmatpush1.msra.mxu0 0.0
  %216 = vmatprep.subr.mxu0 0.0
  %217 = vmatpush1.msra.mxu0 0.0
  %218 = vmatprep.subr.mxu0 0.0
  %219 = vmatpush1.msra.mxu0 0.0
  %220 = vmatprep.subr.mxu0 0.0
  %221 = vmatpush1.msra.mxu0 0.0
  %222 = vmatprep.subr.mxu0 0.0
  %223 = vmatpush1.msra.mxu0 0.0
  %224 = vmatprep.subr.mxu0 0.0
  %225 = vmatpush1.msra.mxu0 0.0
  %226 = vmatprep.subr.mxu0 0.0
  %227 = vmatpush1.msra.mxu0 0.0
  %228 = vmatprep.subr.mxu0 0.0
  %229 = vmatpush1.msra.mxu0 0.0
  %230 = vmatprep.subr.mxu0 0.0
  %231 = vmatpush1.msra.mxu0 0.0
  %232 = vmatprep.subr.mxu0 0.0
  %233 = vmatpush1.msra.mxu0 0.0
  %234 = vmatprep.subr.mxu0 0.0
  %235 = vmatpush1.msra.mxu0 0.0
  %236 = vmatprep.subr.mxu0 0.0
  %237 = vmatpush1.msra.mxu0 0.0
  %238 = vmatprep.subr.mxu0 0.0
  %239 = vmatpush1.msra.mxu0 0.0
  %240 = vmatprep.subr.mxu0 0.0
  %241 = vmatpush1.msra.mxu0 0.0
  %242 = vmatprep.subr.mxu0 0.0
  %243 = vmatpush1.msra.mxu0 0.0
  %244 = vmatprep.subr.mxu0 0.0
  %245 = vmatpush1.msra.mxu0 0.0
  %246 = vmatprep.subr.mxu0 0.0
  %247 = vmatpush1.msra.mxu0 0.0
  %248 = vmatprep.subr.mxu0 0.0
  %249 = vmatpush1.msra.mxu0 0.0
  %250 = vmatprep.subr.mxu0 0.0
  %251 = vmatpush1.msra.mxu0 0.0
  %252 = vmatprep.subr.mxu0 0.0
  %253 = vmatpush1.msra.mxu0 0.0
  %254 = vmatprep.subr.mxu0 0.0
  %255 = vmatpush1.msra.mxu0 0.0
  %256 = vmatprep.subr.mxu0 0.0
  %257 = vmatpush1.msra.mxu0 0.0
  %258 = vmatprep.subr.mxu0 0.0
  %259 = vmatpush1.msra.mxu0 0.0
  %260 = vmatprep.subr.mxu0 0.0
  %261 = vmatpush1.msra.mxu0 0.0
  %262 = vmatprep.subr.mxu0 0.0
  %263 = vmatpush1.msra.mxu0 0.0
  %264 = vmatprep.subr.mxu0 0.0
  %265 = vmatpush1.msra.mxu0 0.0
  %266 = vmatprep.mubr.f32.mxu0 0.0
  %267 = vmatmul.mubr.f32.gmra.mrb[0].mxu0 %v129
  %v268 = vpop.f32.mrb[0].mxu0
  %v269 = vadd.f32 0.0, %v268
  %v270 = vpop.f32.mrb[0].mxu0
  %271 = vdwg.mxu0
  %273 = vrot.lane.b32.xlu0 %v269, 64
  %v274 = vpop.permute.xlu0 %273
  %v276 = vadd.f32 %v127, %v274
  %v277 = vxor.u32 %v201, 2147483648
  %v278 = vmul.f32 %v277, 1.442695
  %v279 = vpow.pop %v278
  %v280 = vadd.f32 %v279, 1.0
  %v281 = vrcp.pop %v280
  %v282 = vmul.f32 1.0, %v281
  %v283 = vtanh.pop %v201
  %v284 = vmul.f32 %v282, 0.0
  %286 = vrot.lane.b32.xlu0 %v283, 96
  %v287 = vpop.permute.xlu0 %286
  %v289 = vmul.f32 %v282, %v287
  %291 = vrot.lane.b32.xlu0 %v289, 16
  %v292 = vpop.permute.xlu0 %291
  %v294 = vadd.f32 %v284, %v292
  %v295 = vtanh.pop %v294
  %297 = vrot.lane.b32.xlu0 %v295, 32
  %v298 = vpop.permute.xlu0 %297
  %v300 = vmul.f32 %v282, %v298
  %v301 = vxor.u32 %v276, 2147483648
  %v302 = vmul.f32 %v301, 1.442695
  %v303 = vpow.pop %v302
  %v304 = vadd.f32 %v303, 1.0
  %v305 = vrcp.pop %v304
  %v306 = vmul.f32 1.0, %v305
  %v307 = vtanh.pop %v276
  %v308 = vmul.f32 %v306, 0.0
  %310 = vrot.lane.b32.xlu0 %v307, 96
  %v311 = vpop.permute.xlu0 %310
  %v313 = vmul.f32 %v306, %v311
  %315 = vrot.lane.b32.xlu0 %v313, 16
  %v316 = vpop.permute.xlu0 %315
  %v318 = vadd.f32 %v308, %v316
  %v319 = vtanh.pop %v318
  %321 = vrot.lane.b32.xlu0 %v319, 32
  %v322 = vpop.permute.xlu0 %321
  %v324 = vmul.f32 %v306, %v322
  %326 = vrot.lane.b32.xlu0 %v300, 80
  %v327 = vpop.permute.xlu0 %326
  %vm329 = vcmask 123904
  %330 = vst.msk [vmem:[%s5] sm:$0x3] %vm329, %v327
  %332 = vrot.lane.b32.xlu0 %v324, 16
  %v333 = vpop.permute.xlu0 %332
  %s335 = scalar_lea.vmem %s6, 14
  %336 = vst.msk [vmem:[%s335] sm:$0x3] %vm329, %v333
  %s337 = scalar_lea.vmem [#allocation2], 2
  %v338 = vld [vmem:[%s337] sm:$0x3]
  %s339 = scalar_lea.vmem [#allocation2], 12
  %v340 = vld [vmem:[%s339] sm:$0x3]
  %v341 = vsel %vm41, %v327, 0
  %343 = vmatprep.subr.mxu0 0.0
  %344 = vmatpush1.msra.mxu0 %v26
  %345 = vmatprep.subr.mxu0 0.0
  %346 = vmatpush1.msra.mxu0 %v27
  %347 = vmatprep.subr.mxu0 0.0
  %348 = vmatpush1.msra.mxu0 0.0
  %349 = vmatprep.subr.mxu0 0.0
  %350 = vmatpush1.msra.mxu0 0.0
  %351 = vmatprep.subr.mxu0 0.0
  %352 = vmatpush1.msra.mxu0 0.0
  %353 = vmatprep.subr.mxu0 0.0
  %354 = vmatpush1.msra.mxu0 0.0
  %355 = vmatprep.subr.mxu0 0.0
  %356 = vmatpush1.msra.mxu0 0.0
  %357 = vmatprep.subr.mxu0 0.0
  %358 = vmatpush1.msra.mxu0 0.0
  %359 = vmatprep.subr.mxu0 0.0
  %360 = vmatpush1.msra.mxu0 0.0
  %361 = vmatprep.subr.mxu0 0.0
  %362 = vmatpush1.msra.mxu0 0.0
  %363 = vmatprep.subr.mxu0 0.0
  %364 = vmatpush1.msra.mxu0 0.0
  %365 = vmatprep.subr.mxu0 0.0
  %366 = vmatpush1.msra.mxu0 0.0
  %367 = vmatprep.subr.mxu0 0.0
  %368 = vmatpush1.msra.mxu0 0.0
  %369 = vmatprep.subr.mxu0 0.0
  %370 = vmatpush1.msra.mxu0 0.0
  %371 = vmatprep.subr.mxu0 0.0
  %372 = vmatpush1.msra.mxu0 0.0
  %373 = vmatprep.subr.mxu0 0.0
  %374 = vmatpush1.msra.mxu0 0.0
  %375 = vmatprep.subr.mxu0 0.0
  %376 = vmatpush1.msra.mxu0 0.0
  %377 = vmatprep.subr.mxu0 0.0
  %378 = vmatpush1.msra.mxu0 0.0
  %379 = vmatprep.subr.mxu0 0.0
  %380 = vmatpush1.msra.mxu0 0.0
  %381 = vmatprep.subr.mxu0 0.0
  %382 = vmatpush1.msra.mxu0 0.0
  %383 = vmatprep.subr.mxu0 0.0
  %384 = vmatpush1.msra.mxu0 0.0
  %385 = vmatprep.subr.mxu0 0.0
  %386 = vmatpush1.msra.mxu0 0.0
  %387 = vmatprep.subr.mxu0 0.0
  %388 = vmatpush1.msra.mxu0 0.0
  %389 = vmatprep.subr.mxu0 0.0
  %390 = vmatpush1.msra.mxu0 0.0
  %391 = vmatprep.subr.mxu0 0.0
  %392 = vmatpush1.msra.mxu0 0.0
  %393 = vmatprep.subr.mxu0 0.0
  %394 = vmatpush1.msra.mxu0 0.0
  %395 = vmatprep.subr.mxu0 0.0
  %396 = vmatpush1.msra.mxu0 0.0
  %397 = vmatprep.subr.mxu0 0.0
  %398 = vmatpush1.msra.mxu0 0.0
  %399 = vmatprep.subr.mxu0 0.0
  %400 = vmatpush1.msra.mxu0 0.0
  %401 = vmatprep.subr.mxu0 0.0
  %402 = vmatpush1.msra.mxu0 0.0
  %403 = vmatprep.subr.mxu0 0.0
  %404 = vmatpush1.msra.mxu0 0.0
  %405 = vmatprep.subr.mxu0 0.0
  %406 = vmatpush1.msra.mxu0 0.0
  %407 = vmatprep.mubr.f32.mxu0 0.0
  %408 = vmatmul.mubr.f32.gmra.mrb[0].mxu0 %v341
  %v409 = vpop.f32.mrb[0].mxu0
  %v410 = vadd.f32 0.0, %v409
  %v411 = vpop.f32.mrb[0].mxu0
  %412 = vdwg.mxu0
  %v413 = vadd.f32 %v338, %v410
  %v414 = vsel %vm41, %v333, 0
  %416 = vmatprep.subr.mxu0 0.0
  %417 = vmatpush1.msra.mxu0 %v28
  %418 = vmatprep.subr.mxu0 0.0
  %419 = vmatpush1.msra.mxu0 %v29
  %420 = vmatprep.subr.mxu0 0.0
  %421 = vmatpush1.msra.mxu0 0.0
  %422 = vmatprep.subr.mxu0 0.0
  %423 = vmatpush1.msra.mxu0 0.0
  %424 = vmatprep.subr.mxu0 0.0
  %425 = vmatpush1.msra.mxu0 0.0
  %426 = vmatprep.subr.mxu0 0.0
  %427 = vmatpush1.msra.mxu0 0.0
  %428 = vmatprep.subr.mxu0 0.0
  %429 = vmatpush1.msra.mxu0 0.0
  %430 = vmatprep.subr.mxu0 0.0
  %431 = vmatpush1.msra.mxu0 0.0
  %432 = vmatprep.subr.mxu0 0.0
  %433 = vmatpush1.msra.mxu0 0.0
  %434 = vmatprep.subr.mxu0 0.0
  %435 = vmatpush1.msra.mxu0 0.0
  %436 = vmatprep.subr.mxu0 0.0
  %437 = vmatpush1.msra.mxu0 0.0
  %438 = vmatprep.subr.mxu0 0.0
  %439 = vmatpush1.msra.mxu0 0.0
  %440 = vmatprep.subr.mxu0 0.0
  %441 = vmatpush1.msra.mxu0 0.0
  %442 = vmatprep.subr.mxu0 0.0
  %443 = vmatpush1.msra.mxu0 0.0
  %444 = vmatprep.subr.mxu0 0.0
  %445 = vmatpush1.msra.mxu0 0.0
  %446 = vmatprep.subr.mxu0 0.0
  %447 = vmatpush1.msra.mxu0 0.0
  %448 = vmatprep.subr.mxu0 0.0
  %449 = vmatpush1.msra.mxu0 0.0
  %450 = vmatprep.subr.mxu0 0.0
  %451 = vmatpush1.msra.mxu0 0.0
  %452 = vmatprep.subr.mxu0 0.0
  %453 = vmatpush1.msra.mxu0 0.0
  %454 = vmatprep.subr.mxu0 0.0
  %455 = vmatpush1.msra.mxu0 0.0
  %456 = vmatprep.subr.mxu0 0.0
  %457 = vmatpush1.msra.mxu0 0.0
  %458 = vmatprep.subr.mxu0 0.0
  %459 = vmatpush1.msra.mxu0 0.0
  %460 = vmatprep.subr.mxu0 0.0
  %461 = vmatpush1.msra.mxu0 0.0
  %462 = vmatprep.subr.mxu0 0.0
  %463 = vmatpush1.msra.mxu0 0.0
  %464 = vmatprep.subr.mxu0 0.0
  %465 = vmatpush1.msra.mxu0 0.0
  %466 = vmatprep.subr.mxu0 0.0
  %467 = vmatpush1.msra.mxu0 0.0
  %468 = vmatprep.subr.mxu0 0.0
  %469 = vmatpush1.msra.mxu0 0.0
  %470 = vmatprep.subr.mxu0 0.0
  %471 = vmatpush1.msra.mxu0 0.0
  %472 = vmatprep.subr.mxu0 0.0
  %473 = vmatpush1.msra.mxu0 0.0
  %474 = vmatprep.subr.mxu0 0.0
  %475 = vmatpush1.msra.mxu0 0.0
  %476 = vmatprep.subr.mxu0 0.0
  %477 = vmatpush1.msra.mxu0 0.0
  %478 = vmatprep.subr.mxu0 0.0
  %479 = vmatpush1.msra.mxu0 0.0
  %480 = vmatprep.mubr.f32.mxu0 0.0
  %481 = vmatmul.mubr.f32.gmra.mrb[0].mxu0 %v414
  %v482 = vpop.f32.mrb[0].mxu0
  %v483 = vadd.f32 0.0, %v482
  %v484 = vpop.f32.mrb[0].mxu0
  %485 = vdwg.mxu0
  %487 = vrot.lane.b32.xlu0 %v483, 64
  %v488 = vpop.permute.xlu0 %487
  %v490 = vadd.f32 %v340, %v488
  %v491 = vxor.u32 %v413, 2147483648
  %v492 = vmul.f32 %v491, 1.442695
  %v493 = vpow.pop %v492
  %v494 = vadd.f32 %v493, 1.0
  %v495 = vrcp.pop %v494
  %v496 = vmul.f32 1.0, %v495
  %v497 = vtanh.pop %v413
  %v498 = vmul.f32 %v496, %v294
  %500 = vrot.lane.b32.xlu0 %v497, 96
  %v501 = vpop.permute.xlu0 %500
  %v503 = vmul.f32 %v496, %v501
  %505 = vrot.lane.b32.xlu0 %v503, 16
  %v506 = vpop.permute.xlu0 %505
  %v508 = vadd.f32 %v498, %v506
  %v509 = vtanh.pop %v508
  %511 = vrot.lane.b32.xlu0 %v509, 32
  %v512 = vpop.permute.xlu0 %511
  %v514 = vmul.f32 %v496, %v512
  %v515 = vxor.u32 %v490, 2147483648
  %v516 = vmul.f32 %v515, 1.442695
  %v517 = vpow.pop %v516
  %v518 = vadd.f32 %v517, 1.0
  %v519 = vrcp.pop %v518
  %v520 = vmul.f32 1.0, %v519
  %v521 = vtanh.pop %v490
  %v522 = vmul.f32 %v520, %v318
  %524 = vrot.lane.b32.xlu0 %v521, 96
  %v525 = vpop.permute.xlu0 %524
  %v527 = vmul.f32 %v520, %v525
  %529 = vrot.lane.b32.xlu0 %v527, 16
  %v530 = vpop.permute.xlu0 %529
  %v532 = vadd.f32 %v522, %v530
  %v533 = vtanh.pop %v532
  %535 = vrot.lane.b32.xlu0 %v533, 32
  %v536 = vpop.permute.xlu0 %535
  %v538 = vmul.f32 %v520, %v536
  %540 = vrot.lane.b32.xlu0 %v514, 80
  %v541 = vpop.permute.xlu0 %540
  %s543 = scalar_lea.vmem %s5, 2
  %544 = vst.msk [vmem:[%s543] sm:$0x3] %vm329, %v541
  %546 = vrot.lane.b32.xlu0 %v538, 16
  %v547 = vpop.permute.xlu0 %546
  %s549 = scalar_lea.vmem %s6, 12
  %550 = vst.msk [vmem:[%s549] sm:$0x3] %vm329, %v547
  %s551 = scalar_lea.vmem [#allocation2], 4
  %v552 = vld [vmem:[%s551] sm:$0x3]
  %s553 = scalar_lea.vmem [#allocation2], 10
  %v554 = vld [vmem:[%s553] sm:$0x3]
  %v555 = vsel %vm41, %v541, 0
  %557 = vmatprep.subr.mxu0 0.0
  %558 = vmatpush1.msra.mxu0 %v26
  %559 = vmatprep.subr.mxu0 0.0
  %560 = vmatpush1.msra.mxu0 %v27
  %561 = vmatprep.subr.mxu0 0.0
  %562 = vmatpush1.msra.mxu0 0.0
  %563 = vmatprep.subr.mxu0 0.0
  %564 = vmatpush1.msra.mxu0 0.0
  %565 = vmatprep.subr.mxu0 0.0
  %566 = vmatpush1.msra.mxu0 0.0
  %567 = vmatprep.subr.mxu0 0.0
  %568 = vmatpush1.msra.mxu0 0.0
  %569 = vmatprep.subr.mxu0 0.0
  %570 = vmatpush1.msra.mxu0 0.0
  %571 = vmatprep.subr.mxu0 0.0
  %572 = vmatpush1.msra.mxu0 0.0
  %573 = vmatprep.subr.mxu0 0.0
  %574 = vmatpush1.msra.mxu0 0.0
  %575 = vmatprep.subr.mxu0 0.0
  %576 = vmatpush1.msra.mxu0 0.0
  %577 = vmatprep.subr.mxu0 0.0
  %578 = vmatpush1.msra.mxu0 0.0
  %579 = vmatprep.subr.mxu0 0.0
  %580 = vmatpush1.msra.mxu0 0.0
  %581 = vmatprep.subr.mxu0 0.0
  %582 = vmatpush1.msra.mxu0 0.0
  %583 = vmatprep.subr.mxu0 0.0
  %584 = vmatpush1.msra.mxu0 0.0
  %585 = vmatprep.subr.mxu0 0.0
  %586 = vmatpush1.msra.mxu0 0.0
  %587 = vmatprep.subr.mxu0 0.0
  %588 = vmatpush1.msra.mxu0 0.0
  %589 = vmatprep.subr.mxu0 0.0
  %590 = vmatpush1.msra.mxu0 0.0
  %591 = vmatprep.subr.mxu0 0.0
  %592 = vmatpush1.msra.mxu0 0.0
  %593 = vmatprep.subr.mxu0 0.0
  %594 = vmatpush1.msra.mxu0 0.0
  %595 = vmatprep.subr.mxu0 0.0
  %596 = vmatpush1.msra.mxu0 0.0
  %597 = vmatprep.subr.mxu0 0.0
  %598 = vmatpush1.msra.mxu0 0.0
  %599 = vmatprep.subr.mxu0 0.0
  %600 = vmatpush1.msra.mxu0 0.0
  %601 = vmatprep.subr.mxu0 0.0
  %602 = vmatpush1.msra.mxu0 0.0
  %603 = vmatprep.subr.mxu0 0.0
  %604 = vmatpush1.msra.mxu0 0.0
  %605 = vmatprep.subr.mxu0 0.0
  %606 = vmatpush1.msra.mxu0 0.0
  %607 = vmatprep.subr.mxu0 0.0
  %608 = vmatpush1.msra.mxu0 0.0
  %609 = vmatprep.subr.mxu0 0.0
  %610 = vmatpush1.msra.mxu0 0.0
  %611 = vmatprep.subr.mxu0 0.0
  %612 = vmatpush1.msra.mxu0 0.0
  %613 = vmatprep.subr.mxu0 0.0
  %614 = vmatpush1.msra.mxu0 0.0
  %615 = vmatprep.subr.mxu0 0.0
  %616 = vmatpush1.msra.mxu0 0.0
  %617 = vmatprep.subr.mxu0 0.0
  %618 = vmatpush1.msra.mxu0 0.0
  %619 = vmatprep.subr.mxu0 0.0
  %620 = vmatpush1.msra.mxu0 0.0
  %621 = vmatprep.mubr.f32.mxu0 0.0
  %622 = vmatmul.mubr.f32.gmra.mrb[0].mxu0 %v555
  %v623 = vpop.f32.mrb[0].mxu0
  %v624 = vadd.f32 0.0, %v623
  %v625 = vpop.f32.mrb[0].mxu0
  %626 = vdwg.mxu0
  %v627 = vadd.f32 %v552, %v624
  %v628 = vsel %vm41, %v547, 0
  %630 = vmatprep.subr.mxu0 0.0
  %631 = vmatpush1.msra.mxu0 %v28
  %632 = vmatprep.subr.mxu0 0.0
  %633 = vmatpush1.msra.mxu0 %v29
  %634 = vmatprep.subr.mxu0 0.0
  %635 = vmatpush1.msra.mxu0 0.0
  %636 = vmatprep.subr.mxu0 0.0
  %637 = vmatpush1.msra.mxu0 0.0
  %638 = vmatprep.subr.mxu0 0.0
  %639 = vmatpush1.msra.mxu0 0.0
  %640 = vmatprep.subr.mxu0 0.0
  %641 = vmatpush1.msra.mxu0 0.0
  %642 = vmatprep.subr.mxu0 0.0
  %643 = vmatpush1.msra.mxu0 0.0
  %644 = vmatprep.subr.mxu0 0.0
  %645 = vmatpush1.msra.mxu0 0.0
  %646 = vmatprep.subr.mxu0 0.0
  %647 = vmatpush1.msra.mxu0 0.0
  %648 = vmatprep.subr.mxu0 0.0
  %649 = vmatpush1.msra.mxu0 0.0
  %650 = vmatprep.subr.mxu0 0.0
  %651 = vmatpush1.msra.mxu0 0.0
  %652 = vmatprep.subr.mxu0 0.0
  %653 = vmatpush1.msra.mxu0 0.0
  %654 = vmatprep.subr.mxu0 0.0
  %655 = vmatpush1.msra.mxu0 0.0
  %656 = vmatprep.subr.mxu0 0.0
  %657 = vmatpush1.msra.mxu0 0.0
  %658 = vmatprep.subr.mxu0 0.0
  %659 = vmatpush1.msra.mxu0 0.0
  %660 = vmatprep.subr.mxu0 0.0
  %661 = vmatpush1.msra.mxu0 0.0
  %662 = vmatprep.subr.mxu0 0.0
  %663 = vmatpush1.msra.mxu0 0.0
  %664 = vmatprep.subr.mxu0 0.0
  %665 = vmatpush1.msra.mxu0 0.0
  %666 = vmatprep.subr.mxu0 0.0
  %667 = vmatpush1.msra.mxu0 0.0
  %668 = vmatprep.subr.mxu0 0.0
  %669 = vmatpush1.msra.mxu0 0.0
  %670 = vmatprep.subr.mxu0 0.0
  %671 = vmatpush1.msra.mxu0 0.0
  %672 = vmatprep.subr.mxu0 0.0
  %673 = vmatpush1.msra.mxu0 0.0
  %674 = vmatprep.subr.mxu0 0.0
  %675 = vmatpush1.msra.mxu0 0.0
  %676 = vmatprep.subr.mxu0 0.0
  %677 = vmatpush1.msra.mxu0 0.0
  %678 = vmatprep.subr.mxu0 0.0
  %679 = vmatpush1.msra.mxu0 0.0
  %680 = vmatprep.subr.mxu0 0.0
  %681 = vmatpush1.msra.mxu0 0.0
  %682 = vmatprep.subr.mxu0 0.0
  %683 = vmatpush1.msra.mxu0 0.0
  %684 = vmatprep.subr.mxu0 0.0
  %685 = vmatpush1.msra.mxu0 0.0
  %686 = vmatprep.subr.mxu0 0.0
  %687 = vmatpush1.msra.mxu0 0.0
  %688 = vmatprep.subr.mxu0 0.0
  %689 = vmatpush1.msra.mxu0 0.0
  %690 = vmatprep.subr.mxu0 0.0
  %691 = vmatpush1.msra.mxu0 0.0
  %692 = vmatprep.subr.mxu0 0.0
  %693 = vmatpush1.msra.mxu0 0.0
  %694 = vmatprep.mubr.f32.mxu0 0.0
  %695 = vmatmul.mubr.f32.gmra.mrb[0].mxu0 %v628
  %v696 = vpop.f32.mrb[0].mxu0
  %v697 = vadd.f32 0.0, %v696
  %v698 = vpop.f32.mrb[0].mxu0
  %699 = vdwg.mxu0
  %701 = vrot.lane.b32.xlu0 %v697, 64
  %v702 = vpop.permute.xlu0 %701
  %v704 = vadd.f32 %v554, %v702
  %v705 = vxor.u32 %v627, 2147483648
  %v706 = vmul.f32 %v705, 1.442695
  %v707 = vpow.pop %v706
  %v708 = vadd.f32 %v707, 1.0
  %v709 = vrcp.pop %v708
  %v710 = vmul.f32 1.0, %v709
  %v711 = vtanh.pop %v627
  %v712 = vmul.f32 %v710, %v508
  %714 = vrot.lane.b32.xlu0 %v711, 96
  %v715 = vpop.permute.xlu0 %714
  %v717 = vmul.f32 %v710, %v715
  %719 = vrot.lane.b32.xlu0 %v717, 16
  %v720 = vpop.permute.xlu0 %719
  %v722 = vadd.f32 %v712, %v720
  %v723 = vtanh.pop %v722
  %725 = vrot.lane.b32.xlu0 %v723, 32
  %v726 = vpop.permute.xlu0 %725
  %v728 = vmul.f32 %v710, %v726
  %v729 = vxor.u32 %v704, 2147483648
  %v730 = vmul.f32 %v729, 1.442695
  %v731 = vpow.pop %v730
  %v732 = vadd.f32 %v731, 1.0
  %v733 = vrcp.pop %v732
  %v734 = vmul.f32 1.0, %v733
  %v735 = vtanh.pop %v704
  %v736 = vmul.f32 %v734, %v532
  %738 = vrot.lane.b32.xlu0 %v735, 96
  %v739 = vpop.permute.xlu0 %738
  %v741 = vmul.f32 %v734, %v739
  %743 = vrot.lane.b32.xlu0 %v741, 16
  %v744 = vpop.permute.xlu0 %743
  %v746 = vadd.f32 %v736, %v744
  %v747 = vtanh.pop %v746
  %749 = vrot.lane.b32.xlu0 %v747, 32
  %v750 = vpop.permute.xlu0 %749
  %v752 = vmul.f32 %v734, %v750
  %754 = vrot.lane.b32.xlu0 %v728, 80
  %v755 = vpop.permute.xlu0 %754
  %s757 = scalar_lea.vmem %s5, 4
  %758 = vst.msk [vmem:[%s757] sm:$0x3] %vm329, %v755
  %760 = vrot.lane.b32.xlu0 %v752, 16
  %v761 = vpop.permute.xlu0 %760
  %s763 = scalar_lea.vmem %s6, 10
  %764 = vst.msk [vmem:[%s763] sm:$0x3] %vm329, %v761
  %s765 = scalar_lea.vmem [#allocation2], 6
  %v766 = vld [vmem:[%s765] sm:$0x3]
  %s767 = scalar_lea.vmem [#allocation2], 8
  %v768 = vld [vmem:[%s767] sm:$0x3]
  %v769 = vsel %vm41, %v755, 0
  %771 = vmatprep.subr.mxu0 0.0
  %772 = vmatpush1.msra.mxu0 %v26
  %773 = vmatprep.subr.mxu0 0.0
  %774 = vmatpush1.msra.mxu0 %v27
  %775 = vmatprep.subr.mxu0 0.0
  %776 = vmatpush1.msra.mxu0 0.0
  %777 = vmatprep.subr.mxu0 0.0
  %778 = vmatpush1.msra.mxu0 0.0
  %779 = vmatprep.subr.mxu0 0.0
  %780 = vmatpush1.msra.mxu0 0.0
  %781 = vmatprep.subr.mxu0 0.0
  %782 = vmatpush1.msra.mxu0 0.0
  %783 = vmatprep.subr.mxu0 0.0
  %784 = vmatpush1.msra.mxu0 0.0
  %785 = vmatprep.subr.mxu0 0.0
  %786 = vmatpush1.msra.mxu0 0.0
  %787 = vmatprep.subr.mxu0 0.0
  %788 = vmatpush1.msra.mxu0 0.0
  %789 = vmatprep.subr.mxu0 0.0
  %790 = vmatpush1.msra.mxu0 0.0
  %791 = vmatprep.subr.mxu0 0.0
  %792 = vmatpush1.msra.mxu0 0.0
  %793 = vmatprep.subr.mxu0 0.0
  %794 = vmatpush1.msra.mxu0 0.0
  %795 = vmatprep.subr.mxu0 0.0
  %796 = vmatpush1.msra.mxu0 0.0
  %797 = vmatprep.subr.mxu0 0.0
  %798 = vmatpush1.msra.mxu0 0.0
  %799 = vmatprep.subr.mxu0 0.0
  %800 = vmatpush1.msra.mxu0 0.0
  %801 = vmatprep.subr.mxu0 0.0
  %802 = vmatpush1.msra.mxu0 0.0
  %803 = vmatprep.subr.mxu0 0.0
  %804 = vmatpush1.msra.mxu0 0.0
  %805 = vmatprep.subr.mxu0 0.0
  %806 = vmatpush1.msra.mxu0 0.0
  %807 = vmatprep.subr.mxu0 0.0
  %808 = vmatpush1.msra.mxu0 0.0
  %809 = vmatprep.subr.mxu0 0.0
  %810 = vmatpush1.msra.mxu0 0.0
  %811 = vmatprep.subr.mxu0 0.0
  %812 = vmatpush1.msra.mxu0 0.0
  %813 = vmatprep.subr.mxu0 0.0
  %814 = vmatpush1.msra.mxu0 0.0
  %815 = vmatprep.subr.mxu0 0.0
  %816 = vmatpush1.msra.mxu0 0.0
  %817 = vmatprep.subr.mxu0 0.0
  %818 = vmatpush1.msra.mxu0 0.0
  %819 = vmatprep.subr.mxu0 0.0
  %820 = vmatpush1.msra.mxu0 0.0
  %821 = vmatprep.subr.mxu0 0.0
  %822 = vmatpush1.msra.mxu0 0.0
  %823 = vmatprep.subr.mxu0 0.0
  %824 = vmatpush1.msra.mxu0 0.0
  %825 = vmatprep.subr.mxu0 0.0
  %826 = vmatpush1.msra.mxu0 0.0
  %827 = vmatprep.subr.mxu0 0.0
  %828 = vmatpush1.msra.mxu0 0.0
  %829 = vmatprep.subr.mxu0 0.0
  %830 = vmatpush1.msra.mxu0 0.0
  %831 = vmatprep.subr.mxu0 0.0
  %832 = vmatpush1.msra.mxu0 0.0
  %833 = vmatprep.subr.mxu0 0.0
  %834 = vmatpush1.msra.mxu0 0.0
  %835 = vmatprep.mubr.f32.mxu0 0.0
  %836 = vmatmul.mubr.f32.gmra.mrb[0].mxu0 %v769
  %v837 = vpop.f32.mrb[0].mxu0
  %v838 = vadd.f32 0.0, %v837
  %v839 = vpop.f32.mrb[0].mxu0
  %840 = vdwg.mxu0
  %v841 = vadd.f32 %v766, %v838
  %v842 = vsel %vm41, %v761, 0
  %844 = vmatprep.subr.mxu0 0.0
  %845 = vmatpush1.msra.mxu0 %v28
  %846 = vmatprep.subr.mxu0 0.0
  %847 = vmatpush1.msra.mxu0 %v29
  %848 = vmatprep.subr.mxu0 0.0
  %849 = vmatpush1.msra.mxu0 0.0
  %850 = vmatprep.subr.mxu0 0.0
  %851 = vmatpush1.msra.mxu0 0.0
  %852 = vmatprep.subr.mxu0 0.0
  %853 = vmatpush1.msra.mxu0 0.0
  %854 = vmatprep.subr.mxu0 0.0
  %855 = vmatpush1.msra.mxu0 0.0
  %856 = vmatprep.subr.mxu0 0.0
  %857 = vmatpush1.msra.mxu0 0.0
  %858 = vmatprep.subr.mxu0 0.0
  %859 = vmatpush1.msra.mxu0 0.0
  %860 = vmatprep.subr.mxu0 0.0
  %861 = vmatpush1.msra.mxu0 0.0
  %862 = vmatprep.subr.mxu0 0.0
  %863 = vmatpush1.msra.mxu0 0.0
  %864 = vmatprep.subr.mxu0 0.0
  %865 = vmatpush1.msra.mxu0 0.0
  %866 = vmatprep.subr.mxu0 0.0
  %867 = vmatpush1.msra.mxu0 0.0
  %868 = vmatprep.subr.mxu0 0.0
  %869 = vmatpush1.msra.mxu0 0.0
  %870 = vmatprep.subr.mxu0 0.0
  %871 = vmatpush1.msra.mxu0 0.0
  %872 = vmatprep.subr.mxu0 0.0
  %873 = vmatpush1.msra.mxu0 0.0
  %874 = vmatprep.subr.mxu0 0.0
  %875 = vmatpush1.msra.mxu0 0.0
  %876 = vmatprep.subr.mxu0 0.0
  %877 = vmatpush1.msra.mxu0 0.0
  %878 = vmatprep.subr.mxu0 0.0
  %879 = vmatpush1.msra.mxu0 0.0
  %880 = vmatprep.subr.mxu0 0.0
  %881 = vmatpush1.msra.mxu0 0.0
  %882 = vmatprep.subr.mxu0 0.0
  %883 = vmatpush1.msra.mxu0 0.0
  %884 = vmatprep.subr.mxu0 0.0
  %885 = vmatpush1.msra.mxu0 0.0
  %886 = vmatprep.subr.mxu0 0.0
  %887 = vmatpush1.msra.mxu0 0.0
  %888 = vmatprep.subr.mxu0 0.0
  %889 = vmatpush1.msra.mxu0 0.0
  %890 = vmatprep.subr.mxu0 0.0
  %891 = vmatpush1.msra.mxu0 0.0
  %892 = vmatprep.subr.mxu0 0.0
  %893 = vmatpush1.msra.mxu0 0.0
  %894 = vmatprep.subr.mxu0 0.0
  %895 = vmatpush1.msra.mxu0 0.0
  %896 = vmatprep.subr.mxu0 0.0
  %897 = vmatpush1.msra.mxu0 0.0
  %898 = vmatprep.subr.mxu0 0.0
  %899 = vmatpush1.msra.mxu0 0.0
  %900 = vmatprep.subr.mxu0 0.0
  %901 = vmatpush1.msra.mxu0 0.0
  %902 = vmatprep.subr.mxu0 0.0
  %903 = vmatpush1.msra.mxu0 0.0
  %904 = vmatprep.subr.mxu0 0.0
  %905 = vmatpush1.msra.mxu0 0.0
  %906 = vmatprep.subr.mxu0 0.0
  %907 = vmatpush1.msra.mxu0 0.0
  %908 = vmatprep.mubr.f32.mxu0 0.0
  %909 = vmatmul.mubr.f32.gmra.mrb[0].mxu0 %v842
  %v910 = vpop.f32.mrb[0].mxu0
  %v911 = vadd.f32 0.0, %v910
  %v912 = vpop.f32.mrb[0].mxu0
  %913 = vdwg.mxu0
  %915 = vrot.lane.b32.xlu0 %v911, 64
  %v916 = vpop.permute.xlu0 %915
  %v918 = vadd.f32 %v768, %v916
  %v919 = vxor.u32 %v841, 2147483648
  %v920 = vmul.f32 %v919, 1.442695
  %v921 = vpow.pop %v920
  %v922 = vadd.f32 %v921, 1.0
  %v923 = vrcp.pop %v922
  %v924 = vmul.f32 1.0, %v923
  %v925 = vtanh.pop %v841
  %v926 = vmul.f32 %v924, %v722
  %928 = vrot.lane.b32.xlu0 %v925, 96
  %v929 = vpop.permute.xlu0 %928
  %v931 = vmul.f32 %v924, %v929
  %933 = vrot.lane.b32.xlu0 %v931, 16
  %v934 = vpop.permute.xlu0 %933
  %v936 = vadd.f32 %v926, %v934
  %v937 = vtanh.pop %v936
  %939 = vrot.lane.b32.xlu0 %v937, 32
  %v940 = vpop.permute.xlu0 %939
  %v942 = vmul.f32 %v924, %v940
  %v943 = vxor.u32 %v918, 2147483648
  %v944 = vmul.f32 %v943, 1.442695
  %v945 = vpow.pop %v944
  %v946 = vadd.f32 %v945, 1.0
  %v947 = vrcp.pop %v946
  %v948 = vmul.f32 1.0, %v947
  %v949 = vtanh.pop %v918
  %v950 = vmul.f32 %v948, %v746
  %952 = vrot.lane.b32.xlu0 %v949, 96
  %v953 = vpop.permute.xlu0 %952
  %v955 = vmul.f32 %v948, %v953
  %957 = vrot.lane.b32.xlu0 %v955, 16
  %v958 = vpop.permute.xlu0 %957
  %v960 = vadd.f32 %v950, %v958
  %v961 = vtanh.pop %v960
  %963 = vrot.lane.b32.xlu0 %v961, 32
  %v964 = vpop.permute.xlu0 %963
  %v966 = vmul.f32 %v948, %v964
  %968 = vrot.lane.b32.xlu0 %v942, 80
  %v969 = vpop.permute.xlu0 %968
  %s971 = scalar_lea.vmem %s5, 6
  %972 = vst.msk [vmem:[%s971] sm:$0x3] %vm329, %v969
  %974 = vrot.lane.b32.xlu0 %v966, 16
  %v975 = vpop.permute.xlu0 %974
  %s977 = scalar_lea.vmem %s6, 8
  %978 = vst.msk [vmem:[%s977] sm:$0x3] %vm329, %v975
  %v979 = vld [vmem:[%s767] sm:$0x3]
  %v980 = vld [vmem:[%s765] sm:$0x3]
  %v981 = vsel %vm41, %v969, 0
  %983 = vmatprep.subr.mxu0 0.0
  %984 = vmatpush1.msra.mxu0 %v26
  %985 = vmatprep.subr.mxu0 0.0
  %986 = vmatpush1.msra.mxu0 %v27
  %987 = vmatprep.subr.mxu0 0.0
  %988 = vmatpush1.msra.mxu0 0.0
  %989 = vmatprep.subr.mxu0 0.0
  %990 = vmatpush1.msra.mxu0 0.0
  %991 = vmatprep.subr.mxu0 0.0
  %992 = vmatpush1.msra.mxu0 0.0
  %993 = vmatprep.subr.mxu0 0.0
  %994 = vmatpush1.msra.mxu0 0.0
  %995 = vmatprep.subr.mxu0 0.0
  %996 = vmatpush1.msra.mxu0 0.0
  %997 = vmatprep.subr.mxu0 0.0
  %998 = vmatpush1.msra.mxu0 0.0
  %999 = vmatprep.subr.mxu0 0.0
  %1000 = vmatpush1.msra.mxu0 0.0
  %1001 = vmatprep.subr.mxu0 0.0
  %1002 = vmatpush1.msra.mxu0 0.0
  %1003 = vmatprep.subr.mxu0 0.0
  %1004 = vmatpush1.msra.mxu0 0.0
  %1005 = vmatprep.subr.mxu0 0.0
  %1006 = vmatpush1.msra.mxu0 0.0
  %1007 = vmatprep.subr.mxu0 0.0
  %1008 = vmatpush1.msra.mxu0 0.0
  %1009 = vmatprep.subr.mxu0 0.0
  %1010 = vmatpush1.msra.mxu0 0.0
  %1011 = vmatprep.subr.mxu0 0.0
  %1012 = vmatpush1.msra.mxu0 0.0
  %1013 = vmatprep.subr.mxu0 0.0
  %1014 = vmatpush1.msra.mxu0 0.0
  %1015 = vmatprep.subr.mxu0 0.0
  %1016 = vmatpush1.msra.mxu0 0.0
  %1017 = vmatprep.subr.mxu0 0.0
  %1018 = vmatpush1.msra.mxu0 0.0
  %1019 = vmatprep.subr.mxu0 0.0
  %1020 = vmatpush1.msra.mxu0 0.0
  %1021 = vmatprep.subr.mxu0 0.0
  %1022 = vmatpush1.msra.mxu0 0.0
  %1023 = vmatprep.subr.mxu0 0.0
  %1024 = vmatpush1.msra.mxu0 0.0
  %1025 = vmatprep.subr.mxu0 0.0
  %1026 = vmatpush1.msra.mxu0 0.0
  %1027 = vmatprep.subr.mxu0 0.0
  %1028 = vmatpush1.msra.mxu0 0.0
  %1029 = vmatprep.subr.mxu0 0.0
  %1030 = vmatpush1.msra.mxu0 0.0
  %1031 = vmatprep.subr.mxu0 0.0
  %1032 = vmatpush1.msra.mxu0 0.0
  %1033 = vmatprep.subr.mxu0 0.0
  %1034 = vmatpush1.msra.mxu0 0.0
  %1035 = vmatprep.subr.mxu0 0.0
  %1036 = vmatpush1.msra.mxu0 0.0
  %1037 = vmatprep.subr.mxu0 0.0
  %1038 = vmatpush1.msra.mxu0 0.0
  %1039 = vmatprep.subr.mxu0 0.0
  %1040 = vmatpush1.msra.mxu0 0.0
  %1041 = vmatprep.subr.mxu0 0.0
  %1042 = vmatpush1.msra.mxu0 0.0
  %1043 = vmatprep.subr.mxu0 0.0
  %1044 = vmatpush1.msra.mxu0 0.0
  %1045 = vmatprep.subr.mxu0 0.0
  %1046 = vmatpush1.msra.mxu0 0.0
  %1047 = vmatprep.mubr.f32.mxu0 0.0
  %1048 = vmatmul.mubr.f32.gmra.mrb[0].mxu0 %v981
  %v1049 = vpop.f32.mrb[0].mxu0
  %v1050 = vadd.f32 0.0, %v1049
  %v1051 = vpop.f32.mrb[0].mxu0
  %1052 = vdwg.mxu0
  %v1053 = vadd.f32 %v979, %v1050
  %v1054 = vsel %vm41, %v975, 0
  %1056 = vmatprep.subr.mxu0 0.0
  %1057 = vmatpush1.msra.mxu0 %v28
  %1058 = vmatprep.subr.mxu0 0.0
  %1059 = vmatpush1.msra.mxu0 %v29
  %1060 = vmatprep.subr.mxu0 0.0
  %1061 = vmatpush1.msra.mxu0 0.0
  %1062 = vmatprep.subr.mxu0 0.0
  %1063 = vmatpush1.msra.mxu0 0.0
  %1064 = vmatprep.subr.mxu0 0.0
  %1065 = vmatpush1.msra.mxu0 0.0
  %1066 = vmatprep.subr.mxu0 0.0
  %1067 = vmatpush1.msra.mxu0 0.0
  %1068 = vmatprep.subr.mxu0 0.0
  %1069 = vmatpush1.msra.mxu0 0.0
  %1070 = vmatprep.subr.mxu0 0.0
  %1071 = vmatpush1.msra.mxu0 0.0
  %1072 = vmatprep.subr.mxu0 0.0
  %1073 = vmatpush1.msra.mxu0 0.0
  %1074 = vmatprep.subr.mxu0 0.0
  %1075 = vmatpush1.msra.mxu0 0.0
  %1076 = vmatprep.subr.mxu0 0.0
  %1077 = vmatpush1.msra.mxu0 0.0
  %1078 = vmatprep.subr.mxu0 0.0
  %1079 = vmatpush1.msra.mxu0 0.0
  %1080 = vmatprep.subr.mxu0 0.0
  %1081 = vmatpush1.msra.mxu0 0.0
  %1082 = vmatprep.subr.mxu0 0.0
  %1083 = vmatpush1.msra.mxu0 0.0
  %1084 = vmatprep.subr.mxu0 0.0
  %1085 = vmatpush1.msra.mxu0 0.0
  %1086 = vmatprep.subr.mxu0 0.0
  %1087 = vmatpush1.msra.mxu0 0.0
  %1088 = vmatprep.subr.mxu0 0.0
  %1089 = vmatpush1.msra.mxu0 0.0
  %1090 = vmatprep.subr.mxu0 0.0
  %1091 = vmatpush1.msra.mxu0 0.0
  %1092 = vmatprep.subr.mxu0 0.0
  %1093 = vmatpush1.msra.mxu0 0.0
  %1094 = vmatprep.subr.mxu0 0.0
  %1095 = vmatpush1.msra.mxu0 0.0
  %1096 = vmatprep.subr.mxu0 0.0
  %1097 = vmatpush1.msra.mxu0 0.0
  %1098 = vmatprep.subr.mxu0 0.0
  %1099 = vmatpush1.msra.mxu0 0.0
  %1100 = vmatprep.subr.mxu0 0.0
  %1101 = vmatpush1.msra.mxu0 0.0
  %1102 = vmatprep.subr.mxu0 0.0
  %1103 = vmatpush1.msra.mxu0 0.0
  %1104 = vmatprep.subr.mxu0 0.0
  %1105 = vmatpush1.msra.mxu0 0.0
  %1106 = vmatprep.subr.mxu0 0.0
  %1107 = vmatpush1.msra.mxu0 0.0
  %1108 = vmatprep.subr.mxu0 0.0
  %1109 = vmatpush1.msra.mxu0 0.0
  %1110 = vmatprep.subr.mxu0 0.0
  %1111 = vmatpush1.msra.mxu0 0.0
  %1112 = vmatprep.subr.mxu0 0.0
  %1113 = vmatpush1.msra.mxu0 0.0
  %1114 = vmatprep.subr.mxu0 0.0
  %1115 = vmatpush1.msra.mxu0 0.0
  %1116 = vmatprep.subr.mxu0 0.0
  %1117 = vmatpush1.msra.mxu0 0.0
  %1118 = vmatprep.subr.mxu0 0.0
  %1119 = vmatpush1.msra.mxu0 0.0
  %1120 = vmatprep.mubr.f32.mxu0 0.0
  %1121 = vmatmul.mubr.f32.gmra.mrb[0].mxu0 %v1054
  %v1122 = vpop.f32.mrb[0].mxu0
  %v1123 = vadd.f32 0.0, %v1122
  %v1124 = vpop.f32.mrb[0].mxu0
  %1125 = vdwg.mxu0
  %1127 = vrot.lane.b32.xlu0 %v1123, 64
  %v1128 = vpop.permute.xlu0 %1127
  %v1130 = vadd.f32 %v980, %v1128
  %v1131 = vxor.u32 %v1053, 2147483648
  %v1132 = vmul.f32 %v1131, 1.442695
  %v1133 = vpow.pop %v1132
  %v1134 = vadd.f32 %v1133, 1.0
  %v1135 = vrcp.pop %v1134
  %v1136 = vmul.f32 1.0, %v1135
  %v1137 = vtanh.pop %v1053
  %v1138 = vmul.f32 %v1136, %v936
  %1140 = vrot.lane.b32.xlu0 %v1137, 96
  %v1141 = vpop.permute.xlu0 %1140
  %v1143 = vmul.f32 %v1136, %v1141
  %1145 = vrot.lane.b32.xlu0 %v1143, 16
  %v1146 = vpop.permute.xlu0 %1145
  %v1148 = vadd.f32 %v1138, %v1146
  %v1149 = vtanh.pop %v1148
  %1151 = vrot.lane.b32.xlu0 %v1149, 32
  %v1152 = vpop.permute.xlu0 %1151
  %v1154 = vmul.f32 %v1136, %v1152
  %v1155 = vxor.u32 %v1130, 2147483648
  %v1156 = vmul.f32 %v1155, 1.442695
  %v1157 = vpow.pop %v1156
  %v1158 = vadd.f32 %v1157, 1.0
  %v1159 = vrcp.pop %v1158
  %v1160 = vmul.f32 1.0, %v1159
  %v1161 = vtanh.pop %v1130
  %v1162 = vmul.f32 %v1160, %v960
  %1164 = vrot.lane.b32.xlu0 %v1161, 96
  %v1165 = vpop.permute.xlu0 %1164
  %v1167 = vmul.f32 %v1160, %v1165
  %1169 = vrot.lane.b32.xlu0 %v1167, 16
  %v1170 = vpop.permute.xlu0 %1169
  %v1172 = vadd.f32 %v1162, %v1170
  %v1173 = vtanh.pop %v1172
  %1175 = vrot.lane.b32.xlu0 %v1173, 32
  %v1176 = vpop.permute.xlu0 %1175
  %v1178 = vmul.f32 %v1160, %v1176
  %1180 = vrot.lane.b32.xlu0 %v1154, 80
  %v1181 = vpop.permute.xlu0 %1180
  %s1183 = scalar_lea.vmem %s5, 8
  %1184 = vst.msk [vmem:[%s1183] sm:$0x3] %vm329, %v1181
  %1186 = vrot.lane.b32.xlu0 %v1178, 16
  %v1187 = vpop.permute.xlu0 %1186
  %s1189 = scalar_lea.vmem %s6, 6
  %1190 = vst.msk [vmem:[%s1189] sm:$0x3] %vm329, %v1187
  %v1191 = vld [vmem:[%s553] sm:$0x3]
  %v1192 = vld [vmem:[%s551] sm:$0x3]
  %v1193 = vsel %vm41, %v1181, 0
  %1195 = vmatprep.subr.mxu0 0.0
  %1196 = vmatpush1.msra.mxu0 %v26
  %1197 = vmatprep.subr.mxu0 0.0
  %1198 = vmatpush1.msra.mxu0 %v27
  %1199 = vmatprep.subr.mxu0 0.0
  %1200 = vmatpush1.msra.mxu0 0.0
  %1201 = vmatprep.subr.mxu0 0.0
  %1202 = vmatpush1.msra.mxu0 0.0
  %1203 = vmatprep.subr.mxu0 0.0
  %1204 = vmatpush1.msra.mxu0 0.0
  %1205 = vmatprep.subr.mxu0 0.0
  %1206 = vmatpush1.msra.mxu0 0.0
  %1207 = vmatprep.subr.mxu0 0.0
  %1208 = vmatpush1.msra.mxu0 0.0
  %1209 = vmatprep.subr.mxu0 0.0
  %1210 = vmatpush1.msra.mxu0 0.0
  %1211 = vmatprep.subr.mxu0 0.0
  %1212 = vmatpush1.msra.mxu0 0.0
  %1213 = vmatprep.subr.mxu0 0.0
  %1214 = vmatpush1.msra.mxu0 0.0
  %1215 = vmatprep.subr.mxu0 0.0
  %1216 = vmatpush1.msra.mxu0 0.0
  %1217 = vmatprep.subr.mxu0 0.0
  %1218 = vmatpush1.msra.mxu0 0.0
  %1219 = vmatprep.subr.mxu0 0.0
  %1220 = vmatpush1.msra.mxu0 0.0
  %1221 = vmatprep.subr.mxu0 0.0
  %1222 = vmatpush1.msra.mxu0 0.0
  %1223 = vmatprep.subr.mxu0 0.0
  %1224 = vmatpush1.msra.mxu0 0.0
  %1225 = vmatprep.subr.mxu0 0.0
  %1226 = vmatpush1.msra.mxu0 0.0
  %1227 = vmatprep.subr.mxu0 0.0
  %1228 = vmatpush1.msra.mxu0 0.0
  %1229 = vmatprep.subr.mxu0 0.0
  %1230 = vmatpush1.msra.mxu0 0.0
  %1231 = vmatprep.subr.mxu0 0.0
  %1232 = vmatpush1.msra.mxu0 0.0
  %1233 = vmatprep.subr.mxu0 0.0
  %1234 = vmatpush1.msra.mxu0 0.0
  %1235 = vmatprep.subr.mxu0 0.0
  %1236 = vmatpush1.msra.mxu0 0.0
  %1237 = vmatprep.subr.mxu0 0.0
  %1238 = vmatpush1.msra.mxu0 0.0
  %1239 = vmatprep.subr.mxu0 0.0
  %1240 = vmatpush1.msra.mxu0 0.0
  %1241 = vmatprep.subr.mxu0 0.0
  %1242 = vmatpush1.msra.mxu0 0.0
  %1243 = vmatprep.subr.mxu0 0.0
  %1244 = vmatpush1.msra.mxu0 0.0
  %1245 = vmatprep.subr.mxu0 0.0
  %1246 = vmatpush1.msra.mxu0 0.0
  %1247 = vmatprep.subr.mxu0 0.0
  %1248 = vmatpush1.msra.mxu0 0.0
  %1249 = vmatprep.subr.mxu0 0.0
  %1250 = vmatpush1.msra.mxu0 0.0
  %1251 = vmatprep.subr.mxu0 0.0
  %1252 = vmatpush1.msra.mxu0 0.0
  %1253 = vmatprep.subr.mxu0 0.0
  %1254 = vmatpush1.msra.mxu0 0.0
  %1255 = vmatprep.subr.mxu0 0.0
  %1256 = vmatpush1.msra.mxu0 0.0
  %1257 = vmatprep.subr.mxu0 0.0
  %1258 = vmatpush1.msra.mxu0 0.0
  %1259 = vmatprep.mubr.f32.mxu0 0.0
  %1260 = vmatmul.mubr.f32.gmra.mrb[0].mxu0 %v1193
  %v1261 = vpop.f32.mrb[0].mxu0
  %v1262 = vadd.f32 0.0, %v1261
  %v1263 = vpop.f32.mrb[0].mxu0
  %1264 = vdwg.mxu0
  %v1265 = vadd.f32 %v1191, %v1262
  %v1266 = vsel %vm41, %v1187, 0
  %1268 = vmatprep.subr.mxu0 0.0
  %1269 = vmatpush1.msra.mxu0 %v28
  %1270 = vmatprep.subr.mxu0 0.0
  %1271 = vmatpush1.msra.mxu0 %v29
  %1272 = vmatprep.subr.mxu0 0.0
  %1273 = vmatpush1.msra.mxu0 0.0
  %1274 = vmatprep.subr.mxu0 0.0
  %1275 = vmatpush1.msra.mxu0 0.0
  %1276 = vmatprep.subr.mxu0 0.0
  %1277 = vmatpush1.msra.mxu0 0.0
  %1278 = vmatprep.subr.mxu0 0.0
  %1279 = vmatpush1.msra.mxu0 0.0
  %1280 = vmatprep.subr.mxu0 0.0
  %1281 = vmatpush1.msra.mxu0 0.0
  %1282 = vmatprep.subr.mxu0 0.0
  %1283 = vmatpush1.msra.mxu0 0.0
  %1284 = vmatprep.subr.mxu0 0.0
  %1285 = vmatpush1.msra.mxu0 0.0
  %1286 = vmatprep.subr.mxu0 0.0
  %1287 = vmatpush1.msra.mxu0 0.0
  %1288 = vmatprep.subr.mxu0 0.0
  %1289 = vmatpush1.msra.mxu0 0.0
  %1290 = vmatprep.subr.mxu0 0.0
  %1291 = vmatpush1.msra.mxu0 0.0
  %1292 = vmatprep.subr.mxu0 0.0
  %1293 = vmatpush1.msra.mxu0 0.0
  %1294 = vmatprep.subr.mxu0 0.0
  %1295 = vmatpush1.msra.mxu0 0.0
  %1296 = vmatprep.subr.mxu0 0.0
  %1297 = vmatpush1.msra.mxu0 0.0
  %1298 = vmatprep.subr.mxu0 0.0
  %1299 = vmatpush1.msra.mxu0 0.0
  %1300 = vmatprep.subr.mxu0 0.0
  %1301 = vmatpush1.msra.mxu0 0.0
  %1302 = vmatprep.subr.mxu0 0.0
  %1303 = vmatpush1.msra.mxu0 0.0
  %1304 = vmatprep.subr.mxu0 0.0
  %1305 = vmatpush1.msra.mxu0 0.0
  %1306 = vmatprep.subr.mxu0 0.0
  %1307 = vmatpush1.msra.mxu0 0.0
  %1308 = vmatprep.subr.mxu0 0.0
  %1309 = vmatpush1.msra.mxu0 0.0
  %1310 = vmatprep.subr.mxu0 0.0
  %1311 = vmatpush1.msra.mxu0 0.0
  %1312 = vmatprep.subr.mxu0 0.0
  %1313 = vmatpush1.msra.mxu0 0.0
  %1314 = vmatprep.subr.mxu0 0.0
  %1315 = vmatpush1.msra.mxu0 0.0
  %1316 = vmatprep.subr.mxu0 0.0
  %1317 = vmatpush1.msra.mxu0 0.0
  %1318 = vmatprep.subr.mxu0 0.0
  %1319 = vmatpush1.msra.mxu0 0.0
  %1320 = vmatprep.subr.mxu0 0.0
  %1321 = vmatpush1.msra.mxu0 0.0
  %1322 = vmatprep.subr.mxu0 0.0
  %1323 = vmatpush1.msra.mxu0 0.0
  %1324 = vmatprep.subr.mxu0 0.0
  %1325 = vmatpush1.msra.mxu0 0.0
  %1326 = vmatprep.subr.mxu0 0.0
  %1327 = vmatpush1.msra.mxu0 0.0
  %1328 = vmatprep.subr.mxu0 0.0
  %1329 = vmatpush1.msra.mxu0 0.0
  %1330 = vmatprep.subr.mxu0 0.0
  %1331 = vmatpush1.msra.mxu0 0.0
  %1332 = vmatprep.mubr.f32.mxu0 0.0
  %1333 = vmatmul.mubr.f32.gmra.mrb[0].mxu0 %v1266
  %v1334 = vpop.f32.mrb[0].mxu0
  %v1335 = vadd.f32 0.0, %v1334
  %v1336 = vpop.f32.mrb[0].mxu0
  %1337 = vdwg.mxu0
  %1339 = vrot.lane.b32.xlu0 %v1335, 64
  %v1340 = vpop.permute.xlu0 %1339
  %v1342 = vadd.f32 %v1192, %v1340
  %v1343 = vxor.u32 %v1265, 2147483648
  %v1344 = vmul.f32 %v1343, 1.442695
  %v1345 = vpow.pop %v1344
  %v1346 = vadd.f32 %v1345, 1.0
  %v1347 = vrcp.pop %v1346
  %v1348 = vmul.f32 1.0, %v1347
  %v1349 = vtanh.pop %v1265
  %v1350 = vmul.f32 %v1348, %v1148
  %1352 = vrot.lane.b32.xlu0 %v1349, 96
  %v1353 = vpop.permute.xlu0 %1352
  %v1355 = vmul.f32 %v1348, %v1353
  %1357 = vrot.lane.b32.xlu0 %v1355, 16
  %v1358 = vpop.permute.xlu0 %1357
  %v1360 = vadd.f32 %v1350, %v1358
  %v1361 = vtanh.pop %v1360
  %1363 = vrot.lane.b32.xlu0 %v1361, 32
  %v1364 = vpop.permute.xlu0 %1363
  %v1366 = vmul.f32 %v1348, %v1364
  %v1367 = vxor.u32 %v1342, 2147483648
  %v1368 = vmul.f32 %v1367, 1.442695
  %v1369 = vpow.pop %v1368
  %v1370 = vadd.f32 %v1369, 1.0
  %v1371 = vrcp.pop %v1370
  %v1372 = vmul.f32 1.0, %v1371
  %v1373 = vtanh.pop %v1342
  %v1374 = vmul.f32 %v1372, %v1172
  %1376 = vrot.lane.b32.xlu0 %v1373, 96
  %v1377 = vpop.permute.xlu0 %1376
  %v1379 = vmul.f32 %v1372, %v1377
  %1381 = vrot.lane.b32.xlu0 %v1379, 16
  %v1382 = vpop.permute.xlu0 %1381
  %v1384 = vadd.f32 %v1374, %v1382
  %v1385 = vtanh.pop %v1384
  %1387 = vrot.lane.b32.xlu0 %v1385, 32
  %v1388 = vpop.permute.xlu0 %1387
  %v1390 = vmul.f32 %v1372, %v1388
  %1392 = vrot.lane.b32.xlu0 %v1366, 80
  %v1393 = vpop.permute.xlu0 %1392
  %s1395 = scalar_lea.vmem %s5, 10
  %1396 = vst.msk [vmem:[%s1395] sm:$0x3] %vm329, %v1393
  %1398 = vrot.lane.b32.xlu0 %v1390, 16
  %v1399 = vpop.permute.xlu0 %1398
  %s1401 = scalar_lea.vmem %s6, 4
  %1402 = vst.msk [vmem:[%s1401] sm:$0x3] %vm329, %v1399
  %v1403 = vld [vmem:[%s339] sm:$0x3]
  %v1404 = vld [vmem:[%s337] sm:$0x3]
  %v1405 = vsel %vm41, %v1393, 0
  %1407 = vmatprep.subr.mxu0 0.0
  %1408 = vmatpush1.msra.mxu0 %v26
  %1409 = vmatprep.subr.mxu0 0.0
  %1410 = vmatpush1.msra.mxu0 %v27
  %1411 = vmatprep.subr.mxu0 0.0
  %1412 = vmatpush1.msra.mxu0 0.0
  %1413 = vmatprep.subr.mxu0 0.0
  %1414 = vmatpush1.msra.mxu0 0.0
  %1415 = vmatprep.subr.mxu0 0.0
  %1416 = vmatpush1.msra.mxu0 0.0
  %1417 = vmatprep.subr.mxu0 0.0
  %1418 = vmatpush1.msra.mxu0 0.0
  %1419 = vmatprep.subr.mxu0 0.0
  %1420 = vmatpush1.msra.mxu0 0.0
  %1421 = vmatprep.subr.mxu0 0.0
  %1422 = vmatpush1.msra.mxu0 0.0
  %1423 = vmatprep.subr.mxu0 0.0
  %1424 = vmatpush1.msra.mxu0 0.0
  %1425 = vmatprep.subr.mxu0 0.0
  %1426 = vmatpush1.msra.mxu0 0.0
  %1427 = vmatprep.subr.mxu0 0.0
  %1428 = vmatpush1.msra.mxu0 0.0
  %1429 = vmatprep.subr.mxu0 0.0
  %1430 = vmatpush1.msra.mxu0 0.0
  %1431 = vmatprep.subr.mxu0 0.0
  %1432 = vmatpush1.msra.mxu0 0.0
  %1433 = vmatprep.subr.mxu0 0.0
  %1434 = vmatpush1.msra.mxu0 0.0
  %1435 = vmatprep.subr.mxu0 0.0
  %1436 = vmatpush1.msra.mxu0 0.0
  %1437 = vmatprep.subr.mxu0 0.0
  %1438 = vmatpush1.msra.mxu0 0.0
  %1439 = vmatprep.subr.mxu0 0.0
  %1440 = vmatpush1.msra.mxu0 0.0
  %1441 = vmatprep.subr.mxu0 0.0
  %1442 = vmatpush1.msra.mxu0 0.0
  %1443 = vmatprep.subr.mxu0 0.0
  %1444 = vmatpush1.msra.mxu0 0.0
  %1445 = vmatprep.subr.mxu0 0.0
  %1446 = vmatpush1.msra.mxu0 0.0
  %1447 = vmatprep.subr.mxu0 0.0
  %1448 = vmatpush1.msra.mxu0 0.0
  %1449 = vmatprep.subr.mxu0 0.0
  %1450 = vmatpush1.msra.mxu0 0.0
  %1451 = vmatprep.subr.mxu0 0.0
  %1452 = vmatpush1.msra.mxu0 0.0
  %1453 = vmatprep.subr.mxu0 0.0
  %1454 = vmatpush1.msra.mxu0 0.0
  %1455 = vmatprep.subr.mxu0 0.0
  %1456 = vmatpush1.msra.mxu0 0.0
  %1457 = vmatprep.subr.mxu0 0.0
  %1458 = vmatpush1.msra.mxu0 0.0
  %1459 = vmatprep.subr.mxu0 0.0
  %1460 = vmatpush1.msra.mxu0 0.0
  %1461 = vmatprep.subr.mxu0 0.0
  %1462 = vmatpush1.msra.mxu0 0.0
  %1463 = vmatprep.subr.mxu0 0.0
  %1464 = vmatpush1.msra.mxu0 0.0
  %1465 = vmatprep.subr.mxu0 0.0
  %1466 = vmatpush1.msra.mxu0 0.0
  %1467 = vmatprep.subr.mxu0 0.0
  %1468 = vmatpush1.msra.mxu0 0.0
  %1469 = vmatprep.subr.mxu0 0.0
  %1470 = vmatpush1.msra.mxu0 0.0
  %1471 = vmatprep.mubr.f32.mxu0 0.0
  %1472 = vmatmul.mubr.f32.gmra.mrb[0].mxu0 %v1405
  %v1473 = vpop.f32.mrb[0].mxu0
  %v1474 = vadd.f32 0.0, %v1473
  %v1475 = vpop.f32.mrb[0].mxu0
  %1476 = vdwg.mxu0
  %v1477 = vadd.f32 %v1403, %v1474
  %v1478 = vsel %vm41, %v1399, 0
  %1480 = vmatprep.subr.mxu0 0.0
  %1481 = vmatpush1.msra.mxu0 %v28
  %1482 = vmatprep.subr.mxu0 0.0
  %1483 = vmatpush1.msra.mxu0 %v29
  %1484 = vmatprep.subr.mxu0 0.0
  %1485 = vmatpush1.msra.mxu0 0.0
  %1486 = vmatprep.subr.mxu0 0.0
  %1487 = vmatpush1.msra.mxu0 0.0
  %1488 = vmatprep.subr.mxu0 0.0
  %1489 = vmatpush1.msra.mxu0 0.0
  %1490 = vmatprep.subr.mxu0 0.0
  %1491 = vmatpush1.msra.mxu0 0.0
  %1492 = vmatprep.subr.mxu0 0.0
  %1493 = vmatpush1.msra.mxu0 0.0
  %1494 = vmatprep.subr.mxu0 0.0
  %1495 = vmatpush1.msra.mxu0 0.0
  %1496 = vmatprep.subr.mxu0 0.0
  %1497 = vmatpush1.msra.mxu0 0.0
  %1498 = vmatprep.subr.mxu0 0.0
  %1499 = vmatpush1.msra.mxu0 0.0
  %1500 = vmatprep.subr.mxu0 0.0
  %1501 = vmatpush1.msra.mxu0 0.0
  %1502 = vmatprep.subr.mxu0 0.0
  %1503 = vmatpush1.msra.mxu0 0.0
  %1504 = vmatprep.subr.mxu0 0.0
  %1505 = vmatpush1.msra.mxu0 0.0
  %1506 = vmatprep.subr.mxu0 0.0
  %1507 = vmatpush1.msra.mxu0 0.0
  %1508 = vmatprep.subr.mxu0 0.0
  %1509 = vmatpush1.msra.mxu0 0.0
  %1510 = vmatprep.subr.mxu0 0.0
  %1511 = vmatpush1.msra.mxu0 0.0
  %1512 = vmatprep.subr.mxu0 0.0
  %1513 = vmatpush1.msra.mxu0 0.0
  %1514 = vmatprep.subr.mxu0 0.0
  %1515 = vmatpush1.msra.mxu0 0.0
  %1516 = vmatprep.subr.mxu0 0.0
  %1517 = vmatpush1.msra.mxu0 0.0
  %1518 = vmatprep.subr.mxu0 0.0
  %1519 = vmatpush1.msra.mxu0 0.0
  %1520 = vmatprep.subr.mxu0 0.0
  %1521 = vmatpush1.msra.mxu0 0.0
  %1522 = vmatprep.subr.mxu0 0.0
  %1523 = vmatpush1.msra.mxu0 0.0
  %1524 = vmatprep.subr.mxu0 0.0
  %1525 = vmatpush1.msra.mxu0 0.0
  %1526 = vmatprep.subr.mxu0 0.0
  %1527 = vmatpush1.msra.mxu0 0.0
  %1528 = vmatprep.subr.mxu0 0.0
  %1529 = vmatpush1.msra.mxu0 0.0
  %1530 = vmatprep.subr.mxu0 0.0
  %1531 = vmatpush1.msra.mxu0 0.0
  %1532 = vmatprep.subr.mxu0 0.0
  %1533 = vmatpush1.msra.mxu0 0.0
  %1534 = vmatprep.subr.mxu0 0.0
  %1535 = vmatpush1.msra.mxu0 0.0
  %1536 = vmatprep.subr.mxu0 0.0
  %1537 = vmatpush1.msra.mxu0 0.0
  %1538 = vmatprep.subr.mxu0 0.0
  %1539 = vmatpush1.msra.mxu0 0.0
  %1540 = vmatprep.subr.mxu0 0.0
  %1541 = vmatpush1.msra.mxu0 0.0
  %1542 = vmatprep.subr.mxu0 0.0
  %1543 = vmatpush1.msra.mxu0 0.0
  %1544 = vmatprep.mubr.f32.mxu0 0.0
  %1545 = vmatmul.mubr.f32.gmra.mrb[0].mxu0 %v1478
  %v1546 = vpop.f32.mrb[0].mxu0
  %v1547 = vadd.f32 0.0, %v1546
  %v1548 = vpop.f32.mrb[0].mxu0
  %1549 = vdwg.mxu0
  %1551 = vrot.lane.b32.xlu0 %v1547, 64
  %v1552 = vpop.permute.xlu0 %1551
  %v1554 = vadd.f32 %v1404, %v1552
  %v1555 = vxor.u32 %v1477, 2147483648
  %v1556 = vmul.f32 %v1555, 1.442695
  %v1557 = vpow.pop %v1556
  %v1558 = vadd.f32 %v1557, 1.0
  %v1559 = vrcp.pop %v1558
  %v1560 = vmul.f32 1.0, %v1559
  %v1561 = vtanh.pop %v1477
  %v1562 = vmul.f32 %v1560, %v1360
  %1564 = vrot.lane.b32.xlu0 %v1561, 96
  %v1565 = vpop.permute.xlu0 %1564
  %v1567 = vmul.f32 %v1560, %v1565
  %1569 = vrot.lane.b32.xlu0 %v1567, 16
  %v1570 = vpop.permute.xlu0 %1569
  %v1572 = vadd.f32 %v1562, %v1570
  %v1573 = vtanh.pop %v1572
  %1575 = vrot.lane.b32.xlu0 %v1573, 32
  %v1576 = vpop.permute.xlu0 %1575
  %v1578 = vmul.f32 %v1560, %v1576
  %v1579 = vxor.u32 %v1554, 2147483648
  %v1580 = vmul.f32 %v1579, 1.442695
  %v1581 = vpow.pop %v1580
  %v1582 = vadd.f32 %v1581, 1.0
  %v1583 = vrcp.pop %v1582
  %v1584 = vmul.f32 1.0, %v1583
  %v1585 = vtanh.pop %v1554
  %v1586 = vmul.f32 %v1584, %v1384
  %1588 = vrot.lane.b32.xlu0 %v1585, 96
  %v1589 = vpop.permute.xlu0 %1588
  %v1591 = vmul.f32 %v1584, %v1589
  %1593 = vrot.lane.b32.xlu0 %v1591, 16
  %v1594 = vpop.permute.xlu0 %1593
  %v1596 = vadd.f32 %v1586, %v1594
  %v1597 = vtanh.pop %v1596
  %1599 = vrot.lane.b32.xlu0 %v1597, 32
  %v1600 = vpop.permute.xlu0 %1599
  %v1602 = vmul.f32 %v1584, %v1600
  %1604 = vrot.lane.b32.xlu0 %v1578, 80
  %v1605 = vpop.permute.xlu0 %1604
  %s1607 = scalar_lea.vmem %s5, 12
  %1608 = vst.msk [vmem:[%s1607] sm:$0x3] %vm329, %v1605
  %1610 = vrot.lane.b32.xlu0 %v1602, 16
  %v1611 = vpop.permute.xlu0 %1610
  %s1613 = scalar_lea.vmem %s6, 2
  %1614 = vst.msk [vmem:[%s1613] sm:$0x3] %vm329, %v1611
  %v1615 = vld [vmem:[%s126] sm:$0x3]
  %v1616 = vld [vmem:[#allocation2] sm:$0x3]
  %v1617 = vsel %vm41, %v1605, 0
  %1619 = vmatprep.subr.mxu0 0.0
  %1620 = vmatpush1.msra.mxu0 %v26
  %1621 = vmatprep.subr.mxu0 0.0
  %1622 = vmatpush1.msra.mxu0 %v27
  %1623 = vmatprep.subr.mxu0 0.0
  %1624 = vmatpush1.msra.mxu0 0.0
  %1625 = vmatprep.subr.mxu0 0.0
  %1626 = vmatpush1.msra.mxu0 0.0
  %1627 = vmatprep.subr.mxu0 0.0
  %1628 = vmatpush1.msra.mxu0 0.0
  %1629 = vmatprep.subr.mxu0 0.0
  %1630 = vmatpush1.msra.mxu0 0.0
  %1631 = vmatprep.subr.mxu0 0.0
  %1632 = vmatpush1.msra.mxu0 0.0
  %1633 = vmatprep.subr.mxu0 0.0
  %1634 = vmatpush1.msra.mxu0 0.0
  %1635 = vmatprep.subr.mxu0 0.0
  %1636 = vmatpush1.msra.mxu0 0.0
  %1637 = vmatprep.subr.mxu0 0.0
  %1638 = vmatpush1.msra.mxu0 0.0
  %1639 = vmatprep.subr.mxu0 0.0
  %1640 = vmatpush1.msra.mxu0 0.0
  %1641 = vmatprep.subr.mxu0 0.0
  %1642 = vmatpush1.msra.mxu0 0.0
  %1643 = vmatprep.subr.mxu0 0.0
  %1644 = vmatpush1.msra.mxu0 0.0
  %1645 = vmatprep.subr.mxu0 0.0
  %1646 = vmatpush1.msra.mxu0 0.0
  %1647 = vmatprep.subr.mxu0 0.0
  %1648 = vmatpush1.msra.mxu0 0.0
  %1649 = vmatprep.subr.mxu0 0.0
  %1650 = vmatpush1.msra.mxu0 0.0
  %1651 = vmatprep.subr.mxu0 0.0
  %1652 = vmatpush1.msra.mxu0 0.0
  %1653 = vmatprep.subr.mxu0 0.0
  %1654 = vmatpush1.msra.mxu0 0.0
  %1655 = vmatprep.subr.mxu0 0.0
  %1656 = vmatpush1.msra.mxu0 0.0
  %1657 = vmatprep.subr.mxu0 0.0
  %1658 = vmatpush1.msra.mxu0 0.0
  %1659 = vmatprep.subr.mxu0 0.0
  %1660 = vmatpush1.msra.mxu0 0.0
  %1661 = vmatprep.subr.mxu0 0.0
  %1662 = vmatpush1.msra.mxu0 0.0
  %1663 = vmatprep.subr.mxu0 0.0
  %1664 = vmatpush1.msra.mxu0 0.0
  %1665 = vmatprep.subr.mxu0 0.0
  %1666 = vmatpush1.msra.mxu0 0.0
  %1667 = vmatprep.subr.mxu0 0.0
  %1668 = vmatpush1.msra.mxu0 0.0
  %1669 = vmatprep.subr.mxu0 0.0
  %1670 = vmatpush1.msra.mxu0 0.0
  %1671 = vmatprep.subr.mxu0 0.0
  %1672 = vmatpush1.msra.mxu0 0.0
  %1673 = vmatprep.subr.mxu0 0.0
  %1674 = vmatpush1.msra.mxu0 0.0
  %1675 = vmatprep.subr.mxu0 0.0
  %1676 = vmatpush1.msra.mxu0 0.0
  %1677 = vmatprep.subr.mxu0 0.0
  %1678 = vmatpush1.msra.mxu0 0.0
  %1679 = vmatprep.subr.mxu0 0.0
  %1680 = vmatpush1.msra.mxu0 0.0
  %1681 = vmatprep.subr.mxu0 0.0
  %1682 = vmatpush1.msra.mxu0 0.0
  %1683 = vmatprep.mubr.f32.mxu0 0.0
  %1684 = vmatmul.mubr.f32.gmra.mrb[0].mxu0 %v1617
  %v1685 = vpop.f32.mrb[0].mxu0
  %v1686 = vadd.f32 0.0, %v1685
  %v1687 = vpop.f32.mrb[0].mxu0
  %1688 = vdwg.mxu0
  %v1689 = vadd.f32 %v1615, %v1686
  %v1690 = vsel %vm41, %v1611, 0
  %1692 = vmatprep.subr.mxu0 0.0
  %1693 = vmatpush1.msra.mxu0 %v28
  %1694 = vmatprep.subr.mxu0 0.0
  %1695 = vmatpush1.msra.mxu0 %v29
  %1696 = vmatprep.subr.mxu0 0.0
  %1697 = vmatpush1.msra.mxu0 0.0
  %1698 = vmatprep.subr.mxu0 0.0
  %1699 = vmatpush1.msra.mxu0 0.0
  %1700 = vmatprep.subr.mxu0 0.0
  %1701 = vmatpush1.msra.mxu0 0.0
  %1702 = vmatprep.subr.mxu0 0.0
  %1703 = vmatpush1.msra.mxu0 0.0
  %1704 = vmatprep.subr.mxu0 0.0
  %1705 = vmatpush1.msra.mxu0 0.0
  %1706 = vmatprep.subr.mxu0 0.0
  %1707 = vmatpush1.msra.mxu0 0.0
  %1708 = vmatprep.subr.mxu0 0.0
  %1709 = vmatpush1.msra.mxu0 0.0
  %1710 = vmatprep.subr.mxu0 0.0
  %1711 = vmatpush1.msra.mxu0 0.0
  %1712 = vmatprep.subr.mxu0 0.0
  %1713 = vmatpush1.msra.mxu0 0.0
  %1714 = vmatprep.subr.mxu0 0.0
  %1715 = vmatpush1.msra.mxu0 0.0
  %1716 = vmatprep.subr.mxu0 0.0
  %1717 = vmatpush1.msra.mxu0 0.0
  %1718 = vmatprep.subr.mxu0 0.0
  %1719 = vmatpush1.msra.mxu0 0.0
  %1720 = vmatprep.subr.mxu0 0.0
  %1721 = vmatpush1.msra.mxu0 0.0
  %1722 = vmatprep.subr.mxu0 0.0
  %1723 = vmatpush1.msra.mxu0 0.0
  %1724 = vmatprep.subr.mxu0 0.0
  %1725 = vmatpush1.msra.mxu0 0.0
  %1726 = vmatprep.subr.mxu0 0.0
  %1727 = vmatpush1.msra.mxu0 0.0
  %1728 = vmatprep.subr.mxu0 0.0
  %1729 = vmatpush1.msra.mxu0 0.0
  %1730 = vmatprep.subr.mxu0 0.0
  %1731 = vmatpush1.msra.mxu0 0.0
  %1732 = vmatprep.subr.mxu0 0.0
  %1733 = vmatpush1.msra.mxu0 0.0
  %1734 = vmatprep.subr.mxu0 0.0
  %1735 = vmatpush1.msra.mxu0 0.0
  %1736 = vmatprep.subr.mxu0 0.0
  %1737 = vmatpush1.msra.mxu0 0.0
  %1738 = vmatprep.subr.mxu0 0.0
  %1739 = vmatpush1.msra.mxu0 0.0
  %1740 = vmatprep.subr.mxu0 0.0
  %1741 = vmatpush1.msra.mxu0 0.0
  %1742 = vmatprep.subr.mxu0 0.0
  %1743 = vmatpush1.msra.mxu0 0.0
  %1744 = vmatprep.subr.mxu0 0.0
  %1745 = vmatpush1.msra.mxu0 0.0
  %1746 = vmatprep.subr.mxu0 0.0
  %1747 = vmatpush1.msra.mxu0 0.0
  %1748 = vmatprep.subr.mxu0 0.0
  %1749 = vmatpush1.msra.mxu0 0.0
  %1750 = vmatprep.subr.mxu0 0.0
  %1751 = vmatpush1.msra.mxu0 0.0
  %1752 = vmatprep.subr.mxu0 0.0
  %1753 = vmatpush1.msra.mxu0 0.0
  %1754 = vmatprep.subr.mxu0 0.0
  %1755 = vmatpush1.msra.mxu0 0.0
  %1756 = vmatprep.mubr.f32.mxu0 0.0
  %1757 = vmatmul.mubr.f32.gmra.mrb[0].mxu0 %v1690
  %v1758 = vpop.f32.mrb[0].mxu0
  %v1759 = vadd.f32 0.0, %v1758
  %v1760 = vpop.f32.mrb[0].mxu0
  %1761 = vdwg.mxu0
  %1763 = vrot.lane.b32.xlu0 %v1759, 64
  %v1764 = vpop.permute.xlu0 %1763
  %v1766 = vadd.f32 %v1616, %v1764
  %v1767 = vxor.u32 %v1689, 2147483648
  %v1768 = vmul.f32 %v1767, 1.442695
  %v1769 = vpow.pop %v1768
  %v1770 = vadd.f32 %v1769, 1.0
  %v1771 = vrcp.pop %v1770
  %v1772 = vmul.f32 1.0, %v1771
  %v1773 = vtanh.pop %v1689
  %v1774 = vmul.f32 %v1772, %v1572
  %1776 = vrot.lane.b32.xlu0 %v1773, 96
  %v1777 = vpop.permute.xlu0 %1776
  %v1779 = vmul.f32 %v1772, %v1777
  %1781 = vrot.lane.b32.xlu0 %v1779, 16
  %v1782 = vpop.permute.xlu0 %1781
  %v1784 = vadd.f32 %v1774, %v1782
  %v1785 = vtanh.pop %v1784
  %1787 = vrot.lane.b32.xlu0 %v1785, 32
  %v1788 = vpop.permute.xlu0 %1787
  %v1790 = vmul.f32 %v1772, %v1788
  %v1791 = vxor.u32 %v1766, 2147483648
  %v1792 = vmul.f32 %v1791, 1.442695
  %v1793 = vpow.pop %v1792
  %v1794 = vadd.f32 %v1793, 1.0
  %v1795 = vrcp.pop %v1794
  %v1796 = vmul.f32 1.0, %v1795
  %v1797 = vtanh.pop %v1766
  %v1798 = vmul.f32 %v1796, %v1596
  %1800 = vrot.lane.b32.xlu0 %v1797, 96
  %v1801 = vpop.permute.xlu0 %1800
  %v1803 = vmul.f32 %v1796, %v1801
  %1805 = vrot.lane.b32.xlu0 %v1803, 16
  %v1806 = vpop.permute.xlu0 %1805
  %v1808 = vadd.f32 %v1798, %v1806
  %v1809 = vtanh.pop %v1808
  %1811 = vrot.lane.b32.xlu0 %v1809, 32
  %v1812 = vpop.permute.xlu0 %1811
  %v1814 = vmul.f32 %v1796, %v1812
  %1816 = vrot.lane.b32.xlu0 %v1790, 80
  %v1817 = vpop.permute.xlu0 %1816
  %s1819 = scalar_lea.vmem %s5, 14
  %1820 = vst.msk [vmem:[%s1819] sm:$0x3] %vm329, %v1817
  %1822 = vrot.lane.b32.xlu0 %v1814, 16
  %v1823 = vpop.permute.xlu0 %1822
  %1825 = vst.msk [vmem:[%s6] sm:$0x3] %vm329, %v1823
  %1826 = vst.msk [vmem:[%s7] sm:$0x3] %vm329, %v1817
  %1828 = vrot.lane.b32.xlu0 %v1784, 112
  %v1829 = vpop.permute.xlu0 %1828
  %1831 = vst.msk [vmem:[%s8] sm:$0x3] %vm329, %v1829
  %1832 = vst.msk [vmem:[%s9] sm:$0x3] %vm329, %v1823
  %1834 = vrot.lane.b32.xlu0 %v1808, 48
  %v1835 = vpop.permute.xlu0 %1834
  %1837 = vst.msk [vmem:[%s10] sm:$0x3] %vm329, %v1835
  // Predicated region
  $region22: #{pointer_generator_forward.2} parent=0 // pred_check
    _
  $region23: #{pointer_generator_forward.2} parent=0 // pred_check_branch
    %1839 = sbr.rel (0) target = $region25
  $region24: #{pointer_generator_forward.2} parent=0 // pred_region
    _
  $region25: #{pointer_generator_forward.2} parent=0 // pred_fallthru
    _
  // Predicated region
  $region26: #{pointer_generator_forward.2} parent=0 // pred_check
    _
  $region27: #{pointer_generator_forward.2} parent=0 // pred_check_branch
    %1841 = sbr.rel (0) target = $region29
  $region28: #{pointer_generator_forward.2} parent=0 // pred_region
    _
  $region29: #{pointer_generator_forward.2} parent=0 // pred_fallthru
    _
  // Predicated region
  $region30: #{pointer_generator_forward.2} parent=0 // pred_check
    _
  $region31: #{pointer_generator_forward.2} parent=0 // pred_check_branch
    %1843 = sbr.rel (0) target = $region33
  $region32: #{pointer_generator_forward.2} parent=0 // pred_region
    _
  $region33: #{pointer_generator_forward.2} parent=0 // pred_fallthru
    _
  // Predicated region
  $region34: #{pointer_generator_forward.2} parent=0 // pred_check
    _
  $region35: #{pointer_generator_forward.2} parent=0 // pred_check_branch
    %1845 = sbr.rel (0) target = $region37
  $region36: #{pointer_generator_forward.2} parent=0 // pred_region
    _
  $region37: #{pointer_generator_forward.2} parent=0 // pred_fallthru
    _
  // Predicated region
  $region38: #{pointer_generator_forward.2} parent=0 // pred_check
    _
  $region39: #{pointer_generator_forward.2} parent=0 // pred_check_branch
    %1847 = sbr.rel (0) target = $region41
  $region40: #{pointer_generator_forward.2} parent=0 // pred_region
    _
  $region41: #{pointer_generator_forward.2} parent=0 // pred_fallthru
    _
  // Predicated region
  $region42: #{pointer_generator_forward.2} parent=0 // pred_check
    _
  $region43: #{pointer_generator_forward.2} parent=0 // pred_check_branch
    %1849 = sbr.rel (0) target = $region45
  $region44: #{pointer_generator_forward.2} parent=0 // pred_region
    _
  $region45: #{pointer_generator_forward.2} parent=0 // pred_fallthru
    _
  // Predicated region
  $region46: #{pointer_generator_forward.2} parent=0 // pred_check
    _
  $region47: #{pointer_generator_forward.2} parent=0 // pred_check_branch
    %1851 = sbr.rel (0) target = $region49
  $region48: #{pointer_generator_forward.2} parent=0 // pred_region
    _
  $region49: #{pointer_generator_forward.2} parent=0 // pred_fallthru
    _
  // Predicated region
  $region50: #{pointer_generator_forward.2} parent=0 // pred_check
    _
  $region51: #{pointer_generator_forward.2} parent=0 // pred_check_branch
    %1853 = sbr.rel (0) target = $region53
  $region52: #{pointer_generator_forward.2} parent=0 // pred_region
    _
  $region53: #{pointer_generator_forward.2} parent=0 // pred_fallthru
    _
  // Predicated region
  $region54: #{pointer_generator_forward.2} parent=0 // pred_check
    _
  $region55: #{pointer_generator_forward.2} parent=0 // pred_check_branch
    %1855 = sbr.rel (0) target = $region57
  $region56: #{pointer_generator_forward.2} parent=0 // pred_region
    _
  $region57: #{pointer_generator_forward.2} parent=0 // pred_fallthru
    _
  // Predicated region
  $region58: #{pointer_generator_forward.2} parent=0 // pred_check
    _
  $region59: #{pointer_generator_forward.2} parent=0 // pred_check_branch
    %1857 = sbr.rel (0) target = $region61
  $region60: #{pointer_generator_forward.2} parent=0 // pred_region
    _
  $region61: #{pointer_generator_forward.2} parent=0 // pred_fallthru
    _
  // Predicated region
  $region62: #{pointer_generator_forward.2} parent=0 // pred_check
    _
  $region63: #{pointer_generator_forward.2} parent=0 // pred_check_branch
    %1859 = sbr.rel (0) target = $region65
  $region64: #{pointer_generator_forward.2} parent=0 // pred_region
    _
  $region65: #{pointer_generator_forward.2} parent=0 // pred_fallthru
    _
  // Predicated region
  $region66: #{pointer_generator_forward.2} parent=0 // pred_check
    _
  $region67: #{pointer_generator_forward.2} parent=0 // pred_check_branch
    %1861 = sbr.rel (0) target = $region69
  $region68: #{pointer_generator_forward.2} parent=0 // pred_region
    _
  $region69: #{pointer_generator_forward.2} parent=0 // pred_fallthru
    _

// kernel: pointer_generator_forward.3
$region0: #{pointer_generator_forward.3}
  #allocation0 [shape = 'u32[]', space=smem, size = 0x4, offset = 0x4, fixed_abs, tag = 'smem constant byte address 0x4 - core index']
  #allocation1 [shape = 'u32[144,128]{1,0:T(1,128)}', space=vmem, size = 0x12000, scoped, tag = 'internal scratch']
  #allocation2 [shape = 'f32[1,1]{1,0:T(1,128)S(1)}', space=vmem, size = 0x200, scoped, tag = 'scoped memory for pointer_generator_forward.3']
  %s0 = inlined_call_operand.vmem [shape: f32[2,8,32], index: 0, kind: input, shape index: {}]
  %s1 = inlined_call_operand.vmem [shape: s32[2,8], index: 1, kind: input, shape index: {}]
  %s2 = inlined_call_operand.vmem [shape: f32[2,128], index: 2, kind: input, shape index: {}]
  %s3 = inlined_call_operand.vmem [shape: f32[32,16], index: 3, kind: input, shape index: {}]
  %s4 = inlined_call_operand.vmem [shape: f32[2,32], index: 4, kind: input, shape index: {}]
  %s5 = inlined_call_operand.vmem [shape: f32[2,32], index: 5, kind: input, shape index: {}]
  %s6 = inlined_call_operand.vmem [shape: f32[2,16], index: 6, kind: input, shape index: {}]
  %s7 = inlined_call_operand.vmem [shape: f32[16,128], index: 7, kind: input, shape index: {}]
  %s8 = inlined_call_operand.vmem [shape: f32[32,128], index: 8, kind: input, shape index: {}]
  %s9 = inlined_call_operand.vmem [shape: f32[1,128], index: 9, kind: input, shape index: {}]
  %s10 = inlined_call_operand.vmem [shape: f32[32,128], index: 10, kind: input, shape index: {}]
  %s11 = inlined_call_operand.vmem [shape: f32[32,128], index: 11, kind: input, shape index: {}]
  %s12 = inlined_call_operand.vmem [shape: f32[1,128], index: 12, kind: input, shape index: {}]
  %s13 = inlined_call_operand.vmem [shape: f32[32,1], index: 13, kind: input, shape index: {}]
  %s14 = inlined_call_operand.vmem [shape: f32[32,1], index: 14, kind: input, shape index: {}]
  %s15 = inlined_call_operand.vmem [shape: f32[16,1], index: 15, kind: input, shape index: {}]
  %s16 = inlined_call_operand.<no memory space> [shape: f32[1,1], index: 16, kind: input, shape index: {}]
  %s17 = inlined_call_operand.vmem [shape: f32[4,2,128], index: 17, kind: output, shape index: {}]
  %s18 = sld [smem:[#allocation0]]
  $region78: #{pointer_generator_forward.3} parent=0
    _
  %s20 = ssub.s32 1, %s18
  %s21 = scalar_select 0, %s20, %s18
  %v22 = vstv %s16
  %23 = vst [vmem:[#allocation2] sm:$0x1] %v22
  // Predicated region
  $region2: #{pointer_generator_forward.3} parent=0 // pred_check
    _
  $region3: #{pointer_generator_forward.3} parent=0 // pred_check_branch
    %25 = sbr.rel (0) target = $region5
  $region4: #{pointer_generator_forward.3} parent=0 // pred_region
    _
  $region5: #{pointer_generator_forward.3} parent=0 // pred_fallthru
    _
  // Predicated region
  $region6: #{pointer_generator_forward.3} parent=0 // pred_check
    _
  $region7: #{pointer_generator_forward.3} parent=0 // pred_check_branch
    %27 = sbr.rel (0) target = $region9
  $region8: #{pointer_generator_forward.3} parent=0 // pred_region
    _
  $region9: #{pointer_generator_forward.3} parent=0 // pred_fallthru
    _
  // Predicated region
  $region10: #{pointer_generator_forward.3} parent=0 // pred_check
    _
  $region11: #{pointer_generator_forward.3} parent=0 // pred_check_branch
    %29 = sbr.rel (0) target = $region13
  $region12: #{pointer_generator_forward.3} parent=0 // pred_region
    _
  $region13: #{pointer_generator_forward.3} parent=0 // pred_fallthru
    _
  // Predicated region
  $region14: #{pointer_generator_forward.3} parent=0 // pred_check
    _
  $region15: #{pointer_generator_forward.3} parent=0 // pred_check_branch
    %31 = sbr.rel (0) target = $region17
  $region16: #{pointer_generator_forward.3} parent=0 // pred_region
    _
  $region17: #{pointer_generator_forward.3} parent=0 // pred_fallthru
    _
  // Predicated region
  $region18: #{pointer_generator_forward.3} parent=0 // pred_check
    _
  $region19: #{pointer_generator_forward.3} parent=0 // pred_check_branch
    %33 = sbr.rel (0) target = $region21
  $region20: #{pointer_generator_forward.3} parent=0 // pred_region
    _
  $region21: #{pointer_generator_forward.3} parent=0 // pred_fallthru
    _
  // Predicated region
  $region22: #{pointer_generator_forward.3} parent=0 // pred_check
    _
  $region23: #{pointer_generator_forward.3} parent=0 // pred_check_branch
    %35 = sbr.rel (0) target = $region25
  $region24: #{pointer_generator_forward.3} parent=0 // pred_region
    _
  $region25: #{pointer_generator_forward.3} parent=0 // pred_fallthru
    _
  // Predicated region
  $region26: #{pointer_generator_forward.3} parent=0 // pred_check
    _
  $region27: #{pointer_generator_forward.3} parent=0 // pred_check_branch
    %37 = sbr.rel (0) target = $region29
  $region28: #{pointer_generator_forward.3} parent=0 // pred_region
    _
  $region29: #{pointer_generator_forward.3} parent=0 // pred_fallthru
    _
  // Predicated region
  $region30: #{pointer_generator_forward.3} parent=0 // pred_check
    _
  $region31: #{pointer_generator_forward.3} parent=0 // pred_check_branch
    %39 = sbr.rel (0) target = $region33
  $region32: #{pointer_generator_forward.3} parent=0 // pred_region
    _
  $region33: #{pointer_generator_forward.3} parent=0 // pred_fallthru
    _
  // Predicated region
  $region34: #{pointer_generator_forward.3} parent=0 // pred_check
    _
  $region35: #{pointer_generator_forward.3} parent=0 // pred_check_branch
    %41 = sbr.rel (0) target = $region37
  $region36: #{pointer_generator_forward.3} parent=0 // pred_region
    _
  $region37: #{pointer_generator_forward.3} parent=0 // pred_fallthru
    _
  // Predicated region
  $region38: #{pointer_generator_forward.3} parent=0 // pred_check
    _
  $region39: #{pointer_generator_forward.3} parent=0 // pred_check_branch
    %43 = sbr.rel (0) target = $region41
  $region40: #{pointer_generator_forward.3} parent=0 // pred_region
    _
  $region41: #{pointer_generator_forward.3} parent=0 // pred_fallthru
    _
  // Predicated region
  $region42: #{pointer_generator_forward.3} parent=0 // pred_check
    _
  $region43: #{pointer_generator_forward.3} parent=0 // pred_check_branch
    %45 = sbr.rel (0) target = $region45
  $region44: #{pointer_generator_forward.3} parent=0 // pred_region
    _
  $region45: #{pointer_generator_forward.3} parent=0 // pred_fallthru
    _
  // Predicated region
  $region46: #{pointer_generator_forward.3} parent=0 // pred_check
    _
  $region47: #{pointer_generator_forward.3} parent=0 // pred_check_branch
    %47 = sbr.rel (0) target = $region49
  $region48: #{pointer_generator_forward.3} parent=0 // pred_region
    _
  $region49: #{pointer_generator_forward.3} parent=0 // pred_fallthru
    _
  // Predicated region
  $region50: #{pointer_generator_forward.3} parent=0 // pred_check
    _
  $region51: #{pointer_generator_forward.3} parent=0 // pred_check_branch
    %49 = sbr.rel (0) target = $region53
  $region52: #{pointer_generator_forward.3} parent=0 // pred_region
    _
  $region53: #{pointer_generator_forward.3} parent=0 // pred_fallthru
    _
  // Predicated region
  $region54: #{pointer_generator_forward.3} parent=0 // pred_check
    _
  $region55: #{pointer_generator_forward.3} parent=0 // pred_check_branch
    %51 = sbr.rel (0) target = $region57
  $region56: #{pointer_generator_forward.3} parent=0 // pred_region
    _
  $region57: #{pointer_generator_forward.3} parent=0 // pred_fallthru
    _
  // Predicated region
  $region58: #{pointer_generator_forward.3} parent=0 // pred_check
    _
  $region59: #{pointer_generator_forward.3} parent=0 // pred_check_branch
    %53 = sbr.rel (0) target = $region61
  $region60: #{pointer_generator_forward.3} parent=0 // pred_region
    _
  $region61: #{pointer_generator_forward.3} parent=0 // pred_fallthru
    _
  // Predicated region
  $region62: #{pointer_generator_forward.3} parent=0 // pred_check
    _
  $region63: #{pointer_generator_forward.3} parent=0 // pred_check_branch
    %55 = sbr.rel (0) target = $region65
  $region64: #{pointer_generator_forward.3} parent=0 // pred_region
    _
  $region65: #{pointer_generator_forward.3} parent=0 // pred_fallthru
    _
  // Predicated region
  $region66: #{pointer_generator_forward.3} parent=0 // pred_check
    _
  $region67: #{pointer_generator_forward.3} parent=0 // pred_check_branch
    %57 = sbr.rel (0) target = $region69
  $region68: #{pointer_generator_forward.3} parent=0 // pred_region
    _
  $region69: #{pointer_generator_forward.3} parent=0 // pred_fallthru
    _
  %v58 = vld [vmem:[%s0] sm:$0xff]
  %v59 = vld [vmem:[%s0 + $0x8] sm:$0xff]
  %v60 = vld [vmem:[%s3] sm:$0xff]
  %v61 = vld [vmem:[%s3 + $0x8] sm:$0xff]
  %v62 = vld [vmem:[%s3 + $0x10] sm:$0xff]
  %v63 = vld [vmem:[%s3 + $0x18] sm:$0xff]
  %v64 = vld [vmem:[%s2] sm:$0x3]
  %v65 = vld [vmem:[%s7] sm:$0xff]
  %v66 = vld [vmem:[%s7 + $0x8] sm:$0xff]
  %v67 = vld [vmem:[%s8] sm:$0xff]
  %v68 = vld [vmem:[%s8 + $0x8] sm:$0xff]
  %v69 = vld [vmem:[%s8 + $0x10] sm:$0xff]
  %v70 = vld [vmem:[%s8 + $0x18] sm:$0xff]
  %v71 = vld [vmem:[%s9] sm:$0x1]
  %v73 = vlaneseq
  %v74 = vshrl.u32 %v73, 7
  %v75 = vsub.s32 0, %v74
  %v76 = vrot.slane %v71, %v75
  %v78 = vld [vmem:[%s10] sm:$0xff]
  %v79 = vld [vmem:[%s10 + $0x8] sm:$0xff]
  %v80 = vld [vmem:[%s10 + $0x10] sm:$0xff]
  %v81 = vld [vmem:[%s10 + $0x18] sm:$0xff]
  %v82 = vld [vmem:[%s11] sm:$0xff]
  %v83 = vld [vmem:[%s11 + $0x8] sm:$0xff]
  %v84 = vld [vmem:[%s11 + $0x10] sm:$0xff]
  %v85 = vld [vmem:[%s11 + $0x18] sm:$0xff]
  %v86 = vld [vmem:[%s12] sm:$0x1]
  %v87 = vld [vmem:[%s13] sm:$0xff]
  %v88 = vld [vmem:[%s13 + $0x8] sm:$0xff]
  %v89 = vld [vmem:[%s13 + $0x10] sm:$0xff]
  %v90 = vld [vmem:[%s13 + $0x18] sm:$0xff]
  %v91 = vld [vmem:[%s14] sm:$0xff]
  %v92 = vld [vmem:[%s14 + $0x8] sm:$0xff]
  %v93 = vld [vmem:[%s14 + $0x10] sm:$0xff]
  %v94 = vld [vmem:[%s14 + $0x18] sm:$0xff]
  %v95 = vld [vmem:[%s15] sm:$0xff]
  %v96 = vld [vmem:[%s15 + $0x8] sm:$0xff]
  %v97 = vld [vmem:[#allocation2] sm:$0x1]
  %v98 = vld [vmem:[%s1] sm:$0x3]
  %v99 = vlaneseq
  %v100 = vand.u32 %v99, 127
  %v101 = vlaneseq
  %v102 = vshrl.u32 %v101, 7
  %v103 = vsub.s32 0, %v102
  %v104 = vrot.slane %v98, %v103
  %106 = vbcast.lane.b32.xlu0 %v104, 256
  %v107 = vpop.permute.xlu0 %106
  %v108 = vlaneseq
  %v109 = vshrl.u32 %v108, 7
  %v110 = vsub.s32 1, %v109
  %v111 = vrot.slane %v98, %v110
  %113 = vbcast.lane.b32.xlu0 %v111, 256
  %v114 = vpop.permute.xlu0 %113
  %vm115 = vcmp.eq.s32.totalorder %v107, %v100
  %vm116 = vcmp.eq.s32.totalorder %v114, %v100
  %v117 = vsel %vm115, 1, 0
  %v118 = vsel %vm116, 1, 0
  %v119 = vcvt.s32.f32 %v117
  %v120 = vcvt.s32.f32 %v118
  %v121 = vld [vmem:[%s4] sm:$0x3]
  %v122 = vld [vmem:[%s5] sm:$0x3]
  %v123 = vld [vmem:[%s6] sm:$0x3]
  %vm124 = vcmask 261120
  %v126 = vsel %vm124, %v121, 0
  %128 = vmatprep.subr.mxu0 0.0
  %129 = vmatpush1.msra.mxu0 %v67
  %130 = vmatprep.subr.mxu0 0.0
  %131 = vmatpush1.msra.mxu0 %v68
  %132 = vmatprep.subr.mxu0 0.0
  %133 = vmatpush1.msra.mxu0 %v69
  %134 = vmatprep.subr.mxu0 0.0
  %135 = vmatpush1.msra.mxu0 %v70
  %136 = vmatprep.subr.mxu0 0.0
  %137 = vmatpush1.msra.mxu0 0.0
  %138 = vmatprep.subr.mxu0 0.0
  %139 = vmatpush1.msra.mxu0 0.0
  %140 = vmatprep.subr.mxu0 0.0
  %141 = vmatpush1.msra.mxu0 0.0
  %142 = vmatprep.subr.mxu0 0.0
  %143 = vmatpush1.msra.mxu0 0.0
  %144 = vmatprep.subr.mxu0 0.0
  %145 = vmatpush1.msra.mxu0 0.0
  %146 = vmatprep.subr.mxu0 0.0
  %147 = vmatpush1.msra.mxu0 0.0
  %148 = vmatprep.subr.mxu0 0.0
  %149 = vmatpush1.msra.mxu0 0.0
  %150 = vmatprep.subr.mxu0 0.0
  %151 = vmatpush1.msra.mxu0 0.0
  %152 = vmatprep.subr.mxu0 0.0
  %153 = vmatpush1.msra.mxu0 0.0
  %154 = vmatprep.subr.mxu0 0.0
  %155 = vmatpush1.msra.mxu0 0.0
  %156 = vmatprep.subr.mxu0 0.0
  %157 = vmatpush1.msra.mxu0 0.0
  %158 = vmatprep.subr.mxu0 0.0
  %159 = vmatpush1.msra.mxu0 0.0
  %160 = vmatprep.subr.mxu0 0.0
  %161 = vmatpush1.msra.mxu0 0.0
  %162 = vmatprep.subr.mxu0 0.0
  %163 = vmatpush1.msra.mxu0 0.0
  %164 = vmatprep.subr.mxu0 0.0
  %165 = vmatpush1.msra.mxu0 0.0
  %166 = vmatprep.subr.mxu0 0.0
  %167 = vmatpush1.msra.mxu0 0.0
  %168 = vmatprep.subr.mxu0 0.0
  %169 = vmatpush1.msra.mxu0 0.0
  %170 = vmatprep.subr.mxu0 0.0
  %171 = vmatpush1.msra.mxu0 0.0
  %172 = vmatprep.subr.mxu0 0.0
  %173 = vmatpush1.msra.mxu0 0.0
  %174 = vmatprep.subr.mxu0 0.0
  %175 = vmatpush1.msra.mxu0 0.0
  %176 = vmatprep.subr.mxu0 0.0
  %177 = vmatpush1.msra.mxu0 0.0
  %178 = vmatprep.subr.mxu0 0.0
  %179 = vmatpush1.msra.mxu0 0.0
  %180 = vmatprep.subr.mxu0 0.0
  %181 = vmatpush1.msra.mxu0 0.0
  %182 = vmatprep.subr.mxu0 0.0
  %183 = vmatpush1.msra.mxu0 0.0
  %184 = vmatprep.subr.mxu0 0.0
  %185 = vmatpush1.msra.mxu0 0.0
  %186 = vmatprep.subr.mxu0 0.0
  %187 = vmatpush1.msra.mxu0 0.0
  %188 = vmatprep.subr.mxu0 0.0
  %189 = vmatpush1.msra.mxu0 0.0
  %190 = vmatprep.subr.mxu0 0.0
  %191 = vmatpush1.msra.mxu0 0.0
  %192 = vmatprep.mubr.f32.mxu0 0.0
  %193 = vmatmul.mubr.f32.gmra.mrb[0].mxu0 %v126
  %v194 = vpop.f32.mrb[0].mxu0
  %v195 = vadd.f32 0.0, %v194
  %v196 = vpop.f32.mrb[0].mxu0
  %197 = vdwg.mxu0
  %vm198 = vcmask 130048
  %v200 = vsel %vm198, %v123, 0
  %202 = vmatprep.subr.mxu0 0.0
  %203 = vmatpush1.msra.mxu0 %v65
  %204 = vmatprep.subr.mxu0 0.0
  %205 = vmatpush1.msra.mxu0 %v66
  %206 = vmatprep.subr.mxu0 0.0
  %207 = vmatpush1.msra.mxu0 0.0
  %208 = vmatprep.subr.mxu0 0.0
  %209 = vmatpush1.msra.mxu0 0.0
  %210 = vmatprep.subr.mxu0 0.0
  %211 = vmatpush1.msra.mxu0 0.0
  %212 = vmatprep.subr.mxu0 0.0
  %213 = vmatpush1.msra.mxu0 0.0
  %214 = vmatprep.subr.mxu0 0.0
  %215 = vmatpush1.msra.mxu0 0.0
  %216 = vmatprep.subr.mxu0 0.0
  %217 = vmatpush1.msra.mxu0 0.0
  %218 = vmatprep.subr.mxu0 0.0
  %219 = vmatpush1.msra.mxu0 0.0
  %220 = vmatprep.subr.mxu0 0.0
  %221 = vmatpush1.msra.mxu0 0.0
  %222 = vmatprep.subr.mxu0 0.0
  %223 = vmatpush1.msra.mxu0 0.0
  %224 = vmatprep.subr.mxu0 0.0
  %225 = vmatpush1.msra.mxu0 0.0
  %226 = vmatprep.subr.mxu0 0.0
  %227 = vmatpush1.msra.mxu0 0.0
  %228 = vmatprep.subr.mxu0 0.0
  %229 = vmatpush1.msra.mxu0 0.0
  %230 = vmatprep.subr.mxu0 0.0
  %231 = vmatpush1.msra.mxu0 0.0
  %232 = vmatprep.subr.mxu0 0.0
  %233 = vmatpush1.msra.mxu0 0.0
  %234 = vmatprep.subr.mxu0 0.0
  %235 = vmatpush1.msra.mxu0 0.0
  %236 = vmatprep.subr.mxu0 0.0
  %237 = vmatpush1.msra.mxu0 0.0
  %238 = vmatprep.subr.mxu0 0.0
  %239 = vmatpush1.msra.mxu0 0.0
  %240 = vmatprep.subr.mxu0 0.0
  %241 = vmatpush1.msra.mxu0 0.0
  %242 = vmatprep.subr.mxu0 0.0
  %243 = vmatpush1.msra.mxu0 0.0
  %244 = vmatprep.subr.mxu0 0.0
  %245 = vmatpush1.msra.mxu0 0.0
  %246 = vmatprep.subr.mxu0 0.0
  %247 = vmatpush1.msra.mxu0 0.0
  %248 = vmatprep.subr.mxu0 0.0
  %249 = vmatpush1.msra.mxu0 0.0
  %250 = vmatprep.subr.mxu0 0.0
  %251 = vmatpush1.msra.mxu0 0.0
  %252 = vmatprep.subr.mxu0 0.0
  %253 = vmatpush1.msra.mxu0 0.0
  %254 = vmatprep.subr.mxu0 0.0
  %255 = vmatpush1.msra.mxu0 0.0
  %256 = vmatprep.subr.mxu0 0.0
  %257 = vmatpush1.msra.mxu0 0.0
  %258 = vmatprep.subr.mxu0 0.0
  %259 = vmatpush1.msra.mxu0 0.0
  %260 = vmatprep.subr.mxu0 0.0
  %261 = vmatpush1.msra.mxu0 0.0
  %262 = vmatprep.subr.mxu0 0.0
  %263 = vmatpush1.msra.mxu0 0.0
  %264 = vmatprep.subr.mxu0 0.0
  %265 = vmatpush1.msra.mxu0 0.0
  %266 = vmatprep.mubr.f32.mxu0 0.0
  %267 = vmatmul.mubr.f32.gmra.mrb[0].mxu0 %v200
  %v268 = vpop.f32.mrb[0].mxu0
  %v269 = vadd.f32 %v195, %v268
  %v270 = vpop.f32.mrb[0].mxu0
  %271 = vdwg.mxu0
  %v272 = vadd.f32 %v269, %v76
  %v273 = vxor.u32 %v272, 2147483648
  %v274 = vmul.f32 %v273, 1.442695
  %v275 = vpow.pop %v274
  %v276 = vadd.f32 %v275, 1.0
  %v277 = vrcp.pop %v276
  %v278 = vmul.f32 1.0, %v277
  %v279 = vtanh.pop %v272
  %281 = vrot.lane.b32.xlu0 %v122, 32
  %v282 = vpop.permute.xlu0 %281
  %v284 = vmul.f32 %v278, %v282
  %286 = vrot.lane.b32.xlu0 %v279, 64
  %v287 = vpop.permute.xlu0 %286
  %v289 = vmul.f32 %v278, %v287
  %291 = vrot.lane.b32.xlu0 %v289, 32
  %v292 = vpop.permute.xlu0 %291
  %v294 = vadd.f32 %v284, %v292
  %v295 = vtanh.pop %v294
  %297 = vrot.lane.b32.xlu0 %v295, 64
  %v298 = vpop.permute.xlu0 %297
  %v300 = vmul.f32 %v278, %v298
  %v303 = vunpack.c.l.s4 1966171168
  %v304 = vunpack.c.0.s8 %v303
  %v305 = vlaneseq
  %v306 = vshrl.u32 %v305, 7
  %v307 = vsub.s32 %v304, %v306
  %v308 = vrot.slane %v300, %v307
  %v309 = vcombine.high %v308, %v308
  %v311 = vunpack.c.l.s4 1966171168
  %v312 = vunpack.c.0.s8 %v311
  %v313 = vlaneseq
  %v314 = vshrl.u32 %v313, 7
  %v315 = vsub.s32 %v312, %v314
  %v316 = vrot.slane %v308, %v315
  %v318 = vunpack.c.l.s4 1966171168
  %v319 = vunpack.c.0.s8 %v318
  %v320 = vlaneseq
  %v321 = vshrl.u32 %v320, 7
  %v322 = vsub.s32 %v319, %v321
  %v323 = vrot.slane %v309, %v322
  %v324 = vlaneseq
  %v325 = vshrl.u32 %v324, 7
  %v326 = vsub.s32 0, %v325
  %v327 = vrot.slane %v316, %v326
  %328 = vrot.lane.b32.xlu0 %v327, 32
  %v329 = vpop.permute.xlu0 %328
  %v330 = vsel %vm124, %v329, 0
  %v333 = vsel %vm124, %v58, 0
  %335 = vmatprep.subr.mxu0 0.0
  %336 = vmatpush1.xpose.msra.mxu0 %v333
  %337 = vmatprep.subr.mxu0 0.0
  %338 = vmatpush1.xpose.msra.mxu0 0.0
  %339 = vmatprep.subr.mxu0 0.0
  %340 = vmatpush1.xpose.msra.mxu0 0.0
  %341 = vmatprep.subr.mxu0 0.0
  %342 = vmatpush1.xpose.msra.mxu0 0.0
  %343 = vmatprep.subr.mxu0 0.0
  %344 = vmatpush1.xpose.msra.mxu0 0.0
  %345 = vmatprep.subr.mxu0 0.0
  %346 = vmatpush1.xpose.msra.mxu0 0.0
  %347 = vmatprep.subr.mxu0 0.0
  %348 = vmatpush1.xpose.msra.mxu0 0.0
  %349 = vmatprep.subr.mxu0 0.0
  %350 = vmatpush1.xpose.msra.mxu0 0.0
  %351 = vmatprep.subr.mxu0 0.0
  %352 = vmatpush1.xpose.msra.mxu0 0.0
  %353 = vmatprep.subr.mxu0 0.0
  %354 = vmatpush1.xpose.msra.mxu0 0.0
  %355 = vmatprep.subr.mxu0 0.0
  %356 = vmatpush1.xpose.msra.mxu0 0.0
  %357 = vmatprep.subr.mxu0 0.0
  %358 = vmatpush1.xpose.msra.mxu0 0.0
  %359 = vmatprep.subr.mxu0 0.0
  %360 = vmatpush1.xpose.msra.mxu0 0.0
  %361 = vmatprep.subr.mxu0 0.0
  %362 = vmatpush1.xpose.msra.mxu0 0.0
  %363 = vmatprep.subr.mxu0 0.0
  %364 = vmatpush1.xpose.msra.mxu0 0.0
  %365 = vmatprep.subr.mxu0 0.0
  %366 = vmatpush1.xpose.msra.mxu0 0.0
  %367 = vmatprep.subr.mxu0 0.0
  %368 = vmatpush1.xpose.msra.mxu0 0.0
  %369 = vmatprep.subr.mxu0 0.0
  %370 = vmatpush1.xpose.msra.mxu0 0.0
  %371 = vmatprep.subr.mxu0 0.0
  %372 = vmatpush1.xpose.msra.mxu0 0.0
  %373 = vmatprep.subr.mxu0 0.0
  %374 = vmatpush1.xpose.msra.mxu0 0.0
  %375 = vmatprep.subr.mxu0 0.0
  %376 = vmatpush1.xpose.msra.mxu0 0.0
  %377 = vmatprep.subr.mxu0 0.0
  %378 = vmatpush1.xpose.msra.mxu0 0.0
  %379 = vmatprep.subr.mxu0 0.0
  %380 = vmatpush1.xpose.msra.mxu0 0.0
  %381 = vmatprep.subr.mxu0 0.0
  %382 = vmatpush1.xpose.msra.mxu0 0.0
  %383 = vmatprep.subr.mxu0 0.0
  %384 = vmatpush1.xpose.msra.mxu0 0.0
  %385 = vmatprep.subr.mxu0 0.0
  %386 = vmatpush1.xpose.msra.mxu0 0.0
  %387 = vmatprep.subr.mxu0 0.0
  %388 = vmatpush1.xpose.msra.mxu0 0.0
  %389 = vmatprep.subr.mxu0 0.0
  %390 = vmatpush1.xpose.msra.mxu0 0.0
  %391 = vmatprep.subr.mxu0 0.0
  %392 = vmatpush1.xpose.msra.mxu0 0.0
  %393 = vmatprep.subr.mxu0 0.0
  %394 = vmatpush1.xpose.msra.mxu0 0.0
  %395 = vmatprep.subr.mxu0 0.0
  %396 = vmatpush1.xpose.msra.mxu0 0.0
  %397 = vmatprep.subr.mxu0 0.0
  %398 = vmatpush1.xpose.msra.mxu0 0.0
  %399 = vmatprep.mubr.f32.mxu0 0.0
  %400 = vmatmul.mubr.f32.gmra.mrb[0].mxu0 %v330
  %v401 = vpop.f32.mrb[0].mxu0
  %v402 = vadd.f32 0.0, %v401
  %v403 = vpop.f32.mrb[0].mxu0
  %404 = vdwg.mxu0
  %v405 = vlaneseq
  %v406 = vshrl.u32 %v405, 7
  %v407 = vsub.s32 0, %v406
  %v408 = vrot.slane %v323, %v407
  %409 = vrot.lane.b32.xlu0 %v408, 32
  %v410 = vpop.permute.xlu0 %409
  %v411 = vsel %vm124, %v410, 0
  %v414 = vsel %vm124, %v59, 0
  %416 = vmatprep.subr.mxu0 0.0
  %417 = vmatpush1.xpose.msra.mxu0 %v414
  %418 = vmatprep.subr.mxu0 0.0
  %419 = vmatpush1.xpose.msra.mxu0 0.0
  %420 = vmatprep.subr.mxu0 0.0
  %421 = vmatpush1.xpose.msra.mxu0 0.0
  %422 = vmatprep.subr.mxu0 0.0
  %423 = vmatpush1.xpose.msra.mxu0 0.0
  %424 = vmatprep.subr.mxu0 0.0
  %425 = vmatpush1.xpose.msra.mxu0 0.0
  %426 = vmatprep.subr.mxu0 0.0
  %427 = vmatpush1.xpose.msra.mxu0 0.0
  %428 = vmatprep.subr.mxu0 0.0
  %429 = vmatpush1.xpose.msra.mxu0 0.0
  %430 = vmatprep.subr.mxu0 0.0
  %431 = vmatpush1.xpose.msra.mxu0 0.0
  %432 = vmatprep.subr.mxu0 0.0
  %433 = vmatpush1.xpose.msra.mxu0 0.0
  %434 = vmatprep.subr.mxu0 0.0
  %435 = vmatpush1.xpose.msra.mxu0 0.0
  %436 = vmatprep.subr.mxu0 0.0
  %437 = vmatpush1.xpose.msra.mxu0 0.0
  %438 = vmatprep.subr.mxu0 0.0
  %439 = vmatpush1.xpose.msra.mxu0 0.0
  %440 = vmatprep.subr.mxu0 0.0
  %441 = vmatpush1.xpose.msra.mxu0 0.0
  %442 = vmatprep.subr.mxu0 0.0
  %443 = vmatpush1.xpose.msra.mxu0 0.0
  %444 = vmatprep.subr.mxu0 0.0
  %445 = vmatpush1.xpose.msra.mxu0 0.0
  %446 = vmatprep.subr.mxu0 0.0
  %447 = vmatpush1.xpose.msra.mxu0 0.0
  %448 = vmatprep.subr.mxu0 0.0
  %449 = vmatpush1.xpose.msra.mxu0 0.0
  %450 = vmatprep.subr.mxu0 0.0
  %451 = vmatpush1.xpose.msra.mxu0 0.0
  %452 = vmatprep.subr.mxu0 0.0
  %453 = vmatpush1.xpose.msra.mxu0 0.0
  %454 = vmatprep.subr.mxu0 0.0
  %455 = vmatpush1.xpose.msra.mxu0 0.0
  %456 = vmatprep.subr.mxu0 0.0
  %457 = vmatpush1.xpose.msra.mxu0 0.0
  %458 = vmatprep.subr.mxu0 0.0
  %459 = vmatpush1.xpose.msra.mxu0 0.0
  %460 = vmatprep.subr.mxu0 0.0
  %461 = vmatpush1.xpose.msra.mxu0 0.0
  %462 = vmatprep.subr.mxu0 0.0
  %463 = vmatpush1.xpose.msra.mxu0 0.0
  %464 = vmatprep.subr.mxu0 0.0
  %465 = vmatpush1.xpose.msra.mxu0 0.0
  %466 = vmatprep.subr.mxu0 0.0
  %467 = vmatpush1.xpose.msra.mxu0 0.0
  %468 = vmatprep.subr.mxu0 0.0
  %469 = vmatpush1.xpose.msra.mxu0 0.0
  %470 = vmatprep.subr.mxu0 0.0
  %471 = vmatpush1.xpose.msra.mxu0 0.0
  %472 = vmatprep.subr.mxu0 0.0
  %473 = vmatpush1.xpose.msra.mxu0 0.0
  %474 = vmatprep.subr.mxu0 0.0
  %475 = vmatpush1.xpose.msra.mxu0 0.0
  %476 = vmatprep.subr.mxu0 0.0
  %477 = vmatpush1.xpose.msra.mxu0 0.0
  %478 = vmatprep.subr.mxu0 0.0
  %479 = vmatpush1.xpose.msra.mxu0 0.0
  %480 = vmatprep.mubr.f32.mxu0 0.0
  %481 = vmatmul.mubr.f32.gmra.mrb[0].mxu0 %v411
  %v482 = vpop.f32.mrb[0].mxu0
  %v483 = vadd.f32 0.0, %v482
  %v484 = vpop.f32.mrb[0].mxu0
  %485 = vdwg.mxu0
  %vm486 = vcmask 57344
  %v487 = vsel %vm486, %v402, -inf
  %488 = vmax.xlane.f32.xlu0 %v487
  %v489 = vpop.xlane.xlu0 %488
  %v490 = vsel %vm486, %v483, -inf
  %491 = vmax.xlane.f32.xlu0 %v490
  %v492 = vpop.xlane.xlu0 %491
  %v493 = vsub.f32 %v402, %v489
  %v494 = vsub.f32 %v483, %v492
  %v495 = vmul.f32 %v493, 1.442695
  %v496 = vpow.pop %v495
  %v497 = vmul.f32 %v494, 1.442695
  %v498 = vpow.pop %v497
  %v499 = vsel %vm486, %v496, 0.0
  %500 = vadd.xlane.f32.xlu0 %v499
  %v501 = vpop.xlane.xlu0 %500
  %v502 = vsel %vm486, %v498, 0.0
  %503 = vadd.xlane.f32.xlu0 %v502
  %v504 = vpop.xlane.xlu0 %503
  %v505 = vrcp.pop %v501
  %v506 = vrcp.pop %v504
  %v507 = vmul.f32 %v496, %v505
  %v508 = vmul.f32 %v498, %v506
  %vm509 = vcmask 64512
  %v511 = vsel %vm509, %v507, 0
  %513 = vmatprep.subr.mxu0 0.0
  %514 = vmatpush1.msra.mxu0 %v58
  %515 = vmatprep.subr.mxu0 0.0
  %516 = vmatpush1.msra.mxu0 0.0
  %517 = vmatprep.subr.mxu0 0.0
  %518 = vmatpush1.msra.mxu0 0.0
  %519 = vmatprep.subr.mxu0 0.0
  %520 = vmatpush1.msra.mxu0 0.0
  %521 = vmatprep.subr.mxu0 0.0
  %522 = vmatpush1.msra.mxu0 0.0
  %523 = vmatprep.subr.mxu0 0.0
  %524 = vmatpush1.msra.mxu0 0.0
  %525 = vmatprep.subr.mxu0 0.0
  %526 = vmatpush1.msra.mxu0 0.0
  %527 = vmatprep.subr.mxu0 0.0
  %528 = vmatpush1.msra.mxu0 0.0
  %529 = vmatprep.subr.mxu0 0.0
  %530 = vmatpush1.msra.mxu0 0.0
  %531 = vmatprep.subr.mxu0 0.0
  %532 = vmatpush1.msra.mxu0 0.0
  %533 = vmatprep.subr.mxu0 0.0
  %534 = vmatpush1.msra.mxu0 0.0
  %535 = vmatprep.subr.mxu0 0.0
  %536 = vmatpush1.msra.mxu0 0.0
  %537 = vmatprep.subr.mxu0 0.0
  %538 = vmatpush1.msra.mxu0 0.0
  %539 = vmatprep.subr.mxu0 0.0
  %540 = vmatpush1.msra.mxu0 0.0
  %541 = vmatprep.subr.mxu0 0.0
  %542 = vmatpush1.msra.mxu0 0.0
  %543 = vmatprep.subr.mxu0 0.0
  %544 = vmatpush1.msra.mxu0 0.0
  %545 = vmatprep.subr.mxu0 0.0
  %546 = vmatpush1.msra.mxu0 0.0
  %547 = vmatprep.subr.mxu0 0.0
  %548 = vmatpush1.msra.mxu0 0.0
  %549 = vmatprep.subr.mxu0 0.0
  %550 = vmatpush1.msra.mxu0 0.0
  %551 = vmatprep.subr.mxu0 0.0
  %552 = vmatpush1.msra.mxu0 0.0
  %553 = vmatprep.subr.mxu0 0.0
  %554 = vmatpush1.msra.mxu0 0.0
  %555 = vmatprep.subr.mxu0 0.0
  %556 = vmatpush1.msra.mxu0 0.0
  %557 = vmatprep.subr.mxu0 0.0
  %558 = vmatpush1.msra.mxu0 0.0
  %559 = vmatprep.subr.mxu0 0.0
  %560 = vmatpush1.msra.mxu0 0.0
  %561 = vmatprep.subr.mxu0 0.0
  %562 = vmatpush1.msra.mxu0 0.0
  %563 = vmatprep.subr.mxu0 0.0
  %564 = vmatpush1.msra.mxu0 0.0
  %565 = vmatprep.subr.mxu0 0.0
  %566 = vmatpush1.msra.mxu0 0.0
  %567 = vmatprep.subr.mxu0 0.0
  %568 = vmatpush1.msra.mxu0 0.0
  %569 = vmatprep.subr.mxu0 0.0
  %570 = vmatpush1.msra.mxu0 0.0
  %571 = vmatprep.subr.mxu0 0.0
  %572 = vmatpush1.msra.mxu0 0.0
  %573 = vmatprep.subr.mxu0 0.0
  %574 = vmatpush1.msra.mxu0 0.0
  %575 = vmatprep.subr.mxu0 0.0
  %576 = vmatpush1.msra.mxu0 0.0
  %577 = vmatprep.mubr.f32.mxu0 0.0
  %578 = vmatmul.mubr.f32.gmra.mrb[0].mxu0 %v511
  %v579 = vpop.f32.mrb[0].mxu0
  %v580 = vadd.f32 0.0, %v579
  %v581 = vpop.f32.mrb[0].mxu0
  %582 = vdwg.mxu0
  %v584 = vsel %vm509, %v508, 0
  %586 = vmatprep.subr.mxu0 0.0
  %587 = vmatpush1.msra.mxu0 %v59
  %588 = vmatprep.subr.mxu0 0.0
  %589 = vmatpush1.msra.mxu0 0.0
  %590 = vmatprep.subr.mxu0 0.0
  %591 = vmatpush1.msra.mxu0 0.0
  %592 = vmatprep.subr.mxu0 0.0
  %593 = vmatpush1.msra.mxu0 0.0
  %594 = vmatprep.subr.mxu0 0.0
  %595 = vmatpush1.msra.mxu0 0.0
  %596 = vmatprep.subr.mxu0 0.0
  %597 = vmatpush1.msra.mxu0 0.0
  %598 = vmatprep.subr.mxu0 0.0
  %599 = vmatpush1.msra.mxu0 0.0
  %600 = vmatprep.subr.mxu0 0.0
  %601 = vmatpush1.msra.mxu0 0.0
  %602 = vmatprep.subr.mxu0 0.0
  %603 = vmatpush1.msra.mxu0 0.0
  %604 = vmatprep.subr.mxu0 0.0
  %605 = vmatpush1.msra.mxu0 0.0
  %606 = vmatprep.subr.mxu0 0.0
  %607 = vmatpush1.msra.mxu0 0.0
  %608 = vmatprep.subr.mxu0 0.0
  %609 = vmatpush1.msra.mxu0 0.0
  %610 = vmatprep.subr.mxu0 0.0
  %611 = vmatpush1.msra.mxu0 0.0
  %612 = vmatprep.subr.mxu0 0.0
  %613 = vmatpush1.msra.mxu0 0.0
  %614 = vmatprep.subr.mxu0 0.0
  %615 = vmatpush1.msra.mxu0 0.0
  %616 = vmatprep.subr.mxu0 0.0
  %617 = vmatpush1.msra.mxu0 0.0
  %618 = vmatprep.subr.mxu0 0.0
  %619 = vmatpush1.msra.mxu0 0.0
  %620 = vmatprep.subr.mxu0 0.0
  %621 = vmatpush1.msra.mxu0 0.0
  %622 = vmatprep.subr.mxu0 0.0
  %623 = vmatpush1.msra.mxu0 0.0
  %624 = vmatprep.subr.mxu0 0.0
  %625 = vmatpush1.msra.mxu0 0.0
  %626 = vmatprep.subr.mxu0 0.0
  %627 = vmatpush1.msra.mxu0 0.0
  %628 = vmatprep.subr.mxu0 0.0
  %629 = vmatpush1.msra.mxu0 0.0
  %630 = vmatprep.subr.mxu0 0.0
  %631 = vmatpush1.msra.mxu0 0.0
  %632 = vmatprep.subr.mxu0 0.0
  %633 = vmatpush1.msra.mxu0 0.0
  %634 = vmatprep.subr.mxu0 0.0
  %635 = vmatpush1.msra.mxu0 0.0
  %636 = vmatprep.subr.mxu0 0.0
  %637 = vmatpush1.msra.mxu0 0.0
  %638 = vmatprep.subr.mxu0 0.0
  %639 = vmatpush1.msra.mxu0 0.0
  %640 = vmatprep.subr.mxu0 0.0
  %641 = vmatpush1.msra.mxu0 0.0
  %642 = vmatprep.subr.mxu0 0.0
  %643 = vmatpush1.msra.mxu0 0.0
  %644 = vmatprep.subr.mxu0 0.0
  %645 = vmatpush1.msra.mxu0 0.0
  %646 = vmatprep.subr.mxu0 0.0
  %647 = vmatpush1.msra.mxu0 0.0
  %648 = vmatprep.subr.mxu0 0.0
  %649 = vmatpush1.msra.mxu0 0.0
  %650 = vmatprep.mubr.f32.mxu0 0.0
  %651 = vmatmul.mubr.f32.gmra.mrb[0].mxu0 %v584
  %v652 = vpop.f32.mrb[0].mxu0
  %v653 = vadd.f32 0.0, %v652
  %v654 = vpop.f32.mrb[0].mxu0
  %655 = vdwg.mxu0
  %v658 = vrot.slane %v653, 7
  %vm659 = vcmask 1041409
  %v660 = vsel %vm659, %v658, %v580
  %v661 = vsel %vm124, %v660, 0
  %663 = vmatprep.subr.mxu0 0.0
  %664 = vmatpush1.msra.mxu0 %v82
  %665 = vmatprep.subr.mxu0 0.0
  %666 = vmatpush1.msra.mxu0 %v83
  %667 = vmatprep.subr.mxu0 0.0
  %668 = vmatpush1.msra.mxu0 %v84
  %669 = vmatprep.subr.mxu0 0.0
  %670 = vmatpush1.msra.mxu0 %v85
  %671 = vmatprep.subr.mxu0 0.0
  %672 = vmatpush1.msra.mxu0 0.0
  %673 = vmatprep.subr.mxu0 0.0
  %674 = vmatpush1.msra.mxu0 0.0
  %675 = vmatprep.subr.mxu0 0.0
  %676 = vmatpush1.msra.mxu0 0.0
  %677 = vmatprep.subr.mxu0 0.0
  %678 = vmatpush1.msra.mxu0 0.0
  %679 = vmatprep.subr.mxu0 0.0
  %680 = vmatpush1.msra.mxu0 0.0
  %681 = vmatprep.subr.mxu0 0.0
  %682 = vmatpush1.msra.mxu0 0.0
  %683 = vmatprep.subr.mxu0 0.0
  %684 = vmatpush1.msra.mxu0 0.0
  %685 = vmatprep.subr.mxu0 0.0
  %686 = vmatpush1.msra.mxu0 0.0
  %687 = vmatprep.subr.mxu0 0.0
  %688 = vmatpush1.msra.mxu0 0.0
  %689 = vmatprep.subr.mxu0 0.0
  %690 = vmatpush1.msra.mxu0 0.0
  %691 = vmatprep.subr.mxu0 0.0
  %692 = vmatpush1.msra.mxu0 0.0
  %693 = vmatprep.subr.mxu0 0.0
  %694 = vmatpush1.msra.mxu0 0.0
  %695 = vmatprep.subr.mxu0 0.0
  %696 = vmatpush1.msra.mxu0 0.0
  %697 = vmatprep.subr.mxu0 0.0
  %698 = vmatpush1.msra.mxu0 0.0
  %699 = vmatprep.subr.mxu0 0.0
  %700 = vmatpush1.msra.mxu0 0.0
  %701 = vmatprep.subr.mxu0 0.0
  %702 = vmatpush1.msra.mxu0 0.0
  %703 = vmatprep.subr.mxu0 0.0
  %704 = vmatpush1.msra.mxu0 0.0
  %705 = vmatprep.subr.mxu0 0.0
  %706 = vmatpush1.msra.mxu0 0.0
  %707 = vmatprep.subr.mxu0 0.0
  %708 = vmatpush1.msra.mxu0 0.0
  %709 = vmatprep.subr.mxu0 0.0
  %710 = vmatpush1.msra.mxu0 0.0
  %711 = vmatprep.subr.mxu0 0.0
  %712 = vmatpush1.msra.mxu0 0.0
  %713 = vmatprep.subr.mxu0 0.0
  %714 = vmatpush1.msra.mxu0 0.0
  %715 = vmatprep.subr.mxu0 0.0
  %716 = vmatpush1.msra.mxu0 0.0
  %717 = vmatprep.subr.mxu0 0.0
  %718 = vmatpush1.msra.mxu0 0.0
  %719 = vmatprep.subr.mxu0 0.0
  %720 = vmatpush1.msra.mxu0 0.0
  %721 = vmatprep.subr.mxu0 0.0
  %722 = vmatpush1.msra.mxu0 0.0
  %723 = vmatprep.subr.mxu0 0.0
  %724 = vmatpush1.msra.mxu0 0.0
  %725 = vmatprep.subr.mxu0 0.0
  %726 = vmatpush1.msra.mxu0 0.0
  %727 = vmatprep.mubr.f32.mxu0 0.0
  %728 = vmatmul.mubr.f32.gmra.mrb[0].mxu0 %v661
  %v729 = vpop.f32.mrb[0].mxu0
  %v730 = vadd.f32 0.0, %v729
  %v731 = vpop.f32.mrb[0].mxu0
  %732 = vdwg.mxu0
  %733 = vrot.lane.b32.xlu0 %v300, 32
  %v734 = vpop.permute.xlu0 %733
  %v735 = vsel %vm124, %v734, 0
  %737 = vmatprep.subr.mxu0 0.0
  %738 = vmatpush1.msra.mxu0 %v78
  %739 = vmatprep.subr.mxu0 0.0
  %740 = vmatpush1.msra.mxu0 %v79
  %741 = vmatprep.subr.mxu0 0.0
  %742 = vmatpush1.msra.mxu0 %v80
  %743 = vmatprep.subr.mxu0 0.0
  %744 = vmatpush1.msra.mxu0 %v81
  %745 = vmatprep.subr.mxu0 0.0
  %746 = vmatpush1.msra.mxu0 0.0
  %747 = vmatprep.subr.mxu0 0.0
  %748 = vmatpush1.msra.mxu0 0.0
  %749 = vmatprep.subr.mxu0 0.0
  %750 = vmatpush1.msra.mxu0 0.0
  %751 = vmatprep.subr.mxu0 0.0
  %752 = vmatpush1.msra.mxu0 0.0
  %753 = vmatprep.subr.mxu0 0.0
  %754 = vmatpush1.msra.mxu0 0.0
  %755 = vmatprep.subr.mxu0 0.0
  %756 = vmatpush1.msra.mxu0 0.0
  %757 = vmatprep.subr.mxu0 0.0
  %758 = vmatpush1.msra.mxu0 0.0
  %759 = vmatprep.subr.mxu0 0.0
  %760 = vmatpush1.msra.mxu0 0.0
  %761 = vmatprep.subr.mxu0 0.0
  %762 = vmatpush1.msra.mxu0 0.0
  %763 = vmatprep.subr.mxu0 0.0
  %764 = vmatpush1.msra.mxu0 0.0
  %765 = vmatprep.subr.mxu0 0.0
  %766 = vmatpush1.msra.mxu0 0.0
  %767 = vmatprep.subr.mxu0 0.0
  %768 = vmatpush1.msra.mxu0 0.0
  %769 = vmatprep.subr.mxu0 0.0
  %770 = vmatpush1.msra.mxu0 0.0
  %771 = vmatprep.subr.mxu0 0.0
  %772 = vmatpush1.msra.mxu0 0.0
  %773 = vmatprep.subr.mxu0 0.0
  %774 = vmatpush1.msra.mxu0 0.0
  %775 = vmatprep.subr.mxu0 0.0
  %776 = vmatpush1.msra.mxu0 0.0
  %777 = vmatprep.subr.mxu0 0.0
  %778 = vmatpush1.msra.mxu0 0.0
  %779 = vmatprep.subr.mxu0 0.0
  %780 = vmatpush1.msra.mxu0 0.0
  %781 = vmatprep.subr.mxu0 0.0
  %782 = vmatpush1.msra.mxu0 0.0
  %783 = vmatprep.subr.mxu0 0.0
  %784 = vmatpush1.msra.mxu0 0.0
  %785 = vmatprep.subr.mxu0 0.0
  %786 = vmatpush1.msra.mxu0 0.0
  %787 = vmatprep.subr.mxu0 0.0
  %788 = vmatpush1.msra.mxu0 0.0
  %789 = vmatprep.subr.mxu0 0.0
  %790 = vmatpush1.msra.mxu0 0.0
  %791 = vmatprep.subr.mxu0 0.0
  %792 = vmatpush1.msra.mxu0 0.0
  %793 = vmatprep.subr.mxu0 0.0
  %794 = vmatpush1.msra.mxu0 0.0
  %795 = vmatprep.subr.mxu0 0.0
  %796 = vmatpush1.msra.mxu0 0.0
  %797 = vmatprep.subr.mxu0 0.0
  %798 = vmatpush1.msra.mxu0 0.0
  %799 = vmatprep.subr.mxu0 0.0
  %800 = vmatpush1.msra.mxu0 0.0
  %801 = vmatprep.mubr.f32.mxu0 0.0
  %802 = vmatmul.mubr.f32.gmra.mrb[0].mxu0 %v735
  %v803 = vpop.f32.mrb[0].mxu0
  %v804 = vadd.f32 %v730, %v803
  %v805 = vpop.f32.mrb[0].mxu0
  %806 = vdwg.mxu0
  %v808 = vlaneseq
  %v809 = vshrl.u32 %v808, 7
  %v810 = vsub.s32 0, %v809
  %v811 = vrot.slane %v86, %v810
  %v813 = vadd.f32 %v804, %v811
  %vm814 = vcmask 1041408
  %v815 = vsel %vm814, %v813, -inf
  %816 = vmax.xlane.f32.xlu0 %v815
  %v817 = vpop.xlane.xlu0 %816
  %v818 = vsub.f32 %v813, %v817
  %v819 = vmul.f32 %v818, 1.442695
  %v820 = vpow.pop %v819
  %v821 = vsel %vm814, %v820, 0.0
  %822 = vadd.xlane.f32.xlu0 %v821
  %v823 = vpop.xlane.xlu0 %822
  %v824 = vrcp.pop %v823
  %v825 = vmul.f32 %v820, %v824
  %826 = vmatprep.subr.mxu0 0.0
  %827 = vmatpush1.msra.mxu0 %v91
  %828 = vmatprep.subr.mxu0 0.0
  %829 = vmatpush1.msra.mxu0 %v92
  %830 = vmatprep.subr.mxu0 0.0
  %831 = vmatpush1.msra.mxu0 %v93
  %832 = vmatprep.subr.mxu0 0.0
  %833 = vmatpush1.msra.mxu0 %v94
  %834 = vmatprep.subr.mxu0 0.0
  %835 = vmatpush1.msra.mxu0 0.0
  %836 = vmatprep.subr.mxu0 0.0
  %837 = vmatpush1.msra.mxu0 0.0
  %838 = vmatprep.subr.mxu0 0.0
  %839 = vmatpush1.msra.mxu0 0.0
  %840 = vmatprep.subr.mxu0 0.0
  %841 = vmatpush1.msra.mxu0 0.0
  %842 = vmatprep.subr.mxu0 0.0
  %843 = vmatpush1.msra.mxu0 0.0
  %844 = vmatprep.subr.mxu0 0.0
  %845 = vmatpush1.msra.mxu0 0.0
  %846 = vmatprep.subr.mxu0 0.0
  %847 = vmatpush1.msra.mxu0 0.0
  %848 = vmatprep.subr.mxu0 0.0
  %849 = vmatpush1.msra.mxu0 0.0
  %850 = vmatprep.subr.mxu0 0.0
  %851 = vmatpush1.msra.mxu0 0.0
  %852 = vmatprep.subr.mxu0 0.0
  %853 = vmatpush1.msra.mxu0 0.0
  %854 = vmatprep.subr.mxu0 0.0
  %855 = vmatpush1.msra.mxu0 0.0
  %856 = vmatprep.subr.mxu0 0.0
  %857 = vmatpush1.msra.mxu0 0.0
  %858 = vmatprep.subr.mxu0 0.0
  %859 = vmatpush1.msra.mxu0 0.0
  %860 = vmatprep.subr.mxu0 0.0
  %861 = vmatpush1.msra.mxu0 0.0
  %862 = vmatprep.subr.mxu0 0.0
  %863 = vmatpush1.msra.mxu0 0.0
  %864 = vmatprep.subr.mxu0 0.0
  %865 = vmatpush1.msra.mxu0 0.0
  %866 = vmatprep.subr.mxu0 0.0
  %867 = vmatpush1.msra.mxu0 0.0
  %868 = vmatprep.subr.mxu0 0.0
  %869 = vmatpush1.msra.mxu0 0.0
  %870 = vmatprep.subr.mxu0 0.0
  %871 = vmatpush1.msra.mxu0 0.0
  %872 = vmatprep.subr.mxu0 0.0
  %873 = vmatpush1.msra.mxu0 0.0
  %874 = vmatprep.subr.mxu0 0.0
  %875 = vmatpush1.msra.mxu0 0.0
  %876 = vmatprep.subr.mxu0 0.0
  %877 = vmatpush1.msra.mxu0 0.0
  %878 = vmatprep.subr.mxu0 0.0
  %879 = vmatpush1.msra.mxu0 0.0
  %880 = vmatprep.subr.mxu0 0.0
  %881 = vmatpush1.msra.mxu0 0.0
  %882 = vmatprep.subr.mxu0 0.0
  %883 = vmatpush1.msra.mxu0 0.0
  %884 = vmatprep.subr.mxu0 0.0
  %885 = vmatpush1.msra.mxu0 0.0
  %886 = vmatprep.subr.mxu0 0.0
  %887 = vmatpush1.msra.mxu0 0.0
  %888 = vmatprep.subr.mxu0 0.0
  %889 = vmatpush1.msra.mxu0 0.0
  %890 = vmatprep.mubr.f32.mxu0 0.0
  %891 = vmatmul.mubr.f32.gmra.mrb[0].mxu0 %v735
  %v892 = vpop.f32.mrb[0].mxu0
  %v893 = vadd.f32 0.0, %v892
  %v894 = vpop.f32.mrb[0].mxu0
  %895 = vdwg.mxu0
  %896 = vmatprep.subr.mxu0 0.0
  %897 = vmatpush1.msra.mxu0 %v87
  %898 = vmatprep.subr.mxu0 0.0
  %899 = vmatpush1.msra.mxu0 %v88
  %900 = vmatprep.subr.mxu0 0.0
  %901 = vmatpush1.msra.mxu0 %v89
  %902 = vmatprep.subr.mxu0 0.0
  %903 = vmatpush1.msra.mxu0 %v90
  %904 = vmatprep.subr.mxu0 0.0
  %905 = vmatpush1.msra.mxu0 0.0
  %906 = vmatprep.subr.mxu0 0.0
  %907 = vmatpush1.msra.mxu0 0.0
  %908 = vmatprep.subr.mxu0 0.0
  %909 = vmatpush1.msra.mxu0 0.0
  %910 = vmatprep.subr.mxu0 0.0
  %911 = vmatpush1.msra.mxu0 0.0
  %912 = vmatprep.subr.mxu0 0.0
  %913 = vmatpush1.msra.mxu0 0.0
  %914 = vmatprep.subr.mxu0 0.0
  %915 = vmatpush1.msra.mxu0 0.0
  %916 = vmatprep.subr.mxu0 0.0
  %917 = vmatpush1.msra.mxu0 0.0
  %918 = vmatprep.subr.mxu0 0.0
  %919 = vmatpush1.msra.mxu0 0.0
  %920 = vmatprep.subr.mxu0 0.0
  %921 = vmatpush1.msra.mxu0 0.0
  %922 = vmatprep.subr.mxu0 0.0
  %923 = vmatpush1.msra.mxu0 0.0
  %924 = vmatprep.subr.mxu0 0.0
  %925 = vmatpush1.msra.mxu0 0.0
  %926 = vmatprep.subr.mxu0 0.0
  %927 = vmatpush1.msra.mxu0 0.0
  %928 = vmatprep.subr.mxu0 0.0
  %929 = vmatpush1.msra.mxu0 0.0
  %930 = vmatprep.subr.mxu0 0.0
  %931 = vmatpush1.msra.mxu0 0.0
  %932 = vmatprep.subr.mxu0 0.0
  %933 = vmatpush1.msra.mxu0 0.0
  %934 = vmatprep.subr.mxu0 0.0
  %935 = vmatpush1.msra.mxu0 0.0
  %936 = vmatprep.subr.mxu0 0.0
  %937 = vmatpush1.msra.mxu0 0.0
  %938 = vmatprep.subr.mxu0 0.0
  %939 = vmatpush1.msra.mxu0 0.0
  %940 = vmatprep.subr.mxu0 0.0
  %941 = vmatpush1.msra.mxu0 0.0
  %942 = vmatprep.subr.mxu0 0.0
  %943 = vmatpush1.msra.mxu0 0.0
  %944 = vmatprep.subr.mxu0 0.0
  %945 = vmatpush1.msra.mxu0 0.0
  %946 = vmatprep.subr.mxu0 0.0
  %947 = vmatpush1.msra.mxu0 0.0
  %948 = vmatprep.subr.mxu0 0.0
  %949 = vmatpush1.msra.mxu0 0.0
  %950 = vmatprep.subr.mxu0 0.0
  %951 = vmatpush1.msra.mxu0 0.0
  %952 = vmatprep.subr.mxu0 0.0
  %953 = vmatpush1.msra.mxu0 0.0
  %954 = vmatprep.subr.mxu0 0.0
  %955 = vmatpush1.msra.mxu0 0.0
  %956 = vmatprep.subr.mxu0 0.0
  %957 = vmatpush1.msra.mxu0 0.0
  %958 = vmatprep.subr.mxu0 0.0
  %959 = vmatpush1.msra.mxu0 0.0
  %960 = vmatprep.mubr.f32.mxu0 0.0
  %961 = vmatmul.mubr.f32.gmra.mrb[0].mxu0 %v661
  %v962 = vpop.f32.mrb[0].mxu0
  %v963 = vadd.f32 %v893, %v962
  %v964 = vpop.f32.mrb[0].mxu0
  %965 = vdwg.mxu0
  %966 = vmatprep.subr.mxu0 0.0
  %967 = vmatpush1.msra.mxu0 %v95
  %968 = vmatprep.subr.mxu0 0.0
  %969 = vmatpush1.msra.mxu0 %v96
  %970 = vmatprep.subr.mxu0 0.0
  %971 = vmatpush1.msra.mxu0 0.0
  %972 = vmatprep.subr.mxu0 0.0
  %973 = vmatpush1.msra.mxu0 0.0
  %974 = vmatprep.subr.mxu0 0.0
  %975 = vmatpush1.msra.mxu0 0.0
  %976 = vmatprep.subr.mxu0 0.0
  %977 = vmatpush1.msra.mxu0 0.0
  %978 = vmatprep.subr.mxu0 0.0
  %979 = vmatpush1.msra.mxu0 0.0
  %980 = vmatprep.subr.mxu0 0.0
  %981 = vmatpush1.msra.mxu0 0.0
  %982 = vmatprep.subr.mxu0 0.0
  %983 = vmatpush1.msra.mxu0 0.0
  %984 = vmatprep.subr.mxu0 0.0
  %985 = vmatpush1.msra.mxu0 0.0
  %986 = vmatprep.subr.mxu0 0.0
  %987 = vmatpush1.msra.mxu0 0.0
  %988 = vmatprep.subr.mxu0 0.0
  %989 = vmatpush1.msra.mxu0 0.0
  %990 = vmatprep.subr.mxu0 0.0
  %991 = vmatpush1.msra.mxu0 0.0
  %992 = vmatprep.subr.mxu0 0.0
  %993 = vmatpush1.msra.mxu0 0.0
  %994 = vmatprep.subr.mxu0 0.0
  %995 = vmatpush1.msra.mxu0 0.0
  %996 = vmatprep.subr.mxu0 0.0
  %997 = vmatpush1.msra.mxu0 0.0
  %998 = vmatprep.subr.mxu0 0.0
  %999 = vmatpush1.msra.mxu0 0.0
  %1000 = vmatprep.subr.mxu0 0.0
  %1001 = vmatpush1.msra.mxu0 0.0
  %1002 = vmatprep.subr.mxu0 0.0
  %1003 = vmatpush1.msra.mxu0 0.0
  %1004 = vmatprep.subr.mxu0 0.0
  %1005 = vmatpush1.msra.mxu0 0.0
  %1006 = vmatprep.subr.mxu0 0.0
  %1007 = vmatpush1.msra.mxu0 0.0
  %1008 = vmatprep.subr.mxu0 0.0
  %1009 = vmatpush1.msra.mxu0 0.0
  %1010 = vmatprep.subr.mxu0 0.0
  %1011 = vmatpush1.msra.mxu0 0.0
  %1012 = vmatprep.subr.mxu0 0.0
  %1013 = vmatpush1.msra.mxu0 0.0
  %1014 = vmatprep.subr.mxu0 0.0
  %1015 = vmatpush1.msra.mxu0 0.0
  %1016 = vmatprep.subr.mxu0 0.0
  %1017 = vmatpush1.msra.mxu0 0.0
  %1018 = vmatprep.subr.mxu0 0.0
  %1019 = vmatpush1.msra.mxu0 0.0
  %1020 = vmatprep.subr.mxu0 0.0
  %1021 = vmatpush1.msra.mxu0 0.0
  %1022 = vmatprep.subr.mxu0 0.0
  %1023 = vmatpush1.msra.mxu0 0.0
  %1024 = vmatprep.subr.mxu0 0.0
  %1025 = vmatpush1.msra.mxu0 0.0
  %1026 = vmatprep.subr.mxu0 0.0
  %1027 = vmatpush1.msra.mxu0 0.0
  %1028 = vmatprep.subr.mxu0 0.0
  %1029 = vmatpush1.msra.mxu0 0.0
  %1030 = vmatprep.mubr.f32.mxu0 0.0
  %1031 = vmatmul.mubr.f32.gmra.mrb[0].mxu0 %v200
  %v1032 = vpop.f32.mrb[0].mxu0
  %v1033 = vadd.f32 0.0, %v1032
  %v1034 = vpop.f32.mrb[0].mxu0
  %1035 = vdwg.mxu0
  %v1036 = vadd.f32 %v963, %v1033
  %v1038 = vlaneseq
  %v1039 = vshrl.u32 %v1038, 7
  %v1040 = vsub.s32 0, %v1039
  %v1041 = vrot.slane %v97, %v1040
  %v1043 = vadd.f32 %v1036, %v1041
  %v1044 = vxor.u32 %v1043, 2147483648
  %v1045 = vmul.f32 %v1044, 1.442695
  %v1046 = vpow.pop %v1045
  %v1047 = vadd.f32 %v1046, 1.0
  %v1048 = vrcp.pop %v1047
  %v1049 = vmul.f32 1.0, %v1048
  %v1050 = vsub.f32 1.0, %v1049
  %1052 = vset.pattern.permute.xlu0 0
  %1053 = vperm.xlu0 %1052, %v1050
  %v1054 = vpop.permute.xlu0 %1053
  %v1056 = vrot.slane %v508, 7
  %v1057 = vsel %vm659, %v1056, %v507
  %v1059 = vmul.f32 %v1054, %v1057
  %v1062 = vunpack.c.l.s4 1966171168
  %v1063 = vunpack.c.0.s8 %v1062
  %v1064 = vlaneseq
  %v1065 = vshrl.u32 %v1064, 7
  %v1066 = vsub.s32 %v1063, %v1065
  %v1067 = vrot.slane %v1059, %v1066
  %v1068 = vcombine.high %v1067, %v1067
  %v1070 = vunpack.c.l.s4 1966171168
  %v1071 = vunpack.c.0.s8 %v1070
  %v1072 = vlaneseq
  %v1073 = vshrl.u32 %v1072, 7
  %v1074 = vsub.s32 %v1071, %v1073
  %v1075 = vrot.slane %v1067, %v1074
  %v1077 = vunpack.c.l.s4 1966171168
  %v1078 = vunpack.c.0.s8 %v1077
  %v1079 = vlaneseq
  %v1080 = vshrl.u32 %v1079, 7
  %v1081 = vsub.s32 %v1078, %v1080
  %v1082 = vrot.slane %v1068, %v1081
  %v1083 = vsel %vm509, %v1075, 0
  %1085 = vmatprep.subr.mxu0 0.0
  %1086 = vmatpush1.msra.mxu0 %v119
  %1087 = vmatprep.subr.mxu0 0.0
  %1088 = vmatpush1.msra.mxu0 0.0
  %1089 = vmatprep.subr.mxu0 0.0
  %1090 = vmatpush1.msra.mxu0 0.0
  %1091 = vmatprep.subr.mxu0 0.0
  %1092 = vmatpush1.msra.mxu0 0.0
  %1093 = vmatprep.subr.mxu0 0.0
  %1094 = vmatpush1.msra.mxu0 0.0
  %1095 = vmatprep.subr.mxu0 0.0
  %1096 = vmatpush1.msra.mxu0 0.0
  %1097 = vmatprep.subr.mxu0 0.0
  %1098 = vmatpush1.msra.mxu0 0.0
  %1099 = vmatprep.subr.mxu0 0.0
  %1100 = vmatpush1.msra.mxu0 0.0
  %1101 = vmatprep.subr.mxu0 0.0
  %1102 = vmatpush1.msra.mxu0 0.0
  %1103 = vmatprep.subr.mxu0 0.0
  %1104 = vmatpush1.msra.mxu0 0.0
  %1105 = vmatprep.subr.mxu0 0.0
  %1106 = vmatpush1.msra.mxu0 0.0
  %1107 = vmatprep.subr.mxu0 0.0
  %1108 = vmatpush1.msra.mxu0 0.0
  %1109 = vmatprep.subr.mxu0 0.0
  %1110 = vmatpush1.msra.mxu0 0.0
  %1111 = vmatprep.subr.mxu0 0.0
  %1112 = vmatpush1.msra.mxu0 0.0
  %1113 = vmatprep.subr.mxu0 0.0
  %1114 = vmatpush1.msra.mxu0 0.0
  %1115 = vmatprep.subr.mxu0 0.0
  %1116 = vmatpush1.msra.mxu0 0.0
  %1117 = vmatprep.subr.mxu0 0.0
  %1118 = vmatpush1.msra.mxu0 0.0
  %1119 = vmatprep.subr.mxu0 0.0
  %1120 = vmatpush1.msra.mxu0 0.0
  %1121 = vmatprep.subr.mxu0 0.0
  %1122 = vmatpush1.msra.mxu0 0.0
  %1123 = vmatprep.subr.mxu0 0.0
  %1124 = vmatpush1.msra.mxu0 0.0
  %1125 = vmatprep.subr.mxu0 0.0
  %1126 = vmatpush1.msra.mxu0 0.0
  %1127 = vmatprep.subr.mxu0 0.0
  %1128 = vmatpush1.msra.mxu0 0.0
  %1129 = vmatprep.subr.mxu0 0.0
  %1130 = vmatpush1.msra.mxu0 0.0
  %1131 = vmatprep.subr.mxu0 0.0
  %1132 = vmatpush1.msra.mxu0 0.0
  %1133 = vmatprep.subr.mxu0 0.0
  %1134 = vmatpush1.msra.mxu0 0.0
  %1135 = vmatprep.subr.mxu0 0.0
  %1136 = vmatpush1.msra.mxu0 0.0
  %1137 = vmatprep.subr.mxu0 0.0
  %1138 = vmatpush1.msra.mxu0 0.0
  %1139 = vmatprep.subr.mxu0 0.0
  %1140 = vmatpush1.msra.mxu0 0.0
  %1141 = vmatprep.subr.mxu0 0.0
  %1142 = vmatpush1.msra.mxu0 0.0
  %1143 = vmatprep.subr.mxu0 0.0
  %1144 = vmatpush1.msra.mxu0 0.0
  %1145 = vmatprep.subr.mxu0 0.0
  %1146 = vmatpush1.msra.mxu0 0.0
  %1147 = vmatprep.subr.mxu0 0.0
  %1148 = vmatpush1.msra.mxu0 0.0
  %1149 = vmatprep.mubr.f32.mxu0 0.0
  %1150 = vmatmul.mubr.f32.gmra.mrb[0].mxu0 %v1083
  %v1151 = vpop.f32.mrb[0].mxu0
  %v1152 = vadd.f32 0.0, %v1151
  %v1153 = vpop.f32.mrb[0].mxu0
  %1154 = vdwg.mxu0
  %v1155 = vsel %vm509, %v1082, 0
  %1157 = vmatprep.subr.mxu0 0.0
  %1158 = vmatpush1.msra.mxu0 %v120
  %1159 = vmatprep.subr.mxu0 0.0
  %1160 = vmatpush1.msra.mxu0 0.0
  %1161 = vmatprep.subr.mxu0 0.0
  %1162 = vmatpush1.msra.mxu0 0.0
  %1163 = vmatprep.subr.mxu0 0.0
  %1164 = vmatpush1.msra.mxu0 0.0
  %1165 = vmatprep.subr.mxu0 0.0
  %1166 = vmatpush1.msra.mxu0 0.0
  %1167 = vmatprep.subr.mxu0 0.0
  %1168 = vmatpush1.msra.mxu0 0.0
  %1169 = vmatprep.subr.mxu0 0.0
  %1170 = vmatpush1.msra.mxu0 0.0
  %1171 = vmatprep.subr.mxu0 0.0
  %1172 = vmatpush1.msra.mxu0 0.0
  %1173 = vmatprep.subr.mxu0 0.0
  %1174 = vmatpush1.msra.mxu0 0.0
  %1175 = vmatprep.subr.mxu0 0.0
  %1176 = vmatpush1.msra.mxu0 0.0
  %1177 = vmatprep.subr.mxu0 0.0
  %1178 = vmatpush1.msra.mxu0 0.0
  %1179 = vmatprep.subr.mxu0 0.0
  %1180 = vmatpush1.msra.mxu0 0.0
  %1181 = vmatprep.subr.mxu0 0.0
  %1182 = vmatpush1.msra.mxu0 0.0
  %1183 = vmatprep.subr.mxu0 0.0
  %1184 = vmatpush1.msra.mxu0 0.0
  %1185 = vmatprep.subr.mxu0 0.0
  %1186 = vmatpush1.msra.mxu0 0.0
  %1187 = vmatprep.subr.mxu0 0.0
  %1188 = vmatpush1.msra.mxu0 0.0
  %1189 = vmatprep.subr.mxu0 0.0
  %1190 = vmatpush1.msra.mxu0 0.0
  %1191 = vmatprep.subr.mxu0 0.0
  %1192 = vmatpush1.msra.mxu0 0.0
  %1193 = vmatprep.subr.mxu0 0.0
  %1194 = vmatpush1.msra.mxu0 0.0
  %1195 = vmatprep.subr.mxu0 0.0
  %1196 = vmatpush1.msra.mxu0 0.0
  %1197 = vmatprep.subr.mxu0 0.0
  %1198 = vmatpush1.msra.mxu0 0.0
  %1199 = vmatprep.subr.mxu0 0.0
  %1200 = vmatpush1.msra.mxu0 0.0
  %1201 = vmatprep.subr.mxu0 0.0
  %1202 = vmatpush1.msra.mxu0 0.0
  %1203 = vmatprep.subr.mxu0 0.0
  %1204 = vmatpush1.msra.mxu0 0.0
  %1205 = vmatprep.subr.mxu0 0.0
  %1206 = vmatpush1.msra.mxu0 0.0
  %1207 = vmatprep.subr.mxu0 0.0
  %1208 = vmatpush1.msra.mxu0 0.0
  %1209 = vmatprep.subr.mxu0 0.0
  %1210 = vmatpush1.msra.mxu0 0.0
  %1211 = vmatprep.subr.mxu0 0.0
  %1212 = vmatpush1.msra.mxu0 0.0
  %1213 = vmatprep.subr.mxu0 0.0
  %1214 = vmatpush1.msra.mxu0 0.0
  %1215 = vmatprep.subr.mxu0 0.0
  %1216 = vmatpush1.msra.mxu0 0.0
  %1217 = vmatprep.subr.mxu0 0.0
  %1218 = vmatpush1.msra.mxu0 0.0
  %1219 = vmatprep.subr.mxu0 0.0
  %1220 = vmatpush1.msra.mxu0 0.0
  %1221 = vmatprep.mubr.f32.mxu0 0.0
  %1222 = vmatmul.mubr.f32.gmra.mrb[0].mxu0 %v1155
  %v1223 = vpop.f32.mrb[0].mxu0
  %v1224 = vadd.f32 0.0, %v1223
  %v1225 = vpop.f32.mrb[0].mxu0
  %1226 = vdwg.mxu0
  %1228 = vset.pattern.permute.xlu0 0
  %1229 = vperm.xlu0 %1228, %v1049
  %v1230 = vpop.permute.xlu0 %1229
  %v1232 = vmul.f32 %v1230, %v825
  %v1233 = vadd.f32 %v1232, %v64
  %v1236 = vrot.slane %v1224, 7
  %v1237 = vsel %vm659, %v1236, %v1152
  %v1239 = vadd.f32 %v1233, %v1237
  %1240 = vst [vmem:[%s17] sm:$0x3] %v1239
  %v1241 = vsel %vm814, %v1239, -inf
  %1242 = vmax.xlane.f32.xlu0 %v1241
  %v1243 = vpop.xlane.xlu0 %1242
  %vm1244 = vcmp.eq.f32.partialorder %v1239, %v1243
  %v1245 = vsel %vm1244, %v100, 128
  %v1246 = vsel %vm814, %v1245, 2147483647
  %v1247 = vand.u32 %v1246, 65535
  %v1248 = vshra.s32 %v1246, 16
  %v1249 = vcvt.s32.f32 %v1247
  %v1250 = vcvt.s32.f32 %v1248
  %1251 = vmin.xlane.f32.xlu0 %v1250
  %v1252 = vpop.xlane.xlu0 %1251
  %vm1253 = vcmp.eq.f32.partialorder %v1250, %v1252
  %v1254 = vsel %vm1253, %v1249, inf
  %1255 = vmin.xlane.f32.xlu0 %v1254
  %v1256 = vpop.xlane.xlu0 %1255
  %v1257 = vcvt.f32.s32 %v1256
  %v1258 = vcvt.f32.s32 %v1252
  %v1259 = vshll.u32 %v1258, 16
  %v1260 = vadd.s32 %v1259, %v1257
  %vm1261 = vcmp.ge.s32.totalorder %v1260, 32
  %v1262 = vsel %vm1261, 1, %v1260
  %vm1263 = vcmp.eq.s32.totalorder %v1262, %v100
  %v1264 = vsel %vm1263, 1, 0
  %v1265 = vcvt.s32.f32 %v1264
  %v1267 = vsel %vm124, %v1265, 0
  %1269 = vmatprep.subr.mxu0 0.0
  %1270 = vmatpush1.msra.mxu0 %v60
  %1271 = vmatprep.subr.mxu0 0.0
  %1272 = vmatpush1.msra.mxu0 %v61
  %1273 = vmatprep.subr.mxu0 0.0
  %1274 = vmatpush1.msra.mxu0 %v62
  %1275 = vmatprep.subr.mxu0 0.0
  %1276 = vmatpush1.msra.mxu0 %v63
  %1277 = vmatprep.subr.mxu0 0.0
  %1278 = vmatpush1.msra.mxu0 0.0
  %1279 = vmatprep.subr.mxu0 0.0
  %1280 = vmatpush1.msra.mxu0 0.0
  %1281 = vmatprep.subr.mxu0 0.0
  %1282 = vmatpush1.msra.mxu0 0.0
  %1283 = vmatprep.subr.mxu0 0.0
  %1284 = vmatpush1.msra.mxu0 0.0
  %1285 = vmatprep.subr.mxu0 0.0
  %1286 = vmatpush1.msra.mxu0 0.0
  %1287 = vmatprep.subr.mxu0 0.0
  %1288 = vmatpush1.msra.mxu0 0.0
  %1289 = vmatprep.subr.mxu0 0.0
  %1290 = vmatpush1.msra.mxu0 0.0
  %1291 = vmatprep.subr.mxu0 0.0
  %1292 = vmatpush1.msra.mxu0 0.0
  %1293 = vmatprep.subr.mxu0 0.0
  %1294 = vmatpush1.msra.mxu0 0.0
  %1295 = vmatprep.subr.mxu0 0.0
  %1296 = vmatpush1.msra.mxu0 0.0
  %1297 = vmatprep.subr.mxu0 0.0
  %1298 = vmatpush1.msra.mxu0 0.0
  %1299 = vmatprep.subr.mxu0 0.0
  %1300 = vmatpush1.msra.mxu0 0.0
  %1301 = vmatprep.subr.mxu0 0.0
  %1302 = vmatpush1.msra.mxu0 0.0
  %1303 = vmatprep.subr.mxu0 0.0
  %1304 = vmatpush1.msra.mxu0 0.0
  %1305 = vmatprep.subr.mxu0 0.0
  %1306 = vmatpush1.msra.mxu0 0.0
  %1307 = vmatprep.subr.mxu0 0.0
  %1308 = vmatpush1.msra.mxu0 0.0
  %1309 = vmatprep.subr.mxu0 0.0
  %1310 = vmatpush1.msra.mxu0 0.0
  %1311 = vmatprep.subr.mxu0 0.0
  %1312 = vmatpush1.msra.mxu0 0.0
  %1313 = vmatprep.subr.mxu0 0.0
  %1314 = vmatpush1.msra.mxu0 0.0
  %1315 = vmatprep.subr.mxu0 0.0
  %1316 = vmatpush1.msra.mxu0 0.0
  %1317 = vmatprep.subr.mxu0 0.0
  %1318 = vmatpush1.msra.mxu0 0.0
  %1319 = vmatprep.subr.mxu0 0.0
  %1320 = vmatpush1.msra.mxu0 0.0
  %1321 = vmatprep.subr.mxu0 0.0
  %1322 = vmatpush1.msra.mxu0 0.0
  %1323 = vmatprep.subr.mxu0 0.0
  %1324 = vmatpush1.msra.mxu0 0.0
  %1325 = vmatprep.subr.mxu0 0.0
  %1326 = vmatpush1.msra.mxu0 0.0
  %1327 = vmatprep.subr.mxu0 0.0
  %1328 = vmatpush1.msra.mxu0 0.0
  %1329 = vmatprep.subr.mxu0 0.0
  %1330 = vmatpush1.msra.mxu0 0.0
  %1331 = vmatprep.subr.mxu0 0.0
  %1332 = vmatpush1.msra.mxu0 0.0
  %1333 = vmatprep.mubr.f32.mxu0 0.0
  %1334 = vmatmul.mubr.f32.gmra.mrb[0].mxu0 %v1267
  %v1335 = vpop.f32.mrb[0].mxu0
  %v1336 = vadd.f32 0.0, %v1335
  %v1337 = vpop.f32.mrb[0].mxu0
  %1338 = vdwg.mxu0
  %1339 = vmatprep.subr.mxu0 0.0
  %1340 = vmatpush1.msra.mxu0 %v67
  %1341 = vmatprep.subr.mxu0 0.0
  %1342 = vmatpush1.msra.mxu0 %v68
  %1343 = vmatprep.subr.mxu0 0.0
  %1344 = vmatpush1.msra.mxu0 %v69
  %1345 = vmatprep.subr.mxu0 0.0
  %1346 = vmatpush1.msra.mxu0 %v70
  %1347 = vmatprep.subr.mxu0 0.0
  %1348 = vmatpush1.msra.mxu0 0.0
  %1349 = vmatprep.subr.mxu0 0.0
  %1350 = vmatpush1.msra.mxu0 0.0
  %1351 = vmatprep.subr.mxu0 0.0
  %1352 = vmatpush1.msra.mxu0 0.0
  %1353 = vmatprep.subr.mxu0 0.0
  %1354 = vmatpush1.msra.mxu0 0.0
  %1355 = vmatprep.subr.mxu0 0.0
  %1356 = vmatpush1.msra.mxu0 0.0
  %1357 = vmatprep.subr.mxu0 0.0
  %1358 = vmatpush1.msra.mxu0 0.0
  %1359 = vmatprep.subr.mxu0 0.0
  %1360 = vmatpush1.msra.mxu0 0.0
  %1361 = vmatprep.subr.mxu0 0.0
  %1362 = vmatpush1.msra.mxu0 0.0
  %1363 = vmatprep.subr.mxu0 0.0
  %1364 = vmatpush1.msra.mxu0 0.0
  %1365 = vmatprep.subr.mxu0 0.0
  %1366 = vmatpush1.msra.mxu0 0.0
  %1367 = vmatprep.subr.mxu0 0.0
  %1368 = vmatpush1.msra.mxu0 0.0
  %1369 = vmatprep.subr.mxu0 0.0
  %1370 = vmatpush1.msra.mxu0 0.0
  %1371 = vmatprep.subr.mxu0 0.0
  %1372 = vmatpush1.msra.mxu0 0.0
  %1373 = vmatprep.subr.mxu0 0.0
  %1374 = vmatpush1.msra.mxu0 0.0
  %1375 = vmatprep.subr.mxu0 0.0
  %1376 = vmatpush1.msra.mxu0 0.0
  %1377 = vmatprep.subr.mxu0 0.0
  %1378 = vmatpush1.msra.mxu0 0.0
  %1379 = vmatprep.subr.mxu0 0.0
  %1380 = vmatpush1.msra.mxu0 0.0
  %1381 = vmatprep.subr.mxu0 0.0
  %1382 = vmatpush1.msra.mxu0 0.0
  %1383 = vmatprep.subr.mxu0 0.0
  %1384 = vmatpush1.msra.mxu0 0.0
  %1385 = vmatprep.subr.mxu0 0.0
  %1386 = vmatpush1.msra.mxu0 0.0
  %1387 = vmatprep.subr.mxu0 0.0
  %1388 = vmatpush1.msra.mxu0 0.0
  %1389 = vmatprep.subr.mxu0 0.0
  %1390 = vmatpush1.msra.mxu0 0.0
  %1391 = vmatprep.subr.mxu0 0.0
  %1392 = vmatpush1.msra.mxu0 0.0
  %1393 = vmatprep.subr.mxu0 0.0
  %1394 = vmatpush1.msra.mxu0 0.0
  %1395 = vmatprep.subr.mxu0 0.0
  %1396 = vmatpush1.msra.mxu0 0.0
  %1397 = vmatprep.subr.mxu0 0.0
  %1398 = vmatpush1.msra.mxu0 0.0
  %1399 = vmatprep.subr.mxu0 0.0
  %1400 = vmatpush1.msra.mxu0 0.0
  %1401 = vmatprep.subr.mxu0 0.0
  %1402 = vmatpush1.msra.mxu0 0.0
  %1403 = vmatprep.mubr.f32.mxu0 0.0
  %1404 = vmatmul.mubr.f32.gmra.mrb[0].mxu0 %v735
  %v1405 = vpop.f32.mrb[0].mxu0
  %v1406 = vadd.f32 0.0, %v1405
  %v1407 = vpop.f32.mrb[0].mxu0
  %1408 = vdwg.mxu0
  %v1410 = vsel %vm198, %v1336, 0
  %1412 = vmatprep.subr.mxu0 0.0
  %1413 = vmatpush1.msra.mxu0 %v65
  %1414 = vmatprep.subr.mxu0 0.0
  %1415 = vmatpush1.msra.mxu0 %v66
  %1416 = vmatprep.subr.mxu0 0.0
  %1417 = vmatpush1.msra.mxu0 0.0
  %1418 = vmatprep.subr.mxu0 0.0
  %1419 = vmatpush1.msra.mxu0 0.0
  %1420 = vmatprep.subr.mxu0 0.0
  %1421 = vmatpush1.msra.mxu0 0.0
  %1422 = vmatprep.subr.mxu0 0.0
  %1423 = vmatpush1.msra.mxu0 0.0
  %1424 = vmatprep.subr.mxu0 0.0
  %1425 = vmatpush1.msra.mxu0 0.0
  %1426 = vmatprep.subr.mxu0 0.0
  %1427 = vmatpush1.msra.mxu0 0.0
  %1428 = vmatprep.subr.mxu0 0.0
  %1429 = vmatpush1.msra.mxu0 0.0
  %1430 = vmatprep.subr.mxu0 0.0
  %1431 = vmatpush1.msra.mxu0 0.0
  %1432 = vmatprep.subr.mxu0 0.0
  %1433 = vmatpush1.msra.mxu0 0.0
  %1434 = vmatprep.subr.mxu0 0.0
  %1435 = vmatpush1.msra.mxu0 0.0
  %1436 = vmatprep.subr.mxu0 0.0
  %1437 = vmatpush1.msra.mxu0 0.0
  %1438 = vmatprep.subr.mxu0 0.0
  %1439 = vmatpush1.msra.mxu0 0.0
  %1440 = vmatprep.subr.mxu0 0.0
  %1441 = vmatpush1.msra.mxu0 0.0
  %1442 = vmatprep.subr.mxu0 0.0
  %1443 = vmatpush1.msra.mxu0 0.0
  %1444 = vmatprep.subr.mxu0 0.0
  %1445 = vmatpush1.msra.mxu0 0.0
  %1446 = vmatprep.subr.mxu0 0.0
  %1447 = vmatpush1.msra.mxu0 0.0
  %1448 = vmatprep.subr.mxu0 0.0
  %1449 = vmatpush1.msra.mxu0 0.0
  %1450 = vmatprep.subr.mxu0 0.0
  %1451 = vmatpush1.msra.mxu0 0.0
  %1452 = vmatprep.subr.mxu0 0.0
  %1453 = vmatpush1.msra.mxu0 0.0
  %1454 = vmatprep.subr.mxu0 0.0
  %1455 = vmatpush1.msra.mxu0 0.0
  %1456 = vmatprep.subr.mxu0 0.0
  %1457 = vmatpush1.msra.mxu0 0.0
  %1458 = vmatprep.subr.mxu0 0.0
  %1459 = vmatpush1.msra.mxu0 0.0
  %1460 = vmatprep.subr.mxu0 0.0
  %1461 = vmatpush1.msra.mxu0 0.0
  %1462 = vmatprep.subr.mxu0 0.0
  %1463 = vmatpush1.msra.mxu0 0.0
  %1464 = vmatprep.subr.mxu0 0.0
  %1465 = vmatpush1.msra.mxu0 0.0
  %1466 = vmatprep.subr.mxu0 0.0
  %1467 = vmatpush1.msra.mxu0 0.0
  %1468 = vmatprep.subr.mxu0 0.0
  %1469 = vmatpush1.msra.mxu0 0.0
  %1470 = vmatprep.subr.mxu0 0.0
  %1471 = vmatpush1.msra.mxu0 0.0
  %1472 = vmatprep.subr.mxu0 0.0
  %1473 = vmatpush1.msra.mxu0 0.0
  %1474 = vmatprep.subr.mxu0 0.0
  %1475 = vmatpush1.msra.mxu0 0.0
  %1476 = vmatprep.mubr.f32.mxu0 0.0
  %1477 = vmatmul.mubr.f32.gmra.mrb[0].mxu0 %v1410
  %v1478 = vpop.f32.mrb[0].mxu0
  %v1479 = vadd.f32 %v1406, %v1478
  %v1480 = vpop.f32.mrb[0].mxu0
  %1481 = vdwg.mxu0
  %v1482 = vadd.f32 %v1479, %v76
  %v1483 = vxor.u32 %v1482, 2147483648
  %v1484 = vmul.f32 %v1483, 1.442695
  %v1485 = vpow.pop %v1484
  %v1486 = vadd.f32 %v1485, 1.0
  %v1487 = vrcp.pop %v1486
  %v1488 = vmul.f32 1.0, %v1487
  %v1489 = vtanh.pop %v1482
  %v1490 = vmul.f32 %v1488, %v294
  %1492 = vrot.lane.b32.xlu0 %v1489, 64
  %v1493 = vpop.permute.xlu0 %1492
  %v1495 = vmul.f32 %v1488, %v1493
  %1497 = vrot.lane.b32.xlu0 %v1495, 32
  %v1498 = vpop.permute.xlu0 %1497
  %v1500 = vadd.f32 %v1490, %v1498
  %v1501 = vtanh.pop %v1500
  %1503 = vrot.lane.b32.xlu0 %v1501, 64
  %v1504 = vpop.permute.xlu0 %1503
  %v1506 = vmul.f32 %v1488, %v1504
  %v1509 = vunpack.c.l.s4 1966171168
  %v1510 = vunpack.c.0.s8 %v1509
  %v1511 = vlaneseq
  %v1512 = vshrl.u32 %v1511, 7
  %v1513 = vsub.s32 %v1510, %v1512
  %v1514 = vrot.slane %v1506, %v1513
  %v1515 = vcombine.high %v1514, %v1514
  %v1517 = vunpack.c.l.s4 1966171168
  %v1518 = vunpack.c.0.s8 %v1517
  %v1519 = vlaneseq
  %v1520 = vshrl.u32 %v1519, 7
  %v1521 = vsub.s32 %v1518, %v1520
  %v1522 = vrot.slane %v1514, %v1521
  %v1524 = vunpack.c.l.s4 1966171168
  %v1525 = vunpack.c.0.s8 %v1524
  %v1526 = vlaneseq
  %v1527 = vshrl.u32 %v1526, 7
  %v1528 = vsub.s32 %v1525, %v1527
  %v1529 = vrot.slane %v1515, %v1528
  %v1530 = vlaneseq
  %v1531 = vshrl.u32 %v1530, 7
  %v1532 = vsub.s32 0, %v1531
  %v1533 = vrot.slane %v1522, %v1532
  %1534 = vrot.lane.b32.xlu0 %v1533, 32
  %v1535 = vpop.permute.xlu0 %1534
  %v1536 = vsel %vm124, %v1535, 0
  %1538 = vmatprep.subr.mxu0 0.0
  %1539 = vmatpush1.xpose.msra.mxu0 %v333
  %1540 = vmatprep.subr.mxu0 0.0
  %1541 = vmatpush1.xpose.msra.mxu0 0.0
  %1542 = vmatprep.subr.mxu0 0.0
  %1543 = vmatpush1.xpose.msra.mxu0 0.0
  %1544 = vmatprep.subr.mxu0 0.0
  %1545 = vmatpush1.xpose.msra.mxu0 0.0
  %1546 = vmatprep.subr.mxu0 0.0
  %1547 = vmatpush1.xpose.msra.mxu0 0.0
  %1548 = vmatprep.subr.mxu0 0.0
  %1549 = vmatpush1.xpose.msra.mxu0 0.0
  %1550 = vmatprep.subr.mxu0 0.0
  %1551 = vmatpush1.xpose.msra.mxu0 0.0
  %1552 = vmatprep.subr.mxu0 0.0
  %1553 = vmatpush1.xpose.msra.mxu0 0.0
  %1554 = vmatprep.subr.mxu0 0.0
  %1555 = vmatpush1.xpose.msra.mxu0 0.0
  %1556 = vmatprep.subr.mxu0 0.0
  %1557 = vmatpush1.xpose.msra.mxu0 0.0
  %1558 = vmatprep.subr.mxu0 0.0
  %1559 = vmatpush1.xpose.msra.mxu0 0.0
  %1560 = vmatprep.subr.mxu0 0.0
  %1561 = vmatpush1.xpose.msra.mxu0 0.0
  %1562 = vmatprep.subr.mxu0 0.0
  %1563 = vmatpush1.xpose.msra.mxu0 0.0
  %1564 = vmatprep.subr.mxu0 0.0
  %1565 = vmatpush1.xpose.msra.mxu0 0.0
  %1566 = vmatprep.subr.mxu0 0.0
  %1567 = vmatpush1.xpose.msra.mxu0 0.0
  %1568 = vmatprep.subr.mxu0 0.0
  %1569 = vmatpush1.xpose.msra.mxu0 0.0
  %1570 = vmatprep.subr.mxu0 0.0
  %1571 = vmatpush1.xpose.msra.mxu0 0.0
  %1572 = vmatprep.subr.mxu0 0.0
  %1573 = vmatpush1.xpose.msra.mxu0 0.0
  %1574 = vmatprep.subr.mxu0 0.0
  %1575 = vmatpush1.xpose.msra.mxu0 0.0
  %1576 = vmatprep.subr.mxu0 0.0
  %1577 = vmatpush1.xpose.msra.mxu0 0.0
  %1578 = vmatprep.subr.mxu0 0.0
  %1579 = vmatpush1.xpose.msra.mxu0 0.0
  %1580 = vmatprep.subr.mxu0 0.0
  %1581 = vmatpush1.xpose.msra.mxu0 0.0
  %1582 = vmatprep.subr.mxu0 0.0
  %1583 = vmatpush1.xpose.msra.mxu0 0.0
  %1584 = vmatprep.subr.mxu0 0.0
  %1585 = vmatpush1.xpose.msra.mxu0 0.0
  %1586 = vmatprep.subr.mxu0 0.0
  %1587 = vmatpush1.xpose.msra.mxu0 0.0
  %1588 = vmatprep.subr.mxu0 0.0
  %1589 = vmatpush1.xpose.msra.mxu0 0.0
  %1590 = vmatprep.subr.mxu0 0.0
  %1591 = vmatpush1.xpose.msra.mxu0 0.0
  %1592 = vmatprep.subr.mxu0 0.0
  %1593 = vmatpush1.xpose.msra.mxu0 0.0
  %1594 = vmatprep.subr.mxu0 0.0
  %1595 = vmatpush1.xpose.msra.mxu0 0.0
  %1596 = vmatprep.subr.mxu0 0.0
  %1597 = vmatpush1.xpose.msra.mxu0 0.0
  %1598 = vmatprep.subr.mxu0 0.0
  %1599 = vmatpush1.xpose.msra.mxu0 0.0
  %1600 = vmatprep.subr.mxu0 0.0
  %1601 = vmatpush1.xpose.msra.mxu0 0.0
  %1602 = vmatprep.mubr.f32.mxu0 0.0
  %1603 = vmatmul.mubr.f32.gmra.mrb[0].mxu0 %v1536
  %v1604 = vpop.f32.mrb[0].mxu0
  %v1605 = vadd.f32 0.0, %v1604
  %v1606 = vpop.f32.mrb[0].mxu0
  %1607 = vdwg.mxu0
  %v1608 = vlaneseq
  %v1609 = vshrl.u32 %v1608, 7
  %v1610 = vsub.s32 0, %v1609
  %v1611 = vrot.slane %v1529, %v1610
  %1612 = vrot.lane.b32.xlu0 %v1611, 32
  %v1613 = vpop.permute.xlu0 %1612
  %v1614 = vsel %vm124, %v1613, 0
  %1616 = vmatprep.subr.mxu0 0.0
  %1617 = vmatpush1.xpose.msra.mxu0 %v414
  %1618 = vmatprep.subr.mxu0 0.0
  %1619 = vmatpush1.xpose.msra.mxu0 0.0
  %1620 = vmatprep.subr.mxu0 0.0
  %1621 = vmatpush1.xpose.msra.mxu0 0.0
  %1622 = vmatprep.subr.mxu0 0.0
  %1623 = vmatpush1.xpose.msra.mxu0 0.0
  %1624 = vmatprep.subr.mxu0 0.0
  %1625 = vmatpush1.xpose.msra.mxu0 0.0
  %1626 = vmatprep.subr.mxu0 0.0
  %1627 = vmatpush1.xpose.msra.mxu0 0.0
  %1628 = vmatprep.subr.mxu0 0.0
  %1629 = vmatpush1.xpose.msra.mxu0 0.0
  %1630 = vmatprep.subr.mxu0 0.0
  %1631 = vmatpush1.xpose.msra.mxu0 0.0
  %1632 = vmatprep.subr.mxu0 0.0
  %1633 = vmatpush1.xpose.msra.mxu0 0.0
  %1634 = vmatprep.subr.mxu0 0.0
  %1635 = vmatpush1.xpose.msra.mxu0 0.0
  %1636 = vmatprep.subr.mxu0 0.0
  %1637 = vmatpush1.xpose.msra.mxu0 0.0
  %1638 = vmatprep.subr.mxu0 0.0
  %1639 = vmatpush1.xpose.msra.mxu0 0.0
  %1640 = vmatprep.subr.mxu0 0.0
  %1641 = vmatpush1.xpose.msra.mxu0 0.0
  %1642 = vmatprep.subr.mxu0 0.0
  %1643 = vmatpush1.xpose.msra.mxu0 0.0
  %1644 = vmatprep.subr.mxu0 0.0
  %1645 = vmatpush1.xpose.msra.mxu0 0.0
  %1646 = vmatprep.subr.mxu0 0.0
  %1647 = vmatpush1.xpose.msra.mxu0 0.0
  %1648 = vmatprep.subr.mxu0 0.0
  %1649 = vmatpush1.xpose.msra.mxu0 0.0
  %1650 = vmatprep.subr.mxu0 0.0
  %1651 = vmatpush1.xpose.msra.mxu0 0.0
  %1652 = vmatprep.subr.mxu0 0.0
  %1653 = vmatpush1.xpose.msra.mxu0 0.0
  %1654 = vmatprep.subr.mxu0 0.0
  %1655 = vmatpush1.xpose.msra.mxu0 0.0
  %1656 = vmatprep.subr.mxu0 0.0
  %1657 = vmatpush1.xpose.msra.mxu0 0.0
  %1658 = vmatprep.subr.mxu0 0.0
  %1659 = vmatpush1.xpose.msra.mxu0 0.0
  %1660 = vmatprep.subr.mxu0 0.0
  %1661 = vmatpush1.xpose.msra.mxu0 0.0
  %1662 = vmatprep.subr.mxu0 0.0
  %1663 = vmatpush1.xpose.msra.mxu0 0.0
  %1664 = vmatprep.subr.mxu0 0.0
  %1665 = vmatpush1.xpose.msra.mxu0 0.0
  %1666 = vmatprep.subr.mxu0 0.0
  %1667 = vmatpush1.xpose.msra.mxu0 0.0
  %1668 = vmatprep.subr.mxu0 0.0
  %1669 = vmatpush1.xpose.msra.mxu0 0.0
  %1670 = vmatprep.subr.mxu0 0.0
  %1671 = vmatpush1.xpose.msra.mxu0 0.0
  %1672 = vmatprep.subr.mxu0 0.0
  %1673 = vmatpush1.xpose.msra.mxu0 0.0
  %1674 = vmatprep.subr.mxu0 0.0
  %1675 = vmatpush1.xpose.msra.mxu0 0.0
  %1676 = vmatprep.subr.mxu0 0.0
  %1677 = vmatpush1.xpose.msra.mxu0 0.0
  %1678 = vmatprep.subr.mxu0 0.0
  %1679 = vmatpush1.xpose.msra.mxu0 0.0
  %1680 = vmatprep.mubr.f32.mxu0 0.0
  %1681 = vmatmul.mubr.f32.gmra.mrb[0].mxu0 %v1614
  %v1682 = vpop.f32.mrb[0].mxu0
  %v1683 = vadd.f32 0.0, %v1682
  %v1684 = vpop.f32.mrb[0].mxu0
  %1685 = vdwg.mxu0
  %v1686 = vsel %vm486, %v1605, -inf
  %1687 = vmax.xlane.f32.xlu0 %v1686
  %v1688 = vpop.xlane.xlu0 %1687
  %v1689 = vsel %vm486, %v1683, -inf
  %1690 = vmax.xlane.f32.xlu0 %v1689
  %v1691 = vpop.xlane.xlu0 %1690
  %v1692 = vsub.f32 %v1605, %v1688
  %v1693 = vsub.f32 %v1683, %v1691
  %v1694 = vmul.f32 %v1692, 1.442695
  %v1695 = vpow.pop %v1694
  %v1696 = vmul.f32 %v1693, 1.442695
  %v1697 = vpow.pop %v1696
  %v1698 = vsel %vm486, %v1695, 0.0
  %1699 = vadd.xlane.f32.xlu0 %v1698
  %v1700 = vpop.xlane.xlu0 %1699
  %v1701 = vsel %vm486, %v1697, 0.0
  %1702 = vadd.xlane.f32.xlu0 %v1701
  %v1703 = vpop.xlane.xlu0 %1702
  %v1704 = vrcp.pop %v1700
  %v1705 = vrcp.pop %v1703
  %v1706 = vmul.f32 %v1695, %v1704
  %v1707 = vmul.f32 %v1697, %v1705
  %v1709 = vsel %vm509, %v1706, 0
  %1711 = vmatprep.subr.mxu0 0.0
  %1712 = vmatpush1.msra.mxu0 %v58
  %1713 = vmatprep.subr.mxu0 0.0
  %1714 = vmatpush1.msra.mxu0 0.0
  %1715 = vmatprep.subr.mxu0 0.0
  %1716 = vmatpush1.msra.mxu0 0.0
  %1717 = vmatprep.subr.mxu0 0.0
  %1718 = vmatpush1.msra.mxu0 0.0
  %1719 = vmatprep.subr.mxu0 0.0
  %1720 = vmatpush1.msra.mxu0 0.0
  %1721 = vmatprep.subr.mxu0 0.0
  %1722 = vmatpush1.msra.mxu0 0.0
  %1723 = vmatprep.subr.mxu0 0.0
  %1724 = vmatpush1.msra.mxu0 0.0
  %1725 = vmatprep.subr.mxu0 0.0
  %1726 = vmatpush1.msra.mxu0 0.0
  %1727 = vmatprep.subr.mxu0 0.0
  %1728 = vmatpush1.msra.mxu0 0.0
  %1729 = vmatprep.subr.mxu0 0.0
  %1730 = vmatpush1.msra.mxu0 0.0
  %1731 = vmatprep.subr.mxu0 0.0
  %1732 = vmatpush1.msra.mxu0 0.0
  %1733 = vmatprep.subr.mxu0 0.0
  %1734 = vmatpush1.msra.mxu0 0.0
  %1735 = vmatprep.subr.mxu0 0.0
  %1736 = vmatpush1.msra.mxu0 0.0
  %1737 = vmatprep.subr.mxu0 0.0
  %1738 = vmatpush1.msra.mxu0 0.0
  %1739 = vmatprep.subr.mxu0 0.0
  %1740 = vmatpush1.msra.mxu0 0.0
  %1741 = vmatprep.subr.mxu0 0.0
  %1742 = vmatpush1.msra.mxu0 0.0
  %1743 = vmatprep.subr.mxu0 0.0
  %1744 = vmatpush1.msra.mxu0 0.0
  %1745 = vmatprep.subr.mxu0 0.0
  %1746 = vmatpush1.msra.mxu0 0.0
  %1747 = vmatprep.subr.mxu0 0.0
  %1748 = vmatpush1.msra.mxu0 0.0
  %1749 = vmatprep.subr.mxu0 0.0
  %1750 = vmatpush1.msra.mxu0 0.0
  %1751 = vmatprep.subr.mxu0 0.0
  %1752 = vmatpush1.msra.mxu0 0.0
  %1753 = vmatprep.subr.mxu0 0.0
  %1754 = vmatpush1.msra.mxu0 0.0
  %1755 = vmatprep.subr.mxu0 0.0
  %1756 = vmatpush1.msra.mxu0 0.0
  %1757 = vmatprep.subr.mxu0 0.0
  %1758 = vmatpush1.msra.mxu0 0.0
  %1759 = vmatprep.subr.mxu0 0.0
  %1760 = vmatpush1.msra.mxu0 0.0
  %1761 = vmatprep.subr.mxu0 0.0
  %1762 = vmatpush1.msra.mxu0 0.0
  %1763 = vmatprep.subr.mxu0 0.0
  %1764 = vmatpush1.msra.mxu0 0.0
  %1765 = vmatprep.subr.mxu0 0.0
  %1766 = vmatpush1.msra.mxu0 0.0
  %1767 = vmatprep.subr.mxu0 0.0
  %1768 = vmatpush1.msra.mxu0 0.0
  %1769 = vmatprep.subr.mxu0 0.0
  %1770 = vmatpush1.msra.mxu0 0.0
  %1771 = vmatprep.subr.mxu0 0.0
  %1772 = vmatpush1.msra.mxu0 0.0
  %1773 = vmatprep.subr.mxu0 0.0
  %1774 = vmatpush1.msra.mxu0 0.0
  %1775 = vmatprep.mubr.f32.mxu0 0.0
  %1776 = vmatmul.mubr.f32.gmra.mrb[0].mxu0 %v1709
  %v1777 = vpop.f32.mrb[0].mxu0
  %v1778 = vadd.f32 0.0, %v1777
  %v1779 = vpop.f32.mrb[0].mxu0
  %1780 = vdwg.mxu0
  %v1782 = vsel %vm509, %v1707, 0
  %1784 = vmatprep.subr.mxu0 0.0
  %1785 = vmatpush1.msra.mxu0 %v59
  %1786 = vmatprep.subr.mxu0 0.0
  %1787 = vmatpush1.msra.mxu0 0.0
  %1788 = vmatprep.subr.mxu0 0.0
  %1789 = vmatpush1.msra.mxu0 0.0
  %1790 = vmatprep.subr.mxu0 0.0
  %1791 = vmatpush1.msra.mxu0 0.0
  %1792 = vmatprep.subr.mxu0 0.0
  %1793 = vmatpush1.msra.mxu0 0.0
  %1794 = vmatprep.subr.mxu0 0.0
  %1795 = vmatpush1.msra.mxu0 0.0
  %1796 = vmatprep.subr.mxu0 0.0
  %1797 = vmatpush1.msra.mxu0 0.0
  %1798 = vmatprep.subr.mxu0 0.0
  %1799 = vmatpush1.msra.mxu0 0.0
  %1800 = vmatprep.subr.mxu0 0.0
  %1801 = vmatpush1.msra.mxu0 0.0
  %1802 = vmatprep.subr.mxu0 0.0
  %1803 = vmatpush1.msra.mxu0 0.0
  %1804 = vmatprep.subr.mxu0 0.0
  %1805 = vmatpush1.msra.mxu0 0.0
  %1806 = vmatprep.subr.mxu0 0.0
  %1807 = vmatpush1.msra.mxu0 0.0
  %1808 = vmatprep.subr.mxu0 0.0
  %1809 = vmatpush1.msra.mxu0 0.0
  %1810 = vmatprep.subr.mxu0 0.0
  %1811 = vmatpush1.msra.mxu0 0.0
  %1812 = vmatprep.subr.mxu0 0.0
  %1813 = vmatpush1.msra.mxu0 0.0
  %1814 = vmatprep.subr.mxu0 0.0
  %1815 = vmatpush1.msra.mxu0 0.0
  %1816 = vmatprep.subr.mxu0 0.0
  %1817 = vmatpush1.msra.mxu0 0.0
  %1818 = vmatprep.subr.mxu0 0.0
  %1819 = vmatpush1.msra.mxu0 0.0
  %1820 = vmatprep.subr.mxu0 0.0
  %1821 = vmatpush1.msra.mxu0 0.0
  %1822 = vmatprep.subr.mxu0 0.0
  %1823 = vmatpush1.msra.mxu0 0.0
  %1824 = vmatprep.subr.mxu0 0.0
  %1825 = vmatpush1.msra.mxu0 0.0
  %1826 = vmatprep.subr.mxu0 0.0
  %1827 = vmatpush1.msra.mxu0 0.0
  %1828 = vmatprep.subr.mxu0 0.0
  %1829 = vmatpush1.msra.mxu0 0.0
  %1830 = vmatprep.subr.mxu0 0.0
  %1831 = vmatpush1.msra.mxu0 0.0
  %1832 = vmatprep.subr.mxu0 0.0
  %1833 = vmatpush1.msra.mxu0 0.0
  %1834 = vmatprep.subr.mxu0 0.0
  %1835 = vmatpush1.msra.mxu0 0.0
  %1836 = vmatprep.subr.mxu0 0.0
  %1837 = vmatpush1.msra.mxu0 0.0
  %1838 = vmatprep.subr.mxu0 0.0
  %1839 = vmatpush1.msra.mxu0 0.0
  %1840 = vmatprep.subr.mxu0 0.0
  %1841 = vmatpush1.msra.mxu0 0.0
  %1842 = vmatprep.subr.mxu0 0.0
  %1843 = vmatpush1.msra.mxu0 0.0
  %1844 = vmatprep.subr.mxu0 0.0
  %1845 = vmatpush1.msra.mxu0 0.0
  %1846 = vmatprep.subr.mxu0 0.0
  %1847 = vmatpush1.msra.mxu0 0.0
  %1848 = vmatprep.mubr.f32.mxu0 0.0
  %1849 = vmatmul.mubr.f32.gmra.mrb[0].mxu0 %v1782
  %v1850 = vpop.f32.mrb[0].mxu0
  %v1851 = vadd.f32 0.0, %v1850
  %v1852 = vpop.f32.mrb[0].mxu0
  %1853 = vdwg.mxu0
  %v1856 = vrot.slane %v1851, 7
  %v1857 = vsel %vm659, %v1856, %v1778
  %v1858 = vsel %vm124, %v1857, 0
  %1860 = vmatprep.subr.mxu0 0.0
  %1861 = vmatpush1.msra.mxu0 %v82
  %1862 = vmatprep.subr.mxu0 0.0
  %1863 = vmatpush1.msra.mxu0 %v83
  %1864 = vmatprep.subr.mxu0 0.0
  %1865 = vmatpush1.msra.mxu0 %v84
  %1866 = vmatprep.subr.mxu0 0.0
  %1867 = vmatpush1.msra.mxu0 %v85
  %1868 = vmatprep.subr.mxu0 0.0
  %1869 = vmatpush1.msra.mxu0 0.0
  %1870 = vmatprep.subr.mxu0 0.0
  %1871 = vmatpush1.msra.mxu0 0.0
  %1872 = vmatprep.subr.mxu0 0.0
  %1873 = vmatpush1.msra.mxu0 0.0
  %1874 = vmatprep.subr.mxu0 0.0
  %1875 = vmatpush1.msra.mxu0 0.0
  %1876 = vmatprep.subr.mxu0 0.0
  %1877 = vmatpush1.msra.mxu0 0.0
  %1878 = vmatprep.subr.mxu0 0.0
  %1879 = vmatpush1.msra.mxu0 0.0
  %1880 = vmatprep.subr.mxu0 0.0
  %1881 = vmatpush1.msra.mxu0 0.0
  %1882 = vmatprep.subr.mxu0 0.0
  %1883 = vmatpush1.msra.mxu0 0.0
  %1884 = vmatprep.subr.mxu0 0.0
  %1885 = vmatpush1.msra.mxu0 0.0
  %1886 = vmatprep.subr.mxu0 0.0
  %1887 = vmatpush1.msra.mxu0 0.0
  %1888 = vmatprep.subr.mxu0 0.0
  %1889 = vmatpush1.msra.mxu0 0.0
  %1890 = vmatprep.subr.mxu0 0.0
  %1891 = vmatpush1.msra.mxu0 0.0
  %1892 = vmatprep.subr.mxu0 0.0
  %1893 = vmatpush1.msra.mxu0 0.0
  %1894 = vmatprep.subr.mxu0 0.0
  %1895 = vmatpush1.msra.mxu0 0.0
  %1896 = vmatprep.subr.mxu0 0.0
  %1897 = vmatpush1.msra.mxu0 0.0
  %1898 = vmatprep.subr.mxu0 0.0
  %1899 = vmatpush1.msra.mxu0 0.0
  %1900 = vmatprep.subr.mxu0 0.0
  %1901 = vmatpush1.msra.mxu0 0.0
  %1902 = vmatprep.subr.mxu0 0.0
  %1903 = vmatpush1.msra.mxu0 0.0
  %1904 = vmatprep.subr.mxu0 0.0
  %1905 = vmatpush1.msra.mxu0 0.0
  %1906 = vmatprep.subr.mxu0 0.0
  %1907 = vmatpush1.msra.mxu0 0.0
  %1908 = vmatprep.subr.mxu0 0.0
  %1909 = vmatpush1.msra.mxu0 0.0
  %1910 = vmatprep.subr.mxu0 0.0
  %1911 = vmatpush1.msra.mxu0 0.0
  %1912 = vmatprep.subr.mxu0 0.0
  %1913 = vmatpush1.msra.mxu0 0.0
  %1914 = vmatprep.subr.mxu0 0.0
  %1915 = vmatpush1.msra.mxu0 0.0
  %1916 = vmatprep.subr.mxu0 0.0
  %1917 = vmatpush1.msra.mxu0 0.0
  %1918 = vmatprep.subr.mxu0 0.0
  %1919 = vmatpush1.msra.mxu0 0.0
  %1920 = vmatprep.subr.mxu0 0.0
  %1921 = vmatpush1.msra.mxu0 0.0
  %1922 = vmatprep.subr.mxu0 0.0
  %1923 = vmatpush1.msra.mxu0 0.0
  %1924 = vmatprep.mubr.f32.mxu0 0.0
  %1925 = vmatmul.mubr.f32.gmra.mrb[0].mxu0 %v1858
  %v1926 = vpop.f32.mrb[0].mxu0
  %v1927 = vadd.f32 0.0, %v1926
  %v1928 = vpop.f32.mrb[0].mxu0
  %1929 = vdwg.mxu0
  %1930 = vrot.lane.b32.xlu0 %v1506, 32
  %v1931 = vpop.permute.xlu0 %1930
  %v1932 = vsel %vm124, %v1931, 0
  %1934 = vmatprep.subr.mxu0 0.0
  %1935 = vmatpush1.msra.mxu0 %v78
  %1936 = vmatprep.subr.mxu0 0.0
  %1937 = vmatpush1.msra.mxu0 %v79
  %1938 = vmatprep.subr.mxu0 0.0
  %1939 = vmatpush1.msra.mxu0 %v80
  %1940 = vmatprep.subr.mxu0 0.0
  %1941 = vmatpush1.msra.mxu0 %v81
  %1942 = vmatprep.subr.mxu0 0.0
  %1943 = vmatpush1.msra.mxu0 0.0
  %1944 = vmatprep.subr.mxu0 0.0
  %1945 = vmatpush1.msra.mxu0 0.0
  %1946 = vmatprep.subr.mxu0 0.0
  %1947 = vmatpush1.msra.mxu0 0.0
  %1948 = vmatprep.subr.mxu0 0.0
  %1949 = vmatpush1.msra.mxu0 0.0
  %1950 = vmatprep.subr.mxu0 0.0
  %1951 = vmatpush1.msra.mxu0 0.0
  %1952 = vmatprep.subr.mxu0 0.0
  %1953 = vmatpush1.msra.mxu0 0.0
  %1954 = vmatprep.subr.mxu0 0.0
  %1955 = vmatpush1.msra.mxu0 0.0
  %1956 = vmatprep.subr.mxu0 0.0
  %1957 = vmatpush1.msra.mxu0 0.0
  %1958 = vmatprep.subr.mxu0 0.0
  %1959 = vmatpush1.msra.mxu0 0.0
  %1960 = vmatprep.subr.mxu0 0.0
  %1961 = vmatpush1.msra.mxu0 0.0
  %1962 = vmatprep.subr.mxu0 0.0
  %1963 = vmatpush1.msra.mxu0 0.0
  %1964 = vmatprep.subr.mxu0 0.0
  %1965 = vmatpush1.msra.mxu0 0.0
  %1966 = vmatprep.subr.mxu0 0.0
  %1967 = vmatpush1.msra.mxu0 0.0
  %1968 = vmatprep.subr.mxu0 0.0
  %1969 = vmatpush1.msra.mxu0 0.0
  %1970 = vmatprep.subr.mxu0 0.0
  %1971 = vmatpush1.msra.mxu0 0.0
  %1972 = vmatprep.subr.mxu0 0.0
  %1973 = vmatpush1.msra.mxu0 0.0
  %1974 = vmatprep.subr.mxu0 0.0
  %1975 = vmatpush1.msra.mxu0 0.0
  %1976 = vmatprep.subr.mxu0 0.0
  %1977 = vmatpush1.msra.mxu0 0.0
  %1978 = vmatprep.subr.mxu0 0.0
  %1979 = vmatpush1.msra.mxu0 0.0
  %1980 = vmatprep.subr.mxu0 0.0
  %1981 = vmatpush1.msra.mxu0 0.0
  %1982 = vmatprep.subr.mxu0 0.0
  %1983 = vmatpush1.msra.mxu0 0.0
  %1984 = vmatprep.subr.mxu0 0.0
  %1985 = vmatpush1.msra.mxu0 0.0
  %1986 = vmatprep.subr.mxu0 0.0
  %1987 = vmatpush1.msra.mxu0 0.0
  %1988 = vmatprep.subr.mxu0 0.0
  %1989 = vmatpush1.msra.mxu0 0.0
  %1990 = vmatprep.subr.mxu0 0.0
  %1991 = vmatpush1.msra.mxu0 0.0
  %1992 = vmatprep.subr.mxu0 0.0
  %1993 = vmatpush1.msra.mxu0 0.0
  %1994 = vmatprep.subr.mxu0 0.0
  %1995 = vmatpush1.msra.mxu0 0.0
  %1996 = vmatprep.subr.mxu0 0.0
  %1997 = vmatpush1.msra.mxu0 0.0
  %1998 = vmatprep.mubr.f32.mxu0 0.0
  %1999 = vmatmul.mubr.f32.gmra.mrb[0].mxu0 %v1932
  %v2000 = vpop.f32.mrb[0].mxu0
  %v2001 = vadd.f32 %v1927, %v2000
  %v2002 = vpop.f32.mrb[0].mxu0
  %2003 = vdwg.mxu0
  %v2004 = vadd.f32 %v2001, %v811
  %v2005 = vsel %vm814, %v2004, -inf
  %2006 = vmax.xlane.f32.xlu0 %v2005
  %v2007 = vpop.xlane.xlu0 %2006
  %v2008 = vsub.f32 %v2004, %v2007
  %v2009 = vmul.f32 %v2008, 1.442695
  %v2010 = vpow.pop %v2009
  %v2011 = vsel %vm814, %v2010, 0.0
  %2012 = vadd.xlane.f32.xlu0 %v2011
  %v2013 = vpop.xlane.xlu0 %2012
  %v2014 = vrcp.pop %v2013
  %v2015 = vmul.f32 %v2010, %v2014
  %2016 = vmatprep.subr.mxu0 0.0
  %2017 = vmatpush1.msra.mxu0 %v91
  %2018 = vmatprep.subr.mxu0 0.0
  %2019 = vmatpush1.msra.mxu0 %v92
  %2020 = vmatprep.subr.mxu0 0.0
  %2021 = vmatpush1.msra.mxu0 %v93
  %2022 = vmatprep.subr.mxu0 0.0
  %2023 = vmatpush1.msra.mxu0 %v94
  %2024 = vmatprep.subr.mxu0 0.0
  %2025 = vmatpush1.msra.mxu0 0.0
  %2026 = vmatprep.subr.mxu0 0.0
  %2027 = vmatpush1.msra.mxu0 0.0
  %2028 = vmatprep.subr.mxu0 0.0
  %2029 = vmatpush1.msra.mxu0 0.0
  %2030 = vmatprep.subr.mxu0 0.0
  %2031 = vmatpush1.msra.mxu0 0.0
  %2032 = vmatprep.subr.mxu0 0.0
  %2033 = vmatpush1.msra.mxu0 0.0
  %2034 = vmatprep.subr.mxu0 0.0
  %2035 = vmatpush1.msra.mxu0 0.0
  %2036 = vmatprep.subr.mxu0 0.0
  %2037 = vmatpush1.msra.mxu0 0.0
  %2038 = vmatprep.subr.mxu0 0.0
  %2039 = vmatpush1.msra.mxu0 0.0
  %2040 = vmatprep.subr.mxu0 0.0
  %2041 = vmatpush1.msra.mxu0 0.0
  %2042 = vmatprep.subr.mxu0 0.0
  %2043 = vmatpush1.msra.mxu0 0.0
  %2044 = vmatprep.subr.mxu0 0.0
  %2045 = vmatpush1.msra.mxu0 0.0
  %2046 = vmatprep.subr.mxu0 0.0
  %2047 = vmatpush1.msra.mxu0 0.0
  %2048 = vmatprep.subr.mxu0 0.0
  %2049 = vmatpush1.msra.mxu0 0.0
  %2050 = vmatprep.subr.mxu0 0.0
  %2051 = vmatpush1.msra.mxu0 0.0
  %2052 = vmatprep.subr.mxu0 0.0
  %2053 = vmatpush1.msra.mxu0 0.0
  %2054 = vmatprep.subr.mxu0 0.0
  %2055 = vmatpush1.msra.mxu0 0.0
  %2056 = vmatprep.subr.mxu0 0.0
  %2057 = vmatpush1.msra.mxu0 0.0
  %2058 = vmatprep.subr.mxu0 0.0
  %2059 = vmatpush1.msra.mxu0 0.0
  %2060 = vmatprep.subr.mxu0 0.0
  %2061 = vmatpush1.msra.mxu0 0.0
  %2062 = vmatprep.subr.mxu0 0.0
  %2063 = vmatpush1.msra.mxu0 0.0
  %2064 = vmatprep.subr.mxu0 0.0
  %2065 = vmatpush1.msra.mxu0 0.0
  %2066 = vmatprep.subr.mxu0 0.0
  %2067 = vmatpush1.msra.mxu0 0.0
  %2068 = vmatprep.subr.mxu0 0.0
  %2069 = vmatpush1.msra.mxu0 0.0
  %2070 = vmatprep.subr.mxu0 0.0
  %2071 = vmatpush1.msra.mxu0 0.0
  %2072 = vmatprep.subr.mxu0 0.0
  %2073 = vmatpush1.msra.mxu0 0.0
  %2074 = vmatprep.subr.mxu0 0.0
  %2075 = vmatpush1.msra.mxu0 0.0
  %2076 = vmatprep.subr.mxu0 0.0
  %2077 = vmatpush1.msra.mxu0 0.0
  %2078 = vmatprep.subr.mxu0 0.0
  %2079 = vmatpush1.msra.mxu0 0.0
  %2080 = vmatprep.mubr.f32.mxu0 0.0
  %2081 = vmatmul.mubr.f32.gmra.mrb[0].mxu0 %v1932
  %v2082 = vpop.f32.mrb[0].mxu0
  %v2083 = vadd.f32 0.0, %v2082
  %v2084 = vpop.f32.mrb[0].mxu0
  %2085 = vdwg.mxu0
  %2086 = vmatprep.subr.mxu0 0.0
  %2087 = vmatpush1.msra.mxu0 %v87
  %2088 = vmatprep.subr.mxu0 0.0
  %2089 = vmatpush1.msra.mxu0 %v88
  %2090 = vmatprep.subr.mxu0 0.0
  %2091 = vmatpush1.msra.mxu0 %v89
  %2092 = vmatprep.subr.mxu0 0.0
  %2093 = vmatpush1.msra.mxu0 %v90
  %2094 = vmatprep.subr.mxu0 0.0
  %2095 = vmatpush1.msra.mxu0 0.0
  %2096 = vmatprep.subr.mxu0 0.0
  %2097 = vmatpush1.msra.mxu0 0.0
  %2098 = vmatprep.subr.mxu0 0.0
  %2099 = vmatpush1.msra.mxu0 0.0
  %2100 = vmatprep.subr.mxu0 0.0
  %2101 = vmatpush1.msra.mxu0 0.0
  %2102 = vmatprep.subr.mxu0 0.0
  %2103 = vmatpush1.msra.mxu0 0.0
  %2104 = vmatprep.subr.mxu0 0.0
  %2105 = vmatpush1.msra.mxu0 0.0
  %2106 = vmatprep.subr.mxu0 0.0
  %2107 = vmatpush1.msra.mxu0 0.0
  %2108 = vmatprep.subr.mxu0 0.0
  %2109 = vmatpush1.msra.mxu0 0.0
  %2110 = vmatprep.subr.mxu0 0.0
  %2111 = vmatpush1.msra.mxu0 0.0
  %2112 = vmatprep.subr.mxu0 0.0
  %2113 = vmatpush1.msra.mxu0 0.0
  %2114 = vmatprep.subr.mxu0 0.0
  %2115 = vmatpush1.msra.mxu0 0.0
  %2116 = vmatprep.subr.mxu0 0.0
  %2117 = vmatpush1.msra.mxu0 0.0
  %2118 = vmatprep.subr.mxu0 0.0
  %2119 = vmatpush1.msra.mxu0 0.0
  %2120 = vmatprep.subr.mxu0 0.0
  %2121 = vmatpush1.msra.mxu0 0.0
  %2122 = vmatprep.subr.mxu0 0.0
  %2123 = vmatpush1.msra.mxu0 0.0
  %2124 = vmatprep.subr.mxu0 0.0
  %2125 = vmatpush1.msra.mxu0 0.0
  %2126 = vmatprep.subr.mxu0 0.0
  %2127 = vmatpush1.msra.mxu0 0.0
  %2128 = vmatprep.subr.mxu0 0.0
  %2129 = vmatpush1.msra.mxu0 0.0
  %2130 = vmatprep.subr.mxu0 0.0
  %2131 = vmatpush1.msra.mxu0 0.0
  %2132 = vmatprep.subr.mxu0 0.0
  %2133 = vmatpush1.msra.mxu0 0.0
  %2134 = vmatprep.subr.mxu0 0.0
  %2135 = vmatpush1.msra.mxu0 0.0
  %2136 = vmatprep.subr.mxu0 0.0
  %2137 = vmatpush1.msra.mxu0 0.0
  %2138 = vmatprep.subr.mxu0 0.0
  %2139 = vmatpush1.msra.mxu0 0.0
  %2140 = vmatprep.subr.mxu0 0.0
  %2141 = vmatpush1.msra.mxu0 0.0
  %2142 = vmatprep.subr.mxu0 0.0
  %2143 = vmatpush1.msra.mxu0 0.0
  %2144 = vmatprep.subr.mxu0 0.0
  %2145 = vmatpush1.msra.mxu0 0.0
  %2146 = vmatprep.subr.mxu0 0.0
  %2147 = vmatpush1.msra.mxu0 0.0
  %2148 = vmatprep.subr.mxu0 0.0
  %2149 = vmatpush1.msra.mxu0 0.0
  %2150 = vmatprep.mubr.f32.mxu0 0.0
  %2151 = vmatmul.mubr.f32.gmra.mrb[0].mxu0 %v1858
  %v2152 = vpop.f32.mrb[0].mxu0
  %v2153 = vadd.f32 %v2083, %v2152
  %v2154 = vpop.f32.mrb[0].mxu0
  %2155 = vdwg.mxu0
  %2156 = vmatprep.subr.mxu0 0.0
  %2157 = vmatpush1.msra.mxu0 %v95
  %2158 = vmatprep.subr.mxu0 0.0
  %2159 = vmatpush1.msra.mxu0 %v96
  %2160 = vmatprep.subr.mxu0 0.0
  %2161 = vmatpush1.msra.mxu0 0.0
  %2162 = vmatprep.subr.mxu0 0.0
  %2163 = vmatpush1.msra.mxu0 0.0
  %2164 = vmatprep.subr.mxu0 0.0
  %2165 = vmatpush1.msra.mxu0 0.0
  %2166 = vmatprep.subr.mxu0 0.0
  %2167 = vmatpush1.msra.mxu0 0.0
  %2168 = vmatprep.subr.mxu0 0.0
  %2169 = vmatpush1.msra.mxu0 0.0
  %2170 = vmatprep.subr.mxu0 0.0
  %2171 = vmatpush1.msra.mxu0 0.0
  %2172 = vmatprep.subr.mxu0 0.0
  %2173 = vmatpush1.msra.mxu0 0.0
  %2174 = vmatprep.subr.mxu0 0.0
  %2175 = vmatpush1.msra.mxu0 0.0
  %2176 = vmatprep.subr.mxu0 0.0
  %2177 = vmatpush1.msra.mxu0 0.0
  %2178 = vmatprep.subr.mxu0 0.0
  %2179 = vmatpush1.msra.mxu0 0.0
  %2180 = vmatprep.subr.mxu0 0.0
  %2181 = vmatpush1.msra.mxu0 0.0
  %2182 = vmatprep.subr.mxu0 0.0
  %2183 = vmatpush1.msra.mxu0 0.0
  %2184 = vmatprep.subr.mxu0 0.0
  %2185 = vmatpush1.msra.mxu0 0.0
  %2186 = vmatprep.subr.mxu0 0.0
  %2187 = vmatpush1.msra.mxu0 0.0
  %2188 = vmatprep.subr.mxu0 0.0
  %2189 = vmatpush1.msra.mxu0 0.0
  %2190 = vmatprep.subr.mxu0 0.0
  %2191 = vmatpush1.msra.mxu0 0.0
  %2192 = vmatprep.subr.mxu0 0.0
  %2193 = vmatpush1.msra.mxu0 0.0
  %2194 = vmatprep.subr.mxu0 0.0
  %2195 = vmatpush1.msra.mxu0 0.0
  %2196 = vmatprep.subr.mxu0 0.0
  %2197 = vmatpush1.msra.mxu0 0.0
  %2198 = vmatprep.subr.mxu0 0.0
  %2199 = vmatpush1.msra.mxu0 0.0
  %2200 = vmatprep.subr.mxu0 0.0
  %2201 = vmatpush1.msra.mxu0 0.0
  %2202 = vmatprep.subr.mxu0 0.0
  %2203 = vmatpush1.msra.mxu0 0.0
  %2204 = vmatprep.subr.mxu0 0.0
  %2205 = vmatpush1.msra.mxu0 0.0
  %2206 = vmatprep.subr.mxu0 0.0
  %2207 = vmatpush1.msra.mxu0 0.0
  %2208 = vmatprep.subr.mxu0 0.0
  %2209 = vmatpush1.msra.mxu0 0.0
  %2210 = vmatprep.subr.mxu0 0.0
  %2211 = vmatpush1.msra.mxu0 0.0
  %2212 = vmatprep.subr.mxu0 0.0
  %2213 = vmatpush1.msra.mxu0 0.0
  %2214 = vmatprep.subr.mxu0 0.0
  %2215 = vmatpush1.msra.mxu0 0.0
  %2216 = vmatprep.subr.mxu0 0.0
  %2217 = vmatpush1.msra.mxu0 0.0
  %2218 = vmatprep.subr.mxu0 0.0
  %2219 = vmatpush1.msra.mxu0 0.0
  %2220 = vmatprep.mubr.f32.mxu0 0.0
  %2221 = vmatmul.mubr.f32.gmra.mrb[0].mxu0 %v1410
  %v2222 = vpop.f32.mrb[0].mxu0
  %v2223 = vadd.f32 0.0, %v2222
  %v2224 = vpop.f32.mrb[0].mxu0
  %2225 = vdwg.mxu0
  %v2226 = vadd.f32 %v2153, %v2223
  %v2227 = vadd.f32 %v2226, %v1041
  %v2228 = vxor.u32 %v2227, 2147483648
  %v2229 = vmul.f32 %v2228, 1.442695
  %v2230 = vpow.pop %v2229
  %v2231 = vadd.f32 %v2230, 1.0
  %v2232 = vrcp.pop %v2231
  %v2233 = vmul.f32 1.0, %v2232
  %v2234 = vsub.f32 1.0, %v2233
  %2236 = vset.pattern.permute.xlu0 0
  %2237 = vperm.xlu0 %2236, %v2234
  %v2238 = vpop.permute.xlu0 %2237
  %v2240 = vrot.slane %v1707, 7
  %v2241 = vsel %vm659, %v2240, %v1706
  %v2243 = vmul.f32 %v2238, %v2241
  %v2246 = vunpack.c.l.s4 1966171168
  %v2247 = vunpack.c.0.s8 %v2246
  %v2248 = vlaneseq
  %v2249 = vshrl.u32 %v2248, 7
  %v2250 = vsub.s32 %v2247, %v2249
  %v2251 = vrot.slane %v2243, %v2250
  %v2252 = vcombine.high %v2251, %v2251
  %v2254 = vunpack.c.l.s4 1966171168
  %v2255 = vunpack.c.0.s8 %v2254
  %v2256 = vlaneseq
  %v2257 = vshrl.u32 %v2256, 7
  %v2258 = vsub.s32 %v2255, %v2257
  %v2259 = vrot.slane %v2251, %v2258
  %v2261 = vunpack.c.l.s4 1966171168
  %v2262 = vunpack.c.0.s8 %v2261
  %v2263 = vlaneseq
  %v2264 = vshrl.u32 %v2263, 7
  %v2265 = vsub.s32 %v2262, %v2264
  %v2266 = vrot.slane %v2252, %v2265
  %v2267 = vsel %vm509, %v2259, 0
  %2269 = vmatprep.subr.mxu0 0.0
  %2270 = vmatpush1.msra.mxu0 %v119
  %2271 = vmatprep.subr.mxu0 0.0
  %2272 = vmatpush1.msra.mxu0 0.0
  %2273 = vmatprep.subr.mxu0 0.0
  %2274 = vmatpush1.msra.mxu0 0.0
  %2275 = vmatprep.subr.mxu0 0.0
  %2276 = vmatpush1.msra.mxu0 0.0
  %2277 = vmatprep.subr.mxu0 0.0
  %2278 = vmatpush1.msra.mxu0 0.0
  %2279 = vmatprep.subr.mxu0 0.0
  %2280 = vmatpush1.msra.mxu0 0.0
  %2281 = vmatprep.subr.mxu0 0.0
  %2282 = vmatpush1.msra.mxu0 0.0
  %2283 = vmatprep.subr.mxu0 0.0
  %2284 = vmatpush1.msra.mxu0 0.0
  %2285 = vmatprep.subr.mxu0 0.0
  %2286 = vmatpush1.msra.mxu0 0.0
  %2287 = vmatprep.subr.mxu0 0.0
  %2288 = vmatpush1.msra.mxu0 0.0
  %2289 = vmatprep.subr.mxu0 0.0
  %2290 = vmatpush1.msra.mxu0 0.0
  %2291 = vmatprep.subr.mxu0 0.0
  %2292 = vmatpush1.msra.mxu0 0.0
  %2293 = vmatprep.subr.mxu0 0.0
  %2294 = vmatpush1.msra.mxu0 0.0
  %2295 = vmatprep.subr.mxu0 0.0
  %2296 = vmatpush1.msra.mxu0 0.0
  %2297 = vmatprep.subr.mxu0 0.0
  %2298 = vmatpush1.msra.mxu0 0.0
  %2299 = vmatprep.subr.mxu0 0.0
  %2300 = vmatpush1.msra.mxu0 0.0
  %2301 = vmatprep.subr.mxu0 0.0
  %2302 = vmatpush1.msra.mxu0 0.0
  %2303 = vmatprep.subr.mxu0 0.0
  %2304 = vmatpush1.msra.mxu0 0.0
  %2305 = vmatprep.subr.mxu0 0.0
  %2306 = vmatpush1.msra.mxu0 0.0
  %2307 = vmatprep.subr.mxu0 0.0
  %2308 = vmatpush1.msra.mxu0 0.0
  %2309 = vmatprep.subr.mxu0 0.0
  %2310 = vmatpush1.msra.mxu0 0.0
  %2311 = vmatprep.subr.mxu0 0.0
  %2312 = vmatpush1.msra.mxu0 0.0
  %2313 = vmatprep.subr.mxu0 0.0
  %2314 = vmatpush1.msra.mxu0 0.0
  %2315 = vmatprep.subr.mxu0 0.0
  %2316 = vmatpush1.msra.mxu0 0.0
  %2317 = vmatprep.subr.mxu0 0.0
  %2318 = vmatpush1.msra.mxu0 0.0
  %2319 = vmatprep.subr.mxu0 0.0
  %2320 = vmatpush1.msra.mxu0 0.0
  %2321 = vmatprep.subr.mxu0 0.0
  %2322 = vmatpush1.msra.mxu0 0.0
  %2323 = vmatprep.subr.mxu0 0.0
  %2324 = vmatpush1.msra.mxu0 0.0
  %2325 = vmatprep.subr.mxu0 0.0
  %2326 = vmatpush1.msra.mxu0 0.0
  %2327 = vmatprep.subr.mxu0 0.0
  %2328 = vmatpush1.msra.mxu0 0.0
  %2329 = vmatprep.subr.mxu0 0.0
  %2330 = vmatpush1.msra.mxu0 0.0
  %2331 = vmatprep.subr.mxu0 0.0
  %2332 = vmatpush1.msra.mxu0 0.0
  %2333 = vmatprep.mubr.f32.mxu0 0.0
  %2334 = vmatmul.mubr.f32.gmra.mrb[0].mxu0 %v2267
  %v2335 = vpop.f32.mrb[0].mxu0
  %v2336 = vadd.f32 0.0, %v2335
  %v2337 = vpop.f32.mrb[0].mxu0
  %2338 = vdwg.mxu0
  %v2339 = vsel %vm509, %v2266, 0
  %2341 = vmatprep.subr.mxu0 0.0
  %2342 = vmatpush1.msra.mxu0 %v120
  %2343 = vmatprep.subr.mxu0 0.0
  %2344 = vmatpush1.msra.mxu0 0.0
  %2345 = vmatprep.subr.mxu0 0.0
  %2346 = vmatpush1.msra.mxu0 0.0
  %2347 = vmatprep.subr.mxu0 0.0
  %2348 = vmatpush1.msra.mxu0 0.0
  %2349 = vmatprep.subr.mxu0 0.0
  %2350 = vmatpush1.msra.mxu0 0.0
  %2351 = vmatprep.subr.mxu0 0.0
  %2352 = vmatpush1.msra.mxu0 0.0
  %2353 = vmatprep.subr.mxu0 0.0
  %2354 = vmatpush1.msra.mxu0 0.0
  %2355 = vmatprep.subr.mxu0 0.0
  %2356 = vmatpush1.msra.mxu0 0.0
  %2357 = vmatprep.subr.mxu0 0.0
  %2358 = vmatpush1.msra.mxu0 0.0
  %2359 = vmatprep.subr.mxu0 0.0
  %2360 = vmatpush1.msra.mxu0 0.0
  %2361 = vmatprep.subr.mxu0 0.0
  %2362 = vmatpush1.msra.mxu0 0.0
  %2363 = vmatprep.subr.mxu0 0.0
  %2364 = vmatpush1.msra.mxu0 0.0
  %2365 = vmatprep.subr.mxu0 0.0
  %2366 = vmatpush1.msra.mxu0 0.0
  %2367 = vmatprep.subr.mxu0 0.0
  %2368 = vmatpush1.msra.mxu0 0.0
  %2369 = vmatprep.subr.mxu0 0.0
  %2370 = vmatpush1.msra.mxu0 0.0
  %2371 = vmatprep.subr.mxu0 0.0
  %2372 = vmatpush1.msra.mxu0 0.0
  %2373 = vmatprep.subr.mxu0 0.0
  %2374 = vmatpush1.msra.mxu0 0.0
  %2375 = vmatprep.subr.mxu0 0.0
  %2376 = vmatpush1.msra.mxu0 0.0
  %2377 = vmatprep.subr.mxu0 0.0
  %2378 = vmatpush1.msra.mxu0 0.0
  %2379 = vmatprep.subr.mxu0 0.0
  %2380 = vmatpush1.msra.mxu0 0.0
  %2381 = vmatprep.subr.mxu0 0.0
  %2382 = vmatpush1.msra.mxu0 0.0
  %2383 = vmatprep.subr.mxu0 0.0
  %2384 = vmatpush1.msra.mxu0 0.0
  %2385 = vmatprep.subr.mxu0 0.0
  %2386 = vmatpush1.msra.mxu0 0.0
  %2387 = vmatprep.subr.mxu0 0.0
  %2388 = vmatpush1.msra.mxu0 0.0
  %2389 = vmatprep.subr.mxu0 0.0
  %2390 = vmatpush1.msra.mxu0 0.0
  %2391 = vmatprep.subr.mxu0 0.0
  %2392 = vmatpush1.msra.mxu0 0.0
  %2393 = vmatprep.subr.mxu0 0.0
  %2394 = vmatpush1.msra.mxu0 0.0
  %2395 = vmatprep.subr.mxu0 0.0
  %2396 = vmatpush1.msra.mxu0 0.0
  %2397 = vmatprep.subr.mxu0 0.0
  %2398 = vmatpush1.msra.mxu0 0.0
  %2399 = vmatprep.subr.mxu0 0.0
  %2400 = vmatpush1.msra.mxu0 0.0
  %2401 = vmatprep.subr.mxu0 0.0
  %2402 = vmatpush1.msra.mxu0 0.0
  %2403 = vmatprep.subr.mxu0 0.0
  %2404 = vmatpush1.msra.mxu0 0.0
  %2405 = vmatprep.mubr.f32.mxu0 0.0
  %2406 = vmatmul.mubr.f32.gmra.mrb[0].mxu0 %v2339
  %v2407 = vpop.f32.mrb[0].mxu0
  %v2408 = vadd.f32 0.0, %v2407
  %v2409 = vpop.f32.mrb[0].mxu0
  %2410 = vdwg.mxu0
  %2412 = vset.pattern.permute.xlu0 0
  %2413 = vperm.xlu0 %2412, %v2233
  %v2414 = vpop.permute.xlu0 %2413
  %v2416 = vmul.f32 %v2414, %v2015
  %v2417 = vadd.f32 %v2416, %v64
  %v2420 = vrot.slane %v2408, 7
  %v2421 = vsel %vm659, %v2420, %v2336
  %v2423 = vadd.f32 %v2417, %v2421
  %s2424 = scalar_lea.vmem %s17, 2
  %2425 = vst [vmem:[%s2424] sm:$0x3] %v2423
  %v2426 = vsel %vm814, %v2423, -inf
  %2427 = vmax.xlane.f32.xlu0 %v2426
  %v2428 = vpop.xlane.xlu0 %2427
  %vm2429 = vcmp.eq.f32.partialorder %v2423, %v2428
  %v2430 = vsel %vm2429, %v100, 128
  %v2431 = vsel %vm814, %v2430, 2147483647
  %v2432 = vand.u32 %v2431, 65535
  %v2433 = vshra.s32 %v2431, 16
  %v2434 = vcvt.s32.f32 %v2432
  %v2435 = vcvt.s32.f32 %v2433
  %2436 = vmin.xlane.f32.xlu0 %v2435
  %v2437 = vpop.xlane.xlu0 %2436
  %vm2438 = vcmp.eq.f32.partialorder %v2435, %v2437
  %v2439 = vsel %vm2438, %v2434, inf
  %2440 = vmin.xlane.f32.xlu0 %v2439
  %v2441 = vpop.xlane.xlu0 %2440
  %v2442 = vcvt.f32.s32 %v2441
  %v2443 = vcvt.f32.s32 %v2437
  %v2444 = vshll.u32 %v2443, 16
  %v2445 = vadd.s32 %v2444, %v2442
  %vm2446 = vcmp.ge.s32.totalorder %v2445, 32
  %v2447 = vsel %vm2446, 1, %v2445
  %vm2448 = vcmp.eq.s32.totalorder %v2447, %v100
  %v2449 = vsel %vm2448, 1, 0
  %v2450 = vcvt.s32.f32 %v2449
  %v2452 = vsel %vm124, %v2450, 0
  %2454 = vmatprep.subr.mxu0 0.0
  %2455 = vmatpush1.msra.mxu0 %v60
  %2456 = vmatprep.subr.mxu0 0.0
  %2457 = vmatpush1.msra.mxu0 %v61
  %2458 = vmatprep.subr.mxu0 0.0
  %2459 = vmatpush1.msra.mxu0 %v62
  %2460 = vmatprep.subr.mxu0 0.0
  %2461 = vmatpush1.msra.mxu0 %v63
  %2462 = vmatprep.subr.mxu0 0.0
  %2463 = vmatpush1.msra.mxu0 0.0
  %2464 = vmatprep.subr.mxu0 0.0
  %2465 = vmatpush1.msra.mxu0 0.0
  %2466 = vmatprep.subr.mxu0 0.0
  %2467 = vmatpush1.msra.mxu0 0.0
  %2468 = vmatprep.subr.mxu0 0.0
  %2469 = vmatpush1.msra.mxu0 0.0
  %2470 = vmatprep.subr.mxu0 0.0
  %2471 = vmatpush1.msra.mxu0 0.0
  %2472 = vmatprep.subr.mxu0 0.0
  %2473 = vmatpush1.msra.mxu0 0.0
  %2474 = vmatprep.subr.mxu0 0.0
  %2475 = vmatpush1.msra.mxu0 0.0
  %2476 = vmatprep.subr.mxu0 0.0
  %2477 = vmatpush1.msra.mxu0 0.0
  %2478 = vmatprep.subr.mxu0 0.0
  %2479 = vmatpush1.msra.mxu0 0.0
  %2480 = vmatprep.subr.mxu0 0.0
  %2481 = vmatpush1.msra.mxu0 0.0
  %2482 = vmatprep.subr.mxu0 0.0
  %2483 = vmatpush1.msra.mxu0 0.0
  %2484 = vmatprep.subr.mxu0 0.0
  %2485 = vmatpush1.msra.mxu0 0.0
  %2486 = vmatprep.subr.mxu0 0.0
  %2487 = vmatpush1.msra.mxu0 0.0
  %2488 = vmatprep.subr.mxu0 0.0
  %2489 = vmatpush1.msra.mxu0 0.0
  %2490 = vmatprep.subr.mxu0 0.0
  %2491 = vmatpush1.msra.mxu0 0.0
  %2492 = vmatprep.subr.mxu0 0.0
  %2493 = vmatpush1.msra.mxu0 0.0
  %2494 = vmatprep.subr.mxu0 0.0
  %2495 = vmatpush1.msra.mxu0 0.0
  %2496 = vmatprep.subr.mxu0 0.0
  %2497 = vmatpush1.msra.mxu0 0.0
  %2498 = vmatprep.subr.mxu0 0.0
  %2499 = vmatpush1.msra.mxu0 0.0
  %2500 = vmatprep.subr.mxu0 0.0
  %2501 = vmatpush1.msra.mxu0 0.0
  %2502 = vmatprep.subr.mxu0 0.0
  %2503 = vmatpush1.msra.mxu0 0.0
  %2504 = vmatprep.subr.mxu0 0.0
  %2505 = vmatpush1.msra.mxu0 0.0
  %2506 = vmatprep.subr.mxu0 0.0
  %2507 = vmatpush1.msra.mxu0 0.0
  %2508 = vmatprep.subr.mxu0 0.0
  %2509 = vmatpush1.msra.mxu0 0.0
  %2510 = vmatprep.subr.mxu0 0.0
  %2511 = vmatpush1.msra.mxu0 0.0
  %2512 = vmatprep.subr.mxu0 0.0
  %2513 = vmatpush1.msra.mxu0 0.0
  %2514 = vmatprep.subr.mxu0 0.0
  %2515 = vmatpush1.msra.mxu0 0.0
  %2516 = vmatprep.subr.mxu0 0.0
  %2517 = vmatpush1.msra.mxu0 0.0
  %2518 = vmatprep.mubr.f32.mxu0 0.0
  %2519 = vmatmul.mubr.f32.gmra.mrb[0].mxu0 %v2452
  %v2520 = vpop.f32.mrb[0].mxu0
  %v2521 = vadd.f32 0.0, %v2520
  %v2522 = vpop.f32.mrb[0].mxu0
  %2523 = vdwg.mxu0
  %2524 = vmatprep.subr.mxu0 0.0
  %2525 = vmatpush1.msra.mxu0 %v67
  %2526 = vmatprep.subr.mxu0 0.0
  %2527 = vmatpush1.msra.mxu0 %v68
  %2528 = vmatprep.subr.mxu0 0.0
  %2529 = vmatpush1.msra.mxu0 %v69
  %2530 = vmatprep.subr.mxu0 0.0
  %2531 = vmatpush1.msra.mxu0 %v70
  %2532 = vmatprep.subr.mxu0 0.0
  %2533 = vmatpush1.msra.mxu0 0.0
  %2534 = vmatprep.subr.mxu0 0.0
  %2535 = vmatpush1.msra.mxu0 0.0
  %2536 = vmatprep.subr.mxu0 0.0
  %2537 = vmatpush1.msra.mxu0 0.0
  %2538 = vmatprep.subr.mxu0 0.0
  %2539 = vmatpush1.msra.mxu0 0.0
  %2540 = vmatprep.subr.mxu0 0.0
  %2541 = vmatpush1.msra.mxu0 0.0
  %2542 = vmatprep.subr.mxu0 0.0
  %2543 = vmatpush1.msra.mxu0 0.0
  %2544 = vmatprep.subr.mxu0 0.0
  %2545 = vmatpush1.msra.mxu0 0.0
  %2546 = vmatprep.subr.mxu0 0.0
  %2547 = vmatpush1.msra.mxu0 0.0
  %2548 = vmatprep.subr.mxu0 0.0
  %2549 = vmatpush1.msra.mxu0 0.0
  %2550 = vmatprep.subr.mxu0 0.0
  %2551 = vmatpush1.msra.mxu0 0.0
  %2552 = vmatprep.subr.mxu0 0.0
  %2553 = vmatpush1.msra.mxu0 0.0
  %2554 = vmatprep.subr.mxu0 0.0
  %2555 = vmatpush1.msra.mxu0 0.0
  %2556 = vmatprep.subr.mxu0 0.0
  %2557 = vmatpush1.msra.mxu0 0.0
  %2558 = vmatprep.subr.mxu0 0.0
  %2559 = vmatpush1.msra.mxu0 0.0
  %2560 = vmatprep.subr.mxu0 0.0
  %2561 = vmatpush1.msra.mxu0 0.0
  %2562 = vmatprep.subr.mxu0 0.0
  %2563 = vmatpush1.msra.mxu0 0.0
  %2564 = vmatprep.subr.mxu0 0.0
  %2565 = vmatpush1.msra.mxu0 0.0
  %2566 = vmatprep.subr.mxu0 0.0
  %2567 = vmatpush1.msra.mxu0 0.0
  %2568 = vmatprep.subr.mxu0 0.0
  %2569 = vmatpush1.msra.mxu0 0.0
  %2570 = vmatprep.subr.mxu0 0.0
  %2571 = vmatpush1.msra.mxu0 0.0
  %2572 = vmatprep.subr.mxu0 0.0
  %2573 = vmatpush1.msra.mxu0 0.0
  %2574 = vmatprep.subr.mxu0 0.0
  %2575 = vmatpush1.msra.mxu0 0.0
  %2576 = vmatprep.subr.mxu0 0.0
  %2577 = vmatpush1.msra.mxu0 0.0
  %2578 = vmatprep.subr.mxu0 0.0
  %2579 = vmatpush1.msra.mxu0 0.0
  %2580 = vmatprep.subr.mxu0 0.0
  %2581 = vmatpush1.msra.mxu0 0.0
  %2582 = vmatprep.subr.mxu0 0.0
  %2583 = vmatpush1.msra.mxu0 0.0
  %2584 = vmatprep.subr.mxu0 0.0
  %2585 = vmatpush1.msra.mxu0 0.0
  %2586 = vmatprep.subr.mxu0 0.0
  %2587 = vmatpush1.msra.mxu0 0.0
  %2588 = vmatprep.mubr.f32.mxu0 0.0
  %2589 = vmatmul.mubr.f32.gmra.mrb[0].mxu0 %v1932
  %v2590 = vpop.f32.mrb[0].mxu0
  %v2591 = vadd.f32 0.0, %v2590
  %v2592 = vpop.f32.mrb[0].mxu0
  %2593 = vdwg.mxu0
  %v2595 = vsel %vm198, %v2521, 0
  %2597 = vmatprep.subr.mxu0 0.0
  %2598 = vmatpush1.msra.mxu0 %v65
  %2599 = vmatprep.subr.mxu0 0.0
  %2600 = vmatpush1.msra.mxu0 %v66
  %2601 = vmatprep.subr.mxu0 0.0
  %2602 = vmatpush1.msra.mxu0 0.0
  %2603 = vmatprep.subr.mxu0 0.0
  %2604 = vmatpush1.msra.mxu0 0.0
  %2605 = vmatprep.subr.mxu0 0.0
  %2606 = vmatpush1.msra.mxu0 0.0
  %2607 = vmatprep.subr.mxu0 0.0
  %2608 = vmatpush1.msra.mxu0 0.0
  %2609 = vmatprep.subr.mxu0 0.0
  %2610 = vmatpush1.msra.mxu0 0.0
  %2611 = vmatprep.subr.mxu0 0.0
  %2612 = vmatpush1.msra.mxu0 0.0
  %2613 = vmatprep.subr.mxu0 0.0
  %2614 = vmatpush1.msra.mxu0 0.0
  %2615 = vmatprep.subr.mxu0 0.0
  %2616 = vmatpush1.msra.mxu0 0.0
  %2617 = vmatprep.subr.mxu0 0.0
  %2618 = vmatpush1.msra.mxu0 0.0
  %2619 = vmatprep.subr.mxu0 0.0
  %2620 = vmatpush1.msra.mxu0 0.0
  %2621 = vmatprep.subr.mxu0 0.0
  %2622 = vmatpush1.msra.mxu0 0.0
  %2623 = vmatprep.subr.mxu0 0.0
  %2624 = vmatpush1.msra.mxu0 0.0
  %2625 = vmatprep.subr.mxu0 0.0
  %2626 = vmatpush1.msra.mxu0 0.0
  %2627 = vmatprep.subr.mxu0 0.0
  %2628 = vmatpush1.msra.mxu0 0.0
  %2629 = vmatprep.subr.mxu0 0.0
  %2630 = vmatpush1.msra.mxu0 0.0
  %2631 = vmatprep.subr.mxu0 0.0
  %2632 = vmatpush1.msra.mxu0 0.0
  %2633 = vmatprep.subr.mxu0 0.0
  %2634 = vmatpush1.msra.mxu0 0.0
  %2635 = vmatprep.subr.mxu0 0.0
  %2636 = vmatpush1.msra.mxu0 0.0
  %2637 = vmatprep.subr.mxu0 0.0
  %2638 = vmatpush1.msra.mxu0 0.0
  %2639 = vmatprep.subr.mxu0 0.0
  %2640 = vmatpush1.msra.mxu0 0.0
  %2641 = vmatprep.subr.mxu0 0.0
  %2642 = vmatpush1.msra.mxu0 0.0
  %2643 = vmatprep.subr.mxu0 0.0
  %2644 = vmatpush1.msra.mxu0 0.0
  %2645 = vmatprep.subr.mxu0 0.0
  %2646 = vmatpush1.msra.mxu0 0.0
  %2647 = vmatprep.subr.mxu0 0.0
  %2648 = vmatpush1.msra.mxu0 0.0
  %2649 = vmatprep.subr.mxu0 0.0
  %2650 = vmatpush1.msra.mxu0 0.0
  %2651 = vmatprep.subr.mxu0 0.0
  %2652 = vmatpush1.msra.mxu0 0.0
  %2653 = vmatprep.subr.mxu0 0.0
  %2654 = vmatpush1.msra.mxu0 0.0
  %2655 = vmatprep.subr.mxu0 0.0
  %2656 = vmatpush1.msra.mxu0 0.0
  %2657 = vmatprep.subr.mxu0 0.0
  %2658 = vmatpush1.msra.mxu0 0.0
  %2659 = vmatprep.subr.mxu0 0.0
  %2660 = vmatpush1.msra.mxu0 0.0
  %2661 = vmatprep.mubr.f32.mxu0 0.0
  %2662 = vmatmul.mubr.f32.gmra.mrb[0].mxu0 %v2595
  %v2663 = vpop.f32.mrb[0].mxu0
  %v2664 = vadd.f32 %v2591, %v2663
  %v2665 = vpop.f32.mrb[0].mxu0
  %2666 = vdwg.mxu0
  %v2667 = vadd.f32 %v2664, %v76
  %v2668 = vxor.u32 %v2667, 2147483648
  %v2669 = vmul.f32 %v2668, 1.442695
  %v2670 = vpow.pop %v2669
  %v2671 = vadd.f32 %v2670, 1.0
  %v2672 = vrcp.pop %v2671
  %v2673 = vmul.f32 1.0, %v2672
  %v2674 = vtanh.pop %v2667
  %v2675 = vmul.f32 %v2673, %v1500
  %2677 = vrot.lane.b32.xlu0 %v2674, 64
  %v2678 = vpop.permute.xlu0 %2677
  %v2680 = vmul.f32 %v2673, %v2678
  %2682 = vrot.lane.b32.xlu0 %v2680, 32
  %v2683 = vpop.permute.xlu0 %2682
  %v2685 = vadd.f32 %v2675, %v2683
  %v2686 = vtanh.pop %v2685
  %2688 = vrot.lane.b32.xlu0 %v2686, 64
  %v2689 = vpop.permute.xlu0 %2688
  %v2691 = vmul.f32 %v2673, %v2689
  %v2694 = vunpack.c.l.s4 1966171168
  %v2695 = vunpack.c.0.s8 %v2694
  %v2696 = vlaneseq
  %v2697 = vshrl.u32 %v2696, 7
  %v2698 = vsub.s32 %v2695, %v2697
  %v2699 = vrot.slane %v2691, %v2698
  %v2700 = vcombine.high %v2699, %v2699
  %v2702 = vunpack.c.l.s4 1966171168
  %v2703 = vunpack.c.0.s8 %v2702
  %v2704 = vlaneseq
  %v2705 = vshrl.u32 %v2704, 7
  %v2706 = vsub.s32 %v2703, %v2705
  %v2707 = vrot.slane %v2699, %v2706
  %v2709 = vunpack.c.l.s4 1966171168
  %v2710 = vunpack.c.0.s8 %v2709
  %v2711 = vlaneseq
  %v2712 = vshrl.u32 %v2711, 7
  %v2713 = vsub.s32 %v2710, %v2712
  %v2714 = vrot.slane %v2700, %v2713
  %v2715 = vlaneseq
  %v2716 = vshrl.u32 %v2715, 7
  %v2717 = vsub.s32 0, %v2716
  %v2718 = vrot.slane %v2707, %v2717
  %2719 = vrot.lane.b32.xlu0 %v2718, 32
  %v2720 = vpop.permute.xlu0 %2719
  %v2721 = vsel %vm124, %v2720, 0
  %2723 = vmatprep.subr.mxu0 0.0
  %2724 = vmatpush1.xpose.msra.mxu0 %v333
  %2725 = vmatprep.subr.mxu0 0.0
  %2726 = vmatpush1.xpose.msra.mxu0 0.0
  %2727 = vmatprep.subr.mxu0 0.0
  %2728 = vmatpush1.xpose.msra.mxu0 0.0
  %2729 = vmatprep.subr.mxu0 0.0
  %2730 = vmatpush1.xpose.msra.mxu0 0.0
  %2731 = vmatprep.subr.mxu0 0.0
  %2732 = vmatpush1.xpose.msra.mxu0 0.0
  %2733 = vmatprep.subr.mxu0 0.0
  %2734 = vmatpush1.xpose.msra.mxu0 0.0
  %2735 = vmatprep.subr.mxu0 0.0
  %2736 = vmatpush1.xpose.msra.mxu0 0.0
  %2737 = vmatprep.subr.mxu0 0.0
  %2738 = vmatpush1.xpose.msra.mxu0 0.0
  %2739 = vmatprep.subr.mxu0 0.0
  %2740 = vmatpush1.xpose.msra.mxu0 0.0
  %2741 = vmatprep.subr.mxu0 0.0
  %2742 = vmatpush1.xpose.msra.mxu0 0.0
  %2743 = vmatprep.subr.mxu0 0.0
  %2744 = vmatpush1.xpose.msra.mxu0 0.0
  %2745 = vmatprep.subr.mxu0 0.0
  %2746 = vmatpush1.xpose.msra.mxu0 0.0
  %2747 = vmatprep.subr.mxu0 0.0
  %2748 = vmatpush1.xpose.msra.mxu0 0.0
  %2749 = vmatprep.subr.mxu0 0.0
  %2750 = vmatpush1.xpose.msra.mxu0 0.0
  %2751 = vmatprep.subr.mxu0 0.0
  %2752 = vmatpush1.xpose.msra.mxu0 0.0
  %2753 = vmatprep.subr.mxu0 0.0
  %2754 = vmatpush1.xpose.msra.mxu0 0.0
  %2755 = vmatprep.subr.mxu0 0.0
  %2756 = vmatpush1.xpose.msra.mxu0 0.0
  %2757 = vmatprep.subr.mxu0 0.0
  %2758 = vmatpush1.xpose.msra.mxu0 0.0
  %2759 = vmatprep.subr.mxu0 0.0
  %2760 = vmatpush1.xpose.msra.mxu0 0.0
  %2761 = vmatprep.subr.mxu0 0.0
  %2762 = vmatpush1.xpose.msra.mxu0 0.0
  %2763 = vmatprep.subr.mxu0 0.0
  %2764 = vmatpush1.xpose.msra.mxu0 0.0
  %2765 = vmatprep.subr.mxu0 0.0
  %2766 = vmatpush1.xpose.msra.mxu0 0.0
  %2767 = vmatprep.subr.mxu0 0.0
  %2768 = vmatpush1.xpose.msra.mxu0 0.0
  %2769 = vmatprep.subr.mxu0 0.0
  %2770 = vmatpush1.xpose.msra.mxu0 0.0
  %2771 = vmatprep.subr.mxu0 0.0
  %2772 = vmatpush1.xpose.msra.mxu0 0.0
  %2773 = vmatprep.subr.mxu0 0.0
  %2774 = vmatpush1.xpose.msra.mxu0 0.0
  %2775 = vmatprep.subr.mxu0 0.0
  %2776 = vmatpush1.xpose.msra.mxu0 0.0
  %2777 = vmatprep.subr.mxu0 0.0
  %2778 = vmatpush1.xpose.msra.mxu0 0.0
  %2779 = vmatprep.subr.mxu0 0.0
  %2780 = vmatpush1.xpose.msra.mxu0 0.0
  %2781 = vmatprep.subr.mxu0 0.0
  %2782 = vmatpush1.xpose.msra.mxu0 0.0
  %2783 = vmatprep.subr.mxu0 0.0
  %2784 = vmatpush1.xpose.msra.mxu0 0.0
  %2785 = vmatprep.subr.mxu0 0.0
  %2786 = vmatpush1.xpose.msra.mxu0 0.0
  %2787 = vmatprep.mubr.f32.mxu0 0.0
  %2788 = vmatmul.mubr.f32.gmra.mrb[0].mxu0 %v2721
  %v2789 = vpop.f32.mrb[0].mxu0
  %v2790 = vadd.f32 0.0, %v2789
  %v2791 = vpop.f32.mrb[0].mxu0
  %2792 = vdwg.mxu0
  %v2793 = vlaneseq
  %v2794 = vshrl.u32 %v2793, 7
  %v2795 = vsub.s32 0, %v2794
  %v2796 = vrot.slane %v2714, %v2795
  %2797 = vrot.lane.b32.xlu0 %v2796, 32
  %v2798 = vpop.permute.xlu0 %2797
  %v2799 = vsel %vm124, %v2798, 0
  %2801 = vmatprep.subr.mxu0 0.0
  %2802 = vmatpush1.xpose.msra.mxu0 %v414
  %2803 = vmatprep.subr.mxu0 0.0
  %2804 = vmatpush1.xpose.msra.mxu0 0.0
  %2805 = vmatprep.subr.mxu0 0.0
  %2806 = vmatpush1.xpose.msra.mxu0 0.0
  %2807 = vmatprep.subr.mxu0 0.0
  %2808 = vmatpush1.xpose.msra.mxu0 0.0
  %2809 = vmatprep.subr.mxu0 0.0
  %2810 = vmatpush1.xpose.msra.mxu0 0.0
  %2811 = vmatprep.subr.mxu0 0.0
  %2812 = vmatpush1.xpose.msra.mxu0 0.0
  %2813 = vmatprep.subr.mxu0 0.0
  %2814 = vmatpush1.xpose.msra.mxu0 0.0
  %2815 = vmatprep.subr.mxu0 0.0
  %2816 = vmatpush1.xpose.msra.mxu0 0.0
  %2817 = vmatprep.subr.mxu0 0.0
  %2818 = vmatpush1.xpose.msra.mxu0 0.0
  %2819 = vmatprep.subr.mxu0 0.0
  %2820 = vmatpush1.xpose.msra.mxu0 0.0
  %2821 = vmatprep.subr.mxu0 0.0
  %2822 = vmatpush1.xpose.msra.mxu0 0.0
  %2823 = vmatprep.subr.mxu0 0.0
  %2824 = vmatpush1.xpose.msra.mxu0 0.0
  %2825 = vmatprep.subr.mxu0 0.0
  %2826 = vmatpush1.xpose.msra.mxu0 0.0
  %2827 = vmatprep.subr.mxu0 0.0
  %2828 = vmatpush1.xpose.msra.mxu0 0.0
  %2829 = vmatprep.subr.mxu0 0.0
  %2830 = vmatpush1.xpose.msra.mxu0 0.0
  %2831 = vmatprep.subr.mxu0 0.0
  %2832 = vmatpush1.xpose.msra.mxu0 0.0
  %2833 = vmatprep.subr.mxu0 0.0
  %2834 = vmatpush1.xpose.msra.mxu0 0.0
  %2835 = vmatprep.subr.mxu0 0.0
  %2836 = vmatpush1.xpose.msra.mxu0 0.0
  %2837 = vmatprep.subr.mxu0 0.0
  %2838 = vmatpush1.xpose.msra.mxu0 0.0
  %2839 = vmatprep.subr.mxu0 0.0
  %2840 = vmatpush1.xpose.msra.mxu0 0.0
  %2841 = vmatprep.subr.mxu0 0.0
  %2842 = vmatpush1.xpose.msra.mxu0 0.0
  %2843 = vmatprep.subr.mxu0 0.0
  %2844 = vmatpush1.xpose.msra.mxu0 0.0
  %2845 = vmatprep.subr.mxu0 0.0
  %2846 = vmatpush1.xpose.msra.mxu0 0.0
  %2847 = vmatprep.subr.mxu0 0.0
  %2848 = vmatpush1.xpose.msra.mxu0 0.0
  %2849 = vmatprep.subr.mxu0 0.0
  %2850 = vmatpush1.xpose.msra.mxu0 0.0
  %2851 = vmatprep.subr.mxu0 0.0
  %2852 = vmatpush1.xpose.msra.mxu0 0.0
  %2853 = vmatprep.subr.mxu0 0.0
  %2854 = vmatpush1.xpose.msra.mxu0 0.0
  %2855 = vmatprep.subr.mxu0 0.0
  %2856 = vmatpush1.xpose.msra.mxu0 0.0
  %2857 = vmatprep.subr.mxu0 0.0
  %2858 = vmatpush1.xpose.msra.mxu0 0.0
  %2859 = vmatprep.subr.mxu0 0.0
  %2860 = vmatpush1.xpose.msra.mxu0 0.0
  %2861 = vmatprep.subr.mxu0 0.0
  %2862 = vmatpush1.xpose.msra.mxu0 0.0
  %2863 = vmatprep.subr.mxu0 0.0
  %2864 = vmatpush1.xpose.msra.mxu0 0.0
  %2865 = vmatprep.mubr.f32.mxu0 0.0
  %2866 = vmatmul.mubr.f32.gmra.mrb[0].mxu0 %v2799
  %v2867 = vpop.f32.mrb[0].mxu0
  %v2868 = vadd.f32 0.0, %v2867
  %v2869 = vpop.f32.mrb[0].mxu0
  %2870 = vdwg.mxu0
  %v2871 = vsel %vm486, %v2790, -inf
  %2872 = vmax.xlane.f32.xlu0 %v2871
  %v2873 = vpop.xlane.xlu0 %2872
  %v2874 = vsel %vm486, %v2868, -inf
  %2875 = vmax.xlane.f32.xlu0 %v2874
  %v2876 = vpop.xlane.xlu0 %2875
  %v2877 = vsub.f32 %v2790, %v2873
  %v2878 = vsub.f32 %v2868, %v2876
  %v2879 = vmul.f32 %v2877, 1.442695
  %v2880 = vpow.pop %v2879
  %v2881 = vmul.f32 %v2878, 1.442695
  %v2882 = vpow.pop %v2881
  %v2883 = vsel %vm486, %v2880, 0.0
  %2884 = vadd.xlane.f32.xlu0 %v2883
  %v2885 = vpop.xlane.xlu0 %2884
  %v2886 = vsel %vm486, %v2882, 0.0
  %2887 = vadd.xlane.f32.xlu0 %v2886
  %v2888 = vpop.xlane.xlu0 %2887
  %v2889 = vrcp.pop %v2885
  %v2890 = vrcp.pop %v2888
  %v2891 = vmul.f32 %v2880, %v2889
  %v2892 = vmul.f32 %v2882, %v2890
  %v2894 = vsel %vm509, %v2891, 0
  %2896 = vmatprep.subr.mxu0 0.0
  %2897 = vmatpush1.msra.mxu0 %v58
  %2898 = vmatprep.subr.mxu0 0.0
  %2899 = vmatpush1.msra.mxu0 0.0
  %2900 = vmatprep.subr.mxu0 0.0
  %2901 = vmatpush1.msra.mxu0 0.0
  %2902 = vmatprep.subr.mxu0 0.0
  %2903 = vmatpush1.msra.mxu0 0.0
  %2904 = vmatprep.subr.mxu0 0.0
  %2905 = vmatpush1.msra.mxu0 0.0
  %2906 = vmatprep.subr.mxu0 0.0
  %2907 = vmatpush1.msra.mxu0 0.0
  %2908 = vmatprep.subr.mxu0 0.0
  %2909 = vmatpush1.msra.mxu0 0.0
  %2910 = vmatprep.subr.mxu0 0.0
  %2911 = vmatpush1.msra.mxu0 0.0
  %2912 = vmatprep.subr.mxu0 0.0
  %2913 = vmatpush1.msra.mxu0 0.0
  %2914 = vmatprep.subr.mxu0 0.0
  %2915 = vmatpush1.msra.mxu0 0.0
  %2916 = vmatprep.subr.mxu0 0.0
  %2917 = vmatpush1.msra.mxu0 0.0
  %2918 = vmatprep.subr.mxu0 0.0
  %2919 = vmatpush1.msra.mxu0 0.0
  %2920 = vmatprep.subr.mxu0 0.0
  %2921 = vmatpush1.msra.mxu0 0.0
  %2922 = vmatprep.subr.mxu0 0.0
  %2923 = vmatpush1.msra.mxu0 0.0
  %2924 = vmatprep.subr.mxu0 0.0
  %2925 = vmatpush1.msra.mxu0 0.0
  %2926 = vmatprep.subr.mxu0 0.0
  %2927 = vmatpush1.msra.mxu0 0.0
  %2928 = vmatprep.subr.mxu0 0.0
  %2929 = vmatpush1.msra.mxu0 0.0
  %2930 = vmatprep.subr.mxu0 0.0
  %2931 = vmatpush1.msra.mxu0 0.0
  %2932 = vmatprep.subr.mxu0 0.0
  %2933 = vmatpush1.msra.mxu0 0.0
  %2934 = vmatprep.subr.mxu0 0.0
  %2935 = vmatpush1.msra.mxu0 0.0
  %2936 = vmatprep.subr.mxu0 0.0
  %2937 = vmatpush1.msra.mxu0 0.0
  %2938 = vmatprep.subr.mxu0 0.0
  %2939 = vmatpush1.msra.mxu0 0.0
  %2940 = vmatprep.subr.mxu0 0.0
  %2941 = vmatpush1.msra.mxu0 0.0
  %2942 = vmatprep.subr.mxu0 0.0
  %2943 = vmatpush1.msra.mxu0 0.0
  %2944 = vmatprep.subr.mxu0 0.0
  %2945 = vmatpush1.msra.mxu0 0.0
  %2946 = vmatprep.subr.mxu0 0.0
  %2947 = vmatpush1.msra.mxu0 0.0
  %2948 = vmatprep.subr.mxu0 0.0
  %2949 = vmatpush1.msra.mxu0 0.0
  %2950 = vmatprep.subr.mxu0 0.0
  %2951 = vmatpush1.msra.mxu0 0.0
  %2952 = vmatprep.subr.mxu0 0.0
  %2953 = vmatpush1.msra.mxu0 0.0
  %2954 = vmatprep.subr.mxu0 0.0
  %2955 = vmatpush1.msra.mxu0 0.0
  %2956 = vmatprep.subr.mxu0 0.0
  %2957 = vmatpush1.msra.mxu0 0.0
  %2958 = vmatprep.subr.mxu0 0.0
  %2959 = vmatpush1.msra.mxu0 0.0
  %2960 = vmatprep.mubr.f32.mxu0 0.0
  %2961 = vmatmul.mubr.f32.gmra.mrb[0].mxu0 %v2894
  %v2962 = vpop.f32.mrb[0].mxu0
  %v2963 = vadd.f32 0.0, %v2962
  %v2964 = vpop.f32.mrb[0].mxu0
  %2965 = vdwg.mxu0
  %v2967 = vsel %vm509, %v2892, 0
  %2969 = vmatprep.subr.mxu0 0.0
  %2970 = vmatpush1.msra.mxu0 %v59
  %2971 = vmatprep.subr.mxu0 0.0
  %2972 = vmatpush1.msra.mxu0 0.0
  %2973 = vmatprep.subr.mxu0 0.0
  %2974 = vmatpush1.msra.mxu0 0.0
  %2975 = vmatprep.subr.mxu0 0.0
  %2976 = vmatpush1.msra.mxu0 0.0
  %2977 = vmatprep.subr.mxu0 0.0
  %2978 = vmatpush1.msra.mxu0 0.0
  %2979 = vmatprep.subr.mxu0 0.0
  %2980 = vmatpush1.msra.mxu0 0.0
  %2981 = vmatprep.subr.mxu0 0.0
  %2982 = vmatpush1.msra.mxu0 0.0
  %2983 = vmatprep.subr.mxu0 0.0
  %2984 = vmatpush1.msra.mxu0 0.0
  %2985 = vmatprep.subr.mxu0 0.0
  %2986 = vmatpush1.msra.mxu0 0.0
  %2987 = vmatprep.subr.mxu0 0.0
  %2988 = vmatpush1.msra.mxu0 0.0
  %2989 = vmatprep.subr.mxu0 0.0
  %2990 = vmatpush1.msra.mxu0 0.0
  %2991 = vmatprep.subr.mxu0 0.0
  %2992 = vmatpush1.msra.mxu0 0.0
  %2993 = vmatprep.subr.mxu0 0.0
  %2994 = vmatpush1.msra.mxu0 0.0
  %2995 = vmatprep.subr.mxu0 0.0
  %2996 = vmatpush1.msra.mxu0 0.0
  %2997 = vmatprep.subr.mxu0 0.0
  %2998 = vmatpush1.msra.mxu0 0.0
  %2999 = vmatprep.subr.mxu0 0.0
  %3000 = vmatpush1.msra.mxu0 0.0
  %3001 = vmatprep.subr.mxu0 0.0
  %3002 = vmatpush1.msra.mxu0 0.0
  %3003 = vmatprep.subr.mxu0 0.0
  %3004 = vmatpush1.msra.mxu0 0.0
  %3005 = vmatprep.subr.mxu0 0.0
  %3006 = vmatpush1.msra.mxu0 0.0
  %3007 = vmatprep.subr.mxu0 0.0
  %3008 = vmatpush1.msra.mxu0 0.0
  %3009 = vmatprep.subr.mxu0 0.0
  %3010 = vmatpush1.msra.mxu0 0.0
  %3011 = vmatprep.subr.mxu0 0.0
  %3012 = vmatpush1.msra.mxu0 0.0
  %3013 = vmatprep.subr.mxu0 0.0
  %3014 = vmatpush1.msra.mxu0 0.0
  %3015 = vmatprep.subr.mxu0 0.0
  %3016 = vmatpush1.msra.mxu0 0.0
  %3017 = vmatprep.subr.mxu0 0.0
  %3018 = vmatpush1.msra.mxu0 0.0
  %3019 = vmatprep.subr.mxu0 0.0
  %3020 = vmatpush1.msra.mxu0 0.0
  %3021 = vmatprep.subr.mxu0 0.0
  %3022 = vmatpush1.msra.mxu0 0.0
  %3023 = vmatprep.subr.mxu0 0.0
  %3024 = vmatpush1.msra.mxu0 0.0
  %3025 = vmatprep.subr.mxu0 0.0
  %3026 = vmatpush1.msra.mxu0 0.0
  %3027 = vmatprep.subr.mxu0 0.0
  %3028 = vmatpush1.msra.mxu0 0.0
  %3029 = vmatprep.subr.mxu0 0.0
  %3030 = vmatpush1.msra.mxu0 0.0
  %3031 = vmatprep.subr.mxu0 0.0
  %3032 = vmatpush1.msra.mxu0 0.0
  %3033 = vmatprep.mubr.f32.mxu0 0.0
  %3034 = vmatmul.mubr.f32.gmra.mrb[0].mxu0 %v2967
  %v3035 = vpop.f32.mrb[0].mxu0
  %v3036 = vadd.f32 0.0, %v3035
  %v3037 = vpop.f32.mrb[0].mxu0
  %3038 = vdwg.mxu0
  %v3041 = vrot.slane %v3036, 7
  %v3042 = vsel %vm659, %v3041, %v2963
  %v3043 = vsel %vm124, %v3042, 0
  %3045 = vmatprep.subr.mxu0 0.0
  %3046 = vmatpush1.msra.mxu0 %v82
  %3047 = vmatprep.subr.mxu0 0.0
  %3048 = vmatpush1.msra.mxu0 %v83
  %3049 = vmatprep.subr.mxu0 0.0
  %3050 = vmatpush1.msra.mxu0 %v84
  %3051 = vmatprep.subr.mxu0 0.0
  %3052 = vmatpush1.msra.mxu0 %v85
  %3053 = vmatprep.subr.mxu0 0.0
  %3054 = vmatpush1.msra.mxu0 0.0
  %3055 = vmatprep.subr.mxu0 0.0
  %3056 = vmatpush1.msra.mxu0 0.0
  %3057 = vmatprep.subr.mxu0 0.0
  %3058 = vmatpush1.msra.mxu0 0.0
  %3059 = vmatprep.subr.mxu0 0.0
  %3060 = vmatpush1.msra.mxu0 0.0
  %3061 = vmatprep.subr.mxu0 0.0
  %3062 = vmatpush1.msra.mxu0 0.0
  %3063 = vmatprep.subr.mxu0 0.0
  %3064 = vmatpush1.msra.mxu0 0.0
  %3065 = vmatprep.subr.mxu0 0.0
  %3066 = vmatpush1.msra.mxu0 0.0
  %3067 = vmatprep.subr.mxu0 0.0
  %3068 = vmatpush1.msra.mxu0 0.0
  %3069 = vmatprep.subr.mxu0 0.0
  %3070 = vmatpush1.msra.mxu0 0.0
  %3071 = vmatprep.subr.mxu0 0.0
  %3072 = vmatpush1.msra.mxu0 0.0
  %3073 = vmatprep.subr.mxu0 0.0
  %3074 = vmatpush1.msra.mxu0 0.0
  %3075 = vmatprep.subr.mxu0 0.0
  %3076 = vmatpush1.msra.mxu0 0.0
  %3077 = vmatprep.subr.mxu0 0.0
  %3078 = vmatpush1.msra.mxu0 0.0
  %3079 = vmatprep.subr.mxu0 0.0
  %3080 = vmatpush1.msra.mxu0 0.0
  %3081 = vmatprep.subr.mxu0 0.0
  %3082 = vmatpush1.msra.mxu0 0.0
  %3083 = vmatprep.subr.mxu0 0.0
  %3084 = vmatpush1.msra.mxu0 0.0
  %3085 = vmatprep.subr.mxu0 0.0
  %3086 = vmatpush1.msra.mxu0 0.0
  %3087 = vmatprep.subr.mxu0 0.0
  %3088 = vmatpush1.msra.mxu0 0.0
  %3089 = vmatprep.subr.mxu0 0.0
  %3090 = vmatpush1.msra.mxu0 0.0
  %3091 = vmatprep.subr.mxu0 0.0
  %3092 = vmatpush1.msra.mxu0 0.0
  %3093 = vmatprep.subr.mxu0 0.0
  %3094 = vmatpush1.msra.mxu0 0.0
  %3095 = vmatprep.subr.mxu0 0.0
  %3096 = vmatpush1.msra.mxu0 0.0
  %3097 = vmatprep.subr.mxu0 0.0
  %3098 = vmatpush1.msra.mxu0 0.0
  %3099 = vmatprep.subr.mxu0 0.0
  %3100 = vmatpush1.msra.mxu0 0.0
  %3101 = vmatprep.subr.mxu0 0.0
  %3102 = vmatpush1.msra.mxu0 0.0
  %3103 = vmatprep.subr.mxu0 0.0
  %3104 = vmatpush1.msra.mxu0 0.0
  %3105 = vmatprep.subr.mxu0 0.0
  %3106 = vmatpush1.msra.mxu0 0.0
  %3107 = vmatprep.subr.mxu0 0.0
  %3108 = vmatpush1.msra.mxu0 0.0
  %3109 = vmatprep.mubr.f32.mxu0 0.0
  %3110 = vmatmul.mubr.f32.gmra.mrb[0].mxu0 %v3043
  %v3111 = vpop.f32.mrb[0].mxu0
  %v3112 = vadd.f32 0.0, %v3111
  %v3113 = vpop.f32.mrb[0].mxu0
  %3114 = vdwg.mxu0
  %3115 = vrot.lane.b32.xlu0 %v2691, 32
  %v3116 = vpop.permute.xlu0 %3115
  %v3117 = vsel %vm124, %v3116, 0
  %3119 = vmatprep.subr.mxu0 0.0
  %3120 = vmatpush1.msra.mxu0 %v78
  %3121 = vmatprep.subr.mxu0 0.0
  %3122 = vmatpush1.msra.mxu0 %v79
  %3123 = vmatprep.subr.mxu0 0.0
  %3124 = vmatpush1.msra.mxu0 %v80
  %3125 = vmatprep.subr.mxu0 0.0
  %3126 = vmatpush1.msra.mxu0 %v81
  %3127 = vmatprep.subr.mxu0 0.0
  %3128 = vmatpush1.msra.mxu0 0.0
  %3129 = vmatprep.subr.mxu0 0.0
  %3130 = vmatpush1.msra.mxu0 0.0
  %3131 = vmatprep.subr.mxu0 0.0
  %3132 = vmatpush1.msra.mxu0 0.0
  %3133 = vmatprep.subr.mxu0 0.0
  %3134 = vmatpush1.msra.mxu0 0.0
  %3135 = vmatprep.subr.mxu0 0.0
  %3136 = vmatpush1.msra.mxu0 0.0
  %3137 = vmatprep.subr.mxu0 0.0
  %3138 = vmatpush1.msra.mxu0 0.0
  %3139 = vmatprep.subr.mxu0 0.0
  %3140 = vmatpush1.msra.mxu0 0.0
  %3141 = vmatprep.subr.mxu0 0.0
  %3142 = vmatpush1.msra.mxu0 0.0
  %3143 = vmatprep.subr.mxu0 0.0
  %3144 = vmatpush1.msra.mxu0 0.0
  %3145 = vmatprep.subr.mxu0 0.0
  %3146 = vmatpush1.msra.mxu0 0.0
  %3147 = vmatprep.subr.mxu0 0.0
  %3148 = vmatpush1.msra.mxu0 0.0
  %3149 = vmatprep.subr.mxu0 0.0
  %3150 = vmatpush1.msra.mxu0 0.0
  %3151 = vmatprep.subr.mxu0 0.0
  %3152 = vmatpush1.msra.mxu0 0.0
  %3153 = vmatprep.subr.mxu0 0.0
  %3154 = vmatpush1.msra.mxu0 0.0
  %3155 = vmatprep.subr.mxu0 0.0
  %3156 = vmatpush1.msra.mxu0 0.0
  %3157 = vmatprep.subr.mxu0 0.0
  %3158 = vmatpush1.msra.mxu0 0.0
  %3159 = vmatprep.subr.mxu0 0.0
  %3160 = vmatpush1.msra.mxu0 0.0
  %3161 = vmatprep.subr.mxu0 0.0
  %3162 = vmatpush1.msra.mxu0 0.0
  %3163 = vmatprep.subr.mxu0 0.0
  %3164 = vmatpush1.msra.mxu0 0.0
  %3165 = vmatprep.subr.mxu0 0.0
  %3166 = vmatpush1.msra.mxu0 0.0
  %3167 = vmatprep.subr.mxu0 0.0
  %3168 = vmatpush1.msra.mxu0 0.0
  %3169 = vmatprep.subr.mxu0 0.0
  %3170 = vmatpush1.msra.mxu0 0.0
  %3171 = vmatprep.subr.mxu0 0.0
  %3172 = vmatpush1.msra.mxu0 0.0
  %3173 = vmatprep.subr.mxu0 0.0
  %3174 = vmatpush1.msra.mxu0 0.0
  %3175 = vmatprep.subr.mxu0 0.0
  %3176 = vmatpush1.msra.mxu0 0.0
  %3177 = vmatprep.subr.mxu0 0.0
  %3178 = vmatpush1.msra.mxu0 0.0
  %3179 = vmatprep.subr.mxu0 0.0
  %3180 = vmatpush1.msra.mxu0 0.0
  %3181 = vmatprep.subr.mxu0 0.0
  %3182 = vmatpush1.msra.mxu0 0.0
  %3183 = vmatprep.mubr.f32.mxu0 0.0
  %3184 = vmatmul.mubr.f32.gmra.mrb[0].mxu0 %v3117
  %v3185 = vpop.f32.mrb[0].mxu0
  %v3186 = vadd.f32 %v3112, %v3185
  %v3187 = vpop.f32.mrb[0].mxu0
  %3188 = vdwg.mxu0
  %v3189 = vadd.f32 %v3186, %v811
  %v3190 = vsel %vm814, %v3189, -inf
  %3191 = vmax.xlane.f32.xlu0 %v3190
  %v3192 = vpop.xlane.xlu0 %3191
  %v3193 = vsub.f32 %v3189, %v3192
  %v3194 = vmul.f32 %v3193, 1.442695
  %v3195 = vpow.pop %v3194
  %v3196 = vsel %vm814, %v3195, 0.0
  %3197 = vadd.xlane.f32.xlu0 %v3196
  %v3198 = vpop.xlane.xlu0 %3197
  %v3199 = vrcp.pop %v3198
  %v3200 = vmul.f32 %v3195, %v3199
  %3201 = vmatprep.subr.mxu0 0.0
  %3202 = vmatpush1.msra.mxu0 %v91
  %3203 = vmatprep.subr.mxu0 0.0
  %3204 = vmatpush1.msra.mxu0 %v92
  %3205 = vmatprep.subr.mxu0 0.0
  %3206 = vmatpush1.msra.mxu0 %v93
  %3207 = vmatprep.subr.mxu0 0.0
  %3208 = vmatpush1.msra.mxu0 %v94
  %3209 = vmatprep.subr.mxu0 0.0
  %3210 = vmatpush1.msra.mxu0 0.0
  %3211 = vmatprep.subr.mxu0 0.0
  %3212 = vmatpush1.msra.mxu0 0.0
  %3213 = vmatprep.subr.mxu0 0.0
  %3214 = vmatpush1.msra.mxu0 0.0
  %3215 = vmatprep.subr.mxu0 0.0
  %3216 = vmatpush1.msra.mxu0 0.0
  %3217 = vmatprep.subr.mxu0 0.0
  %3218 = vmatpush1.msra.mxu0 0.0
  %3219 = vmatprep.subr.mxu0 0.0
  %3220 = vmatpush1.msra.mxu0 0.0
  %3221 = vmatprep.subr.mxu0 0.0
  %3222 = vmatpush1.msra.mxu0 0.0
  %3223 = vmatprep.subr.mxu0 0.0
  %3224 = vmatpush1.msra.mxu0 0.0
  %3225 = vmatprep.subr.mxu0 0.0
  %3226 = vmatpush1.msra.mxu0 0.0
  %3227 = vmatprep.subr.mxu0 0.0
  %3228 = vmatpush1.msra.mxu0 0.0
  %3229 = vmatprep.subr.mxu0 0.0
  %3230 = vmatpush1.msra.mxu0 0.0
  %3231 = vmatprep.subr.mxu0 0.0
  %3232 = vmatpush1.msra.mxu0 0.0
  %3233 = vmatprep.subr.mxu0 0.0
  %3234 = vmatpush1.msra.mxu0 0.0
  %3235 = vmatprep.subr.mxu0 0.0
  %3236 = vmatpush1.msra.mxu0 0.0
  %3237 = vmatprep.subr.mxu0 0.0
  %3238 = vmatpush1.msra.mxu0 0.0
  %3239 = vmatprep.subr.mxu0 0.0
  %3240 = vmatpush1.msra.mxu0 0.0
  %3241 = vmatprep.subr.mxu0 0.0
  %3242 = vmatpush1.msra.mxu0 0.0
  %3243 = vmatprep.subr.mxu0 0.0
  %3244 = vmatpush1.msra.mxu0 0.0
  %3245 = vmatprep.subr.mxu0 0.0
  %3246 = vmatpush1.msra.mxu0 0.0
  %3247 = vmatprep.subr.mxu0 0.0
  %3248 = vmatpush1.msra.mxu0 0.0
  %3249 = vmatprep.subr.mxu0 0.0
  %3250 = vmatpush1.msra.mxu0 0.0
  %3251 = vmatprep.subr.mxu0 0.0
  %3252 = vmatpush1.msra.mxu0 0.0
  %3253 = vmatprep.subr.mxu0 0.0
  %3254 = vmatpush1.msra.mxu0 0.0
  %3255 = vmatprep.subr.mxu0 0.0
  %3256 = vmatpush1.msra.mxu0 0.0
  %3257 = vmatprep.subr.mxu0 0.0
  %3258 = vmatpush1.msra.mxu0 0.0
  %3259 = vmatprep.subr.mxu0 0.0
  %3260 = vmatpush1.msra.mxu0 0.0
  %3261 = vmatprep.subr.mxu0 0.0
  %3262 = vmatpush1.msra.mxu0 0.0
  %3263 = vmatprep.subr.mxu0 0.0
  %3264 = vmatpush1.msra.mxu0 0.0
  %3265 = vmatprep.mubr.f32.mxu0 0.0
  %3266 = vmatmul.mubr.f32.gmra.mrb[0].mxu0 %v3117
  %v3267 = vpop.f32.mrb[0].mxu0
  %v3268 = vadd.f32 0.0, %v3267
  %v3269 = vpop.f32.mrb[0].mxu0
  %3270 = vdwg.mxu0
  %3271 = vmatprep.subr.mxu0 0.0
  %3272 = vmatpush1.msra.mxu0 %v87
  %3273 = vmatprep.subr.mxu0 0.0
  %3274 = vmatpush1.msra.mxu0 %v88
  %3275 = vmatprep.subr.mxu0 0.0
  %3276 = vmatpush1.msra.mxu0 %v89
  %3277 = vmatprep.subr.mxu0 0.0
  %3278 = vmatpush1.msra.mxu0 %v90
  %3279 = vmatprep.subr.mxu0 0.0
  %3280 = vmatpush1.msra.mxu0 0.0
  %3281 = vmatprep.subr.mxu0 0.0
  %3282 = vmatpush1.msra.mxu0 0.0
  %3283 = vmatprep.subr.mxu0 0.0
  %3284 = vmatpush1.msra.mxu0 0.0
  %3285 = vmatprep.subr.mxu0 0.0
  %3286 = vmatpush1.msra.mxu0 0.0
  %3287 = vmatprep.subr.mxu0 0.0
  %3288 = vmatpush1.msra.mxu0 0.0
  %3289 = vmatprep.subr.mxu0 0.0
  %3290 = vmatpush1.msra.mxu0 0.0
  %3291 = vmatprep.subr.mxu0 0.0
  %3292 = vmatpush1.msra.mxu0 0.0
  %3293 = vmatprep.subr.mxu0 0.0
  %3294 = vmatpush1.msra.mxu0 0.0
  %3295 = vmatprep.subr.mxu0 0.0
  %3296 = vmatpush1.msra.mxu0 0.0
  %3297 = vmatprep.subr.mxu0 0.0
  %3298 = vmatpush1.msra.mxu0 0.0
  %3299 = vmatprep.subr.mxu0 0.0
  %3300 = vmatpush1.msra.mxu0 0.0
  %3301 = vmatprep.subr.mxu0 0.0
  %3302 = vmatpush1.msra.mxu0 0.0
  %3303 = vmatprep.subr.mxu0 0.0
  %3304 = vmatpush1.msra.mxu0 0.0
  %3305 = vmatprep.subr.mxu0 0.0
  %3306 = vmatpush1.msra.mxu0 0.0
  %3307 = vmatprep.subr.mxu0 0.0
  %3308 = vmatpush1.msra.mxu0 0.0
  %3309 = vmatprep.subr.mxu0 0.0
  %3310 = vmatpush1.msra.mxu0 0.0
  %3311 = vmatprep.subr.mxu0 0.0
  %3312 = vmatpush1.msra.mxu0 0.0
  %3313 = vmatprep.subr.mxu0 0.0
  %3314 = vmatpush1.msra.mxu0 0.0
  %3315 = vmatprep.subr.mxu0 0.0
  %3316 = vmatpush1.msra.mxu0 0.0
  %3317 = vmatprep.subr.mxu0 0.0
  %3318 = vmatpush1.msra.mxu0 0.0
  %3319 = vmatprep.subr.mxu0 0.0
  %3320 = vmatpush1.msra.mxu0 0.0
  %3321 = vmatprep.subr.mxu0 0.0
  %3322 = vmatpush1.msra.mxu0 0.0
  %3323 = vmatprep.subr.mxu0 0.0
  %3324 = vmatpush1.msra.mxu0 0.0
  %3325 = vmatprep.subr.mxu0 0.0
  %3326 = vmatpush1.msra.mxu0 0.0
  %3327 = vmatprep.subr.mxu0 0.0
  %3328 = vmatpush1.msra.mxu0 0.0
  %3329 = vmatprep.subr.mxu0 0.0
  %3330 = vmatpush1.msra.mxu0 0.0
  %3331 = vmatprep.subr.mxu0 0.0
  %3332 = vmatpush1.msra.mxu0 0.0
  %3333 = vmatprep.subr.mxu0 0.0
  %3334 = vmatpush1.msra.mxu0 0.0
  %3335 = vmatprep.mubr.f32.mxu0 0.0
  %3336 = vmatmul.mubr.f32.gmra.mrb[0].mxu0 %v3043
  %v3337 = vpop.f32.mrb[0].mxu0
  %v3338 = vadd.f32 %v3268, %v3337
  %v3339 = vpop.f32.mrb[0].mxu0
  %3340 = vdwg.mxu0
  %3341 = vmatprep.subr.mxu0 0.0
  %3342 = vmatpush1.msra.mxu0 %v95
  %3343 = vmatprep.subr.mxu0 0.0
  %3344 = vmatpush1.msra.mxu0 %v96
  %3345 = vmatprep.subr.mxu0 0.0
  %3346 = vmatpush1.msra.mxu0 0.0
  %3347 = vmatprep.subr.mxu0 0.0
  %3348 = vmatpush1.msra.mxu0 0.0
  %3349 = vmatprep.subr.mxu0 0.0
  %3350 = vmatpush1.msra.mxu0 0.0
  %3351 = vmatprep.subr.mxu0 0.0
  %3352 = vmatpush1.msra.mxu0 0.0
  %3353 = vmatprep.subr.mxu0 0.0
  %3354 = vmatpush1.msra.mxu0 0.0
  %3355 = vmatprep.subr.mxu0 0.0
  %3356 = vmatpush1.msra.mxu0 0.0
  %3357 = vmatprep.subr.mxu0 0.0
  %3358 = vmatpush1.msra.mxu0 0.0
  %3359 = vmatprep.subr.mxu0 0.0
  %3360 = vmatpush1.msra.mxu0 0.0
  %3361 = vmatprep.subr.mxu0 0.0
  %3362 = vmatpush1.msra.mxu0 0.0
  %3363 = vmatprep.subr.mxu0 0.0
  %3364 = vmatpush1.msra.mxu0 0.0
  %3365 = vmatprep.subr.mxu0 0.0
  %3366 = vmatpush1.msra.mxu0 0.0
  %3367 = vmatprep.subr.mxu0 0.0
  %3368 = vmatpush1.msra.mxu0 0.0
  %3369 = vmatprep.subr.mxu0 0.0
  %3370 = vmatpush1.msra.mxu0 0.0
  %3371 = vmatprep.subr.mxu0 0.0
  %3372 = vmatpush1.msra.mxu0 0.0
  %3373 = vmatprep.subr.mxu0 0.0
  %3374 = vmatpush1.msra.mxu0 0.0
  %3375 = vmatprep.subr.mxu0 0.0
  %3376 = vmatpush1.msra.mxu0 0.0
  %3377 = vmatprep.subr.mxu0 0.0
  %3378 = vmatpush1.msra.mxu0 0.0
  %3379 = vmatprep.subr.mxu0 0.0
  %3380 = vmatpush1.msra.mxu0 0.0
  %3381 = vmatprep.subr.mxu0 0.0
  %3382 = vmatpush1.msra.mxu0 0.0
  %3383 = vmatprep.subr.mxu0 0.0
  %3384 = vmatpush1.msra.mxu0 0.0
  %3385 = vmatprep.subr.mxu0 0.0
  %3386 = vmatpush1.msra.mxu0 0.0
  %3387 = vmatprep.subr.mxu0 0.0
  %3388 = vmatpush1.msra.mxu0 0.0
  %3389 = vmatprep.subr.mxu0 0.0
  %3390 = vmatpush1.msra.mxu0 0.0
  %3391 = vmatprep.subr.mxu0 0.0
  %3392 = vmatpush1.msra.mxu0 0.0
  %3393 = vmatprep.subr.mxu0 0.0
  %3394 = vmatpush1.msra.mxu0 0.0
  %3395 = vmatprep.subr.mxu0 0.0
  %3396 = vmatpush1.msra.mxu0 0.0
  %3397 = vmatprep.subr.mxu0 0.0
  %3398 = vmatpush1.msra.mxu0 0.0
  %3399 = vmatprep.subr.mxu0 0.0
  %3400 = vmatpush1.msra.mxu0 0.0
  %3401 = vmatprep.subr.mxu0 0.0
  %3402 = vmatpush1.msra.mxu0 0.0
  %3403 = vmatprep.subr.mxu0 0.0
  %3404 = vmatpush1.msra.mxu0 0.0
  %3405 = vmatprep.mubr.f32.mxu0 0.0
  %3406 = vmatmul.mubr.f32.gmra.mrb[0].mxu0 %v2595
  %v3407 = vpop.f32.mrb[0].mxu0
  %v3408 = vadd.f32 0.0, %v3407
  %v3409 = vpop.f32.mrb[0].mxu0
  %3410 = vdwg.mxu0
  %v3411 = vadd.f32 %v3338, %v3408
  %v3412 = vadd.f32 %v3411, %v1041
  %v3413 = vxor.u32 %v3412, 2147483648
  %v3414 = vmul.f32 %v3413, 1.442695
  %v3415 = vpow.pop %v3414
  %v3416 = vadd.f32 %v3415, 1.0
  %v3417 = vrcp.pop %v3416
  %v3418 = vmul.f32 1.0, %v3417
  %v3419 = vsub.f32 1.0, %v3418
  %3421 = vset.pattern.permute.xlu0 0
  %3422 = vperm.xlu0 %3421, %v3419
  %v3423 = vpop.permute.xlu0 %3422
  %v3425 = vrot.slane %v2892, 7
  %v3426 = vsel %vm659, %v3425, %v2891
  %v3428 = vmul.f32 %v3423, %v3426
  %v3431 = vunpack.c.l.s4 1966171168
  %v3432 = vunpack.c.0.s8 %v3431
  %v3433 = vlaneseq
  %v3434 = vshrl.u32 %v3433, 7
  %v3435 = vsub.s32 %v3432, %v3434
  %v3436 = vrot.slane %v3428, %v3435
  %v3437 = vcombine.high %v3436, %v3436
  %v3439 = vunpack.c.l.s4 1966171168
  %v3440 = vunpack.c.0.s8 %v3439
  %v3441 = vlaneseq
  %v3442 = vshrl.u32 %v3441, 7
  %v3443 = vsub.s32 %v3440, %v3442
  %v3444 = vrot.slane %v3436, %v3443
  %v3446 = vunpack.c.l.s4 1966171168
  %v3447 = vunpack.c.0.s8 %v3446
  %v3448 = vlaneseq
  %v3449 = vshrl.u32 %v3448, 7
  %v3450 = vsub.s32 %v3447, %v3449
  %v3451 = vrot.slane %v3437, %v3450
  %v3452 = vsel %vm509, %v3444, 0
  %3454 = vmatprep.subr.mxu0 0.0
  %3455 = vmatpush1.msra.mxu0 %v119
  %3456 = vmatprep.subr.mxu0 0.0
  %3457 = vmatpush1.msra.mxu0 0.0
  %3458 = vmatprep.subr.mxu0 0.0
  %3459 = vmatpush1.msra.mxu0 0.0
  %3460 = vmatprep.subr.mxu0 0.0
  %3461 = vmatpush1.msra.mxu0 0.0
  %3462 = vmatprep.subr.mxu0 0.0
  %3463 = vmatpush1.msra.mxu0 0.0
  %3464 = vmatprep.subr.mxu0 0.0
  %3465 = vmatpush1.msra.mxu0 0.0
  %3466 = vmatprep.subr.mxu0 0.0
  %3467 = vmatpush1.msra.mxu0 0.0
  %3468 = vmatprep.subr.mxu0 0.0
  %3469 = vmatpush1.msra.mxu0 0.0
  %3470 = vmatprep.subr.mxu0 0.0
  %3471 = vmatpush1.msra.mxu0 0.0
  %3472 = vmatprep.subr.mxu0 0.0
  %3473 = vmatpush1.msra.mxu0 0.0
  %3474 = vmatprep.subr.mxu0 0.0
  %3475 = vmatpush1.msra.mxu0 0.0
  %3476 = vmatprep.subr.mxu0 0.0
  %3477 = vmatpush1.msra.mxu0 0.0
  %3478 = vmatprep.subr.mxu0 0.0
  %3479 = vmatpush1.msra.mxu0 0.0
  %3480 = vmatprep.subr.mxu0 0.0
  %3481 = vmatpush1.msra.mxu0 0.0
  %3482 = vmatprep.subr.mxu0 0.0
  %3483 = vmatpush1.msra.mxu0 0.0
  %3484 = vmatprep.subr.mxu0 0.0
  %3485 = vmatpush1.msra.mxu0 0.0
  %3486 = vmatprep.subr.mxu0 0.0
  %3487 = vmatpush1.msra.mxu0 0.0
  %3488 = vmatprep.subr.mxu0 0.0
  %3489 = vmatpush1.msra.mxu0 0.0
  %3490 = vmatprep.subr.mxu0 0.0
  %3491 = vmatpush1.msra.mxu0 0.0
  %3492 = vmatprep.subr.mxu0 0.0
  %3493 = vmatpush1.msra.mxu0 0.0
  %3494 = vmatprep.subr.mxu0 0.0
  %3495 = vmatpush1.msra.mxu0 0.0
  %3496 = vmatprep.subr.mxu0 0.0
  %3497 = vmatpush1.msra.mxu0 0.0
  %3498 = vmatprep.subr.mxu0 0.0
  %3499 = vmatpush1.msra.mxu0 0.0
  %3500 = vmatprep.subr.mxu0 0.0
  %3501 = vmatpush1.msra.mxu0 0.0
  %3502 = vmatprep.subr.mxu0 0.0
  %3503 = vmatpush1.msra.mxu0 0.0
  %3504 = vmatprep.subr.mxu0 0.0
  %3505 = vmatpush1.msra.mxu0 0.0
  %3506 = vmatprep.subr.mxu0 0.0
  %3507 = vmatpush1.msra.mxu0 0.0
  %3508 = vmatprep.subr.mxu0 0.0
  %3509 = vmatpush1.msra.mxu0 0.0
  %3510 = vmatprep.subr.mxu0 0.0
  %3511 = vmatpush1.msra.mxu0 0.0
  %3512 = vmatprep.subr.mxu0 0.0
  %3513 = vmatpush1.msra.mxu0 0.0
  %3514 = vmatprep.subr.mxu0 0.0
  %3515 = vmatpush1.msra.mxu0 0.0
  %3516 = vmatprep.subr.mxu0 0.0
  %3517 = vmatpush1.msra.mxu0 0.0
  %3518 = vmatprep.mubr.f32.mxu0 0.0
  %3519 = vmatmul.mubr.f32.gmra.mrb[0].mxu0 %v3452
  %v3520 = vpop.f32.mrb[0].mxu0
  %v3521 = vadd.f32 0.0, %v3520
  %v3522 = vpop.f32.mrb[0].mxu0
  %3523 = vdwg.mxu0
  %v3524 = vsel %vm509, %v3451, 0
  %3526 = vmatprep.subr.mxu0 0.0
  %3527 = vmatpush1.msra.mxu0 %v120
  %3528 = vmatprep.subr.mxu0 0.0
  %3529 = vmatpush1.msra.mxu0 0.0
  %3530 = vmatprep.subr.mxu0 0.0
  %3531 = vmatpush1.msra.mxu0 0.0
  %3532 = vmatprep.subr.mxu0 0.0
  %3533 = vmatpush1.msra.mxu0 0.0
  %3534 = vmatprep.subr.mxu0 0.0
  %3535 = vmatpush1.msra.mxu0 0.0
  %3536 = vmatprep.subr.mxu0 0.0
  %3537 = vmatpush1.msra.mxu0 0.0
  %3538 = vmatprep.subr.mxu0 0.0
  %3539 = vmatpush1.msra.mxu0 0.0
  %3540 = vmatprep.subr.mxu0 0.0
  %3541 = vmatpush1.msra.mxu0 0.0
  %3542 = vmatprep.subr.mxu0 0.0
  %3543 = vmatpush1.msra.mxu0 0.0
  %3544 = vmatprep.subr.mxu0 0.0
  %3545 = vmatpush1.msra.mxu0 0.0
  %3546 = vmatprep.subr.mxu0 0.0
  %3547 = vmatpush1.msra.mxu0 0.0
  %3548 = vmatprep.subr.mxu0 0.0
  %3549 = vmatpush1.msra.mxu0 0.0
  %3550 = vmatprep.subr.mxu0 0.0
  %3551 = vmatpush1.msra.mxu0 0.0
  %3552 = vmatprep.subr.mxu0 0.0
  %3553 = vmatpush1.msra.mxu0 0.0
  %3554 = vmatprep.subr.mxu0 0.0
  %3555 = vmatpush1.msra.mxu0 0.0
  %3556 = vmatprep.subr.mxu0 0.0
  %3557 = vmatpush1.msra.mxu0 0.0
  %3558 = vmatprep.subr.mxu0 0.0
  %3559 = vmatpush1.msra.mxu0 0.0
  %3560 = vmatprep.subr.mxu0 0.0
  %3561 = vmatpush1.msra.mxu0 0.0
  %3562 = vmatprep.subr.mxu0 0.0
  %3563 = vmatpush1.msra.mxu0 0.0
  %3564 = vmatprep.subr.mxu0 0.0
  %3565 = vmatpush1.msra.mxu0 0.0
  %3566 = vmatprep.subr.mxu0 0.0
  %3567 = vmatpush1.msra.mxu0 0.0
  %3568 = vmatprep.subr.mxu0 0.0
  %3569 = vmatpush1.msra.mxu0 0.0
  %3570 = vmatprep.subr.mxu0 0.0
  %3571 = vmatpush1.msra.mxu0 0.0
  %3572 = vmatprep.subr.mxu0 0.0
  %3573 = vmatpush1.msra.mxu0 0.0
  %3574 = vmatprep.subr.mxu0 0.0
  %3575 = vmatpush1.msra.mxu0 0.0
  %3576 = vmatprep.subr.mxu0 0.0
  %3577 = vmatpush1.msra.mxu0 0.0
  %3578 = vmatprep.subr.mxu0 0.0
  %3579 = vmatpush1.msra.mxu0 0.0
  %3580 = vmatprep.subr.mxu0 0.0
  %3581 = vmatpush1.msra.mxu0 0.0
  %3582 = vmatprep.subr.mxu0 0.0
  %3583 = vmatpush1.msra.mxu0 0.0
  %3584 = vmatprep.subr.mxu0 0.0
  %3585 = vmatpush1.msra.mxu0 0.0
  %3586 = vmatprep.subr.mxu0 0.0
  %3587 = vmatpush1.msra.mxu0 0.0
  %3588 = vmatprep.subr.mxu0 0.0
  %3589 = vmatpush1.msra.mxu0 0.0
  %3590 = vmatprep.mubr.f32.mxu0 0.0
  %3591 = vmatmul.mubr.f32.gmra.mrb[0].mxu0 %v3524
  %v3592 = vpop.f32.mrb[0].mxu0
  %v3593 = vadd.f32 0.0, %v3592
  %v3594 = vpop.f32.mrb[0].mxu0
  %3595 = vdwg.mxu0
  %3597 = vset.pattern.permute.xlu0 0
  %3598 = vperm.xlu0 %3597, %v3418
  %v3599 = vpop.permute.xlu0 %3598
  %v3601 = vmul.f32 %v3599, %v3200
  %v3602 = vadd.f32 %v3601, %v64
  %v3605 = vrot.slane %v3593, 7
  %v3606 = vsel %vm659, %v3605, %v3521
  %v3608 = vadd.f32 %v3602, %v3606
  %s3609 = scalar_lea.vmem %s17, 4
  %3610 = vst [vmem:[%s3609] sm:$0x3] %v3608
  %v3611 = vsel %vm814, %v3608, -inf
  %3612 = vmax.xlane.f32.xlu0 %v3611
  %v3613 = vpop.xlane.xlu0 %3612
  %vm3614 = vcmp.eq.f32.partialorder %v3608, %v3613
  %v3615 = vsel %vm3614, %v100, 128
  %v3616 = vsel %vm814, %v3615, 2147483647
  %v3617 = vand.u32 %v3616, 65535
  %v3618 = vshra.s32 %v3616, 16
  %v3619 = vcvt.s32.f32 %v3617
  %v3620 = vcvt.s32.f32 %v3618
  %3621 = vmin.xlane.f32.xlu0 %v3620
  %v3622 = vpop.xlane.xlu0 %3621
  %vm3623 = vcmp.eq.f32.partialorder %v3620, %v3622
  %v3624 = vsel %vm3623, %v3619, inf
  %3625 = vmin.xlane.f32.xlu0 %v3624
  %v3626 = vpop.xlane.xlu0 %3625
  %v3627 = vcvt.f32.s32 %v3626
  %v3628 = vcvt.f32.s32 %v3622
  %v3629 = vshll.u32 %v3628, 16
  %v3630 = vadd.s32 %v3629, %v3627
  %vm3631 = vcmp.ge.s32.totalorder %v3630, 32
  %v3632 = vsel %vm3631, 1, %v3630
  %vm3633 = vcmp.eq.s32.totalorder %v3632, %v100
  %v3634 = vsel %vm3633, 1, 0
  %v3635 = vcvt.s32.f32 %v3634
  %v3637 = vsel %vm124, %v3635, 0
  %3639 = vmatprep.subr.mxu0 0.0
  %3640 = vmatpush1.msra.mxu0 %v60
  %3641 = vmatprep.subr.mxu0 0.0
  %3642 = vmatpush1.msra.mxu0 %v61
  %3643 = vmatprep.subr.mxu0 0.0
  %3644 = vmatpush1.msra.mxu0 %v62
  %3645 = vmatprep.subr.mxu0 0.0
  %3646 = vmatpush1.msra.mxu0 %v63
  %3647 = vmatprep.subr.mxu0 0.0
  %3648 = vmatpush1.msra.mxu0 0.0
  %3649 = vmatprep.subr.mxu0 0.0
  %3650 = vmatpush1.msra.mxu0 0.0
  %3651 = vmatprep.subr.mxu0 0.0
  %3652 = vmatpush1.msra.mxu0 0.0
  %3653 = vmatprep.subr.mxu0 0.0
  %3654 = vmatpush1.msra.mxu0 0.0
  %3655 = vmatprep.subr.mxu0 0.0
  %3656 = vmatpush1.msra.mxu0 0.0
  %3657 = vmatprep.subr.mxu0 0.0
  %3658 = vmatpush1.msra.mxu0 0.0
  %3659 = vmatprep.subr.mxu0 0.0
  %3660 = vmatpush1.msra.mxu0 0.0
  %3661 = vmatprep.subr.mxu0 0.0
  %3662 = vmatpush1.msra.mxu0 0.0
  %3663 = vmatprep.subr.mxu0 0.0
  %3664 = vmatpush1.msra.mxu0 0.0
  %3665 = vmatprep.subr.mxu0 0.0
  %3666 = vmatpush1.msra.mxu0 0.0
  %3667 = vmatprep.subr.mxu0 0.0
  %3668 = vmatpush1.msra.mxu0 0.0
  %3669 = vmatprep.subr.mxu0 0.0
  %3670 = vmatpush1.msra.mxu0 0.0
  %3671 = vmatprep.subr.mxu0 0.0
  %3672 = vmatpush1.msra.mxu0 0.0
  %3673 = vmatprep.subr.mxu0 0.0
  %3674 = vmatpush1.msra.mxu0 0.0
  %3675 = vmatprep.subr.mxu0 0.0
  %3676 = vmatpush1.msra.mxu0 0.0
  %3677 = vmatprep.subr.mxu0 0.0
  %3678 = vmatpush1.msra.mxu0 0.0
  %3679 = vmatprep.subr.mxu0 0.0
  %3680 = vmatpush1.msra.mxu0 0.0
  %3681 = vmatprep.subr.mxu0 0.0
  %3682 = vmatpush1.msra.mxu0 0.0
  %3683 = vmatprep.subr.mxu0 0.0
  %3684 = vmatpush1.msra.mxu0 0.0
  %3685 = vmatprep.subr.mxu0 0.0
  %3686 = vmatpush1.msra.mxu0 0.0
  %3687 = vmatprep.subr.mxu0 0.0
  %3688 = vmatpush1.msra.mxu0 0.0
  %3689 = vmatprep.subr.mxu0 0.0
  %3690 = vmatpush1.msra.mxu0 0.0
  %3691 = vmatprep.subr.mxu0 0.0
  %3692 = vmatpush1.msra.mxu0 0.0
  %3693 = vmatprep.subr.mxu0 0.0
  %3694 = vmatpush1.msra.mxu0 0.0
  %3695 = vmatprep.subr.mxu0 0.0
  %3696 = vmatpush1.msra.mxu0 0.0
  %3697 = vmatprep.subr.mxu0 0.0
  %3698 = vmatpush1.msra.mxu0 0.0
  %3699 = vmatprep.subr.mxu0 0.0
  %3700 = vmatpush1.msra.mxu0 0.0
  %3701 = vmatprep.subr.mxu0 0.0
  %3702 = vmatpush1.msra.mxu0 0.0
  %3703 = vmatprep.mubr.f32.mxu0 0.0
  %3704 = vmatmul.mubr.f32.gmra.mrb[0].mxu0 %v3637
  %v3705 = vpop.f32.mrb[0].mxu0
  %v3706 = vadd.f32 0.0, %v3705
  %v3707 = vpop.f32.mrb[0].mxu0
  %3708 = vdwg.mxu0
  %3709 = vmatprep.subr.mxu0 0.0
  %3710 = vmatpush1.msra.mxu0 %v67
  %3711 = vmatprep.subr.mxu0 0.0
  %3712 = vmatpush1.msra.mxu0 %v68
  %3713 = vmatprep.subr.mxu0 0.0
  %3714 = vmatpush1.msra.mxu0 %v69
  %3715 = vmatprep.subr.mxu0 0.0
  %3716 = vmatpush1.msra.mxu0 %v70
  %3717 = vmatprep.subr.mxu0 0.0
  %3718 = vmatpush1.msra.mxu0 0.0
  %3719 = vmatprep.subr.mxu0 0.0
  %3720 = vmatpush1.msra.mxu0 0.0
  %3721 = vmatprep.subr.mxu0 0.0
  %3722 = vmatpush1.msra.mxu0 0.0
  %3723 = vmatprep.subr.mxu0 0.0
  %3724 = vmatpush1.msra.mxu0 0.0
  %3725 = vmatprep.subr.mxu0 0.0
  %3726 = vmatpush1.msra.mxu0 0.0
  %3727 = vmatprep.subr.mxu0 0.0
  %3728 = vmatpush1.msra.mxu0 0.0
  %3729 = vmatprep.subr.mxu0 0.0
  %3730 = vmatpush1.msra.mxu0 0.0
  %3731 = vmatprep.subr.mxu0 0.0
  %3732 = vmatpush1.msra.mxu0 0.0
  %3733 = vmatprep.subr.mxu0 0.0
  %3734 = vmatpush1.msra.mxu0 0.0
  %3735 = vmatprep.subr.mxu0 0.0
  %3736 = vmatpush1.msra.mxu0 0.0
  %3737 = vmatprep.subr.mxu0 0.0
  %3738 = vmatpush1.msra.mxu0 0.0
  %3739 = vmatprep.subr.mxu0 0.0
  %3740 = vmatpush1.msra.mxu0 0.0
  %3741 = vmatprep.subr.mxu0 0.0
  %3742 = vmatpush1.msra.mxu0 0.0
  %3743 = vmatprep.subr.mxu0 0.0
  %3744 = vmatpush1.msra.mxu0 0.0
  %3745 = vmatprep.subr.mxu0 0.0
  %3746 = vmatpush1.msra.mxu0 0.0
  %3747 = vmatprep.subr.mxu0 0.0
  %3748 = vmatpush1.msra.mxu0 0.0
  %3749 = vmatprep.subr.mxu0 0.0
  %3750 = vmatpush1.msra.mxu0 0.0
  %3751 = vmatprep.subr.mxu0 0.0
  %3752 = vmatpush1.msra.mxu0 0.0
  %3753 = vmatprep.subr.mxu0 0.0
  %3754 = vmatpush1.msra.mxu0 0.0
  %3755 = vmatprep.subr.mxu0 0.0
  %3756 = vmatpush1.msra.mxu0 0.0
  %3757 = vmatprep.subr.mxu0 0.0
  %3758 = vmatpush1.msra.mxu0 0.0
  %3759 = vmatprep.subr.mxu0 0.0
  %3760 = vmatpush1.msra.mxu0 0.0
  %3761 = vmatprep.subr.mxu0 0.0
  %3762 = vmatpush1.msra.mxu0 0.0
  %3763 = vmatprep.subr.mxu0 0.0
  %3764 = vmatpush1.msra.mxu0 0.0
  %3765 = vmatprep.subr.mxu0 0.0
  %3766 = vmatpush1.msra.mxu0 0.0
  %3767 = vmatprep.subr.mxu0 0.0
  %3768 = vmatpush1.msra.mxu0 0.0
  %3769 = vmatprep.subr.mxu0 0.0
  %3770 = vmatpush1.msra.mxu0 0.0
  %3771 = vmatprep.subr.mxu0 0.0
  %3772 = vmatpush1.msra.mxu0 0.0
  %3773 = vmatprep.mubr.f32.mxu0 0.0
  %3774 = vmatmul.mubr.f32.gmra.mrb[0].mxu0 %v3117
  %v3775 = vpop.f32.mrb[0].mxu0
  %v3776 = vadd.f32 0.0, %v3775
  %v3777 = vpop.f32.mrb[0].mxu0
  %3778 = vdwg.mxu0
  %v3780 = vsel %vm198, %v3706, 0
  %3782 = vmatprep.subr.mxu0 0.0
  %3783 = vmatpush1.msra.mxu0 %v65
  %3784 = vmatprep.subr.mxu0 0.0
  %3785 = vmatpush1.msra.mxu0 %v66
  %3786 = vmatprep.subr.mxu0 0.0
  %3787 = vmatpush1.msra.mxu0 0.0
  %3788 = vmatprep.subr.mxu0 0.0
  %3789 = vmatpush1.msra.mxu0 0.0
  %3790 = vmatprep.subr.mxu0 0.0
  %3791 = vmatpush1.msra.mxu0 0.0
  %3792 = vmatprep.subr.mxu0 0.0
  %3793 = vmatpush1.msra.mxu0 0.0
  %3794 = vmatprep.subr.mxu0 0.0
  %3795 = vmatpush1.msra.mxu0 0.0
  %3796 = vmatprep.subr.mxu0 0.0
  %3797 = vmatpush1.msra.mxu0 0.0
  %3798 = vmatprep.subr.mxu0 0.0
  %3799 = vmatpush1.msra.mxu0 0.0
  %3800 = vmatprep.subr.mxu0 0.0
  %3801 = vmatpush1.msra.mxu0 0.0
  %3802 = vmatprep.subr.mxu0 0.0
  %3803 = vmatpush1.msra.mxu0 0.0
  %3804 = vmatprep.subr.mxu0 0.0
  %3805 = vmatpush1.msra.mxu0 0.0
  %3806 = vmatprep.subr.mxu0 0.0
  %3807 = vmatpush1.msra.mxu0 0.0
  %3808 = vmatprep.subr.mxu0 0.0
  %3809 = vmatpush1.msra.mxu0 0.0
  %3810 = vmatprep.subr.mxu0 0.0
  %3811 = vmatpush1.msra.mxu0 0.0
  %3812 = vmatprep.subr.mxu0 0.0
  %3813 = vmatpush1.msra.mxu0 0.0
  %3814 = vmatprep.subr.mxu0 0.0
  %3815 = vmatpush1.msra.mxu0 0.0
  %3816 = vmatprep.subr.mxu0 0.0
  %3817 = vmatpush1.msra.mxu0 0.0
  %3818 = vmatprep.subr.mxu0 0.0
  %3819 = vmatpush1.msra.mxu0 0.0
  %3820 = vmatprep.subr.mxu0 0.0
  %3821 = vmatpush1.msra.mxu0 0.0
  %3822 = vmatprep.subr.mxu0 0.0
  %3823 = vmatpush1.msra.mxu0 0.0
  %3824 = vmatprep.subr.mxu0 0.0
  %3825 = vmatpush1.msra.mxu0 0.0
  %3826 = vmatprep.subr.mxu0 0.0
  %3827 = vmatpush1.msra.mxu0 0.0
  %3828 = vmatprep.subr.mxu0 0.0
  %3829 = vmatpush1.msra.mxu0 0.0
  %3830 = vmatprep.subr.mxu0 0.0
  %3831 = vmatpush1.msra.mxu0 0.0
  %3832 = vmatprep.subr.mxu0 0.0
  %3833 = vmatpush1.msra.mxu0 0.0
  %3834 = vmatprep.subr.mxu0 0.0
  %3835 = vmatpush1.msra.mxu0 0.0
  %3836 = vmatprep.subr.mxu0 0.0
  %3837 = vmatpush1.msra.mxu0 0.0
  %3838 = vmatprep.subr.mxu0 0.0
  %3839 = vmatpush1.msra.mxu0 0.0
  %3840 = vmatprep.subr.mxu0 0.0
  %3841 = vmatpush1.msra.mxu0 0.0
  %3842 = vmatprep.subr.mxu0 0.0
  %3843 = vmatpush1.msra.mxu0 0.0
  %3844 = vmatprep.subr.mxu0 0.0
  %3845 = vmatpush1.msra.mxu0 0.0
  %3846 = vmatprep.mubr.f32.mxu0 0.0
  %3847 = vmatmul.mubr.f32.gmra.mrb[0].mxu0 %v3780
  %v3848 = vpop.f32.mrb[0].mxu0
  %v3849 = vadd.f32 %v3776, %v3848
  %v3850 = vpop.f32.mrb[0].mxu0
  %3851 = vdwg.mxu0
  %v3852 = vadd.f32 %v3849, %v76
  %v3853 = vxor.u32 %v3852, 2147483648
  %v3854 = vmul.f32 %v3853, 1.442695
  %v3855 = vpow.pop %v3854
  %v3856 = vadd.f32 %v3855, 1.0
  %v3857 = vrcp.pop %v3856
  %v3858 = vmul.f32 1.0, %v3857
  %v3859 = vtanh.pop %v3852
  %v3860 = vmul.f32 %v3858, %v2685
  %3862 = vrot.lane.b32.xlu0 %v3859, 64
  %v3863 = vpop.permute.xlu0 %3862
  %v3865 = vmul.f32 %v3858, %v3863
  %3867 = vrot.lane.b32.xlu0 %v3865, 32
  %v3868 = vpop.permute.xlu0 %3867
  %v3870 = vadd.f32 %v3860, %v3868
  %v3871 = vtanh.pop %v3870
  %3873 = vrot.lane.b32.xlu0 %v3871, 64
  %v3874 = vpop.permute.xlu0 %3873
  %v3876 = vmul.f32 %v3858, %v3874
  %v3879 = vunpack.c.l.s4 1966171168
  %v3880 = vunpack.c.0.s8 %v3879
  %v3881 = vlaneseq
  %v3882 = vshrl.u32 %v3881, 7
  %v3883 = vsub.s32 %v3880, %v3882
  %v3884 = vrot.slane %v3876, %v3883
  %v3885 = vcombine.high %v3884, %v3884
  %v3887 = vunpack.c.l.s4 1966171168
  %v3888 = vunpack.c.0.s8 %v3887
  %v3889 = vlaneseq
  %v3890 = vshrl.u32 %v3889, 7
  %v3891 = vsub.s32 %v3888, %v3890
  %v3892 = vrot.slane %v3884, %v3891
  %v3894 = vunpack.c.l.s4 1966171168
  %v3895 = vunpack.c.0.s8 %v3894
  %v3896 = vlaneseq
  %v3897 = vshrl.u32 %v3896, 7
  %v3898 = vsub.s32 %v3895, %v3897
  %v3899 = vrot.slane %v3885, %v3898
  %v3900 = vlaneseq
  %v3901 = vshrl.u32 %v3900, 7
  %v3902 = vsub.s32 0, %v3901
  %v3903 = vrot.slane %v3892, %v3902
  %3904 = vrot.lane.b32.xlu0 %v3903, 32
  %v3905 = vpop.permute.xlu0 %3904
  %v3906 = vsel %vm124, %v3905, 0
  %3908 = vmatprep.subr.mxu0 0.0
  %3909 = vmatpush1.xpose.msra.mxu0 %v333
  %3910 = vmatprep.subr.mxu0 0.0
  %3911 = vmatpush1.xpose.msra.mxu0 0.0
  %3912 = vmatprep.subr.mxu0 0.0
  %3913 = vmatpush1.xpose.msra.mxu0 0.0
  %3914 = vmatprep.subr.mxu0 0.0
  %3915 = vmatpush1.xpose.msra.mxu0 0.0
  %3916 = vmatprep.subr.mxu0 0.0
  %3917 = vmatpush1.xpose.msra.mxu0 0.0
  %3918 = vmatprep.subr.mxu0 0.0
  %3919 = vmatpush1.xpose.msra.mxu0 0.0
  %3920 = vmatprep.subr.mxu0 0.0
  %3921 = vmatpush1.xpose.msra.mxu0 0.0
  %3922 = vmatprep.subr.mxu0 0.0
  %3923 = vmatpush1.xpose.msra.mxu0 0.0
  %3924 = vmatprep.subr.mxu0 0.0
  %3925 = vmatpush1.xpose.msra.mxu0 0.0
  %3926 = vmatprep.subr.mxu0 0.0
  %3927 = vmatpush1.xpose.msra.mxu0 0.0
  %3928 = vmatprep.subr.mxu0 0.0
  %3929 = vmatpush1.xpose.msra.mxu0 0.0
  %3930 = vmatprep.subr.mxu0 0.0
  %3931 = vmatpush1.xpose.msra.mxu0 0.0
  %3932 = vmatprep.subr.mxu0 0.0
  %3933 = vmatpush1.xpose.msra.mxu0 0.0
  %3934 = vmatprep.subr.mxu0 0.0
  %3935 = vmatpush1.xpose.msra.mxu0 0.0
  %3936 = vmatprep.subr.mxu0 0.0
  %3937 = vmatpush1.xpose.msra.mxu0 0.0
  %3938 = vmatprep.subr.mxu0 0.0
  %3939 = vmatpush1.xpose.msra.mxu0 0.0
  %3940 = vmatprep.subr.mxu0 0.0
  %3941 = vmatpush1.xpose.msra.mxu0 0.0
  %3942 = vmatprep.subr.mxu0 0.0
  %3943 = vmatpush1.xpose.msra.mxu0 0.0
  %3944 = vmatprep.subr.mxu0 0.0
  %3945 = vmatpush1.xpose.msra.mxu0 0.0
  %3946 = vmatprep.subr.mxu0 0.0
  %3947 = vmatpush1.xpose.msra.mxu0 0.0
  %3948 = vmatprep.subr.mxu0 0.0
  %3949 = vmatpush1.xpose.msra.mxu0 0.0
  %3950 = vmatprep.subr.mxu0 0.0
  %3951 = vmatpush1.xpose.msra.mxu0 0.0
  %3952 = vmatprep.subr.mxu0 0.0
  %3953 = vmatpush1.xpose.msra.mxu0 0.0
  %3954 = vmatprep.subr.mxu0 0.0
  %3955 = vmatpush1.xpose.msra.mxu0 0.0
  %3956 = vmatprep.subr.mxu0 0.0
  %3957 = vmatpush1.xpose.msra.mxu0 0.0
  %3958 = vmatprep.subr.mxu0 0.0
  %3959 = vmatpush1.xpose.msra.mxu0 0.0
  %3960 = vmatprep.subr.mxu0 0.0
  %3961 = vmatpush1.xpose.msra.mxu0 0.0
  %3962 = vmatprep.subr.mxu0 0.0
  %3963 = vmatpush1.xpose.msra.mxu0 0.0
  %3964 = vmatprep.subr.mxu0 0.0
  %3965 = vmatpush1.xpose.msra.mxu0 0.0
  %3966 = vmatprep.subr.mxu0 0.0
  %3967 = vmatpush1.xpose.msra.mxu0 0.0
  %3968 = vmatprep.subr.mxu0 0.0
  %3969 = vmatpush1.xpose.msra.mxu0 0.0
  %3970 = vmatprep.subr.mxu0 0.0
  %3971 = vmatpush1.xpose.msra.mxu0 0.0
  %3972 = vmatprep.mubr.f32.mxu0 0.0
  %3973 = vmatmul.mubr.f32.gmra.mrb[0].mxu0 %v3906
  %v3974 = vpop.f32.mrb[0].mxu0
  %v3975 = vadd.f32 0.0, %v3974
  %v3976 = vpop.f32.mrb[0].mxu0
  %3977 = vdwg.mxu0
  %v3978 = vlaneseq
  %v3979 = vshrl.u32 %v3978, 7
  %v3980 = vsub.s32 0, %v3979
  %v3981 = vrot.slane %v3899, %v3980
  %3982 = vrot.lane.b32.xlu0 %v3981, 32
  %v3983 = vpop.permute.xlu0 %3982
  %v3984 = vsel %vm124, %v3983, 0
  %3986 = vmatprep.subr.mxu0 0.0
  %3987 = vmatpush1.xpose.msra.mxu0 %v414
  %3988 = vmatprep.subr.mxu0 0.0
  %3989 = vmatpush1.xpose.msra.mxu0 0.0
  %3990 = vmatprep.subr.mxu0 0.0
  %3991 = vmatpush1.xpose.msra.mxu0 0.0
  %3992 = vmatprep.subr.mxu0 0.0
  %3993 = vmatpush1.xpose.msra.mxu0 0.0
  %3994 = vmatprep.subr.mxu0 0.0
  %3995 = vmatpush1.xpose.msra.mxu0 0.0
  %3996 = vmatprep.subr.mxu0 0.0
  %3997 = vmatpush1.xpose.msra.mxu0 0.0
  %3998 = vmatprep.subr.mxu0 0.0
  %3999 = vmatpush1.xpose.msra.mxu0 0.0
  %4000 = vmatprep.subr.mxu0 0.0
  %4001 = vmatpush1.xpose.msra.mxu0 0.0
  %4002 = vmatprep.subr.mxu0 0.0
  %4003 = vmatpush1.xpose.msra.mxu0 0.0
  %4004 = vmatprep.subr.mxu0 0.0
  %4005 = vmatpush1.xpose.msra.mxu0 0.0
  %4006 = vmatprep.subr.mxu0 0.0
  %4007 = vmatpush1.xpose.msra.mxu0 0.0
  %4008 = vmatprep.subr.mxu0 0.0
  %4009 = vmatpush1.xpose.msra.mxu0 0.0
  %4010 = vmatprep.subr.mxu0 0.0
  %4011 = vmatpush1.xpose.msra.mxu0 0.0
  %4012 = vmatprep.subr.mxu0 0.0
  %4013 = vmatpush1.xpose.msra.mxu0 0.0
  %4014 = vmatprep.subr.mxu0 0.0
  %4015 = vmatpush1.xpose.msra.mxu0 0.0
  %4016 = vmatprep.subr.mxu0 0.0
  %4017 = vmatpush1.xpose.msra.mxu0 0.0
  %4018 = vmatprep.subr.mxu0 0.0
  %4019 = vmatpush1.xpose.msra.mxu0 0.0
  %4020 = vmatprep.subr.mxu0 0.0
  %4021 = vmatpush1.xpose.msra.mxu0 0.0
  %4022 = vmatprep.subr.mxu0 0.0
  %4023 = vmatpush1.xpose.msra.mxu0 0.0
  %4024 = vmatprep.subr.mxu0 0.0
  %4025 = vmatpush1.xpose.msra.mxu0 0.0
  %4026 = vmatprep.subr.mxu0 0.0
  %4027 = vmatpush1.xpose.msra.mxu0 0.0
  %4028 = vmatprep.subr.mxu0 0.0
  %4029 = vmatpush1.xpose.msra.mxu0 0.0
  %4030 = vmatprep.subr.mxu0 0.0
  %4031 = vmatpush1.xpose.msra.mxu0 0.0
  %4032 = vmatprep.subr.mxu0 0.0
  %4033 = vmatpush1.xpose.msra.mxu0 0.0
  %4034 = vmatprep.subr.mxu0 0.0
  %4035 = vmatpush1.xpose.msra.mxu0 0.0
  %4036 = vmatprep.subr.mxu0 0.0
  %4037 = vmatpush1.xpose.msra.mxu0 0.0
  %4038 = vmatprep.subr.mxu0 0.0
  %4039 = vmatpush1.xpose.msra.mxu0 0.0
  %4040 = vmatprep.subr.mxu0 0.0
  %4041 = vmatpush1.xpose.msra.mxu0 0.0
  %4042 = vmatprep.subr.mxu0 0.0
  %4043 = vmatpush1.xpose.msra.mxu0 0.0
  %4044 = vmatprep.subr.mxu0 0.0
  %4045 = vmatpush1.xpose.msra.mxu0 0.0
  %4046 = vmatprep.subr.mxu0 0.0
  %4047 = vmatpush1.xpose.msra.mxu0 0.0
  %4048 = vmatprep.subr.mxu0 0.0
  %4049 = vmatpush1.xpose.msra.mxu0 0.0
  %4050 = vmatprep.mubr.f32.mxu0 0.0
  %4051 = vmatmul.mubr.f32.gmra.mrb[0].mxu0 %v3984
  %v4052 = vpop.f32.mrb[0].mxu0
  %v4053 = vadd.f32 0.0, %v4052
  %v4054 = vpop.f32.mrb[0].mxu0
  %4055 = vdwg.mxu0
  %v4056 = vsel %vm486, %v3975, -inf
  %4057 = vmax.xlane.f32.xlu0 %v4056
  %v4058 = vpop.xlane.xlu0 %4057
  %v4059 = vsel %vm486, %v4053, -inf
  %4060 = vmax.xlane.f32.xlu0 %v4059
  %v4061 = vpop.xlane.xlu0 %4060
  %v4062 = vsub.f32 %v3975, %v4058
  %v4063 = vsub.f32 %v4053, %v4061
  %v4064 = vmul.f32 %v4062, 1.442695
  %v4065 = vpow.pop %v4064
  %v4066 = vmul.f32 %v4063, 1.442695
  %v4067 = vpow.pop %v4066
  %v4068 = vsel %vm486, %v4065, 0.0
  %4069 = vadd.xlane.f32.xlu0 %v4068
  %v4070 = vpop.xlane.xlu0 %4069
  %v4071 = vsel %vm486, %v4067, 0.0
  %4072 = vadd.xlane.f32.xlu0 %v4071
  %v4073 = vpop.xlane.xlu0 %4072
  %v4074 = vrcp.pop %v4070
  %v4075 = vrcp.pop %v4073
  %v4076 = vmul.f32 %v4065, %v4074
  %v4077 = vmul.f32 %v4067, %v4075
  %v4079 = vsel %vm509, %v4076, 0
  %4081 = vmatprep.subr.mxu0 0.0
  %4082 = vmatpush1.msra.mxu0 %v58
  %4083 = vmatprep.subr.mxu0 0.0
  %4084 = vmatpush1.msra.mxu0 0.0
  %4085 = vmatprep.subr.mxu0 0.0
  %4086 = vmatpush1.msra.mxu0 0.0
  %4087 = vmatprep.subr.mxu0 0.0
  %4088 = vmatpush1.msra.mxu0 0.0
  %4089 = vmatprep.subr.mxu0 0.0
  %4090 = vmatpush1.msra.mxu0 0.0
  %4091 = vmatprep.subr.mxu0 0.0
  %4092 = vmatpush1.msra.mxu0 0.0
  %4093 = vmatprep.subr.mxu0 0.0
  %4094 = vmatpush1.msra.mxu0 0.0
  %4095 = vmatprep.subr.mxu0 0.0
  %4096 = vmatpush1.msra.mxu0 0.0
  %4097 = vmatprep.subr.mxu0 0.0
  %4098 = vmatpush1.msra.mxu0 0.0
  %4099 = vmatprep.subr.mxu0 0.0
  %4100 = vmatpush1.msra.mxu0 0.0
  %4101 = vmatprep.subr.mxu0 0.0
  %4102 = vmatpush1.msra.mxu0 0.0
  %4103 = vmatprep.subr.mxu0 0.0
  %4104 = vmatpush1.msra.mxu0 0.0
  %4105 = vmatprep.subr.mxu0 0.0
  %4106 = vmatpush1.msra.mxu0 0.0
  %4107 = vmatprep.subr.mxu0 0.0
  %4108 = vmatpush1.msra.mxu0 0.0
  %4109 = vmatprep.subr.mxu0 0.0
  %4110 = vmatpush1.msra.mxu0 0.0
  %4111 = vmatprep.subr.mxu0 0.0
  %4112 = vmatpush1.msra.mxu0 0.0
  %4113 = vmatprep.subr.mxu0 0.0
  %4114 = vmatpush1.msra.mxu0 0.0
  %4115 = vmatprep.subr.mxu0 0.0
  %4116 = vmatpush1.msra.mxu0 0.0
  %4117 = vmatprep.subr.mxu0 0.0
  %4118 = vmatpush1.msra.mxu0 0.0
  %4119 = vmatprep.subr.mxu0 0.0
  %4120 = vmatpush1.msra.mxu0 0.0
  %4121 = vmatprep.subr.mxu0 0.0
  %4122 = vmatpush1.msra.mxu0 0.0
  %4123 = vmatprep.subr.mxu0 0.0
  %4124 = vmatpush1.msra.mxu0 0.0
  %4125 = vmatprep.subr.mxu0 0.0
  %4126 = vmatpush1.msra.mxu0 0.0
  %4127 = vmatprep.subr.mxu0 0.0
  %4128 = vmatpush1.msra.mxu0 0.0
  %4129 = vmatprep.subr.mxu0 0.0
  %4130 = vmatpush1.msra.mxu0 0.0
  %4131 = vmatprep.subr.mxu0 0.0
  %4132 = vmatpush1.msra.mxu0 0.0
  %4133 = vmatprep.subr.mxu0 0.0
  %4134 = vmatpush1.msra.mxu0 0.0
  %4135 = vmatprep.subr.mxu0 0.0
  %4136 = vmatpush1.msra.mxu0 0.0
  %4137 = vmatprep.subr.mxu0 0.0
  %4138 = vmatpush1.msra.mxu0 0.0
  %4139 = vmatprep.subr.mxu0 0.0
  %4140 = vmatpush1.msra.mxu0 0.0
  %4141 = vmatprep.subr.mxu0 0.0
  %4142 = vmatpush1.msra.mxu0 0.0
  %4143 = vmatprep.subr.mxu0 0.0
  %4144 = vmatpush1.msra.mxu0 0.0
  %4145 = vmatprep.mubr.f32.mxu0 0.0
  %4146 = vmatmul.mubr.f32.gmra.mrb[0].mxu0 %v4079
  %v4147 = vpop.f32.mrb[0].mxu0
  %v4148 = vadd.f32 0.0, %v4147
  %v4149 = vpop.f32.mrb[0].mxu0
  %4150 = vdwg.mxu0
  %v4152 = vsel %vm509, %v4077, 0
  %4154 = vmatprep.subr.mxu0 0.0
  %4155 = vmatpush1.msra.mxu0 %v59
  %4156 = vmatprep.subr.mxu0 0.0
  %4157 = vmatpush1.msra.mxu0 0.0
  %4158 = vmatprep.subr.mxu0 0.0
  %4159 = vmatpush1.msra.mxu0 0.0
  %4160 = vmatprep.subr.mxu0 0.0
  %4161 = vmatpush1.msra.mxu0 0.0
  %4162 = vmatprep.subr.mxu0 0.0
  %4163 = vmatpush1.msra.mxu0 0.0
  %4164 = vmatprep.subr.mxu0 0.0
  %4165 = vmatpush1.msra.mxu0 0.0
  %4166 = vmatprep.subr.mxu0 0.0
  %4167 = vmatpush1.msra.mxu0 0.0
  %4168 = vmatprep.subr.mxu0 0.0
  %4169 = vmatpush1.msra.mxu0 0.0
  %4170 = vmatprep.subr.mxu0 0.0
  %4171 = vmatpush1.msra.mxu0 0.0
  %4172 = vmatprep.subr.mxu0 0.0
  %4173 = vmatpush1.msra.mxu0 0.0
  %4174 = vmatprep.subr.mxu0 0.0
  %4175 = vmatpush1.msra.mxu0 0.0
  %4176 = vmatprep.subr.mxu0 0.0
  %4177 = vmatpush1.msra.mxu0 0.0
  %4178 = vmatprep.subr.mxu0 0.0
  %4179 = vmatpush1.msra.mxu0 0.0
  %4180 = vmatprep.subr.mxu0 0.0
  %4181 = vmatpush1.msra.mxu0 0.0
  %4182 = vmatprep.subr.mxu0 0.0
  %4183 = vmatpush1.msra.mxu0 0.0
  %4184 = vmatprep.subr.mxu0 0.0
  %4185 = vmatpush1.msra.mxu0 0.0
  %4186 = vmatprep.subr.mxu0 0.0
  %4187 = vmatpush1.msra.mxu0 0.0
  %4188 = vmatprep.subr.mxu0 0.0
  %4189 = vmatpush1.msra.mxu0 0.0
  %4190 = vmatprep.subr.mxu0 0.0
  %4191 = vmatpush1.msra.mxu0 0.0
  %4192 = vmatprep.subr.mxu0 0.0
  %4193 = vmatpush1.msra.mxu0 0.0
  %4194 = vmatprep.subr.mxu0 0.0
  %4195 = vmatpush1.msra.mxu0 0.0
  %4196 = vmatprep.subr.mxu0 0.0
  %4197 = vmatpush1.msra.mxu0 0.0
  %4198 = vmatprep.subr.mxu0 0.0
  %4199 = vmatpush1.msra.mxu0 0.0
  %4200 = vmatprep.subr.mxu0 0.0
  %4201 = vmatpush1.msra.mxu0 0.0
  %4202 = vmatprep.subr.mxu0 0.0
  %4203 = vmatpush1.msra.mxu0 0.0
  %4204 = vmatprep.subr.mxu0 0.0
  %4205 = vmatpush1.msra.mxu0 0.0
  %4206 = vmatprep.subr.mxu0 0.0
  %4207 = vmatpush1.msra.mxu0 0.0
  %4208 = vmatprep.subr.mxu0 0.0
  %4209 = vmatpush1.msra.mxu0 0.0
  %4210 = vmatprep.subr.mxu0 0.0
  %4211 = vmatpush1.msra.mxu0 0.0
  %4212 = vmatprep.subr.mxu0 0.0
  %4213 = vmatpush1.msra.mxu0 0.0
  %4214 = vmatprep.subr.mxu0 0.0
  %4215 = vmatpush1.msra.mxu0 0.0
  %4216 = vmatprep.subr.mxu0 0.0
  %4217 = vmatpush1.msra.mxu0 0.0
  %4218 = vmatprep.mubr.f32.mxu0 0.0
  %4219 = vmatmul.mubr.f32.gmra.mrb[0].mxu0 %v4152
  %v4220 = vpop.f32.mrb[0].mxu0
  %v4221 = vadd.f32 0.0, %v4220
  %v4222 = vpop.f32.mrb[0].mxu0
  %4223 = vdwg.mxu0
  %v4226 = vrot.slane %v4221, 7
  %v4227 = vsel %vm659, %v4226, %v4148
  %v4228 = vsel %vm124, %v4227, 0
  %4230 = vmatprep.subr.mxu0 0.0
  %4231 = vmatpush1.msra.mxu0 %v82
  %4232 = vmatprep.subr.mxu0 0.0
  %4233 = vmatpush1.msra.mxu0 %v83
  %4234 = vmatprep.subr.mxu0 0.0
  %4235 = vmatpush1.msra.mxu0 %v84
  %4236 = vmatprep.subr.mxu0 0.0
  %4237 = vmatpush1.msra.mxu0 %v85
  %4238 = vmatprep.subr.mxu0 0.0
  %4239 = vmatpush1.msra.mxu0 0.0
  %4240 = vmatprep.subr.mxu0 0.0
  %4241 = vmatpush1.msra.mxu0 0.0
  %4242 = vmatprep.subr.mxu0 0.0
  %4243 = vmatpush1.msra.mxu0 0.0
  %4244 = vmatprep.subr.mxu0 0.0
  %4245 = vmatpush1.msra.mxu0 0.0
  %4246 = vmatprep.subr.mxu0 0.0
  %4247 = vmatpush1.msra.mxu0 0.0
  %4248 = vmatprep.subr.mxu0 0.0
  %4249 = vmatpush1.msra.mxu0 0.0
  %4250 = vmatprep.subr.mxu0 0.0
  %4251 = vmatpush1.msra.mxu0 0.0
  %4252 = vmatprep.subr.mxu0 0.0
  %4253 = vmatpush1.msra.mxu0 0.0
  %4254 = vmatprep.subr.mxu0 0.0
  %4255 = vmatpush1.msra.mxu0 0.0
  %4256 = vmatprep.subr.mxu0 0.0
  %4257 = vmatpush1.msra.mxu0 0.0
  %4258 = vmatprep.subr.mxu0 0.0
  %4259 = vmatpush1.msra.mxu0 0.0
  %4260 = vmatprep.subr.mxu0 0.0
  %4261 = vmatpush1.msra.mxu0 0.0
  %4262 = vmatprep.subr.mxu0 0.0
  %4263 = vmatpush1.msra.mxu0 0.0
  %4264 = vmatprep.subr.mxu0 0.0
  %4265 = vmatpush1.msra.mxu0 0.0
  %4266 = vmatprep.subr.mxu0 0.0
  %4267 = vmatpush1.msra.mxu0 0.0
  %4268 = vmatprep.subr.mxu0 0.0
  %4269 = vmatpush1.msra.mxu0 0.0
  %4270 = vmatprep.subr.mxu0 0.0
  %4271 = vmatpush1.msra.mxu0 0.0
  %4272 = vmatprep.subr.mxu0 0.0
  %4273 = vmatpush1.msra.mxu0 0.0
  %4274 = vmatprep.subr.mxu0 0.0
  %4275 = vmatpush1.msra.mxu0 0.0
  %4276 = vmatprep.subr.mxu0 0.0
  %4277 = vmatpush1.msra.mxu0 0.0
  %4278 = vmatprep.subr.mxu0 0.0
  %4279 = vmatpush1.msra.mxu0 0.0
  %4280 = vmatprep.subr.mxu0 0.0
  %4281 = vmatpush1.msra.mxu0 0.0
  %4282 = vmatprep.subr.mxu0 0.0
  %4283 = vmatpush1.msra.mxu0 0.0
  %4284 = vmatprep.subr.mxu0 0.0
  %4285 = vmatpush1.msra.mxu0 0.0
  %4286 = vmatprep.subr.mxu0 0.0
  %4287 = vmatpush1.msra.mxu0 0.0
  %4288 = vmatprep.subr.mxu0 0.0
  %4289 = vmatpush1.msra.mxu0 0.0
  %4290 = vmatprep.subr.mxu0 0.0
  %4291 = vmatpush1.msra.mxu0 0.0
  %4292 = vmatprep.subr.mxu0 0.0
  %4293 = vmatpush1.msra.mxu0 0.0
  %4294 = vmatprep.mubr.f32.mxu0 0.0
  %4295 = vmatmul.mubr.f32.gmra.mrb[0].mxu0 %v4228
  %v4296 = vpop.f32.mrb[0].mxu0
  %v4297 = vadd.f32 0.0, %v4296
  %v4298 = vpop.f32.mrb[0].mxu0
  %4299 = vdwg.mxu0
  %4300 = vrot.lane.b32.xlu0 %v3876, 32
  %v4301 = vpop.permute.xlu0 %4300
  %v4302 = vsel %vm124, %v4301, 0
  %4304 = vmatprep.subr.mxu0 0.0
  %4305 = vmatpush1.msra.mxu0 %v78
  %4306 = vmatprep.subr.mxu0 0.0
  %4307 = vmatpush1.msra.mxu0 %v79
  %4308 = vmatprep.subr.mxu0 0.0
  %4309 = vmatpush1.msra.mxu0 %v80
  %4310 = vmatprep.subr.mxu0 0.0
  %4311 = vmatpush1.msra.mxu0 %v81
  %4312 = vmatprep.subr.mxu0 0.0
  %4313 = vmatpush1.msra.mxu0 0.0
  %4314 = vmatprep.subr.mxu0 0.0
  %4315 = vmatpush1.msra.mxu0 0.0
  %4316 = vmatprep.subr.mxu0 0.0
  %4317 = vmatpush1.msra.mxu0 0.0
  %4318 = vmatprep.subr.mxu0 0.0
  %4319 = vmatpush1.msra.mxu0 0.0
  %4320 = vmatprep.subr.mxu0 0.0
  %4321 = vmatpush1.msra.mxu0 0.0
  %4322 = vmatprep.subr.mxu0 0.0
  %4323 = vmatpush1.msra.mxu0 0.0
  %4324 = vmatprep.subr.mxu0 0.0
  %4325 = vmatpush1.msra.mxu0 0.0
  %4326 = vmatprep.subr.mxu0 0.0
  %4327 = vmatpush1.msra.mxu0 0.0
  %4328 = vmatprep.subr.mxu0 0.0
  %4329 = vmatpush1.msra.mxu0 0.0
  %4330 = vmatprep.subr.mxu0 0.0
  %4331 = vmatpush1.msra.mxu0 0.0
  %4332 = vmatprep.subr.mxu0 0.0
  %4333 = vmatpush1.msra.mxu0 0.0
  %4334 = vmatprep.subr.mxu0 0.0
  %4335 = vmatpush1.msra.mxu0 0.0
  %4336 = vmatprep.subr.mxu0 0.0
  %4337 = vmatpush1.msra.mxu0 0.0
  %4338 = vmatprep.subr.mxu0 0.0
  %4339 = vmatpush1.msra.mxu0 0.0
  %4340 = vmatprep.subr.mxu0 0.0
  %4341 = vmatpush1.msra.mxu0 0.0
  %4342 = vmatprep.subr.mxu0 0.0
  %4343 = vmatpush1.msra.mxu0 0.0
  %4344 = vmatprep.subr.mxu0 0.0
  %4345 = vmatpush1.msra.mxu0 0.0
  %4346 = vmatprep.subr.mxu0 0.0
  %4347 = vmatpush1.msra.mxu0 0.0
  %4348 = vmatprep.subr.mxu0 0.0
  %4349 = vmatpush1.msra.mxu0 0.0
  %4350 = vmatprep.subr.mxu0 0.0
  %4351 = vmatpush1.msra.mxu0 0.0
  %4352 = vmatprep.subr.mxu0 0.0
  %4353 = vmatpush1.msra.mxu0 0.0
  %4354 = vmatprep.subr.mxu0 0.0
  %4355 = vmatpush1.msra.mxu0 0.0
  %4356 = vmatprep.subr.mxu0 0.0
  %4357 = vmatpush1.msra.mxu0 0.0
  %4358 = vmatprep.subr.mxu0 0.0
  %4359 = vmatpush1.msra.mxu0 0.0
  %4360 = vmatprep.subr.mxu0 0.0
  %4361 = vmatpush1.msra.mxu0 0.0
  %4362 = vmatprep.subr.mxu0 0.0
  %4363 = vmatpush1.msra.mxu0 0.0
  %4364 = vmatprep.subr.mxu0 0.0
  %4365 = vmatpush1.msra.mxu0 0.0
  %4366 = vmatprep.subr.mxu0 0.0
  %4367 = vmatpush1.msra.mxu0 0.0
  %4368 = vmatprep.mubr.f32.mxu0 0.0
  %4369 = vmatmul.mubr.f32.gmra.mrb[0].mxu0 %v4302
  %v4370 = vpop.f32.mrb[0].mxu0
  %v4371 = vadd.f32 %v4297, %v4370
  %v4372 = vpop.f32.mrb[0].mxu0
  %4373 = vdwg.mxu0
  %v4374 = vadd.f32 %v4371, %v811
  %v4375 = vsel %vm814, %v4374, -inf
  %4376 = vmax.xlane.f32.xlu0 %v4375
  %v4377 = vpop.xlane.xlu0 %4376
  %v4378 = vsub.f32 %v4374, %v4377
  %v4379 = vmul.f32 %v4378, 1.442695
  %v4380 = vpow.pop %v4379
  %v4381 = vsel %vm814, %v4380, 0.0
  %4382 = vadd.xlane.f32.xlu0 %v4381
  %v4383 = vpop.xlane.xlu0 %4382
  %v4384 = vrcp.pop %v4383
  %v4385 = vmul.f32 %v4380, %v4384
  %4386 = vmatprep.subr.mxu0 0.0
  %4387 = vmatpush1.msra.mxu0 %v91
  %4388 = vmatprep.subr.mxu0 0.0
  %4389 = vmatpush1.msra.mxu0 %v92
  %4390 = vmatprep.subr.mxu0 0.0
  %4391 = vmatpush1.msra.mxu0 %v93
  %4392 = vmatprep.subr.mxu0 0.0
  %4393 = vmatpush1.msra.mxu0 %v94
  %4394 = vmatprep.subr.mxu0 0.0
  %4395 = vmatpush1.msra.mxu0 0.0
  %4396 = vmatprep.subr.mxu0 0.0
  %4397 = vmatpush1.msra.mxu0 0.0
  %4398 = vmatprep.subr.mxu0 0.0
  %4399 = vmatpush1.msra.mxu0 0.0
  %4400 = vmatprep.subr.mxu0 0.0
  %4401 = vmatpush1.msra.mxu0 0.0
  %4402 = vmatprep.subr.mxu0 0.0
  %4403 = vmatpush1.msra.mxu0 0.0
  %4404 = vmatprep.subr.mxu0 0.0
  %4405 = vmatpush1.msra.mxu0 0.0
  %4406 = vmatprep.subr.mxu0 0.0
  %4407 = vmatpush1.msra.mxu0 0.0
  %4408 = vmatprep.subr.mxu0 0.0
  %4409 = vmatpush1.msra.mxu0 0.0
  %4410 = vmatprep.subr.mxu0 0.0
  %4411 = vmatpush1.msra.mxu0 0.0
  %4412 = vmatprep.subr.mxu0 0.0
  %4413 = vmatpush1.msra.mxu0 0.0
  %4414 = vmatprep.subr.mxu0 0.0
  %4415 = vmatpush1.msra.mxu0 0.0
  %4416 = vmatprep.subr.mxu0 0.0
  %4417 = vmatpush1.msra.mxu0 0.0
  %4418 = vmatprep.subr.mxu0 0.0
  %4419 = vmatpush1.msra.mxu0 0.0
  %4420 = vmatprep.subr.mxu0 0.0
  %4421 = vmatpush1.msra.mxu0 0.0
  %4422 = vmatprep.subr.mxu0 0.0
  %4423 = vmatpush1.msra.mxu0 0.0
  %4424 = vmatprep.subr.mxu0 0.0
  %4425 = vmatpush1.msra.mxu0 0.0
  %4426 = vmatprep.subr.mxu0 0.0
  %4427 = vmatpush1.msra.mxu0 0.0
  %4428 = vmatprep.subr.mxu0 0.0
  %4429 = vmatpush1.msra.mxu0 0.0
  %4430 = vmatprep.subr.mxu0 0.0
  %4431 = vmatpush1.msra.mxu0 0.0
  %4432 = vmatprep.subr.mxu0 0.0
  %4433 = vmatpush1.msra.mxu0 0.0
  %4434 = vmatprep.subr.mxu0 0.0
  %4435 = vmatpush1.msra.mxu0 0.0
  %4436 = vmatprep.subr.mxu0 0.0
  %4437 = vmatpush1.msra.mxu0 0.0
  %4438 = vmatprep.subr.mxu0 0.0
  %4439 = vmatpush1.msra.mxu0 0.0
  %4440 = vmatprep.subr.mxu0 0.0
  %4441 = vmatpush1.msra.mxu0 0.0
  %4442 = vmatprep.subr.mxu0 0.0
  %4443 = vmatpush1.msra.mxu0 0.0
  %4444 = vmatprep.subr.mxu0 0.0
  %4445 = vmatpush1.msra.mxu0 0.0
  %4446 = vmatprep.subr.mxu0 0.0
  %4447 = vmatpush1.msra.mxu0 0.0
  %4448 = vmatprep.subr.mxu0 0.0
  %4449 = vmatpush1.msra.mxu0 0.0
  %4450 = vmatprep.mubr.f32.mxu0 0.0
  %4451 = vmatmul.mubr.f32.gmra.mrb[0].mxu0 %v4302
  %v4452 = vpop.f32.mrb[0].mxu0
  %v4453 = vadd.f32 0.0, %v4452
  %v4454 = vpop.f32.mrb[0].mxu0
  %4455 = vdwg.mxu0
  %4456 = vmatprep.subr.mxu0 0.0
  %4457 = vmatpush1.msra.mxu0 %v87
  %4458 = vmatprep.subr.mxu0 0.0
  %4459 = vmatpush1.msra.mxu0 %v88
  %4460 = vmatprep.subr.mxu0 0.0
  %4461 = vmatpush1.msra.mxu0 %v89
  %4462 = vmatprep.subr.mxu0 0.0
  %4463 = vmatpush1.msra.mxu0 %v90
  %4464 = vmatprep.subr.mxu0 0.0
  %4465 = vmatpush1.msra.mxu0 0.0
  %4466 = vmatprep.subr.mxu0 0.0
  %4467 = vmatpush1.msra.mxu0 0.0
  %4468 = vmatprep.subr.mxu0 0.0
  %4469 = vmatpush1.msra.mxu0 0.0
  %4470 = vmatprep.subr.mxu0 0.0
  %4471 = vmatpush1.msra.mxu0 0.0
  %4472 = vmatprep.subr.mxu0 0.0
  %4473 = vmatpush1.msra.mxu0 0.0
  %4474 = vmatprep.subr.mxu0 0.0
  %4475 = vmatpush1.msra.mxu0 0.0
  %4476 = vmatprep.subr.mxu0 0.0
  %4477 = vmatpush1.msra.mxu0 0.0
  %4478 = vmatprep.subr.mxu0 0.0
  %4479 = vmatpush1.msra.mxu0 0.0
  %4480 = vmatprep.subr.mxu0 0.0
  %4481 = vmatpush1.msra.mxu0 0.0
  %4482 = vmatprep.subr.mxu0 0.0
  %4483 = vmatpush1.msra.mxu0 0.0
  %4484 = vmatprep.subr.mxu0 0.0
  %4485 = vmatpush1.msra.mxu0 0.0
  %4486 = vmatprep.subr.mxu0 0.0
  %4487 = vmatpush1.msra.mxu0 0.0
  %4488 = vmatprep.subr.mxu0 0.0
  %4489 = vmatpush1.msra.mxu0 0.0
  %4490 = vmatprep.subr.mxu0 0.0
  %4491 = vmatpush1.msra.mxu0 0.0
  %4492 = vmatprep.subr.mxu0 0.0
  %4493 = vmatpush1.msra.mxu0 0.0
  %4494 = vmatprep.subr.mxu0 0.0
  %4495 = vmatpush1.msra.mxu0 0.0
  %4496 = vmatprep.subr.mxu0 0.0
  %4497 = vmatpush1.msra.mxu0 0.0
  %4498 = vmatprep.subr.mxu0 0.0
  %4499 = vmatpush1.msra.mxu0 0.0
  %4500 = vmatprep.subr.mxu0 0.0
  %4501 = vmatpush1.msra.mxu0 0.0
  %4502 = vmatprep.subr.mxu0 0.0
  %4503 = vmatpush1.msra.mxu0 0.0
  %4504 = vmatprep.subr.mxu0 0.0
  %4505 = vmatpush1.msra.mxu0 0.0
  %4506 = vmatprep.subr.mxu0 0.0
  %4507 = vmatpush1.msra.mxu0 0.0
  %4508 = vmatprep.subr.mxu0 0.0
  %4509 = vmatpush1.msra.mxu0 0.0
  %4510 = vmatprep.subr.mxu0 0.0
  %4511 = vmatpush1.msra.mxu0 0.0
  %4512 = vmatprep.subr.mxu0 0.0
  %4513 = vmatpush1.msra.mxu0 0.0
  %4514 = vmatprep.subr.mxu0 0.0
  %4515 = vmatpush1.msra.mxu0 0.0
  %4516 = vmatprep.subr.mxu0 0.0
  %4517 = vmatpush1.msra.mxu0 0.0
  %4518 = vmatprep.subr.mxu0 0.0
  %4519 = vmatpush1.msra.mxu0 0.0
  %4520 = vmatprep.mubr.f32.mxu0 0.0
  %4521 = vmatmul.mubr.f32.gmra.mrb[0].mxu0 %v4228
  %v4522 = vpop.f32.mrb[0].mxu0
  %v4523 = vadd.f32 %v4453, %v4522
  %v4524 = vpop.f32.mrb[0].mxu0
  %4525 = vdwg.mxu0
  %4526 = vmatprep.subr.mxu0 0.0
  %4527 = vmatpush1.msra.mxu0 %v95
  %4528 = vmatprep.subr.mxu0 0.0
  %4529 = vmatpush1.msra.mxu0 %v96
  %4530 = vmatprep.subr.mxu0 0.0
  %4531 = vmatpush1.msra.mxu0 0.0
  %4532 = vmatprep.subr.mxu0 0.0
  %4533 = vmatpush1.msra.mxu0 0.0
  %4534 = vmatprep.subr.mxu0 0.0
  %4535 = vmatpush1.msra.mxu0 0.0
  %4536 = vmatprep.subr.mxu0 0.0
  %4537 = vmatpush1.msra.mxu0 0.0
  %4538 = vmatprep.subr.mxu0 0.0
  %4539 = vmatpush1.msra.mxu0 0.0
  %4540 = vmatprep.subr.mxu0 0.0
  %4541 = vmatpush1.msra.mxu0 0.0
  %4542 = vmatprep.subr.mxu0 0.0
  %4543 = vmatpush1.msra.mxu0 0.0
  %4544 = vmatprep.subr.mxu0 0.0
  %4545 = vmatpush1.msra.mxu0 0.0
  %4546 = vmatprep.subr.mxu0 0.0
  %4547 = vmatpush1.msra.mxu0 0.0
  %4548 = vmatprep.subr.mxu0 0.0
  %4549 = vmatpush1.msra.mxu0 0.0
  %4550 = vmatprep.subr.mxu0 0.0
  %4551 = vmatpush1.msra.mxu0 0.0
  %4552 = vmatprep.subr.mxu0 0.0
  %4553 = vmatpush1.msra.mxu0 0.0
  %4554 = vmatprep.subr.mxu0 0.0
  %4555 = vmatpush1.msra.mxu0 0.0
  %4556 = vmatprep.subr.mxu0 0.0
  %4557 = vmatpush1.msra.mxu0 0.0
  %4558 = vmatprep.subr.mxu0 0.0
  %4559 = vmatpush1.msra.mxu0 0.0
  %4560 = vmatprep.subr.mxu0 0.0
  %4561 = vmatpush1.msra.mxu0 0.0
  %4562 = vmatprep.subr.mxu0 0.0
  %4563 = vmatpush1.msra.mxu0 0.0
  %4564 = vmatprep.subr.mxu0 0.0
  %4565 = vmatpush1.msra.mxu0 0.0
  %4566 = vmatprep.subr.mxu0 0.0
  %4567 = vmatpush1.msra.mxu0 0.0
  %4568 = vmatprep.subr.mxu0 0.0
  %4569 = vmatpush1.msra.mxu0 0.0
  %4570 = vmatprep.subr.mxu0 0.0
  %4571 = vmatpush1.msra.mxu0 0.0
  %4572 = vmatprep.subr.mxu0 0.0
  %4573 = vmatpush1.msra.mxu0 0.0
  %4574 = vmatprep.subr.mxu0 0.0
  %4575 = vmatpush1.msra.mxu0 0.0
  %4576 = vmatprep.subr.mxu0 0.0
  %4577 = vmatpush1.msra.mxu0 0.0
  %4578 = vmatprep.subr.mxu0 0.0
  %4579 = vmatpush1.msra.mxu0 0.0
  %4580 = vmatprep.subr.mxu0 0.0
  %4581 = vmatpush1.msra.mxu0 0.0
  %4582 = vmatprep.subr.mxu0 0.0
  %4583 = vmatpush1.msra.mxu0 0.0
  %4584 = vmatprep.subr.mxu0 0.0
  %4585 = vmatpush1.msra.mxu0 0.0
  %4586 = vmatprep.subr.mxu0 0.0
  %4587 = vmatpush1.msra.mxu0 0.0
  %4588 = vmatprep.subr.mxu0 0.0
  %4589 = vmatpush1.msra.mxu0 0.0
  %4590 = vmatprep.mubr.f32.mxu0 0.0
  %4591 = vmatmul.mubr.f32.gmra.mrb[0].mxu0 %v3780
  %v4592 = vpop.f32.mrb[0].mxu0
  %v4593 = vadd.f32 0.0, %v4592
  %v4594 = vpop.f32.mrb[0].mxu0
  %4595 = vdwg.mxu0
  %v4596 = vadd.f32 %v4523, %v4593
  %v4597 = vadd.f32 %v4596, %v1041
  %v4598 = vxor.u32 %v4597, 2147483648
  %v4599 = vmul.f32 %v4598, 1.442695
  %v4600 = vpow.pop %v4599
  %v4601 = vadd.f32 %v4600, 1.0
  %v4602 = vrcp.pop %v4601
  %v4603 = vmul.f32 1.0, %v4602
  %v4604 = vsub.f32 1.0, %v4603
  %4606 = vset.pattern.permute.xlu0 0
  %4607 = vperm.xlu0 %4606, %v4604
  %v4608 = vpop.permute.xlu0 %4607
  %v4610 = vrot.slane %v4077, 7
  %v4611 = vsel %vm659, %v4610, %v4076
  %v4613 = vmul.f32 %v4608, %v4611
  %v4616 = vunpack.c.l.s4 1966171168
  %v4617 = vunpack.c.0.s8 %v4616
  %v4618 = vlaneseq
  %v4619 = vshrl.u32 %v4618, 7
  %v4620 = vsub.s32 %v4617, %v4619
  %v4621 = vrot.slane %v4613, %v4620
  %v4622 = vcombine.high %v4621, %v4621
  %v4624 = vunpack.c.l.s4 1966171168
  %v4625 = vunpack.c.0.s8 %v4624
  %v4626 = vlaneseq
  %v4627 = vshrl.u32 %v4626, 7
  %v4628 = vsub.s32 %v4625, %v4627
  %v4629 = vrot.slane %v4621, %v4628
  %v4631 = vunpack.c.l.s4 1966171168
  %v4632 = vunpack.c.0.s8 %v4631
  %v4633 = vlaneseq
  %v4634 = vshrl.u32 %v4633, 7
  %v4635 = vsub.s32 %v4632, %v4634
  %v4636 = vrot.slane %v4622, %v4635
  %v4637 = vsel %vm509, %v4629, 0
  %4639 = vmatprep.subr.mxu0 0.0
  %4640 = vmatpush1.msra.mxu0 %v119
  %4641 = vmatprep.subr.mxu0 0.0
  %4642 = vmatpush1.msra.mxu0 0.0
  %4643 = vmatprep.subr.mxu0 0.0
  %4644 = vmatpush1.msra.mxu0 0.0
  %4645 = vmatprep.subr.mxu0 0.0
  %4646 = vmatpush1.msra.mxu0 0.0
  %4647 = vmatprep.subr.mxu0 0.0
  %4648 = vmatpush1.msra.mxu0 0.0
  %4649 = vmatprep.subr.mxu0 0.0
  %4650 = vmatpush1.msra.mxu0 0.0
  %4651 = vmatprep.subr.mxu0 0.0
  %4652 = vmatpush1.msra.mxu0 0.0
  %4653 = vmatprep.subr.mxu0 0.0
  %4654 = vmatpush1.msra.mxu0 0.0
  %4655 = vmatprep.subr.mxu0 0.0
  %4656 = vmatpush1.msra.mxu0 0.0
  %4657 = vmatprep.subr.mxu0 0.0
  %4658 = vmatpush1.msra.mxu0 0.0
  %4659 = vmatprep.subr.mxu0 0.0
  %4660 = vmatpush1.msra.mxu0 0.0
  %4661 = vmatprep.subr.mxu0 0.0
  %4662 = vmatpush1.msra.mxu0 0.0
  %4663 = vmatprep.subr.mxu0 0.0
  %4664 = vmatpush1.msra.mxu0 0.0
  %4665 = vmatprep.subr.mxu0 0.0
  %4666 = vmatpush1.msra.mxu0 0.0
  %4667 = vmatprep.subr.mxu0 0.0
  %4668 = vmatpush1.msra.mxu0 0.0
  %4669 = vmatprep.subr.mxu0 0.0
  %4670 = vmatpush1.msra.mxu0 0.0
  %4671 = vmatprep.subr.mxu0 0.0
  %4672 = vmatpush1.msra.mxu0 0.0
  %4673 = vmatprep.subr.mxu0 0.0
  %4674 = vmatpush1.msra.mxu0 0.0
  %4675 = vmatprep.subr.mxu0 0.0
  %4676 = vmatpush1.msra.mxu0 0.0
  %4677 = vmatprep.subr.mxu0 0.0
  %4678 = vmatpush1.msra.mxu0 0.0
  %4679 = vmatprep.subr.mxu0 0.0
  %4680 = vmatpush1.msra.mxu0 0.0
  %4681 = vmatprep.subr.mxu0 0.0
  %4682 = vmatpush1.msra.mxu0 0.0
  %4683 = vmatprep.subr.mxu0 0.0
  %4684 = vmatpush1.msra.mxu0 0.0
  %4685 = vmatprep.subr.mxu0 0.0
  %4686 = vmatpush1.msra.mxu0 0.0
  %4687 = vmatprep.subr.mxu0 0.0
  %4688 = vmatpush1.msra.mxu0 0.0
  %4689 = vmatprep.subr.mxu0 0.0
  %4690 = vmatpush1.msra.mxu0 0.0
  %4691 = vmatprep.subr.mxu0 0.0
  %4692 = vmatpush1.msra.mxu0 0.0
  %4693 = vmatprep.subr.mxu0 0.0
  %4694 = vmatpush1.msra.mxu0 0.0
  %4695 = vmatprep.subr.mxu0 0.0
  %4696 = vmatpush1.msra.mxu0 0.0
  %4697 = vmatprep.subr.mxu0 0.0
  %4698 = vmatpush1.msra.mxu0 0.0
  %4699 = vmatprep.subr.mxu0 0.0
  %4700 = vmatpush1.msra.mxu0 0.0
  %4701 = vmatprep.subr.mxu0 0.0
  %4702 = vmatpush1.msra.mxu0 0.0
  %4703 = vmatprep.mubr.f32.mxu0 0.0
  %4704 = vmatmul.mubr.f32.gmra.mrb[0].mxu0 %v4637
  %v4705 = vpop.f32.mrb[0].mxu0
  %v4706 = vadd.f32 0.0, %v4705
  %v4707 = vpop.f32.mrb[0].mxu0
  %4708 = vdwg.mxu0
  %v4709 = vsel %vm509, %v4636, 0
  %4711 = vmatprep.subr.mxu0 0.0
  %4712 = vmatpush1.msra.mxu0 %v120
  %4713 = vmatprep.subr.mxu0 0.0
  %4714 = vmatpush1.msra.mxu0 0.0
  %4715 = vmatprep.subr.mxu0 0.0
  %4716 = vmatpush1.msra.mxu0 0.0
  %4717 = vmatprep.subr.mxu0 0.0
  %4718 = vmatpush1.msra.mxu0 0.0
  %4719 = vmatprep.subr.mxu0 0.0
  %4720 = vmatpush1.msra.mxu0 0.0
  %4721 = vmatprep.subr.mxu0 0.0
  %4722 = vmatpush1.msra.mxu0 0.0
  %4723 = vmatprep.subr.mxu0 0.0
  %4724 = vmatpush1.msra.mxu0 0.0
  %4725 = vmatprep.subr.mxu0 0.0
  %4726 = vmatpush1.msra.mxu0 0.0
  %4727 = vmatprep.subr.mxu0 0.0
  %4728 = vmatpush1.msra.mxu0 0.0
  %4729 = vmatprep.subr.mxu0 0.0
  %4730 = vmatpush1.msra.mxu0 0.0
  %4731 = vmatprep.subr.mxu0 0.0
  %4732 = vmatpush1.msra.mxu0 0.0
  %4733 = vmatprep.subr.mxu0 0.0
  %4734 = vmatpush1.msra.mxu0 0.0
  %4735 = vmatprep.subr.mxu0 0.0
  %4736 = vmatpush1.msra.mxu0 0.0
  %4737 = vmatprep.subr.mxu0 0.0
  %4738 = vmatpush1.msra.mxu0 0.0
  %4739 = vmatprep.subr.mxu0 0.0
  %4740 = vmatpush1.msra.mxu0 0.0
  %4741 = vmatprep.subr.mxu0 0.0
  %4742 = vmatpush1.msra.mxu0 0.0
  %4743 = vmatprep.subr.mxu0 0.0
  %4744 = vmatpush1.msra.mxu0 0.0
  %4745 = vmatprep.subr.mxu0 0.0
  %4746 = vmatpush1.msra.mxu0 0.0
  %4747 = vmatprep.subr.mxu0 0.0
  %4748 = vmatpush1.msra.mxu0 0.0
  %4749 = vmatprep.subr.mxu0 0.0
  %4750 = vmatpush1.msra.mxu0 0.0
  %4751 = vmatprep.subr.mxu0 0.0
  %4752 = vmatpush1.msra.mxu0 0.0
  %4753 = vmatprep.subr.mxu0 0.0
  %4754 = vmatpush1.msra.mxu0 0.0
  %4755 = vmatprep.subr.mxu0 0.0
  %4756 = vmatpush1.msra.mxu0 0.0
  %4757 = vmatprep.subr.mxu0 0.0
  %4758 = vmatpush1.msra.mxu0 0.0
  %4759 = vmatprep.subr.mxu0 0.0
  %4760 = vmatpush1.msra.mxu0 0.0
  %4761 = vmatprep.subr.mxu0 0.0
  %4762 = vmatpush1.msra.mxu0 0.0
  %4763 = vmatprep.subr.mxu0 0.0
  %4764 = vmatpush1.msra.mxu0 0.0
  %4765 = vmatprep.subr.mxu0 0.0
  %4766 = vmatpush1.msra.mxu0 0.0
  %4767 = vmatprep.subr.mxu0 0.0
  %4768 = vmatpush1.msra.mxu0 0.0
  %4769 = vmatprep.subr.mxu0 0.0
  %4770 = vmatpush1.msra.mxu0 0.0
  %4771 = vmatprep.subr.mxu0 0.0
  %4772 = vmatpush1.msra.mxu0 0.0
  %4773 = vmatprep.subr.mxu0 0.0
  %4774 = vmatpush1.msra.mxu0 0.0
  %4775 = vmatprep.mubr.f32.mxu0 0.0
  %4776 = vmatmul.mubr.f32.gmra.mrb[0].mxu0 %v4709
  %v4777 = vpop.f32.mrb[0].mxu0
  %v4778 = vadd.f32 0.0, %v4777
  %v4779 = vpop.f32.mrb[0].mxu0
  %4780 = vdwg.mxu0
  %4782 = vset.pattern.permute.xlu0 0
  %4783 = vperm.xlu0 %4782, %v4603
  %v4784 = vpop.permute.xlu0 %4783
  %v4786 = vmul.f32 %v4784, %v4385
  %v4787 = vadd.f32 %v4786, %v64
  %v4790 = vrot.slane %v4778, 7
  %v4791 = vsel %vm659, %v4790, %v4706
  %v4793 = vadd.f32 %v4787, %v4791
  %s4794 = scalar_lea.vmem %s17, 6
  %4795 = vst [vmem:[%s4794] sm:$0x3] %v4793
  // Predicated region
  $region70: #{pointer_generator_forward.3} parent=0 // pred_check
    _
  $region71: #{pointer_generator_forward.3} parent=0 // pred_check_branch
    %4797 = sbr.rel (0) target = $region73
  $region72: #{pointer_generator_forward.3} parent=0 // pred_region
    _
  $region73: #{pointer_generator_forward.3} parent=0 // pred_fallthru
    _
  // Predicated region
  $region74: #{pointer_generator_forward.3} parent=0 // pred_check
    _
  $region75: #{pointer_generator_forward.3} parent=0 // pred_check_branch
    %4799 = sbr.rel (0) target = $region77
  $region76: #{pointer_generator_forward.3} parent=0 // pred_region
    _
  $region77: #{pointer_generator_forward.3} parent=0 // pred_fallthru
    _

</llo_original>
